<compile_context>
chip_gen: v7x
topology: tpu7x:2x2x1
jax: 0.10.0
libtpu: 0.0.40
codegen_flags: <defaults>
</compile_context>

<pallas_src>
import functools

import jax
import jax.numpy as jnp
from jax.experimental import pallas as pl
from jax.experimental.pallas import tpu as pltpu


def _preact_block_kernel(x_ref, row_ref, col_ref, w1_ref, w2_ref,
                         s1_ref, b1_ref, s2_ref, b2_ref, o_ref, *, H, W):
    """One image per grid step; spatial dims flattened into matmul rows.

    x_ref  : (1, M, Cp)  input activations, M = H*W, Cp = lane-padded channels (fp32)
    row_ref: (M, 1)      y coordinate of each flattened row (int32)
    col_ref: (M, 1)      x coordinate of each flattened row (int32)
    w1_ref : (9*Cp, Pp)  conv1 weights, im2col layout (bf16)
    w2_ref : (9*Pp, Pp)  conv2 weights, im2col layout (bf16)
    s*/b*  : (1, Cp)     folded BatchNorm scale / shift (fp32)
    o_ref  : (1, M, Pp)  output (fp32)
    """
    M = x_ref.shape[1]
    x = x_ref[0]                       # (M, Cp) fp32
    row = row_ref[...]                 # (M, 1) int32
    col = col_ref[...]                 # (M, 1) int32

    def conv3x3(h, w_ref):
        # h: (M, Cin) fp32 ; w_ref: (9*Cin, Cout) bf16  ->  (M, Cout) fp32
        taps = []
        for dy in range(3):
            for dx in range(3):
                oy, ox = dy - 1, dx - 1
                if oy == 0 and ox == 0:
                    taps.append(h.astype(jnp.bfloat16))
                    continue
                s = oy * W + ox
                # shifted[f] = h[f + s] (flat index); wrap-around is masked below.
                t = pltpu.roll(h, shift=(-s) % M, axis=0)
                valid = ((row + oy >= 0) & (row + oy < H) &
                         (col + ox >= 0) & (col + ox < W))
                taps.append(jnp.where(valid, t, 0.0).astype(jnp.bfloat16))
        patch = jnp.concatenate(taps, axis=1)          # (M, 9*Cin) bf16, lane-dense
        return jnp.dot(patch, w_ref[...], preferred_element_type=jnp.float32)

    h1 = jnp.maximum(x * s1_ref[...] + b1_ref[...], 0.0)      # bn1 + relu (fp32)
    a1 = conv3x3(h1, w1_ref)                                   # conv1
    h2 = jnp.maximum(a1 * s2_ref[...] + b2_ref[...], 0.0)      # bn2 + relu
    a2 = conv3x3(h2, w2_ref)                                   # conv2
    o_ref[0] = (a2 + x).astype(o_ref.dtype)                    # residual add


def _round_up(v, m):
    return (v + m - 1) // m * m


def preact_block_nhwc(x, w1_hwio, w2_hwio, s1, b1, s2, b2):
    """x: (N,H,W,C) fp32; w*: HWIO fp32; s*/b*: (C,) folded BN scale/shift."""
    N, H, W, C = x.shape
    P = w1_hwio.shape[3]
    assert P == C, "stride=1 / downsample=False requires planes == in_channels"
    M = H * W
    Cp = _round_up(max(C, 1), 128)      # lane-dense channel padding
    Pp = _round_up(max(P, 1), 128)

    # --- pad operands so all minor dims are multiples of 128 lanes ----------
    xf = x.reshape(N, M, C).astype(jnp.float32)
    xp = jnp.zeros((N, M, Cp), jnp.float32).at[:, :, :C].set(xf)

    w1p = jnp.zeros((3, 3, Cp, Pp), jnp.float32).at[:, :, :C, :P].set(
        w1_hwio.astype(jnp.float32))
    w1p = w1p.reshape(9 * Cp, Pp).astype(jnp.bfloat16)
    w2p = jnp.zeros((3, 3, Pp, Pp), jnp.float32).at[:, :, :P, :P].set(
        w2_hwio.astype(jnp.float32))
    w2p = w2p.reshape(9 * Pp, Pp).astype(jnp.bfloat16)

    def pad_vec(v, n):
        return jnp.zeros((1, n), jnp.float32).at[0, :v.shape[0]].set(
            v.astype(jnp.float32))

    s1p, b1p = pad_vec(s1, Cp), pad_vec(b1, Cp)
    s2p, b2p = pad_vec(s2, Pp), pad_vec(b2, Pp)

    # Precomputed (y, x) of each flattened row: avoids int div/mod in-kernel.
    ar = jnp.arange(M, dtype=jnp.int32)
    row_idx = (ar // W).reshape(M, 1)
    col_idx = (ar % W).reshape(M, 1)

    kernel = functools.partial(_preact_block_kernel, H=H, W=W)

    out = pl.pallas_call(
        kernel,
        out_shape=jax.ShapeDtypeStruct((N, M, Pp), jnp.float32),
        grid=(N,),
        in_specs=[
            pl.BlockSpec((1, M, Cp), lambda n: (n, 0, 0)),
            pl.BlockSpec((M, 1), lambda n: (0, 0)),
            pl.BlockSpec((M, 1), lambda n: (0, 0)),
            pl.BlockSpec((9 * Cp, Pp), lambda n: (0, 0)),
            pl.BlockSpec((9 * Pp, Pp), lambda n: (0, 0)),
            pl.BlockSpec((1, Cp), lambda n: (0, 0)),
            pl.BlockSpec((1, Cp), lambda n: (0, 0)),
            pl.BlockSpec((1, Pp), lambda n: (0, 0)),
            pl.BlockSpec((1, Pp), lambda n: (0, 0)),
        ],
        out_specs=pl.BlockSpec((1, M, Pp), lambda n: (n, 0, 0)),
        compiler_params=pltpu.CompilerParams(
            dimension_semantics=("parallel",),
            vmem_limit_bytes=32 * 1024 * 1024,
        ),
    )(xp, row_idx, col_idx, w1p, w2p, s1p, b1p, s2p, b2p)

    return out[:, :, :P].reshape(N, H, W, P)


def preact_block_nchw(x_nchw, params):
    """PyTorch-facing wrapper: NCHW in / NCHW out, folds eval-mode BatchNorm."""
    x = jnp.transpose(x_nchw, (0, 2, 3, 1)).astype(jnp.float32)   # NCHW -> NHWC
    w1 = jnp.transpose(params['conv1_w'], (2, 3, 1, 0))           # OIHW -> HWIO
    w2 = jnp.transpose(params['conv2_w'], (2, 3, 1, 0))

    eps = 1e-5
    s1 = params['bn1_gamma'] / jnp.sqrt(params['bn1_var'] + eps)
    b1 = params['bn1_beta'] - params['bn1_mean'] * s1
    s2 = params['bn2_gamma'] / jnp.sqrt(params['bn2_var'] + eps)
    b2 = params['bn2_beta'] - params['bn2_mean'] * s2

    y = preact_block_nhwc(x, w1, w2, s1, b1, s2, b2)
    return jnp.transpose(y, (0, 3, 1, 2))                         # NHWC -> NCHW


def _reference_nchw(x_nchw, params):
    """Pure-JAX fp32 reference (XLA convs) for validation."""
    x = jnp.transpose(x_nchw, (0, 2, 3, 1)).astype(jnp.float32)
    w1 = jnp.transpose(params['conv1_w'], (2, 3, 1, 0))
    w2 = jnp.transpose(params['conv2_w'], (2, 3, 1, 0))
    eps = 1e-5
    s1 = params['bn1_gamma'] / jnp.sqrt(params['bn1_var'] + eps)
    b1 = params['bn1_beta'] - params['bn1_mean'] * s1
    s2 = params['bn2_gamma'] / jnp.sqrt(params['bn2_var'] + eps)
    b2 = params['bn2_beta'] - params['bn2_mean'] * s2

    h = jnp.maximum(x * s1 + b1, 0.0)
    y = jax.lax.conv_general_dilated(h, w1, (1, 1), 'SAME',
                                     dimension_numbers=('NHWC', 'HWIO', 'NHWC'))
    h2 = jnp.maximum(y * s2 + b2, 0.0)
    y2 = jax.lax.conv_general_dilated(h2, w2, (1, 1), 'SAME',
                                      dimension_numbers=('NHWC', 'HWIO', 'NHWC'))
    out = y2 + x
    return jnp.transpose(out, (0, 3, 1, 2))


def _init_params(key, in_channels, planes):
    ks = jax.random.split(key, 8)
    return {
        # conv weights in PyTorch OIHW layout
        'conv1_w': jax.random.normal(ks[0], (planes, in_channels, 3, 3), jnp.float32) * 0.1,
        'conv2_w': jax.random.normal(ks[1], (planes, planes, 3, 3), jnp.float32) * 0.1,
        # BatchNorm2d affine + running stats (inference mode)
        'bn1_gamma': 1.0 + 0.1 * jax.random.normal(ks[2], (in_channels,), jnp.float32),
        'bn1_beta': 0.1 * jax.random.normal(ks[3], (in_channels,), jnp.float32),
        'bn1_mean': 0.1 * jax.random.normal(ks[4], (in_channels,), jnp.float32),
        'bn1_var': jnp.abs(1.0 + 0.1 * jax.random.normal(ks[5], (in_channels,), jnp.float32)),
        'bn2_gamma': 1.0 + 0.1 * jax.random.normal(ks[6], (planes,), jnp.float32),
        'bn2_beta': 0.1 * jax.random.normal(ks[7], (planes,), jnp.float32),
        'bn2_mean': jnp.zeros((planes,), jnp.float32),
        'bn2_var': jnp.ones((planes,), jnp.float32),
    }


if __name__ == "__main__":
    key = jax.random.PRNGKey(0)
    kx, kp = jax.random.split(key)

    N, C, H, W = 2, 4, 16, 16
    planes = 4  # downsample=False, stride=1 -> planes == in_channels

    x = jax.random.normal(kx, (N, C, H, W), jnp.float32)
    params = _init_params(kp, C, planes)

    fwd = jax.jit(preact_block_nchw)
    out = jax.block_until_ready(fwd(x, params))
    ref = jax.block_until_ready(_reference_nchw(x, params))

    assert out.shape == (N, planes, H, W)
    max_err = float(jnp.max(jnp.abs(out - ref)))
    # bf16 MXU inputs (fp32 accumulation) -> tolerance widened vs fp32 reference.
    assert jnp.allclose(out, ref, atol=5e-2, rtol=5e-2), f"max err {max_err}"

    print("KERNEL_OK")
</pallas_src>

<mosaic_0001>
module attributes {stable_mosaic.version = 11 : i64} {
  func.func @_preact_block_kernel(%arg0: i32, %arg1: memref<1x256x128xf32, #tpu.memory_space<vmem>>, %arg2: memref<256x1xi32, #tpu.memory_space<vmem>>, %arg3: memref<256x1xi32, #tpu.memory_space<vmem>>, %arg4: memref<1152x128xbf16, #tpu.memory_space<vmem>>, %arg5: memref<1152x128xbf16, #tpu.memory_space<vmem>>, %arg6: memref<1x128xf32, #tpu.memory_space<vmem>>, %arg7: memref<1x128xf32, #tpu.memory_space<vmem>>, %arg8: memref<1x128xf32, #tpu.memory_space<vmem>>, %arg9: memref<1x128xf32, #tpu.memory_space<vmem>>, %arg10: memref<1x256x128xf32, #tpu.memory_space<vmem>>) attributes {dimension_semantics = [#tpu.dimension_semantics<parallel>], iteration_bounds = array<i64: 2>, scalar_prefetch = 0 : i64, scratch_operands = 0 : i64, tpu.core_type = #tpu.core_type<tc>, window_params = [{transform_indices = @transform_0, window_bounds = array<i64: 1, 256, 128>}, {pipeline_mode = #tpu.pipeline_mode<synchronous>, transform_indices = @transform_1, window_bounds = array<i64: 256, 1>}, {pipeline_mode = #tpu.pipeline_mode<synchronous>, transform_indices = @transform_2, window_bounds = array<i64: 256, 1>}, {pipeline_mode = #tpu.pipeline_mode<synchronous>, transform_indices = @transform_3, window_bounds = array<i64: 1152, 128>}, {pipeline_mode = #tpu.pipeline_mode<synchronous>, transform_indices = @transform_4, window_bounds = array<i64: 1152, 128>}, {pipeline_mode = #tpu.pipeline_mode<synchronous>, transform_indices = @transform_5, window_bounds = array<i64: 1, 128>}, {pipeline_mode = #tpu.pipeline_mode<synchronous>, transform_indices = @transform_6, window_bounds = array<i64: 1, 128>}, {pipeline_mode = #tpu.pipeline_mode<synchronous>, transform_indices = @transform_7, window_bounds = array<i64: 1, 128>}, {pipeline_mode = #tpu.pipeline_mode<synchronous>, transform_indices = @transform_8, window_bounds = array<i64: 1, 128>}, {transform_indices = @transform_9, window_bounds = array<i64: 1, 256, 128>}]} {
    %c0 = arith.constant 0 : index
    %c0_0 = arith.constant 0 : index
    %c0_1 = arith.constant 0 : index
    %0 = vector.load %arg1[%c0, %c0_0, %c0_1] : memref<1x256x128xf32, #tpu.memory_space<vmem>>, vector<1x256x128xf32>
    %1 = vector.shape_cast %0 : vector<1x256x128xf32> to vector<256x128xf32>
    %c0_2 = arith.constant 0 : index
    %c0_3 = arith.constant 0 : index
    %2 = vector.load %arg2[%c0_2, %c0_3] : memref<256x1xi32, #tpu.memory_space<vmem>>, vector<256x1xi32>
    %c0_4 = arith.constant 0 : index
    %c0_5 = arith.constant 0 : index
    %3 = vector.load %arg3[%c0_4, %c0_5] : memref<256x1xi32, #tpu.memory_space<vmem>>, vector<256x1xi32>
    %c0_6 = arith.constant 0 : index
    %c0_7 = arith.constant 0 : index
    %4 = vector.load %arg6[%c0_6, %c0_7] : memref<1x128xf32, #tpu.memory_space<vmem>>, vector<1x128xf32>
    %5 = vector.broadcast %4 : vector<1x128xf32> to vector<256x128xf32>
    %6 = arith.mulf %1, %5 : vector<256x128xf32>
    %c0_8 = arith.constant 0 : index
    %c0_9 = arith.constant 0 : index
    %7 = vector.load %arg7[%c0_8, %c0_9] : memref<1x128xf32, #tpu.memory_space<vmem>>, vector<1x128xf32>
    %8 = vector.broadcast %7 : vector<1x128xf32> to vector<256x128xf32>
    %9 = arith.addf %6, %8 : vector<256x128xf32>
    %cst = arith.constant 0.000000e+00 : f32
    %10 = vector.broadcast %cst : f32 to vector<256x128xf32>
    %11 = arith.maximumf %9, %10 : vector<256x128xf32>
    %c17_i32 = arith.constant 17 : i32
    %12 = tpu.dynamic_rotate %11 by %c17_i32 dim 0 : vector<256x128xf32>, i32 -> vector<256x128xf32>
    %c-1_i32 = arith.constant -1 : i32
    %13 = vector.broadcast %c-1_i32 : i32 to vector<256x1xi32>
    %14 = arith.addi %2, %13 : vector<256x1xi32>
    %c0_i32 = arith.constant 0 : i32
    %15 = vector.broadcast %c0_i32 : i32 to vector<256x1xi32>
    %16 = arith.cmpi sge, %14, %15 : vector<256x1xi32>
    %c-1_i32_10 = arith.constant -1 : i32
    %17 = vector.broadcast %c-1_i32_10 : i32 to vector<256x1xi32>
    %18 = arith.addi %2, %17 : vector<256x1xi32>
    %c16_i32 = arith.constant 16 : i32
    %19 = vector.broadcast %c16_i32 : i32 to vector<256x1xi32>
    %20 = arith.cmpi slt, %18, %19 : vector<256x1xi32>
    %21 = arith.andi %16, %20 : vector<256x1xi1>
    %c-1_i32_11 = arith.constant -1 : i32
    %22 = vector.broadcast %c-1_i32_11 : i32 to vector<256x1xi32>
    %23 = arith.addi %3, %22 : vector<256x1xi32>
    %c0_i32_12 = arith.constant 0 : i32
    %24 = vector.broadcast %c0_i32_12 : i32 to vector<256x1xi32>
    %25 = arith.cmpi sge, %23, %24 : vector<256x1xi32>
    %26 = arith.andi %21, %25 : vector<256x1xi1>
    %c-1_i32_13 = arith.constant -1 : i32
    %27 = vector.broadcast %c-1_i32_13 : i32 to vector<256x1xi32>
    %28 = arith.addi %3, %27 : vector<256x1xi32>
    %c16_i32_14 = arith.constant 16 : i32
    %29 = vector.broadcast %c16_i32_14 : i32 to vector<256x1xi32>
    %30 = arith.cmpi slt, %28, %29 : vector<256x1xi32>
    %31 = arith.andi %26, %30 : vector<256x1xi1>
    %cst_15 = arith.constant 0.000000e+00 : f32
    %32 = vector.shape_cast %31 : vector<256x1xi1> to vector<256x1xi1>
    %33 = vector.broadcast %32 : vector<256x1xi1> to vector<256x128xi1>
    %34 = vector.broadcast %cst_15 : f32 to vector<256x128xf32>
    %35 = arith.select %33, %12, %34 : vector<256x128xi1>, vector<256x128xf32>
    %36 = arith.truncf %35 : vector<256x128xf32> to vector<256x128xbf16>
    %c16_i32_16 = arith.constant 16 : i32
    %37 = tpu.dynamic_rotate %11 by %c16_i32_16 dim 0 : vector<256x128xf32>, i32 -> vector<256x128xf32>
    %c-1_i32_17 = arith.constant -1 : i32
    %38 = vector.broadcast %c-1_i32_17 : i32 to vector<256x1xi32>
    %39 = arith.addi %2, %38 : vector<256x1xi32>
    %c0_i32_18 = arith.constant 0 : i32
    %40 = vector.broadcast %c0_i32_18 : i32 to vector<256x1xi32>
    %41 = arith.cmpi sge, %39, %40 : vector<256x1xi32>
    %c-1_i32_19 = arith.constant -1 : i32
    %42 = vector.broadcast %c-1_i32_19 : i32 to vector<256x1xi32>
    %43 = arith.addi %2, %42 : vector<256x1xi32>
    %c16_i32_20 = arith.constant 16 : i32
    %44 = vector.broadcast %c16_i32_20 : i32 to vector<256x1xi32>
    %45 = arith.cmpi slt, %43, %44 : vector<256x1xi32>
    %46 = arith.andi %41, %45 : vector<256x1xi1>
    %c0_i32_21 = arith.constant 0 : i32
    %47 = vector.broadcast %c0_i32_21 : i32 to vector<256x1xi32>
    %48 = arith.addi %3, %47 : vector<256x1xi32>
    %c0_i32_22 = arith.constant 0 : i32
    %49 = vector.broadcast %c0_i32_22 : i32 to vector<256x1xi32>
    %50 = arith.cmpi sge, %48, %49 : vector<256x1xi32>
    %51 = arith.andi %46, %50 : vector<256x1xi1>
    %c0_i32_23 = arith.constant 0 : i32
    %52 = vector.broadcast %c0_i32_23 : i32 to vector<256x1xi32>
    %53 = arith.addi %3, %52 : vector<256x1xi32>
    %c16_i32_24 = arith.constant 16 : i32
    %54 = vector.broadcast %c16_i32_24 : i32 to vector<256x1xi32>
    %55 = arith.cmpi slt, %53, %54 : vector<256x1xi32>
    %56 = arith.andi %51, %55 : vector<256x1xi1>
    %cst_25 = arith.constant 0.000000e+00 : f32
    %57 = vector.shape_cast %56 : vector<256x1xi1> to vector<256x1xi1>
    %58 = vector.broadcast %57 : vector<256x1xi1> to vector<256x128xi1>
    %59 = vector.broadcast %cst_25 : f32 to vector<256x128xf32>
    %60 = arith.select %58, %37, %59 : vector<256x128xi1>, vector<256x128xf32>
    %61 = arith.truncf %60 : vector<256x128xf32> to vector<256x128xbf16>
    %c15_i32 = arith.constant 15 : i32
    %62 = tpu.dynamic_rotate %11 by %c15_i32 dim 0 : vector<256x128xf32>, i32 -> vector<256x128xf32>
    %c-1_i32_26 = arith.constant -1 : i32
    %63 = vector.broadcast %c-1_i32_26 : i32 to vector<256x1xi32>
    %64 = arith.addi %2, %63 : vector<256x1xi32>
    %c0_i32_27 = arith.constant 0 : i32
    %65 = vector.broadcast %c0_i32_27 : i32 to vector<256x1xi32>
    %66 = arith.cmpi sge, %64, %65 : vector<256x1xi32>
    %c-1_i32_28 = arith.constant -1 : i32
    %67 = vector.broadcast %c-1_i32_28 : i32 to vector<256x1xi32>
    %68 = arith.addi %2, %67 : vector<256x1xi32>
    %c16_i32_29 = arith.constant 16 : i32
    %69 = vector.broadcast %c16_i32_29 : i32 to vector<256x1xi32>
    %70 = arith.cmpi slt, %68, %69 : vector<256x1xi32>
    %71 = arith.andi %66, %70 : vector<256x1xi1>
    %c1_i32 = arith.constant 1 : i32
    %72 = vector.broadcast %c1_i32 : i32 to vector<256x1xi32>
    %73 = arith.addi %3, %72 : vector<256x1xi32>
    %c0_i32_30 = arith.constant 0 : i32
    %74 = vector.broadcast %c0_i32_30 : i32 to vector<256x1xi32>
    %75 = arith.cmpi sge, %73, %74 : vector<256x1xi32>
    %76 = arith.andi %71, %75 : vector<256x1xi1>
    %c1_i32_31 = arith.constant 1 : i32
    %77 = vector.broadcast %c1_i32_31 : i32 to vector<256x1xi32>
    %78 = arith.addi %3, %77 : vector<256x1xi32>
    %c16_i32_32 = arith.constant 16 : i32
    %79 = vector.broadcast %c16_i32_32 : i32 to vector<256x1xi32>
    %80 = arith.cmpi slt, %78, %79 : vector<256x1xi32>
    %81 = arith.andi %76, %80 : vector<256x1xi1>
    %cst_33 = arith.constant 0.000000e+00 : f32
    %82 = vector.shape_cast %81 : vector<256x1xi1> to vector<256x1xi1>
    %83 = vector.broadcast %82 : vector<256x1xi1> to vector<256x128xi1>
    %84 = vector.broadcast %cst_33 : f32 to vector<256x128xf32>
    %85 = arith.select %83, %62, %84 : vector<256x128xi1>, vector<256x128xf32>
    %86 = arith.truncf %85 : vector<256x128xf32> to vector<256x128xbf16>
    %c1_i32_34 = arith.constant 1 : i32
    %87 = tpu.dynamic_rotate %11 by %c1_i32_34 dim 0 : vector<256x128xf32>, i32 -> vector<256x128xf32>
    %c0_i32_35 = arith.constant 0 : i32
    %88 = vector.broadcast %c0_i32_35 : i32 to vector<256x1xi32>
    %89 = arith.addi %2, %88 : vector<256x1xi32>
    %c0_i32_36 = arith.constant 0 : i32
    %90 = vector.broadcast %c0_i32_36 : i32 to vector<256x1xi32>
    %91 = arith.cmpi sge, %89, %90 : vector<256x1xi32>
    %c0_i32_37 = arith.constant 0 : i32
    %92 = vector.broadcast %c0_i32_37 : i32 to vector<256x1xi32>
    %93 = arith.addi %2, %92 : vector<256x1xi32>
    %c16_i32_38 = arith.constant 16 : i32
    %94 = vector.broadcast %c16_i32_38 : i32 to vector<256x1xi32>
    %95 = arith.cmpi slt, %93, %94 : vector<256x1xi32>
    %96 = arith.andi %91, %95 : vector<256x1xi1>
    %c-1_i32_39 = arith.constant -1 : i32
    %97 = vector.broadcast %c-1_i32_39 : i32 to vector<256x1xi32>
    %98 = arith.addi %3, %97 : vector<256x1xi32>
    %c0_i32_40 = arith.constant 0 : i32
    %99 = vector.broadcast %c0_i32_40 : i32 to vector<256x1xi32>
    %100 = arith.cmpi sge, %98, %99 : vector<256x1xi32>
    %101 = arith.andi %96, %100 : vector<256x1xi1>
    %c-1_i32_41 = arith.constant -1 : i32
    %102 = vector.broadcast %c-1_i32_41 : i32 to vector<256x1xi32>
    %103 = arith.addi %3, %102 : vector<256x1xi32>
    %c16_i32_42 = arith.constant 16 : i32
    %104 = vector.broadcast %c16_i32_42 : i32 to vector<256x1xi32>
    %105 = arith.cmpi slt, %103, %104 : vector<256x1xi32>
    %106 = arith.andi %101, %105 : vector<256x1xi1>
    %cst_43 = arith.constant 0.000000e+00 : f32
    %107 = vector.shape_cast %106 : vector<256x1xi1> to vector<256x1xi1>
    %108 = vector.broadcast %107 : vector<256x1xi1> to vector<256x128xi1>
    %109 = vector.broadcast %cst_43 : f32 to vector<256x128xf32>
    %110 = arith.select %108, %87, %109 : vector<256x128xi1>, vector<256x128xf32>
    %111 = arith.truncf %110 : vector<256x128xf32> to vector<256x128xbf16>
    %112 = arith.truncf %11 : vector<256x128xf32> to vector<256x128xbf16>
    %c255_i32 = arith.constant 255 : i32
    %113 = tpu.dynamic_rotate %11 by %c255_i32 dim 0 : vector<256x128xf32>, i32 -> vector<256x128xf32>
    %c0_i32_44 = arith.constant 0 : i32
    %114 = vector.broadcast %c0_i32_44 : i32 to vector<256x1xi32>
    %115 = arith.addi %2, %114 : vector<256x1xi32>
    %c0_i32_45 = arith.constant 0 : i32
    %116 = vector.broadcast %c0_i32_45 : i32 to vector<256x1xi32>
    %117 = arith.cmpi sge, %115, %116 : vector<256x1xi32>
    %c0_i32_46 = arith.constant 0 : i32
    %118 = vector.broadcast %c0_i32_46 : i32 to vector<256x1xi32>
    %119 = arith.addi %2, %118 : vector<256x1xi32>
    %c16_i32_47 = arith.constant 16 : i32
    %120 = vector.broadcast %c16_i32_47 : i32 to vector<256x1xi32>
    %121 = arith.cmpi slt, %119, %120 : vector<256x1xi32>
    %122 = arith.andi %117, %121 : vector<256x1xi1>
    %c1_i32_48 = arith.constant 1 : i32
    %123 = vector.broadcast %c1_i32_48 : i32 to vector<256x1xi32>
    %124 = arith.addi %3, %123 : vector<256x1xi32>
    %c0_i32_49 = arith.constant 0 : i32
    %125 = vector.broadcast %c0_i32_49 : i32 to vector<256x1xi32>
    %126 = arith.cmpi sge, %124, %125 : vector<256x1xi32>
    %127 = arith.andi %122, %126 : vector<256x1xi1>
    %c1_i32_50 = arith.constant 1 : i32
    %128 = vector.broadcast %c1_i32_50 : i32 to vector<256x1xi32>
    %129 = arith.addi %3, %128 : vector<256x1xi32>
    %c16_i32_51 = arith.constant 16 : i32
    %130 = vector.broadcast %c16_i32_51 : i32 to vector<256x1xi32>
    %131 = arith.cmpi slt, %129, %130 : vector<256x1xi32>
    %132 = arith.andi %127, %131 : vector<256x1xi1>
    %cst_52 = arith.constant 0.000000e+00 : f32
    %133 = vector.shape_cast %132 : vector<256x1xi1> to vector<256x1xi1>
    %134 = vector.broadcast %133 : vector<256x1xi1> to vector<256x128xi1>
    %135 = vector.broadcast %cst_52 : f32 to vector<256x128xf32>
    %136 = arith.select %134, %113, %135 : vector<256x128xi1>, vector<256x128xf32>
    %137 = arith.truncf %136 : vector<256x128xf32> to vector<256x128xbf16>
    %c241_i32 = arith.constant 241 : i32
    %138 = tpu.dynamic_rotate %11 by %c241_i32 dim 0 : vector<256x128xf32>, i32 -> vector<256x128xf32>
    %c1_i32_53 = arith.constant 1 : i32
    %139 = vector.broadcast %c1_i32_53 : i32 to vector<256x1xi32>
    %140 = arith.addi %2, %139 : vector<256x1xi32>
    %c0_i32_54 = arith.constant 0 : i32
    %141 = vector.broadcast %c0_i32_54 : i32 to vector<256x1xi32>
    %142 = arith.cmpi sge, %140, %141 : vector<256x1xi32>
    %c1_i32_55 = arith.constant 1 : i32
    %143 = vector.broadcast %c1_i32_55 : i32 to vector<256x1xi32>
    %144 = arith.addi %2, %143 : vector<256x1xi32>
    %c16_i32_56 = arith.constant 16 : i32
    %145 = vector.broadcast %c16_i32_56 : i32 to vector<256x1xi32>
    %146 = arith.cmpi slt, %144, %145 : vector<256x1xi32>
    %147 = arith.andi %142, %146 : vector<256x1xi1>
    %c-1_i32_57 = arith.constant -1 : i32
    %148 = vector.broadcast %c-1_i32_57 : i32 to vector<256x1xi32>
    %149 = arith.addi %3, %148 : vector<256x1xi32>
    %c0_i32_58 = arith.constant 0 : i32
    %150 = vector.broadcast %c0_i32_58 : i32 to vector<256x1xi32>
    %151 = arith.cmpi sge, %149, %150 : vector<256x1xi32>
    %152 = arith.andi %147, %151 : vector<256x1xi1>
    %c-1_i32_59 = arith.constant -1 : i32
    %153 = vector.broadcast %c-1_i32_59 : i32 to vector<256x1xi32>
    %154 = arith.addi %3, %153 : vector<256x1xi32>
    %c16_i32_60 = arith.constant 16 : i32
    %155 = vector.broadcast %c16_i32_60 : i32 to vector<256x1xi32>
    %156 = arith.cmpi slt, %154, %155 : vector<256x1xi32>
    %157 = arith.andi %152, %156 : vector<256x1xi1>
    %cst_61 = arith.constant 0.000000e+00 : f32
    %158 = vector.shape_cast %157 : vector<256x1xi1> to vector<256x1xi1>
    %159 = vector.broadcast %158 : vector<256x1xi1> to vector<256x128xi1>
    %160 = vector.broadcast %cst_61 : f32 to vector<256x128xf32>
    %161 = arith.select %159, %138, %160 : vector<256x128xi1>, vector<256x128xf32>
    %162 = arith.truncf %161 : vector<256x128xf32> to vector<256x128xbf16>
    %c240_i32 = arith.constant 240 : i32
    %163 = tpu.dynamic_rotate %11 by %c240_i32 dim 0 : vector<256x128xf32>, i32 -> vector<256x128xf32>
    %c1_i32_62 = arith.constant 1 : i32
    %164 = vector.broadcast %c1_i32_62 : i32 to vector<256x1xi32>
    %165 = arith.addi %2, %164 : vector<256x1xi32>
    %c0_i32_63 = arith.constant 0 : i32
    %166 = vector.broadcast %c0_i32_63 : i32 to vector<256x1xi32>
    %167 = arith.cmpi sge, %165, %166 : vector<256x1xi32>
    %c1_i32_64 = arith.constant 1 : i32
    %168 = vector.broadcast %c1_i32_64 : i32 to vector<256x1xi32>
    %169 = arith.addi %2, %168 : vector<256x1xi32>
    %c16_i32_65 = arith.constant 16 : i32
    %170 = vector.broadcast %c16_i32_65 : i32 to vector<256x1xi32>
    %171 = arith.cmpi slt, %169, %170 : vector<256x1xi32>
    %172 = arith.andi %167, %171 : vector<256x1xi1>
    %c0_i32_66 = arith.constant 0 : i32
    %173 = vector.broadcast %c0_i32_66 : i32 to vector<256x1xi32>
    %174 = arith.addi %3, %173 : vector<256x1xi32>
    %c0_i32_67 = arith.constant 0 : i32
    %175 = vector.broadcast %c0_i32_67 : i32 to vector<256x1xi32>
    %176 = arith.cmpi sge, %174, %175 : vector<256x1xi32>
    %177 = arith.andi %172, %176 : vector<256x1xi1>
    %c0_i32_68 = arith.constant 0 : i32
    %178 = vector.broadcast %c0_i32_68 : i32 to vector<256x1xi32>
    %179 = arith.addi %3, %178 : vector<256x1xi32>
    %c16_i32_69 = arith.constant 16 : i32
    %180 = vector.broadcast %c16_i32_69 : i32 to vector<256x1xi32>
    %181 = arith.cmpi slt, %179, %180 : vector<256x1xi32>
    %182 = arith.andi %177, %181 : vector<256x1xi1>
    %cst_70 = arith.constant 0.000000e+00 : f32
    %183 = vector.shape_cast %182 : vector<256x1xi1> to vector<256x1xi1>
    %184 = vector.broadcast %183 : vector<256x1xi1> to vector<256x128xi1>
    %185 = vector.broadcast %cst_70 : f32 to vector<256x128xf32>
    %186 = arith.select %184, %163, %185 : vector<256x128xi1>, vector<256x128xf32>
    %187 = arith.truncf %186 : vector<256x128xf32> to vector<256x128xbf16>
    %c239_i32 = arith.constant 239 : i32
    %188 = tpu.dynamic_rotate %11 by %c239_i32 dim 0 : vector<256x128xf32>, i32 -> vector<256x128xf32>
    %c1_i32_71 = arith.constant 1 : i32
    %189 = vector.broadcast %c1_i32_71 : i32 to vector<256x1xi32>
    %190 = arith.addi %2, %189 : vector<256x1xi32>
    %c0_i32_72 = arith.constant 0 : i32
    %191 = vector.broadcast %c0_i32_72 : i32 to vector<256x1xi32>
    %192 = arith.cmpi sge, %190, %191 : vector<256x1xi32>
    %c1_i32_73 = arith.constant 1 : i32
    %193 = vector.broadcast %c1_i32_73 : i32 to vector<256x1xi32>
    %194 = arith.addi %2, %193 : vector<256x1xi32>
    %c16_i32_74 = arith.constant 16 : i32
    %195 = vector.broadcast %c16_i32_74 : i32 to vector<256x1xi32>
    %196 = arith.cmpi slt, %194, %195 : vector<256x1xi32>
    %197 = arith.andi %192, %196 : vector<256x1xi1>
    %c1_i32_75 = arith.constant 1 : i32
    %198 = vector.broadcast %c1_i32_75 : i32 to vector<256x1xi32>
    %199 = arith.addi %3, %198 : vector<256x1xi32>
    %c0_i32_76 = arith.constant 0 : i32
    %200 = vector.broadcast %c0_i32_76 : i32 to vector<256x1xi32>
    %201 = arith.cmpi sge, %199, %200 : vector<256x1xi32>
    %202 = arith.andi %197, %201 : vector<256x1xi1>
    %c1_i32_77 = arith.constant 1 : i32
    %203 = vector.broadcast %c1_i32_77 : i32 to vector<256x1xi32>
    %204 = arith.addi %3, %203 : vector<256x1xi32>
    %c16_i32_78 = arith.constant 16 : i32
    %205 = vector.broadcast %c16_i32_78 : i32 to vector<256x1xi32>
    %206 = arith.cmpi slt, %204, %205 : vector<256x1xi32>
    %207 = arith.andi %202, %206 : vector<256x1xi1>
    %cst_79 = arith.constant 0.000000e+00 : f32
    %208 = vector.shape_cast %207 : vector<256x1xi1> to vector<256x1xi1>
    %209 = vector.broadcast %208 : vector<256x1xi1> to vector<256x128xi1>
    %210 = vector.broadcast %cst_79 : f32 to vector<256x128xf32>
    %211 = arith.select %209, %188, %210 : vector<256x128xi1>, vector<256x128xf32>
    %212 = arith.truncf %211 : vector<256x128xf32> to vector<256x128xbf16>
    %213 = tpu.concatenate %36, %61, %86, %111, %112, %137, %162, %187, %212 in 1 : vector<256x128xbf16>, vector<256x128xbf16>, vector<256x128xbf16>, vector<256x128xbf16>, vector<256x128xbf16>, vector<256x128xbf16>, vector<256x128xbf16>, vector<256x128xbf16>, vector<256x128xbf16> -> vector<256x1152xbf16>
    %c0_80 = arith.constant 0 : index
    %c0_81 = arith.constant 0 : index
    %214 = vector.load %arg4[%c0_80, %c0_81] : memref<1152x128xbf16, #tpu.memory_space<vmem>>, vector<1152x128xbf16>
    %cst_82 = arith.constant dense<0.000000e+00> : vector<256x128xf32>
    %215 = tpu.matmul %213, %214, %cst_82 {dimension_numbers = #tpu.dot_dimension_numbers<[1], [0], [0], [1], [0, 0, 1, 1], [], []>} : vector<256x1152xbf16>, vector<1152x128xbf16>, vector<256x128xf32> -> vector<256x128xf32>
    %c0_83 = arith.constant 0 : index
    %c0_84 = arith.constant 0 : index
    %216 = vector.load %arg8[%c0_83, %c0_84] : memref<1x128xf32, #tpu.memory_space<vmem>>, vector<1x128xf32>
    %217 = vector.broadcast %216 : vector<1x128xf32> to vector<256x128xf32>
    %218 = arith.mulf %215, %217 : vector<256x128xf32>
    %c0_85 = arith.constant 0 : index
    %c0_86 = arith.constant 0 : index
    %219 = vector.load %arg9[%c0_85, %c0_86] : memref<1x128xf32, #tpu.memory_space<vmem>>, vector<1x128xf32>
    %220 = vector.broadcast %219 : vector<1x128xf32> to vector<256x128xf32>
    %221 = arith.addf %218, %220 : vector<256x128xf32>
    %cst_87 = arith.constant 0.000000e+00 : f32
    %222 = vector.broadcast %cst_87 : f32 to vector<256x128xf32>
    %223 = arith.maximumf %221, %222 : vector<256x128xf32>
    %c17_i32_88 = arith.constant 17 : i32
    %224 = tpu.dynamic_rotate %223 by %c17_i32_88 dim 0 : vector<256x128xf32>, i32 -> vector<256x128xf32>
    %c-1_i32_89 = arith.constant -1 : i32
    %225 = vector.broadcast %c-1_i32_89 : i32 to vector<256x1xi32>
    %226 = arith.addi %2, %225 : vector<256x1xi32>
    %c0_i32_90 = arith.constant 0 : i32
    %227 = vector.broadcast %c0_i32_90 : i32 to vector<256x1xi32>
    %228 = arith.cmpi sge, %226, %227 : vector<256x1xi32>
    %c-1_i32_91 = arith.constant -1 : i32
    %229 = vector.broadcast %c-1_i32_91 : i32 to vector<256x1xi32>
    %230 = arith.addi %2, %229 : vector<256x1xi32>
    %c16_i32_92 = arith.constant 16 : i32
    %231 = vector.broadcast %c16_i32_92 : i32 to vector<256x1xi32>
    %232 = arith.cmpi slt, %230, %231 : vector<256x1xi32>
    %233 = arith.andi %228, %232 : vector<256x1xi1>
    %c-1_i32_93 = arith.constant -1 : i32
    %234 = vector.broadcast %c-1_i32_93 : i32 to vector<256x1xi32>
    %235 = arith.addi %3, %234 : vector<256x1xi32>
    %c0_i32_94 = arith.constant 0 : i32
    %236 = vector.broadcast %c0_i32_94 : i32 to vector<256x1xi32>
    %237 = arith.cmpi sge, %235, %236 : vector<256x1xi32>
    %238 = arith.andi %233, %237 : vector<256x1xi1>
    %c-1_i32_95 = arith.constant -1 : i32
    %239 = vector.broadcast %c-1_i32_95 : i32 to vector<256x1xi32>
    %240 = arith.addi %3, %239 : vector<256x1xi32>
    %c16_i32_96 = arith.constant 16 : i32
    %241 = vector.broadcast %c16_i32_96 : i32 to vector<256x1xi32>
    %242 = arith.cmpi slt, %240, %241 : vector<256x1xi32>
    %243 = arith.andi %238, %242 : vector<256x1xi1>
    %cst_97 = arith.constant 0.000000e+00 : f32
    %244 = vector.shape_cast %243 : vector<256x1xi1> to vector<256x1xi1>
    %245 = vector.broadcast %244 : vector<256x1xi1> to vector<256x128xi1>
    %246 = vector.broadcast %cst_97 : f32 to vector<256x128xf32>
    %247 = arith.select %245, %224, %246 : vector<256x128xi1>, vector<256x128xf32>
    %248 = arith.truncf %247 : vector<256x128xf32> to vector<256x128xbf16>
    %c16_i32_98 = arith.constant 16 : i32
    %249 = tpu.dynamic_rotate %223 by %c16_i32_98 dim 0 : vector<256x128xf32>, i32 -> vector<256x128xf32>
    %c-1_i32_99 = arith.constant -1 : i32
    %250 = vector.broadcast %c-1_i32_99 : i32 to vector<256x1xi32>
    %251 = arith.addi %2, %250 : vector<256x1xi32>
    %c0_i32_100 = arith.constant 0 : i32
    %252 = vector.broadcast %c0_i32_100 : i32 to vector<256x1xi32>
    %253 = arith.cmpi sge, %251, %252 : vector<256x1xi32>
    %c-1_i32_101 = arith.constant -1 : i32
    %254 = vector.broadcast %c-1_i32_101 : i32 to vector<256x1xi32>
    %255 = arith.addi %2, %254 : vector<256x1xi32>
    %c16_i32_102 = arith.constant 16 : i32
    %256 = vector.broadcast %c16_i32_102 : i32 to vector<256x1xi32>
    %257 = arith.cmpi slt, %255, %256 : vector<256x1xi32>
    %258 = arith.andi %253, %257 : vector<256x1xi1>
    %c0_i32_103 = arith.constant 0 : i32
    %259 = vector.broadcast %c0_i32_103 : i32 to vector<256x1xi32>
    %260 = arith.addi %3, %259 : vector<256x1xi32>
    %c0_i32_104 = arith.constant 0 : i32
    %261 = vector.broadcast %c0_i32_104 : i32 to vector<256x1xi32>
    %262 = arith.cmpi sge, %260, %261 : vector<256x1xi32>
    %263 = arith.andi %258, %262 : vector<256x1xi1>
    %c0_i32_105 = arith.constant 0 : i32
    %264 = vector.broadcast %c0_i32_105 : i32 to vector<256x1xi32>
    %265 = arith.addi %3, %264 : vector<256x1xi32>
    %c16_i32_106 = arith.constant 16 : i32
    %266 = vector.broadcast %c16_i32_106 : i32 to vector<256x1xi32>
    %267 = arith.cmpi slt, %265, %266 : vector<256x1xi32>
    %268 = arith.andi %263, %267 : vector<256x1xi1>
    %cst_107 = arith.constant 0.000000e+00 : f32
    %269 = vector.shape_cast %268 : vector<256x1xi1> to vector<256x1xi1>
    %270 = vector.broadcast %269 : vector<256x1xi1> to vector<256x128xi1>
    %271 = vector.broadcast %cst_107 : f32 to vector<256x128xf32>
    %272 = arith.select %270, %249, %271 : vector<256x128xi1>, vector<256x128xf32>
    %273 = arith.truncf %272 : vector<256x128xf32> to vector<256x128xbf16>
    %c15_i32_108 = arith.constant 15 : i32
    %274 = tpu.dynamic_rotate %223 by %c15_i32_108 dim 0 : vector<256x128xf32>, i32 -> vector<256x128xf32>
    %c-1_i32_109 = arith.constant -1 : i32
    %275 = vector.broadcast %c-1_i32_109 : i32 to vector<256x1xi32>
    %276 = arith.addi %2, %275 : vector<256x1xi32>
    %c0_i32_110 = arith.constant 0 : i32
    %277 = vector.broadcast %c0_i32_110 : i32 to vector<256x1xi32>
    %278 = arith.cmpi sge, %276, %277 : vector<256x1xi32>
    %c-1_i32_111 = arith.constant -1 : i32
    %279 = vector.broadcast %c-1_i32_111 : i32 to vector<256x1xi32>
    %280 = arith.addi %2, %279 : vector<256x1xi32>
    %c16_i32_112 = arith.constant 16 : i32
    %281 = vector.broadcast %c16_i32_112 : i32 to vector<256x1xi32>
    %282 = arith.cmpi slt, %280, %281 : vector<256x1xi32>
    %283 = arith.andi %278, %282 : vector<256x1xi1>
    %c1_i32_113 = arith.constant 1 : i32
    %284 = vector.broadcast %c1_i32_113 : i32 to vector<256x1xi32>
    %285 = arith.addi %3, %284 : vector<256x1xi32>
    %c0_i32_114 = arith.constant 0 : i32
    %286 = vector.broadcast %c0_i32_114 : i32 to vector<256x1xi32>
    %287 = arith.cmpi sge, %285, %286 : vector<256x1xi32>
    %288 = arith.andi %283, %287 : vector<256x1xi1>
    %c1_i32_115 = arith.constant 1 : i32
    %289 = vector.broadcast %c1_i32_115 : i32 to vector<256x1xi32>
    %290 = arith.addi %3, %289 : vector<256x1xi32>
    %c16_i32_116 = arith.constant 16 : i32
    %291 = vector.broadcast %c16_i32_116 : i32 to vector<256x1xi32>
    %292 = arith.cmpi slt, %290, %291 : vector<256x1xi32>
    %293 = arith.andi %288, %292 : vector<256x1xi1>
    %cst_117 = arith.constant 0.000000e+00 : f32
    %294 = vector.shape_cast %293 : vector<256x1xi1> to vector<256x1xi1>
    %295 = vector.broadcast %294 : vector<256x1xi1> to vector<256x128xi1>
    %296 = vector.broadcast %cst_117 : f32 to vector<256x128xf32>
    %297 = arith.select %295, %274, %296 : vector<256x128xi1>, vector<256x128xf32>
    %298 = arith.truncf %297 : vector<256x128xf32> to vector<256x128xbf16>
    %c1_i32_118 = arith.constant 1 : i32
    %299 = tpu.dynamic_rotate %223 by %c1_i32_118 dim 0 : vector<256x128xf32>, i32 -> vector<256x128xf32>
    %c0_i32_119 = arith.constant 0 : i32
    %300 = vector.broadcast %c0_i32_119 : i32 to vector<256x1xi32>
    %301 = arith.addi %2, %300 : vector<256x1xi32>
    %c0_i32_120 = arith.constant 0 : i32
    %302 = vector.broadcast %c0_i32_120 : i32 to vector<256x1xi32>
    %303 = arith.cmpi sge, %301, %302 : vector<256x1xi32>
    %c0_i32_121 = arith.constant 0 : i32
    %304 = vector.broadcast %c0_i32_121 : i32 to vector<256x1xi32>
    %305 = arith.addi %2, %304 : vector<256x1xi32>
    %c16_i32_122 = arith.constant 16 : i32
    %306 = vector.broadcast %c16_i32_122 : i32 to vector<256x1xi32>
    %307 = arith.cmpi slt, %305, %306 : vector<256x1xi32>
    %308 = arith.andi %303, %307 : vector<256x1xi1>
    %c-1_i32_123 = arith.constant -1 : i32
    %309 = vector.broadcast %c-1_i32_123 : i32 to vector<256x1xi32>
    %310 = arith.addi %3, %309 : vector<256x1xi32>
    %c0_i32_124 = arith.constant 0 : i32
    %311 = vector.broadcast %c0_i32_124 : i32 to vector<256x1xi32>
    %312 = arith.cmpi sge, %310, %311 : vector<256x1xi32>
    %313 = arith.andi %308, %312 : vector<256x1xi1>
    %c-1_i32_125 = arith.constant -1 : i32
    %314 = vector.broadcast %c-1_i32_125 : i32 to vector<256x1xi32>
    %315 = arith.addi %3, %314 : vector<256x1xi32>
    %c16_i32_126 = arith.constant 16 : i32
    %316 = vector.broadcast %c16_i32_126 : i32 to vector<256x1xi32>
    %317 = arith.cmpi slt, %315, %316 : vector<256x1xi32>
    %318 = arith.andi %313, %317 : vector<256x1xi1>
    %cst_127 = arith.constant 0.000000e+00 : f32
    %319 = vector.shape_cast %318 : vector<256x1xi1> to vector<256x1xi1>
    %320 = vector.broadcast %319 : vector<256x1xi1> to vector<256x128xi1>
    %321 = vector.broadcast %cst_127 : f32 to vector<256x128xf32>
    %322 = arith.select %320, %299, %321 : vector<256x128xi1>, vector<256x128xf32>
    %323 = arith.truncf %322 : vector<256x128xf32> to vector<256x128xbf16>
    %324 = arith.truncf %223 : vector<256x128xf32> to vector<256x128xbf16>
    %c255_i32_128 = arith.constant 255 : i32
    %325 = tpu.dynamic_rotate %223 by %c255_i32_128 dim 0 : vector<256x128xf32>, i32 -> vector<256x128xf32>
    %c0_i32_129 = arith.constant 0 : i32
    %326 = vector.broadcast %c0_i32_129 : i32 to vector<256x1xi32>
    %327 = arith.addi %2, %326 : vector<256x1xi32>
    %c0_i32_130 = arith.constant 0 : i32
    %328 = vector.broadcast %c0_i32_130 : i32 to vector<256x1xi32>
    %329 = arith.cmpi sge, %327, %328 : vector<256x1xi32>
    %c0_i32_131 = arith.constant 0 : i32
    %330 = vector.broadcast %c0_i32_131 : i32 to vector<256x1xi32>
    %331 = arith.addi %2, %330 : vector<256x1xi32>
    %c16_i32_132 = arith.constant 16 : i32
    %332 = vector.broadcast %c16_i32_132 : i32 to vector<256x1xi32>
    %333 = arith.cmpi slt, %331, %332 : vector<256x1xi32>
    %334 = arith.andi %329, %333 : vector<256x1xi1>
    %c1_i32_133 = arith.constant 1 : i32
    %335 = vector.broadcast %c1_i32_133 : i32 to vector<256x1xi32>
    %336 = arith.addi %3, %335 : vector<256x1xi32>
    %c0_i32_134 = arith.constant 0 : i32
    %337 = vector.broadcast %c0_i32_134 : i32 to vector<256x1xi32>
    %338 = arith.cmpi sge, %336, %337 : vector<256x1xi32>
    %339 = arith.andi %334, %338 : vector<256x1xi1>
    %c1_i32_135 = arith.constant 1 : i32
    %340 = vector.broadcast %c1_i32_135 : i32 to vector<256x1xi32>
    %341 = arith.addi %3, %340 : vector<256x1xi32>
    %c16_i32_136 = arith.constant 16 : i32
    %342 = vector.broadcast %c16_i32_136 : i32 to vector<256x1xi32>
    %343 = arith.cmpi slt, %341, %342 : vector<256x1xi32>
    %344 = arith.andi %339, %343 : vector<256x1xi1>
    %cst_137 = arith.constant 0.000000e+00 : f32
    %345 = vector.shape_cast %344 : vector<256x1xi1> to vector<256x1xi1>
    %346 = vector.broadcast %345 : vector<256x1xi1> to vector<256x128xi1>
    %347 = vector.broadcast %cst_137 : f32 to vector<256x128xf32>
    %348 = arith.select %346, %325, %347 : vector<256x128xi1>, vector<256x128xf32>
    %349 = arith.truncf %348 : vector<256x128xf32> to vector<256x128xbf16>
    %c241_i32_138 = arith.constant 241 : i32
    %350 = tpu.dynamic_rotate %223 by %c241_i32_138 dim 0 : vector<256x128xf32>, i32 -> vector<256x128xf32>
    %c1_i32_139 = arith.constant 1 : i32
    %351 = vector.broadcast %c1_i32_139 : i32 to vector<256x1xi32>
    %352 = arith.addi %2, %351 : vector<256x1xi32>
    %c0_i32_140 = arith.constant 0 : i32
    %353 = vector.broadcast %c0_i32_140 : i32 to vector<256x1xi32>
    %354 = arith.cmpi sge, %352, %353 : vector<256x1xi32>
    %c1_i32_141 = arith.constant 1 : i32
    %355 = vector.broadcast %c1_i32_141 : i32 to vector<256x1xi32>
    %356 = arith.addi %2, %355 : vector<256x1xi32>
    %c16_i32_142 = arith.constant 16 : i32
    %357 = vector.broadcast %c16_i32_142 : i32 to vector<256x1xi32>
    %358 = arith.cmpi slt, %356, %357 : vector<256x1xi32>
    %359 = arith.andi %354, %358 : vector<256x1xi1>
    %c-1_i32_143 = arith.constant -1 : i32
    %360 = vector.broadcast %c-1_i32_143 : i32 to vector<256x1xi32>
    %361 = arith.addi %3, %360 : vector<256x1xi32>
    %c0_i32_144 = arith.constant 0 : i32
    %362 = vector.broadcast %c0_i32_144 : i32 to vector<256x1xi32>
    %363 = arith.cmpi sge, %361, %362 : vector<256x1xi32>
    %364 = arith.andi %359, %363 : vector<256x1xi1>
    %c-1_i32_145 = arith.constant -1 : i32
    %365 = vector.broadcast %c-1_i32_145 : i32 to vector<256x1xi32>
    %366 = arith.addi %3, %365 : vector<256x1xi32>
    %c16_i32_146 = arith.constant 16 : i32
    %367 = vector.broadcast %c16_i32_146 : i32 to vector<256x1xi32>
    %368 = arith.cmpi slt, %366, %367 : vector<256x1xi32>
    %369 = arith.andi %364, %368 : vector<256x1xi1>
    %cst_147 = arith.constant 0.000000e+00 : f32
    %370 = vector.shape_cast %369 : vector<256x1xi1> to vector<256x1xi1>
    %371 = vector.broadcast %370 : vector<256x1xi1> to vector<256x128xi1>
    %372 = vector.broadcast %cst_147 : f32 to vector<256x128xf32>
    %373 = arith.select %371, %350, %372 : vector<256x128xi1>, vector<256x128xf32>
    %374 = arith.truncf %373 : vector<256x128xf32> to vector<256x128xbf16>
    %c240_i32_148 = arith.constant 240 : i32
    %375 = tpu.dynamic_rotate %223 by %c240_i32_148 dim 0 : vector<256x128xf32>, i32 -> vector<256x128xf32>
    %c1_i32_149 = arith.constant 1 : i32
    %376 = vector.broadcast %c1_i32_149 : i32 to vector<256x1xi32>
    %377 = arith.addi %2, %376 : vector<256x1xi32>
    %c0_i32_150 = arith.constant 0 : i32
    %378 = vector.broadcast %c0_i32_150 : i32 to vector<256x1xi32>
    %379 = arith.cmpi sge, %377, %378 : vector<256x1xi32>
    %c1_i32_151 = arith.constant 1 : i32
    %380 = vector.broadcast %c1_i32_151 : i32 to vector<256x1xi32>
    %381 = arith.addi %2, %380 : vector<256x1xi32>
    %c16_i32_152 = arith.constant 16 : i32
    %382 = vector.broadcast %c16_i32_152 : i32 to vector<256x1xi32>
    %383 = arith.cmpi slt, %381, %382 : vector<256x1xi32>
    %384 = arith.andi %379, %383 : vector<256x1xi1>
    %c0_i32_153 = arith.constant 0 : i32
    %385 = vector.broadcast %c0_i32_153 : i32 to vector<256x1xi32>
    %386 = arith.addi %3, %385 : vector<256x1xi32>
    %c0_i32_154 = arith.constant 0 : i32
    %387 = vector.broadcast %c0_i32_154 : i32 to vector<256x1xi32>
    %388 = arith.cmpi sge, %386, %387 : vector<256x1xi32>
    %389 = arith.andi %384, %388 : vector<256x1xi1>
    %c0_i32_155 = arith.constant 0 : i32
    %390 = vector.broadcast %c0_i32_155 : i32 to vector<256x1xi32>
    %391 = arith.addi %3, %390 : vector<256x1xi32>
    %c16_i32_156 = arith.constant 16 : i32
    %392 = vector.broadcast %c16_i32_156 : i32 to vector<256x1xi32>
    %393 = arith.cmpi slt, %391, %392 : vector<256x1xi32>
    %394 = arith.andi %389, %393 : vector<256x1xi1>
    %cst_157 = arith.constant 0.000000e+00 : f32
    %395 = vector.shape_cast %394 : vector<256x1xi1> to vector<256x1xi1>
    %396 = vector.broadcast %395 : vector<256x1xi1> to vector<256x128xi1>
    %397 = vector.broadcast %cst_157 : f32 to vector<256x128xf32>
    %398 = arith.select %396, %375, %397 : vector<256x128xi1>, vector<256x128xf32>
    %399 = arith.truncf %398 : vector<256x128xf32> to vector<256x128xbf16>
    %c239_i32_158 = arith.constant 239 : i32
    %400 = tpu.dynamic_rotate %223 by %c239_i32_158 dim 0 : vector<256x128xf32>, i32 -> vector<256x128xf32>
    %c1_i32_159 = arith.constant 1 : i32
    %401 = vector.broadcast %c1_i32_159 : i32 to vector<256x1xi32>
    %402 = arith.addi %2, %401 : vector<256x1xi32>
    %c0_i32_160 = arith.constant 0 : i32
    %403 = vector.broadcast %c0_i32_160 : i32 to vector<256x1xi32>
    %404 = arith.cmpi sge, %402, %403 : vector<256x1xi32>
    %c1_i32_161 = arith.constant 1 : i32
    %405 = vector.broadcast %c1_i32_161 : i32 to vector<256x1xi32>
    %406 = arith.addi %2, %405 : vector<256x1xi32>
    %c16_i32_162 = arith.constant 16 : i32
    %407 = vector.broadcast %c16_i32_162 : i32 to vector<256x1xi32>
    %408 = arith.cmpi slt, %406, %407 : vector<256x1xi32>
    %409 = arith.andi %404, %408 : vector<256x1xi1>
    %c1_i32_163 = arith.constant 1 : i32
    %410 = vector.broadcast %c1_i32_163 : i32 to vector<256x1xi32>
    %411 = arith.addi %3, %410 : vector<256x1xi32>
    %c0_i32_164 = arith.constant 0 : i32
    %412 = vector.broadcast %c0_i32_164 : i32 to vector<256x1xi32>
    %413 = arith.cmpi sge, %411, %412 : vector<256x1xi32>
    %414 = arith.andi %409, %413 : vector<256x1xi1>
    %c1_i32_165 = arith.constant 1 : i32
    %415 = vector.broadcast %c1_i32_165 : i32 to vector<256x1xi32>
    %416 = arith.addi %3, %415 : vector<256x1xi32>
    %c16_i32_166 = arith.constant 16 : i32
    %417 = vector.broadcast %c16_i32_166 : i32 to vector<256x1xi32>
    %418 = arith.cmpi slt, %416, %417 : vector<256x1xi32>
    %419 = arith.andi %414, %418 : vector<256x1xi1>
    %cst_167 = arith.constant 0.000000e+00 : f32
    %420 = vector.shape_cast %419 : vector<256x1xi1> to vector<256x1xi1>
    %421 = vector.broadcast %420 : vector<256x1xi1> to vector<256x128xi1>
    %422 = vector.broadcast %cst_167 : f32 to vector<256x128xf32>
    %423 = arith.select %421, %400, %422 : vector<256x128xi1>, vector<256x128xf32>
    %424 = arith.truncf %423 : vector<256x128xf32> to vector<256x128xbf16>
    %425 = tpu.concatenate %248, %273, %298, %323, %324, %349, %374, %399, %424 in 1 : vector<256x128xbf16>, vector<256x128xbf16>, vector<256x128xbf16>, vector<256x128xbf16>, vector<256x128xbf16>, vector<256x128xbf16>, vector<256x128xbf16>, vector<256x128xbf16>, vector<256x128xbf16> -> vector<256x1152xbf16>
    %c0_168 = arith.constant 0 : index
    %c0_169 = arith.constant 0 : index
    %426 = vector.load %arg5[%c0_168, %c0_169] : memref<1152x128xbf16, #tpu.memory_space<vmem>>, vector<1152x128xbf16>
    %cst_170 = arith.constant dense<0.000000e+00> : vector<256x128xf32>
    %427 = tpu.matmul %425, %426, %cst_170 {dimension_numbers = #tpu.dot_dimension_numbers<[1], [0], [0], [1], [0, 0, 1, 1], [], []>} : vector<256x1152xbf16>, vector<1152x128xbf16>, vector<256x128xf32> -> vector<256x128xf32>
    %428 = arith.addf %427, %1 : vector<256x128xf32>
    %c0_171 = arith.constant 0 : index
    %c0_172 = arith.constant 0 : index
    %c0_173 = arith.constant 0 : index
    %429 = vector.load %arg10[%c0_171, %c0_172, %c0_173] : memref<1x256x128xf32, #tpu.memory_space<vmem>>, vector<1x256x128xf32>
    %430 = vector.shape_cast %429 : vector<1x256x128xf32> to vector<256x128xf32>
    %431 = vector.shape_cast %428 : vector<256x128xf32> to vector<1x256x128xf32>
    tpu.vector_store %arg10[%c0_171, %c0_172, %c0_173], %431 {strides = array<i32>} : memref<1x256x128xf32, #tpu.memory_space<vmem>>, vector<1x256x128xf32>,
    return
  }
  func.func @transform_0(%arg0: i32) -> (i32, i32, i32) {
    %c0_i32 = arith.constant 0 : i32
    %c0_i32_0 = arith.constant 0 : i32
    %c0_i32_1 = arith.constant 0 : i32
    return %arg0, %c0_i32, %c0_i32_0 : i32, i32, i32
  }
  func.func @transform_1(%arg0: i32) -> (i32, i32) {
    %c0_i32 = arith.constant 0 : i32
    %c0_i32_0 = arith.constant 0 : i32
    %c0_i32_1 = arith.constant 0 : i32
    return %c0_i32, %c0_i32_0 : i32, i32
  }
  func.func @transform_2(%arg0: i32) -> (i32, i32) {
    %c0_i32 = arith.constant 0 : i32
    %c0_i32_0 = arith.constant 0 : i32
    %c0_i32_1 = arith.constant 0 : i32
    return %c0_i32, %c0_i32_0 : i32, i32
  }
  func.func @transform_3(%arg0: i32) -> (i32, i32) {
    %c0_i32 = arith.constant 0 : i32
    %c0_i32_0 = arith.constant 0 : i32
    %c0_i32_1 = arith.constant 0 : i32
    return %c0_i32, %c0_i32_0 : i32, i32
  }
  func.func @transform_4(%arg0: i32) -> (i32, i32) {
    %c0_i32 = arith.constant 0 : i32
    %c0_i32_0 = arith.constant 0 : i32
    %c0_i32_1 = arith.constant 0 : i32
    return %c0_i32, %c0_i32_0 : i32, i32
  }
  func.func @transform_5(%arg0: i32) -> (i32, i32) {
    %c0_i32 = arith.constant 0 : i32
    %c0_i32_0 = arith.constant 0 : i32
    %c0_i32_1 = arith.constant 0 : i32
    return %c0_i32, %c0_i32_0 : i32, i32
  }
  func.func @transform_6(%arg0: i32) -> (i32, i32) {
    %c0_i32 = arith.constant 0 : i32
    %c0_i32_0 = arith.constant 0 : i32
    %c0_i32_1 = arith.constant 0 : i32
    return %c0_i32, %c0_i32_0 : i32, i32
  }
  func.func @transform_7(%arg0: i32) -> (i32, i32) {
    %c0_i32 = arith.constant 0 : i32
    %c0_i32_0 = arith.constant 0 : i32
    %c0_i32_1 = arith.constant 0 : i32
    return %c0_i32, %c0_i32_0 : i32, i32
  }
  func.func @transform_8(%arg0: i32) -> (i32, i32) {
    %c0_i32 = arith.constant 0 : i32
    %c0_i32_0 = arith.constant 0 : i32
    %c0_i32_1 = arith.constant 0 : i32
    return %c0_i32, %c0_i32_0 : i32, i32
  }
  func.func @transform_9(%arg0: i32) -> (i32, i32, i32) {
    %c0_i32 = arith.constant 0 : i32
    %c0_i32_0 = arith.constant 0 : i32
    %c0_i32_1 = arith.constant 0 : i32
    return %arg0, %c0_i32, %c0_i32_0 : i32, i32, i32
  }
}

</mosaic_0001>

<llo_original>
// kernel: preact_block_nchw.1
$region0: #{preact_block_nchw.1}
  #allocation0 [shape = 'u32[]', space=smem, size = 0x4, offset = 0x4, fixed_abs, tag = 'smem constant byte address 0x4 - core index']
  #allocation1 [shape = 'u32[144,128]{1,0:T(1,128)}', space=vmem, size = 0x12000, scoped, tag = 'internal scratch']
  %s0 = inlined_call_operand.vmem [shape: f32[2,256,128], index: 0, kind: input, shape index: {}]
  %s1 = inlined_call_operand.vmem [shape: s32[256,1], index: 1, kind: input, shape index: {}]
  %s2 = inlined_call_operand.vmem [shape: s32[256,1], index: 2, kind: input, shape index: {}]
  %s3 = inlined_call_operand.vmem [shape: bf16[1152,128], index: 3, kind: input, shape index: {}]
  %s4 = inlined_call_operand.vmem [shape: bf16[1152,128], index: 4, kind: input, shape index: {}]
  %s5 = inlined_call_operand.vmem [shape: f32[1,128], index: 5, kind: input, shape index: {}]
  %s6 = inlined_call_operand.vmem [shape: f32[1,128], index: 6, kind: input, shape index: {}]
  %s7 = inlined_call_operand.vmem [shape: f32[1,128], index: 7, kind: input, shape index: {}]
  %s8 = inlined_call_operand.vmem [shape: f32[1,128], index: 8, kind: input, shape index: {}]
  %s9 = inlined_call_operand.vmem [shape: f32[2,256,128], index: 9, kind: output, shape index: {}]
  %s10 = sld [smem:[#allocation0]]
  $region69: #{preact_block_nchw.1} parent=0
    _
  %s12 = ssub.s32 1, %s10
  %s13 = scalar_select 0, %s12, %s10
  loop: start=0, step=1, limit=4
  $region2: #{preact_block_nchw.1} parent=0 // loop_pre_header
    _
  $region3: #{preact_block_nchw.1} parent=0 // loop_header
    %s15 = sphi 0, %s19
    %p16 = scmp.ge.s32.totalorder %s15, 4
    %s25 = sphi 0, %s27
    %s28 = sphi 0, %s25
    %s29 = sphi 0, %s28
    %s45 = sphi 0, %s29
    %s49 = sphi 0, %s49
    %s51 = sphi 0, %s49
    %s52 = sphi 0, %s51
    %s66 = sphi 0, %s52
    %s70 = sphi 0, %s70
    %s72 = sphi 0, %s70
    %s73 = sphi 0, %s72
    %s87 = sphi 0, %s73
    %s91 = sphi 0, %s91
    %s93 = sphi 0, %s91
    %s94 = sphi 0, %s93
    %s108 = sphi 0, %s94
    %s112 = sphi 0, %s112
    %s114 = sphi 0, %s112
    %s115 = sphi 0, %s114
    %s129 = sphi 0, %s115
    %s133 = sphi 0, %s133
    %s135 = sphi 0, %s133
    %s136 = sphi 0, %s135
    %s150 = sphi 0, %s136
    %s154 = sphi 0, %s154
    %s156 = sphi 0, %s154
    %s157 = sphi 0, %s156
    %s171 = sphi 0, %s157
    %s175 = sphi 0, %s175
    %s177 = sphi 0, %s175
    %s178 = sphi 0, %s177
    %s192 = sphi 0, %s178
    %s196 = sphi 0, %s196
    %s198 = sphi 0, %s196
    %s199 = sphi 0, %s198
    %s213 = sphi 0, %s199
    %s219 = sphi 0, %s221
    %s222 = sphi 0, %s219
    %s223 = sphi 0, %s222
    %s239 = sphi 0, %s223
  $region4: #{preact_block_nchw.1} parent=0 // loop_header_branch
    %18 = sbr.rel (%p16) target = $region8
  $region5: #{preact_block_nchw.1} parent=0 // loop_body
    %s20 = ssub.s32 %s15, 1
    %s21 = ssub.s32 %s15, 2
    %s22 = sadd.s32 %s15, 1
    %s23 = ssub.s32 %s15, %s22
    %p24 = scmp.eq.s32.totalorder %s23, 0
    %s26 = sadd.s32 %s25, 1
    %s27 = scalar_select %p24, %s25, %s26
    %p30 = pneg %p24
    %p31 = scmp.eq.s32.totalorder %s15, 1
    %p32 = por %p30, %p31
    %p33 = scmp.ne.s32.totalorder %s25, %s28
    %p34 = scmp.eq.s32.totalorder %s15, 0
    %p35 = por %p33, %p34
    %p36 = scmp.ne.s32.totalorder %s25, %s28
    %p37 = scmp.eq.s32.totalorder %s20, 1
    %p38 = por %p36, %p37
    %p39 = scmp.ne.s32.totalorder %s28, %s29
    %p40 = scmp.eq.s32.totalorder %s20, 0
    %p41 = por %p39, %p40
    %p42 = scmp.ne.s32.totalorder %s28, %s29
    %p43 = scmp.eq.s32.totalorder %s21, 1
    %p44 = por %p42, %p43
    %p46 = scmp.ne.s32.totalorder %s29, %s45
    %p47 = scmp.eq.s32.totalorder %s21, 0
    %p48 = por %p46, %p47
    %s50 = sadd.s32 %s49, 1
    %p53 = scmp.eq.s32.totalorder %s15, 1
    %p54 = scmp.ne.s32.totalorder %s49, %s51
    %p55 = scmp.eq.s32.totalorder %s15, 0
    %p56 = por %p54, %p55
    %p57 = scmp.ne.s32.totalorder %s49, %s51
    %p58 = scmp.eq.s32.totalorder %s20, 1
    %p59 = por %p57, %p58
    %p60 = scmp.ne.s32.totalorder %s51, %s52
    %p61 = scmp.eq.s32.totalorder %s20, 0
    %p62 = por %p60, %p61
    %p63 = scmp.ne.s32.totalorder %s51, %s52
    %p64 = scmp.eq.s32.totalorder %s21, 1
    %p65 = por %p63, %p64
    %p67 = scmp.ne.s32.totalorder %s52, %s66
    %p68 = scmp.eq.s32.totalorder %s21, 0
    %p69 = por %p67, %p68
    %s71 = sadd.s32 %s70, 1
    %p74 = scmp.eq.s32.totalorder %s15, 1
    %p75 = scmp.ne.s32.totalorder %s70, %s72
    %p76 = scmp.eq.s32.totalorder %s15, 0
    %p77 = por %p75, %p76
    %p78 = scmp.ne.s32.totalorder %s70, %s72
    %p79 = scmp.eq.s32.totalorder %s20, 1
    %p80 = por %p78, %p79
    %p81 = scmp.ne.s32.totalorder %s72, %s73
    %p82 = scmp.eq.s32.totalorder %s20, 0
    %p83 = por %p81, %p82
    %p84 = scmp.ne.s32.totalorder %s72, %s73
    %p85 = scmp.eq.s32.totalorder %s21, 1
    %p86 = por %p84, %p85
    %p88 = scmp.ne.s32.totalorder %s73, %s87
    %p89 = scmp.eq.s32.totalorder %s21, 0
    %p90 = por %p88, %p89
    %s92 = sadd.s32 %s91, 1
    %p95 = scmp.eq.s32.totalorder %s15, 1
    %p96 = scmp.ne.s32.totalorder %s91, %s93
    %p97 = scmp.eq.s32.totalorder %s15, 0
    %p98 = por %p96, %p97
    %p99 = scmp.ne.s32.totalorder %s91, %s93
    %p100 = scmp.eq.s32.totalorder %s20, 1
    %p101 = por %p99, %p100
    %p102 = scmp.ne.s32.totalorder %s93, %s94
    %p103 = scmp.eq.s32.totalorder %s20, 0
    %p104 = por %p102, %p103
    %p105 = scmp.ne.s32.totalorder %s93, %s94
    %p106 = scmp.eq.s32.totalorder %s21, 1
    %p107 = por %p105, %p106
    %p109 = scmp.ne.s32.totalorder %s94, %s108
    %p110 = scmp.eq.s32.totalorder %s21, 0
    %p111 = por %p109, %p110
    %s113 = sadd.s32 %s112, 1
    %p116 = scmp.eq.s32.totalorder %s15, 1
    %p117 = scmp.ne.s32.totalorder %s112, %s114
    %p118 = scmp.eq.s32.totalorder %s15, 0
    %p119 = por %p117, %p118
    %p120 = scmp.ne.s32.totalorder %s112, %s114
    %p121 = scmp.eq.s32.totalorder %s20, 1
    %p122 = por %p120, %p121
    %p123 = scmp.ne.s32.totalorder %s114, %s115
    %p124 = scmp.eq.s32.totalorder %s20, 0
    %p125 = por %p123, %p124
    %p126 = scmp.ne.s32.totalorder %s114, %s115
    %p127 = scmp.eq.s32.totalorder %s21, 1
    %p128 = por %p126, %p127
    %p130 = scmp.ne.s32.totalorder %s115, %s129
    %p131 = scmp.eq.s32.totalorder %s21, 0
    %p132 = por %p130, %p131
    %s134 = sadd.s32 %s133, 1
    %p137 = scmp.eq.s32.totalorder %s15, 1
    %p138 = scmp.ne.s32.totalorder %s133, %s135
    %p139 = scmp.eq.s32.totalorder %s15, 0
    %p140 = por %p138, %p139
    %p141 = scmp.ne.s32.totalorder %s133, %s135
    %p142 = scmp.eq.s32.totalorder %s20, 1
    %p143 = por %p141, %p142
    %p144 = scmp.ne.s32.totalorder %s135, %s136
    %p145 = scmp.eq.s32.totalorder %s20, 0
    %p146 = por %p144, %p145
    %p147 = scmp.ne.s32.totalorder %s135, %s136
    %p148 = scmp.eq.s32.totalorder %s21, 1
    %p149 = por %p147, %p148
    %p151 = scmp.ne.s32.totalorder %s136, %s150
    %p152 = scmp.eq.s32.totalorder %s21, 0
    %p153 = por %p151, %p152
    %s155 = sadd.s32 %s154, 1
    %p158 = scmp.eq.s32.totalorder %s15, 1
    %p159 = scmp.ne.s32.totalorder %s154, %s156
    %p160 = scmp.eq.s32.totalorder %s15, 0
    %p161 = por %p159, %p160
    %p162 = scmp.ne.s32.totalorder %s154, %s156
    %p163 = scmp.eq.s32.totalorder %s20, 1
    %p164 = por %p162, %p163
    %p165 = scmp.ne.s32.totalorder %s156, %s157
    %p166 = scmp.eq.s32.totalorder %s20, 0
    %p167 = por %p165, %p166
    %p168 = scmp.ne.s32.totalorder %s156, %s157
    %p169 = scmp.eq.s32.totalorder %s21, 1
    %p170 = por %p168, %p169
    %p172 = scmp.ne.s32.totalorder %s157, %s171
    %p173 = scmp.eq.s32.totalorder %s21, 0
    %p174 = por %p172, %p173
    %s176 = sadd.s32 %s175, 1
    %p179 = scmp.eq.s32.totalorder %s15, 1
    %p180 = scmp.ne.s32.totalorder %s175, %s177
    %p181 = scmp.eq.s32.totalorder %s15, 0
    %p182 = por %p180, %p181
    %p183 = scmp.ne.s32.totalorder %s175, %s177
    %p184 = scmp.eq.s32.totalorder %s20, 1
    %p185 = por %p183, %p184
    %p186 = scmp.ne.s32.totalorder %s177, %s178
    %p187 = scmp.eq.s32.totalorder %s20, 0
    %p188 = por %p186, %p187
    %p189 = scmp.ne.s32.totalorder %s177, %s178
    %p190 = scmp.eq.s32.totalorder %s21, 1
    %p191 = por %p189, %p190
    %p193 = scmp.ne.s32.totalorder %s178, %s192
    %p194 = scmp.eq.s32.totalorder %s21, 0
    %p195 = por %p193, %p194
    %s197 = sadd.s32 %s196, 1
    %p200 = scmp.eq.s32.totalorder %s15, 1
    %p201 = scmp.ne.s32.totalorder %s196, %s198
    %p202 = scmp.eq.s32.totalorder %s15, 0
    %p203 = por %p201, %p202
    %p204 = scmp.ne.s32.totalorder %s196, %s198
    %p205 = scmp.eq.s32.totalorder %s20, 1
    %p206 = por %p204, %p205
    %p207 = scmp.ne.s32.totalorder %s198, %s199
    %p208 = scmp.eq.s32.totalorder %s20, 0
    %p209 = por %p207, %p208
    %p210 = scmp.ne.s32.totalorder %s198, %s199
    %p211 = scmp.eq.s32.totalorder %s21, 1
    %p212 = por %p210, %p211
    %p214 = scmp.ne.s32.totalorder %s199, %s213
    %p215 = scmp.eq.s32.totalorder %s21, 0
    %p216 = por %p214, %p215
    %s217 = ssub.s32 %s15, %s22
    %p218 = scmp.eq.s32.totalorder %s217, 0
    %s220 = sadd.s32 %s219, 1
    %s221 = scalar_select %p218, %s219, %s220
    %p224 = pneg %p218
    %p225 = scmp.eq.s32.totalorder %s15, 1
    %p226 = por %p224, %p225
    %p227 = scmp.ne.s32.totalorder %s219, %s222
    %p228 = scmp.eq.s32.totalorder %s15, 0
    %p229 = por %p227, %p228
    %p230 = scmp.ne.s32.totalorder %s219, %s222
    %p231 = scmp.eq.s32.totalorder %s20, 1
    %p232 = por %p230, %p231
    %p233 = scmp.ne.s32.totalorder %s222, %s223
    %p234 = scmp.eq.s32.totalorder %s20, 0
    %p235 = por %p233, %p234
    %p236 = scmp.ne.s32.totalorder %s222, %s223
    %p237 = scmp.eq.s32.totalorder %s21, 1
    %p238 = por %p236, %p237
    %p240 = scmp.ne.s32.totalorder %s223, %s239
    %p241 = scmp.eq.s32.totalorder %s21, 0
    %p242 = por %p240, %p241
    %p243 = scmp.le.s32.totalorder 1, %s15
    %p244 = scmp.lt.s32.totalorder %s15, 3
    %p245 = pnand %p243, %p244
    %p246 = pneg %p245
    // Predicated region
    $region9: #{preact_block_nchw.1} parent=5 // pred_check
      _
    $region10: #{preact_block_nchw.1} parent=5 // pred_check_branch
      %248 = sbr.rel (%p245) target = $region12
    $region11: #{preact_block_nchw.1} parent=5 // pred_region
      %s249 = ssub.s32 %s15, 1
      // Predicated region
      $region13: #{preact_block_nchw.1} parent=11 // pred_check
        %p250 = pneg %p62
      $region14: #{preact_block_nchw.1} parent=11 // pred_check_branch
        %252 = sbr.rel (%p250) target = $region16
      $region15: #{preact_block_nchw.1} parent=11 // pred_region
        _
      $region16: #{preact_block_nchw.1} parent=11 // pred_fallthru
        _
      // Predicated region
      $region17: #{preact_block_nchw.1} parent=11 // pred_check
        %p253 = pneg %p83
      $region18: #{preact_block_nchw.1} parent=11 // pred_check_branch
        %255 = sbr.rel (%p253) target = $region20
      $region19: #{preact_block_nchw.1} parent=11 // pred_region
        _
      $region20: #{preact_block_nchw.1} parent=11 // pred_fallthru
        _
      // Predicated region
      $region21: #{preact_block_nchw.1} parent=11 // pred_check
        %p256 = pneg %p104
      $region22: #{preact_block_nchw.1} parent=11 // pred_check_branch
        %258 = sbr.rel (%p256) target = $region24
      $region23: #{preact_block_nchw.1} parent=11 // pred_region
        _
      $region24: #{preact_block_nchw.1} parent=11 // pred_fallthru
        _
      // Predicated region
      $region25: #{preact_block_nchw.1} parent=11 // pred_check
        %p259 = pneg %p125
      $region26: #{preact_block_nchw.1} parent=11 // pred_check_branch
        %261 = sbr.rel (%p259) target = $region28
      $region27: #{preact_block_nchw.1} parent=11 // pred_region
        _
      $region28: #{preact_block_nchw.1} parent=11 // pred_fallthru
        _
      // Predicated region
      $region29: #{preact_block_nchw.1} parent=11 // pred_check
        %p262 = pneg %p146
      $region30: #{preact_block_nchw.1} parent=11 // pred_check_branch
        %264 = sbr.rel (%p262) target = $region32
      $region31: #{preact_block_nchw.1} parent=11 // pred_region
        _
      $region32: #{preact_block_nchw.1} parent=11 // pred_fallthru
        _
      // Predicated region
      $region33: #{preact_block_nchw.1} parent=11 // pred_check
        %p265 = pneg %p167
      $region34: #{preact_block_nchw.1} parent=11 // pred_check_branch
        %267 = sbr.rel (%p265) target = $region36
      $region35: #{preact_block_nchw.1} parent=11 // pred_region
        _
      $region36: #{preact_block_nchw.1} parent=11 // pred_fallthru
        _
      // Predicated region
      $region37: #{preact_block_nchw.1} parent=11 // pred_check
        %p268 = pneg %p188
      $region38: #{preact_block_nchw.1} parent=11 // pred_check_branch
        %270 = sbr.rel (%p268) target = $region40
      $region39: #{preact_block_nchw.1} parent=11 // pred_region
        _
      $region40: #{preact_block_nchw.1} parent=11 // pred_fallthru
        _
      // Predicated region
      $region41: #{preact_block_nchw.1} parent=11 // pred_check
        %p271 = pneg %p209
      $region42: #{preact_block_nchw.1} parent=11 // pred_check_branch
        %273 = sbr.rel (%p271) target = $region44
      $region43: #{preact_block_nchw.1} parent=11 // pred_region
        _
      $region44: #{preact_block_nchw.1} parent=11 // pred_fallthru
        _
    $region12: #{preact_block_nchw.1} parent=5 // pred_fallthru
      _
    %p274 = scmp.lt.s32.totalorder %s15, 2
    // Predicated region
    $region45: #{preact_block_nchw.1} parent=5 // pred_check
      %p275 = pneg %p274
    $region46: #{preact_block_nchw.1} parent=5 // pred_check_branch
      %277 = sbr.rel (%p275) target = $region48
    $region47: #{preact_block_nchw.1} parent=5 // pred_region
      // Predicated region
      $region49: #{preact_block_nchw.1} parent=47 // pred_check
        %p278 = pneg %p35
      $region50: #{preact_block_nchw.1} parent=47 // pred_check_branch
        %280 = sbr.rel (%p278) target = $region52
      $region51: #{preact_block_nchw.1} parent=47 // pred_region
        %p281 = scmp.lt.s32.totalorder %s15, 1
        %s282 = scalar_select %p281, %s15, 1
        %s283 = smul.addr %s282, 32
        %s284 = smul.addr %s283, 8
        %s285 = scalar_lea.vmem %s0, %s284
      $region52: #{preact_block_nchw.1} parent=47 // pred_fallthru
        _
    $region48: #{preact_block_nchw.1} parent=5 // pred_fallthru
      _
    %p286 = scmp.le.s32.totalorder 1, %s15
    %p287 = scmp.lt.s32.totalorder %s15, 3
    %p288 = pnand %p286, %p287
    %p289 = pneg %p288
    // Predicated region
    $region53: #{preact_block_nchw.1} parent=5 // pred_check
      _
    $region54: #{preact_block_nchw.1} parent=5 // pred_check_branch
      %291 = sbr.rel (%p288) target = $region56
    $region55: #{preact_block_nchw.1} parent=5 // pred_region
      %s292 = ssub.s32 %s15, 1
      %p293 = scmp.lt.s32.totalorder %s20, 1
      %s294 = scalar_select %p293, %s20, 1
      %s295 = smul.addr %s294, 32
      %s296 = smul.addr %s295, 8
      %s297 = scalar_lea.vmem %s0, %s296
      %p298 = pneg %p41
      %p299 = pneg %p38
      %p300 = pneg %p62
      %p301 = pneg %p59
      %p302 = pneg %p83
      %p303 = pneg %p80
      %p304 = pneg %p104
      %p305 = pneg %p101
      %p306 = pneg %p125
      %p307 = pneg %p122
      %p308 = pneg %p146
      %p309 = pneg %p143
      %p310 = pneg %p167
      %p311 = pneg %p164
      %p312 = pneg %p188
      %p313 = pneg %p185
      %p314 = pneg %p209
      %p315 = pneg %p206
      %p316 = pneg %p235
      %p317 = pneg %p232
      %p318 = scmp.lt.s32.totalorder %s20, 1
      %s319 = scalar_select %p318, %s20, 1
      %s320 = smul.addr %s319, 32
      %s321 = smul.addr %s320, 8
      %s322 = scalar_lea.vmem %s9, %s321
      %p323 = scmp.lt.s32.totalorder %s20, 1
      %s324 = scalar_select %p323, %s20, 1
      %s325 = smul.addr %s324, 32
      %s326 = smul.addr %s325, 8
      %s327 = scalar_lea.vmem %s0, %s326
      %p328 = scmp.lt.s32.totalorder %s20, 1
      %s329 = scalar_select %p328, %s20, 1
      %s330 = smul.addr %s329, 32
      %s331 = smul.addr %s330, 8
      %s332 = scalar_lea.vmem %s9, %s331
      %v334 = vld [vmem:[%s327] sm:$0xff]
      %v335 = vld [vmem:[%s327 + $0x8] sm:$0xff]
      %v336 = vld [vmem:[%s327 + $0x10] sm:$0xff]
      %v337 = vld [vmem:[%s327 + $0x18] sm:$0xff]
      %v338 = vld [vmem:[%s327 + $0x20] sm:$0xff]
      %v339 = vld [vmem:[%s327 + $0x28] sm:$0xff]
      %v340 = vld [vmem:[%s327 + $0x30] sm:$0xff]
      %v341 = vld [vmem:[%s327 + $0x38] sm:$0xff]
      %v342 = vld [vmem:[%s327 + $0x40] sm:$0xff]
      %v343 = vld [vmem:[%s327 + $0x48] sm:$0xff]
      %v344 = vld [vmem:[%s327 + $0x50] sm:$0xff]
      %v345 = vld [vmem:[%s327 + $0x58] sm:$0xff]
      %v346 = vld [vmem:[%s327 + $0x60] sm:$0xff]
      %v347 = vld [vmem:[%s327 + $0x68] sm:$0xff]
      %v348 = vld [vmem:[%s327 + $0x70] sm:$0xff]
      %v349 = vld [vmem:[%s327 + $0x78] sm:$0xff]
      %v350 = vld [vmem:[%s327 + $0x80] sm:$0xff]
      %v351 = vld [vmem:[%s327 + $0x88] sm:$0xff]
      %v352 = vld [vmem:[%s327 + $0x90] sm:$0xff]
      %v353 = vld [vmem:[%s327 + $0x98] sm:$0xff]
      %v354 = vld [vmem:[%s327 + $0xa0] sm:$0xff]
      %v355 = vld [vmem:[%s327 + $0xa8] sm:$0xff]
      %v356 = vld [vmem:[%s327 + $0xb0] sm:$0xff]
      %v357 = vld [vmem:[%s327 + $0xb8] sm:$0xff]
      %v358 = vld [vmem:[%s327 + $0xc0] sm:$0xff]
      %v359 = vld [vmem:[%s327 + $0xc8] sm:$0xff]
      %v360 = vld [vmem:[%s327 + $0xd0] sm:$0xff]
      %v361 = vld [vmem:[%s327 + $0xd8] sm:$0xff]
      %v362 = vld [vmem:[%s327 + $0xe0] sm:$0xff]
      %v363 = vld [vmem:[%s327 + $0xe8] sm:$0xff]
      %v364 = vld [vmem:[%s327 + $0xf0] sm:$0xff]
      %v365 = vld [vmem:[%s327 + $0xf8] sm:$0xff]
      %v366 = vld [vmem:[%s1] sm:$0xff]
      %v367 = vld [vmem:[%s1 + $0x8] sm:$0xff]
      %v368 = vld [vmem:[%s1 + $0x10] sm:$0xff]
      %v369 = vld [vmem:[%s1 + $0x18] sm:$0xff]
      %v370 = vld [vmem:[%s1 + $0x20] sm:$0xff]
      %v371 = vld [vmem:[%s1 + $0x28] sm:$0xff]
      %v372 = vld [vmem:[%s1 + $0x30] sm:$0xff]
      %v373 = vld [vmem:[%s1 + $0x38] sm:$0xff]
      %v374 = vld [vmem:[%s1 + $0x40] sm:$0xff]
      %v375 = vld [vmem:[%s1 + $0x48] sm:$0xff]
      %v376 = vld [vmem:[%s1 + $0x50] sm:$0xff]
      %v377 = vld [vmem:[%s1 + $0x58] sm:$0xff]
      %v378 = vld [vmem:[%s1 + $0x60] sm:$0xff]
      %v379 = vld [vmem:[%s1 + $0x68] sm:$0xff]
      %v380 = vld [vmem:[%s1 + $0x70] sm:$0xff]
      %v381 = vld [vmem:[%s1 + $0x78] sm:$0xff]
      %v382 = vld [vmem:[%s1 + $0x80] sm:$0xff]
      %v383 = vld [vmem:[%s1 + $0x88] sm:$0xff]
      %v384 = vld [vmem:[%s1 + $0x90] sm:$0xff]
      %v385 = vld [vmem:[%s1 + $0x98] sm:$0xff]
      %v386 = vld [vmem:[%s1 + $0xa0] sm:$0xff]
      %v387 = vld [vmem:[%s1 + $0xa8] sm:$0xff]
      %v388 = vld [vmem:[%s1 + $0xb0] sm:$0xff]
      %v389 = vld [vmem:[%s1 + $0xb8] sm:$0xff]
      %v390 = vld [vmem:[%s1 + $0xc0] sm:$0xff]
      %v391 = vld [vmem:[%s1 + $0xc8] sm:$0xff]
      %v392 = vld [vmem:[%s1 + $0xd0] sm:$0xff]
      %v393 = vld [vmem:[%s1 + $0xd8] sm:$0xff]
      %v394 = vld [vmem:[%s1 + $0xe0] sm:$0xff]
      %v395 = vld [vmem:[%s1 + $0xe8] sm:$0xff]
      %v396 = vld [vmem:[%s1 + $0xf0] sm:$0xff]
      %v397 = vld [vmem:[%s1 + $0xf8] sm:$0xff]
      %v398 = vld [vmem:[%s2] sm:$0xff]
      %v399 = vld [vmem:[%s2 + $0x8] sm:$0xff]
      %v400 = vld [vmem:[%s2 + $0x10] sm:$0xff]
      %v401 = vld [vmem:[%s2 + $0x18] sm:$0xff]
      %v402 = vld [vmem:[%s2 + $0x20] sm:$0xff]
      %v403 = vld [vmem:[%s2 + $0x28] sm:$0xff]
      %v404 = vld [vmem:[%s2 + $0x30] sm:$0xff]
      %v405 = vld [vmem:[%s2 + $0x38] sm:$0xff]
      %v406 = vld [vmem:[%s2 + $0x40] sm:$0xff]
      %v407 = vld [vmem:[%s2 + $0x48] sm:$0xff]
      %v408 = vld [vmem:[%s2 + $0x50] sm:$0xff]
      %v409 = vld [vmem:[%s2 + $0x58] sm:$0xff]
      %v410 = vld [vmem:[%s2 + $0x60] sm:$0xff]
      %v411 = vld [vmem:[%s2 + $0x68] sm:$0xff]
      %v412 = vld [vmem:[%s2 + $0x70] sm:$0xff]
      %v413 = vld [vmem:[%s2 + $0x78] sm:$0xff]
      %v414 = vld [vmem:[%s2 + $0x80] sm:$0xff]
      %v415 = vld [vmem:[%s2 + $0x88] sm:$0xff]
      %v416 = vld [vmem:[%s2 + $0x90] sm:$0xff]
      %v417 = vld [vmem:[%s2 + $0x98] sm:$0xff]
      %v418 = vld [vmem:[%s2 + $0xa0] sm:$0xff]
      %v419 = vld [vmem:[%s2 + $0xa8] sm:$0xff]
      %v420 = vld [vmem:[%s2 + $0xb0] sm:$0xff]
      %v421 = vld [vmem:[%s2 + $0xb8] sm:$0xff]
      %v422 = vld [vmem:[%s2 + $0xc0] sm:$0xff]
      %v423 = vld [vmem:[%s2 + $0xc8] sm:$0xff]
      %v424 = vld [vmem:[%s2 + $0xd0] sm:$0xff]
      %v425 = vld [vmem:[%s2 + $0xd8] sm:$0xff]
      %v426 = vld [vmem:[%s2 + $0xe0] sm:$0xff]
      %v427 = vld [vmem:[%s2 + $0xe8] sm:$0xff]
      %v428 = vld [vmem:[%s2 + $0xf0] sm:$0xff]
      %v429 = vld [vmem:[%s2 + $0xf8] sm:$0xff]
      %v430 = vld [vmem:[%s5] sm:$0x1]
      %v432 = vlaneseq
      %v433 = vshrl.u32 %v432, 7
      %v434 = vsub.s32 0, %v433
      %v435 = vrot.slane %v430, %v434
      %v437 = vmul.f32 %v334, %v435
      %v438 = vmul.f32 %v335, %v435
      %v439 = vmul.f32 %v336, %v435
      %v440 = vmul.f32 %v337, %v435
      %v441 = vmul.f32 %v338, %v435
      %v442 = vmul.f32 %v339, %v435
      %v443 = vmul.f32 %v340, %v435
      %v444 = vmul.f32 %v341, %v435
      %v445 = vmul.f32 %v342, %v435
      %v446 = vmul.f32 %v343, %v435
      %v447 = vmul.f32 %v344, %v435
      %v448 = vmul.f32 %v345, %v435
      %v449 = vmul.f32 %v346, %v435
      %v450 = vmul.f32 %v347, %v435
      %v451 = vmul.f32 %v348, %v435
      %v452 = vmul.f32 %v349, %v435
      %v453 = vmul.f32 %v350, %v435
      %v454 = vmul.f32 %v351, %v435
      %v455 = vmul.f32 %v352, %v435
      %v456 = vmul.f32 %v353, %v435
      %v457 = vmul.f32 %v354, %v435
      %v458 = vmul.f32 %v355, %v435
      %v459 = vmul.f32 %v356, %v435
      %v460 = vmul.f32 %v357, %v435
      %v461 = vmul.f32 %v358, %v435
      %v462 = vmul.f32 %v359, %v435
      %v463 = vmul.f32 %v360, %v435
      %v464 = vmul.f32 %v361, %v435
      %v465 = vmul.f32 %v362, %v435
      %v466 = vmul.f32 %v363, %v435
      %v467 = vmul.f32 %v364, %v435
      %v468 = vmul.f32 %v365, %v435
      %v469 = vld [vmem:[%s6] sm:$0x1]
      %v471 = vlaneseq
      %v472 = vshrl.u32 %v471, 7
      %v473 = vsub.s32 0, %v472
      %v474 = vrot.slane %v469, %v473
      %v476 = vadd.f32 %v437, %v474
      %v477 = vadd.f32 %v438, %v474
      %v478 = vadd.f32 %v439, %v474
      %v479 = vadd.f32 %v440, %v474
      %v480 = vadd.f32 %v441, %v474
      %v481 = vadd.f32 %v442, %v474
      %v482 = vadd.f32 %v443, %v474
      %v483 = vadd.f32 %v444, %v474
      %v484 = vadd.f32 %v445, %v474
      %v485 = vadd.f32 %v446, %v474
      %v486 = vadd.f32 %v447, %v474
      %v487 = vadd.f32 %v448, %v474
      %v488 = vadd.f32 %v449, %v474
      %v489 = vadd.f32 %v450, %v474
      %v490 = vadd.f32 %v451, %v474
      %v491 = vadd.f32 %v452, %v474
      %v492 = vadd.f32 %v453, %v474
      %v493 = vadd.f32 %v454, %v474
      %v494 = vadd.f32 %v455, %v474
      %v495 = vadd.f32 %v456, %v474
      %v496 = vadd.f32 %v457, %v474
      %v497 = vadd.f32 %v458, %v474
      %v498 = vadd.f32 %v459, %v474
      %v499 = vadd.f32 %v460, %v474
      %v500 = vadd.f32 %v461, %v474
      %v501 = vadd.f32 %v462, %v474
      %v502 = vadd.f32 %v463, %v474
      %v503 = vadd.f32 %v464, %v474
      %v504 = vadd.f32 %v465, %v474
      %v505 = vadd.f32 %v466, %v474
      %v506 = vadd.f32 %v467, %v474
      %v507 = vadd.f32 %v468, %v474
      %v508 = vmax.f32 %v476, 0.0
      %v509 = vmax.f32 %v477, 0.0
      %v510 = vmax.f32 %v478, 0.0
      %v511 = vmax.f32 %v479, 0.0
      %v512 = vmax.f32 %v480, 0.0
      %v513 = vmax.f32 %v481, 0.0
      %v514 = vmax.f32 %v482, 0.0
      %v515 = vmax.f32 %v483, 0.0
      %v516 = vmax.f32 %v484, 0.0
      %v517 = vmax.f32 %v485, 0.0
      %v518 = vmax.f32 %v486, 0.0
      %v519 = vmax.f32 %v487, 0.0
      %v520 = vmax.f32 %v488, 0.0
      %v521 = vmax.f32 %v489, 0.0
      %v522 = vmax.f32 %v490, 0.0
      %v523 = vmax.f32 %v491, 0.0
      %v524 = vmax.f32 %v492, 0.0
      %v525 = vmax.f32 %v493, 0.0
      %v526 = vmax.f32 %v494, 0.0
      %v527 = vmax.f32 %v495, 0.0
      %v528 = vmax.f32 %v496, 0.0
      %v529 = vmax.f32 %v497, 0.0
      %v530 = vmax.f32 %v498, 0.0
      %v531 = vmax.f32 %v499, 0.0
      %v532 = vmax.f32 %v500, 0.0
      %v533 = vmax.f32 %v501, 0.0
      %v534 = vmax.f32 %v502, 0.0
      %v535 = vmax.f32 %v503, 0.0
      %v536 = vmax.f32 %v504, 0.0
      %v537 = vmax.f32 %v505, 0.0
      %v538 = vmax.f32 %v506, 0.0
      %v539 = vmax.f32 %v507, 0.0
      %v540 = vrot.slane %v508, 7
      %v541 = vrot.slane %v509, 7
      %v542 = vrot.slane %v510, 7
      %v543 = vrot.slane %v511, 7
      %v544 = vrot.slane %v512, 7
      %v545 = vrot.slane %v513, 7
      %v546 = vrot.slane %v514, 7
      %v547 = vrot.slane %v515, 7
      %v548 = vrot.slane %v516, 7
      %v549 = vrot.slane %v517, 7
      %v550 = vrot.slane %v518, 7
      %v551 = vrot.slane %v519, 7
      %v552 = vrot.slane %v520, 7
      %v553 = vrot.slane %v521, 7
      %v554 = vrot.slane %v522, 7
      %v555 = vrot.slane %v523, 7
      %v556 = vrot.slane %v524, 7
      %v557 = vrot.slane %v525, 7
      %v558 = vrot.slane %v526, 7
      %v559 = vrot.slane %v527, 7
      %v560 = vrot.slane %v528, 7
      %v561 = vrot.slane %v529, 7
      %v562 = vrot.slane %v530, 7
      %v563 = vrot.slane %v531, 7
      %v564 = vrot.slane %v532, 7
      %v565 = vrot.slane %v533, 7
      %v566 = vrot.slane %v534, 7
      %v567 = vrot.slane %v535, 7
      %v568 = vrot.slane %v536, 7
      %v569 = vrot.slane %v537, 7
      %v570 = vrot.slane %v538, 7
      %v571 = vrot.slane %v539, 7
      %v572 = vlaneseq
      %v573 = vshrl.u32 %v572, 7
      %vm574 = vcmp.lt.s32.totalorder %v573, 1
      %v575 = vsel %vm574, %v570, %v571
      %v576 = vsel %vm574, %v569, %v570
      %v577 = vsel %vm574, %v568, %v569
      %v578 = vsel %vm574, %v567, %v568
      %v579 = vsel %vm574, %v566, %v567
      %v580 = vsel %vm574, %v565, %v566
      %v581 = vsel %vm574, %v564, %v565
      %v582 = vsel %vm574, %v563, %v564
      %v583 = vsel %vm574, %v562, %v563
      %v584 = vsel %vm574, %v561, %v562
      %v585 = vsel %vm574, %v560, %v561
      %v586 = vsel %vm574, %v559, %v560
      %v587 = vsel %vm574, %v558, %v559
      %v588 = vsel %vm574, %v557, %v558
      %v589 = vsel %vm574, %v556, %v557
      %v590 = vsel %vm574, %v555, %v556
      %v591 = vsel %vm574, %v554, %v555
      %v592 = vsel %vm574, %v553, %v554
      %v593 = vsel %vm574, %v552, %v553
      %v594 = vsel %vm574, %v551, %v552
      %v595 = vsel %vm574, %v550, %v551
      %v596 = vsel %vm574, %v549, %v550
      %v597 = vsel %vm574, %v548, %v549
      %v598 = vsel %vm574, %v547, %v548
      %v599 = vsel %vm574, %v546, %v547
      %v600 = vsel %vm574, %v545, %v546
      %v601 = vsel %vm574, %v544, %v545
      %v602 = vsel %vm574, %v543, %v544
      %v603 = vsel %vm574, %v542, %v543
      %v604 = vsel %vm574, %v541, %v542
      %v605 = vsel %vm574, %v540, %v541
      %v606 = vsel %vm574, %v571, %v540
      %v607 = vadd.s32 %v366, 4294967295
      %v608 = vadd.s32 %v367, 4294967295
      %v609 = vadd.s32 %v368, 4294967295
      %v610 = vadd.s32 %v369, 4294967295
      %v611 = vadd.s32 %v370, 4294967295
      %v612 = vadd.s32 %v371, 4294967295
      %v613 = vadd.s32 %v372, 4294967295
      %v614 = vadd.s32 %v373, 4294967295
      %v615 = vadd.s32 %v374, 4294967295
      %v616 = vadd.s32 %v375, 4294967295
      %v617 = vadd.s32 %v376, 4294967295
      %v618 = vadd.s32 %v377, 4294967295
      %v619 = vadd.s32 %v378, 4294967295
      %v620 = vadd.s32 %v379, 4294967295
      %v621 = vadd.s32 %v380, 4294967295
      %v622 = vadd.s32 %v381, 4294967295
      %v623 = vadd.s32 %v382, 4294967295
      %v624 = vadd.s32 %v383, 4294967295
      %v625 = vadd.s32 %v384, 4294967295
      %v626 = vadd.s32 %v385, 4294967295
      %v627 = vadd.s32 %v386, 4294967295
      %v628 = vadd.s32 %v387, 4294967295
      %v629 = vadd.s32 %v388, 4294967295
      %v630 = vadd.s32 %v389, 4294967295
      %v631 = vadd.s32 %v390, 4294967295
      %v632 = vadd.s32 %v391, 4294967295
      %v633 = vadd.s32 %v392, 4294967295
      %v634 = vadd.s32 %v393, 4294967295
      %v635 = vadd.s32 %v394, 4294967295
      %v636 = vadd.s32 %v395, 4294967295
      %v637 = vadd.s32 %v396, 4294967295
      %v638 = vadd.s32 %v397, 4294967295
      %vm639 = vcmp.ge.s32.totalorder %v607, 0
      %vm640 = vcmp.ge.s32.totalorder %v608, 0
      %vm641 = vcmp.ge.s32.totalorder %v609, 0
      %vm642 = vcmp.ge.s32.totalorder %v610, 0
      %vm643 = vcmp.ge.s32.totalorder %v611, 0
      %vm644 = vcmp.ge.s32.totalorder %v612, 0
      %vm645 = vcmp.ge.s32.totalorder %v613, 0
      %vm646 = vcmp.ge.s32.totalorder %v614, 0
      %vm647 = vcmp.ge.s32.totalorder %v615, 0
      %vm648 = vcmp.ge.s32.totalorder %v616, 0
      %vm649 = vcmp.ge.s32.totalorder %v617, 0
      %vm650 = vcmp.ge.s32.totalorder %v618, 0
      %vm651 = vcmp.ge.s32.totalorder %v619, 0
      %vm652 = vcmp.ge.s32.totalorder %v620, 0
      %vm653 = vcmp.ge.s32.totalorder %v621, 0
      %vm654 = vcmp.ge.s32.totalorder %v622, 0
      %vm655 = vcmp.ge.s32.totalorder %v623, 0
      %vm656 = vcmp.ge.s32.totalorder %v624, 0
      %vm657 = vcmp.ge.s32.totalorder %v625, 0
      %vm658 = vcmp.ge.s32.totalorder %v626, 0
      %vm659 = vcmp.ge.s32.totalorder %v627, 0
      %vm660 = vcmp.ge.s32.totalorder %v628, 0
      %vm661 = vcmp.ge.s32.totalorder %v629, 0
      %vm662 = vcmp.ge.s32.totalorder %v630, 0
      %vm663 = vcmp.ge.s32.totalorder %v631, 0
      %vm664 = vcmp.ge.s32.totalorder %v632, 0
      %vm665 = vcmp.ge.s32.totalorder %v633, 0
      %vm666 = vcmp.ge.s32.totalorder %v634, 0
      %vm667 = vcmp.ge.s32.totalorder %v635, 0
      %vm668 = vcmp.ge.s32.totalorder %v636, 0
      %vm669 = vcmp.ge.s32.totalorder %v637, 0
      %vm670 = vcmp.ge.s32.totalorder %v638, 0
      %vm671 = vcmp.lt.s32.totalorder %v607, 16
      %vm672 = vcmp.lt.s32.totalorder %v608, 16
      %vm673 = vcmp.lt.s32.totalorder %v609, 16
      %vm674 = vcmp.lt.s32.totalorder %v610, 16
      %vm675 = vcmp.lt.s32.totalorder %v611, 16
      %vm676 = vcmp.lt.s32.totalorder %v612, 16
      %vm677 = vcmp.lt.s32.totalorder %v613, 16
      %vm678 = vcmp.lt.s32.totalorder %v614, 16
      %vm679 = vcmp.lt.s32.totalorder %v615, 16
      %vm680 = vcmp.lt.s32.totalorder %v616, 16
      %vm681 = vcmp.lt.s32.totalorder %v617, 16
      %vm682 = vcmp.lt.s32.totalorder %v618, 16
      %vm683 = vcmp.lt.s32.totalorder %v619, 16
      %vm684 = vcmp.lt.s32.totalorder %v620, 16
      %vm685 = vcmp.lt.s32.totalorder %v621, 16
      %vm686 = vcmp.lt.s32.totalorder %v622, 16
      %vm687 = vcmp.lt.s32.totalorder %v623, 16
      %vm688 = vcmp.lt.s32.totalorder %v624, 16
      %vm689 = vcmp.lt.s32.totalorder %v625, 16
      %vm690 = vcmp.lt.s32.totalorder %v626, 16
      %vm691 = vcmp.lt.s32.totalorder %v627, 16
      %vm692 = vcmp.lt.s32.totalorder %v628, 16
      %vm693 = vcmp.lt.s32.totalorder %v629, 16
      %vm694 = vcmp.lt.s32.totalorder %v630, 16
      %vm695 = vcmp.lt.s32.totalorder %v631, 16
      %vm696 = vcmp.lt.s32.totalorder %v632, 16
      %vm697 = vcmp.lt.s32.totalorder %v633, 16
      %vm698 = vcmp.lt.s32.totalorder %v634, 16
      %vm699 = vcmp.lt.s32.totalorder %v635, 16
      %vm700 = vcmp.lt.s32.totalorder %v636, 16
      %vm701 = vcmp.lt.s32.totalorder %v637, 16
      %vm702 = vcmp.lt.s32.totalorder %v638, 16
      %vm703 = vmand %vm639, %vm671
      %vm704 = vmand %vm640, %vm672
      %vm705 = vmand %vm641, %vm673
      %vm706 = vmand %vm642, %vm674
      %vm707 = vmand %vm643, %vm675
      %vm708 = vmand %vm644, %vm676
      %vm709 = vmand %vm645, %vm677
      %vm710 = vmand %vm646, %vm678
      %vm711 = vmand %vm647, %vm679
      %vm712 = vmand %vm648, %vm680
      %vm713 = vmand %vm649, %vm681
      %vm714 = vmand %vm650, %vm682
      %vm715 = vmand %vm651, %vm683
      %vm716 = vmand %vm652, %vm684
      %vm717 = vmand %vm653, %vm685
      %vm718 = vmand %vm654, %vm686
      %vm719 = vmand %vm655, %vm687
      %vm720 = vmand %vm656, %vm688
      %vm721 = vmand %vm657, %vm689
      %vm722 = vmand %vm658, %vm690
      %vm723 = vmand %vm659, %vm691
      %vm724 = vmand %vm660, %vm692
      %vm725 = vmand %vm661, %vm693
      %vm726 = vmand %vm662, %vm694
      %vm727 = vmand %vm663, %vm695
      %vm728 = vmand %vm664, %vm696
      %vm729 = vmand %vm665, %vm697
      %vm730 = vmand %vm666, %vm698
      %vm731 = vmand %vm667, %vm699
      %vm732 = vmand %vm668, %vm700
      %vm733 = vmand %vm669, %vm701
      %vm734 = vmand %vm670, %vm702
      %v735 = vadd.s32 %v398, 4294967295
      %v736 = vadd.s32 %v399, 4294967295
      %v737 = vadd.s32 %v400, 4294967295
      %v738 = vadd.s32 %v401, 4294967295
      %v739 = vadd.s32 %v402, 4294967295
      %v740 = vadd.s32 %v403, 4294967295
      %v741 = vadd.s32 %v404, 4294967295
      %v742 = vadd.s32 %v405, 4294967295
      %v743 = vadd.s32 %v406, 4294967295
      %v744 = vadd.s32 %v407, 4294967295
      %v745 = vadd.s32 %v408, 4294967295
      %v746 = vadd.s32 %v409, 4294967295
      %v747 = vadd.s32 %v410, 4294967295
      %v748 = vadd.s32 %v411, 4294967295
      %v749 = vadd.s32 %v412, 4294967295
      %v750 = vadd.s32 %v413, 4294967295
      %v751 = vadd.s32 %v414, 4294967295
      %v752 = vadd.s32 %v415, 4294967295
      %v753 = vadd.s32 %v416, 4294967295
      %v754 = vadd.s32 %v417, 4294967295
      %v755 = vadd.s32 %v418, 4294967295
      %v756 = vadd.s32 %v419, 4294967295
      %v757 = vadd.s32 %v420, 4294967295
      %v758 = vadd.s32 %v421, 4294967295
      %v759 = vadd.s32 %v422, 4294967295
      %v760 = vadd.s32 %v423, 4294967295
      %v761 = vadd.s32 %v424, 4294967295
      %v762 = vadd.s32 %v425, 4294967295
      %v763 = vadd.s32 %v426, 4294967295
      %v764 = vadd.s32 %v427, 4294967295
      %v765 = vadd.s32 %v428, 4294967295
      %v766 = vadd.s32 %v429, 4294967295
      %vm767 = vcmp.ge.s32.totalorder %v735, 0
      %vm768 = vcmp.ge.s32.totalorder %v736, 0
      %vm769 = vcmp.ge.s32.totalorder %v737, 0
      %vm770 = vcmp.ge.s32.totalorder %v738, 0
      %vm771 = vcmp.ge.s32.totalorder %v739, 0
      %vm772 = vcmp.ge.s32.totalorder %v740, 0
      %vm773 = vcmp.ge.s32.totalorder %v741, 0
      %vm774 = vcmp.ge.s32.totalorder %v742, 0
      %vm775 = vcmp.ge.s32.totalorder %v743, 0
      %vm776 = vcmp.ge.s32.totalorder %v744, 0
      %vm777 = vcmp.ge.s32.totalorder %v745, 0
      %vm778 = vcmp.ge.s32.totalorder %v746, 0
      %vm779 = vcmp.ge.s32.totalorder %v747, 0
      %vm780 = vcmp.ge.s32.totalorder %v748, 0
      %vm781 = vcmp.ge.s32.totalorder %v749, 0
      %vm782 = vcmp.ge.s32.totalorder %v750, 0
      %vm783 = vcmp.ge.s32.totalorder %v751, 0
      %vm784 = vcmp.ge.s32.totalorder %v752, 0
      %vm785 = vcmp.ge.s32.totalorder %v753, 0
      %vm786 = vcmp.ge.s32.totalorder %v754, 0
      %vm787 = vcmp.ge.s32.totalorder %v755, 0
      %vm788 = vcmp.ge.s32.totalorder %v756, 0
      %vm789 = vcmp.ge.s32.totalorder %v757, 0
      %vm790 = vcmp.ge.s32.totalorder %v758, 0
      %vm791 = vcmp.ge.s32.totalorder %v759, 0
      %vm792 = vcmp.ge.s32.totalorder %v760, 0
      %vm793 = vcmp.ge.s32.totalorder %v761, 0
      %vm794 = vcmp.ge.s32.totalorder %v762, 0
      %vm795 = vcmp.ge.s32.totalorder %v763, 0
      %vm796 = vcmp.ge.s32.totalorder %v764, 0
      %vm797 = vcmp.ge.s32.totalorder %v765, 0
      %vm798 = vcmp.ge.s32.totalorder %v766, 0
      %vm799 = vmand %vm703, %vm767
      %vm800 = vmand %vm704, %vm768
      %vm801 = vmand %vm705, %vm769
      %vm802 = vmand %vm706, %vm770
      %vm803 = vmand %vm707, %vm771
      %vm804 = vmand %vm708, %vm772
      %vm805 = vmand %vm709, %vm773
      %vm806 = vmand %vm710, %vm774
      %vm807 = vmand %vm711, %vm775
      %vm808 = vmand %vm712, %vm776
      %vm809 = vmand %vm713, %vm777
      %vm810 = vmand %vm714, %vm778
      %vm811 = vmand %vm715, %vm779
      %vm812 = vmand %vm716, %vm780
      %vm813 = vmand %vm717, %vm781
      %vm814 = vmand %vm718, %vm782
      %vm815 = vmand %vm719, %vm783
      %vm816 = vmand %vm720, %vm784
      %vm817 = vmand %vm721, %vm785
      %vm818 = vmand %vm722, %vm786
      %vm819 = vmand %vm723, %vm787
      %vm820 = vmand %vm724, %vm788
      %vm821 = vmand %vm725, %vm789
      %vm822 = vmand %vm726, %vm790
      %vm823 = vmand %vm727, %vm791
      %vm824 = vmand %vm728, %vm792
      %vm825 = vmand %vm729, %vm793
      %vm826 = vmand %vm730, %vm794
      %vm827 = vmand %vm731, %vm795
      %vm828 = vmand %vm732, %vm796
      %vm829 = vmand %vm733, %vm797
      %vm830 = vmand %vm734, %vm798
      %vm831 = vcmp.lt.s32.totalorder %v735, 16
      %vm832 = vcmp.lt.s32.totalorder %v736, 16
      %vm833 = vcmp.lt.s32.totalorder %v737, 16
      %vm834 = vcmp.lt.s32.totalorder %v738, 16
      %vm835 = vcmp.lt.s32.totalorder %v739, 16
      %vm836 = vcmp.lt.s32.totalorder %v740, 16
      %vm837 = vcmp.lt.s32.totalorder %v741, 16
      %vm838 = vcmp.lt.s32.totalorder %v742, 16
      %vm839 = vcmp.lt.s32.totalorder %v743, 16
      %vm840 = vcmp.lt.s32.totalorder %v744, 16
      %vm841 = vcmp.lt.s32.totalorder %v745, 16
      %vm842 = vcmp.lt.s32.totalorder %v746, 16
      %vm843 = vcmp.lt.s32.totalorder %v747, 16
      %vm844 = vcmp.lt.s32.totalorder %v748, 16
      %vm845 = vcmp.lt.s32.totalorder %v749, 16
      %vm846 = vcmp.lt.s32.totalorder %v750, 16
      %vm847 = vcmp.lt.s32.totalorder %v751, 16
      %vm848 = vcmp.lt.s32.totalorder %v752, 16
      %vm849 = vcmp.lt.s32.totalorder %v753, 16
      %vm850 = vcmp.lt.s32.totalorder %v754, 16
      %vm851 = vcmp.lt.s32.totalorder %v755, 16
      %vm852 = vcmp.lt.s32.totalorder %v756, 16
      %vm853 = vcmp.lt.s32.totalorder %v757, 16
      %vm854 = vcmp.lt.s32.totalorder %v758, 16
      %vm855 = vcmp.lt.s32.totalorder %v759, 16
      %vm856 = vcmp.lt.s32.totalorder %v760, 16
      %vm857 = vcmp.lt.s32.totalorder %v761, 16
      %vm858 = vcmp.lt.s32.totalorder %v762, 16
      %vm859 = vcmp.lt.s32.totalorder %v763, 16
      %vm860 = vcmp.lt.s32.totalorder %v764, 16
      %vm861 = vcmp.lt.s32.totalorder %v765, 16
      %vm862 = vcmp.lt.s32.totalorder %v766, 16
      %vm863 = vmand %vm799, %vm831
      %vm864 = vmand %vm800, %vm832
      %vm865 = vmand %vm801, %vm833
      %vm866 = vmand %vm802, %vm834
      %vm867 = vmand %vm803, %vm835
      %vm868 = vmand %vm804, %vm836
      %vm869 = vmand %vm805, %vm837
      %vm870 = vmand %vm806, %vm838
      %vm871 = vmand %vm807, %vm839
      %vm872 = vmand %vm808, %vm840
      %vm873 = vmand %vm809, %vm841
      %vm874 = vmand %vm810, %vm842
      %vm875 = vmand %vm811, %vm843
      %vm876 = vmand %vm812, %vm844
      %vm877 = vmand %vm813, %vm845
      %vm878 = vmand %vm814, %vm846
      %vm879 = vmand %vm815, %vm847
      %vm880 = vmand %vm816, %vm848
      %vm881 = vmand %vm817, %vm849
      %vm882 = vmand %vm818, %vm850
      %vm883 = vmand %vm819, %vm851
      %vm884 = vmand %vm820, %vm852
      %vm885 = vmand %vm821, %vm853
      %vm886 = vmand %vm822, %vm854
      %vm887 = vmand %vm823, %vm855
      %vm888 = vmand %vm824, %vm856
      %vm889 = vmand %vm825, %vm857
      %vm890 = vmand %vm826, %vm858
      %vm891 = vmand %vm827, %vm859
      %vm892 = vmand %vm828, %vm860
      %vm893 = vmand %vm829, %vm861
      %vm894 = vmand %vm830, %vm862
      %v895 = vsel %vm863, 1, 0
      %v896 = vsel %vm864, 1, 0
      %v897 = vsel %vm865, 1, 0
      %v898 = vsel %vm866, 1, 0
      %v899 = vsel %vm867, 1, 0
      %v900 = vsel %vm868, 1, 0
      %v901 = vsel %vm869, 1, 0
      %v902 = vsel %vm870, 1, 0
      %v903 = vsel %vm871, 1, 0
      %v904 = vsel %vm872, 1, 0
      %v905 = vsel %vm873, 1, 0
      %v906 = vsel %vm874, 1, 0
      %v907 = vsel %vm875, 1, 0
      %v908 = vsel %vm876, 1, 0
      %v909 = vsel %vm877, 1, 0
      %v910 = vsel %vm878, 1, 0
      %v911 = vsel %vm879, 1, 0
      %v912 = vsel %vm880, 1, 0
      %v913 = vsel %vm881, 1, 0
      %v914 = vsel %vm882, 1, 0
      %v915 = vsel %vm883, 1, 0
      %v916 = vsel %vm884, 1, 0
      %v917 = vsel %vm885, 1, 0
      %v918 = vsel %vm886, 1, 0
      %v919 = vsel %vm887, 1, 0
      %v920 = vsel %vm888, 1, 0
      %v921 = vsel %vm889, 1, 0
      %v922 = vsel %vm890, 1, 0
      %v923 = vsel %vm891, 1, 0
      %v924 = vsel %vm892, 1, 0
      %v925 = vsel %vm893, 1, 0
      %v926 = vsel %vm894, 1, 0
      %927 = vset.pattern.permute.xlu0 0
      %928 = vperm.xlu0 %927, %v895
      %v929 = vpop.permute.xlu0 %928
      %930 = vset.pattern.permute.xlu0 0
      %931 = vperm.xlu0 %930, %v896
      %v932 = vpop.permute.xlu0 %931
      %933 = vset.pattern.permute.xlu0 0
      %934 = vperm.xlu0 %933, %v897
      %v935 = vpop.permute.xlu0 %934
      %936 = vset.pattern.permute.xlu0 0
      %937 = vperm.xlu0 %936, %v898
      %v938 = vpop.permute.xlu0 %937
      %939 = vset.pattern.permute.xlu0 0
      %940 = vperm.xlu0 %939, %v899
      %v941 = vpop.permute.xlu0 %940
      %942 = vset.pattern.permute.xlu0 0
      %943 = vperm.xlu0 %942, %v900
      %v944 = vpop.permute.xlu0 %943
      %945 = vset.pattern.permute.xlu0 0
      %946 = vperm.xlu0 %945, %v901
      %v947 = vpop.permute.xlu0 %946
      %948 = vset.pattern.permute.xlu0 0
      %949 = vperm.xlu0 %948, %v902
      %v950 = vpop.permute.xlu0 %949
      %951 = vset.pattern.permute.xlu0 0
      %952 = vperm.xlu0 %951, %v903
      %v953 = vpop.permute.xlu0 %952
      %954 = vset.pattern.permute.xlu0 0
      %955 = vperm.xlu0 %954, %v904
      %v956 = vpop.permute.xlu0 %955
      %957 = vset.pattern.permute.xlu0 0
      %958 = vperm.xlu0 %957, %v905
      %v959 = vpop.permute.xlu0 %958
      %960 = vset.pattern.permute.xlu0 0
      %961 = vperm.xlu0 %960, %v906
      %v962 = vpop.permute.xlu0 %961
      %963 = vset.pattern.permute.xlu0 0
      %964 = vperm.xlu0 %963, %v907
      %v965 = vpop.permute.xlu0 %964
      %966 = vset.pattern.permute.xlu0 0
      %967 = vperm.xlu0 %966, %v908
      %v968 = vpop.permute.xlu0 %967
      %969 = vset.pattern.permute.xlu0 0
      %970 = vperm.xlu0 %969, %v909
      %v971 = vpop.permute.xlu0 %970
      %972 = vset.pattern.permute.xlu0 0
      %973 = vperm.xlu0 %972, %v910
      %v974 = vpop.permute.xlu0 %973
      %975 = vset.pattern.permute.xlu0 0
      %976 = vperm.xlu0 %975, %v911
      %v977 = vpop.permute.xlu0 %976
      %978 = vset.pattern.permute.xlu0 0
      %979 = vperm.xlu0 %978, %v912
      %v980 = vpop.permute.xlu0 %979
      %981 = vset.pattern.permute.xlu0 0
      %982 = vperm.xlu0 %981, %v913
      %v983 = vpop.permute.xlu0 %982
      %984 = vset.pattern.permute.xlu0 0
      %985 = vperm.xlu0 %984, %v914
      %v986 = vpop.permute.xlu0 %985
      %987 = vset.pattern.permute.xlu0 0
      %988 = vperm.xlu0 %987, %v915
      %v989 = vpop.permute.xlu0 %988
      %990 = vset.pattern.permute.xlu0 0
      %991 = vperm.xlu0 %990, %v916
      %v992 = vpop.permute.xlu0 %991
      %993 = vset.pattern.permute.xlu0 0
      %994 = vperm.xlu0 %993, %v917
      %v995 = vpop.permute.xlu0 %994
      %996 = vset.pattern.permute.xlu0 0
      %997 = vperm.xlu0 %996, %v918
      %v998 = vpop.permute.xlu0 %997
      %999 = vset.pattern.permute.xlu0 0
      %1000 = vperm.xlu0 %999, %v919
      %v1001 = vpop.permute.xlu0 %1000
      %1002 = vset.pattern.permute.xlu0 0
      %1003 = vperm.xlu0 %1002, %v920
      %v1004 = vpop.permute.xlu0 %1003
      %1005 = vset.pattern.permute.xlu0 0
      %1006 = vperm.xlu0 %1005, %v921
      %v1007 = vpop.permute.xlu0 %1006
      %1008 = vset.pattern.permute.xlu0 0
      %1009 = vperm.xlu0 %1008, %v922
      %v1010 = vpop.permute.xlu0 %1009
      %1011 = vset.pattern.permute.xlu0 0
      %1012 = vperm.xlu0 %1011, %v923
      %v1013 = vpop.permute.xlu0 %1012
      %1014 = vset.pattern.permute.xlu0 0
      %1015 = vperm.xlu0 %1014, %v924
      %v1016 = vpop.permute.xlu0 %1015
      %1017 = vset.pattern.permute.xlu0 0
      %1018 = vperm.xlu0 %1017, %v925
      %v1019 = vpop.permute.xlu0 %1018
      %1020 = vset.pattern.permute.xlu0 0
      %1021 = vperm.xlu0 %1020, %v926
      %v1022 = vpop.permute.xlu0 %1021
      %vm1023 = vcmp.eq.s32.totalorder %v929, 1
      %vm1024 = vcmp.eq.s32.totalorder %v932, 1
      %vm1025 = vcmp.eq.s32.totalorder %v935, 1
      %vm1026 = vcmp.eq.s32.totalorder %v938, 1
      %vm1027 = vcmp.eq.s32.totalorder %v941, 1
      %vm1028 = vcmp.eq.s32.totalorder %v944, 1
      %vm1029 = vcmp.eq.s32.totalorder %v947, 1
      %vm1030 = vcmp.eq.s32.totalorder %v950, 1
      %vm1031 = vcmp.eq.s32.totalorder %v953, 1
      %vm1032 = vcmp.eq.s32.totalorder %v956, 1
      %vm1033 = vcmp.eq.s32.totalorder %v959, 1
      %vm1034 = vcmp.eq.s32.totalorder %v962, 1
      %vm1035 = vcmp.eq.s32.totalorder %v965, 1
      %vm1036 = vcmp.eq.s32.totalorder %v968, 1
      %vm1037 = vcmp.eq.s32.totalorder %v971, 1
      %vm1038 = vcmp.eq.s32.totalorder %v974, 1
      %vm1039 = vcmp.eq.s32.totalorder %v977, 1
      %vm1040 = vcmp.eq.s32.totalorder %v980, 1
      %vm1041 = vcmp.eq.s32.totalorder %v983, 1
      %vm1042 = vcmp.eq.s32.totalorder %v986, 1
      %vm1043 = vcmp.eq.s32.totalorder %v989, 1
      %vm1044 = vcmp.eq.s32.totalorder %v992, 1
      %vm1045 = vcmp.eq.s32.totalorder %v995, 1
      %vm1046 = vcmp.eq.s32.totalorder %v998, 1
      %vm1047 = vcmp.eq.s32.totalorder %v1001, 1
      %vm1048 = vcmp.eq.s32.totalorder %v1004, 1
      %vm1049 = vcmp.eq.s32.totalorder %v1007, 1
      %vm1050 = vcmp.eq.s32.totalorder %v1010, 1
      %vm1051 = vcmp.eq.s32.totalorder %v1013, 1
      %vm1052 = vcmp.eq.s32.totalorder %v1016, 1
      %vm1053 = vcmp.eq.s32.totalorder %v1019, 1
      %vm1054 = vcmp.eq.s32.totalorder %v1022, 1
      %v1055 = vsel %vm1023, %v576, 0.0
      %v1056 = vsel %vm1024, %v575, 0.0
      %v1057 = vsel %vm1025, %v606, 0.0
      %v1058 = vsel %vm1026, %v605, 0.0
      %v1059 = vsel %vm1027, %v604, 0.0
      %v1060 = vsel %vm1028, %v603, 0.0
      %v1061 = vsel %vm1029, %v602, 0.0
      %v1062 = vsel %vm1030, %v601, 0.0
      %v1063 = vsel %vm1031, %v600, 0.0
      %v1064 = vsel %vm1032, %v599, 0.0
      %v1065 = vsel %vm1033, %v598, 0.0
      %v1066 = vsel %vm1034, %v597, 0.0
      %v1067 = vsel %vm1035, %v596, 0.0
      %v1068 = vsel %vm1036, %v595, 0.0
      %v1069 = vsel %vm1037, %v594, 0.0
      %v1070 = vsel %vm1038, %v593, 0.0
      %v1071 = vsel %vm1039, %v592, 0.0
      %v1072 = vsel %vm1040, %v591, 0.0
      %v1073 = vsel %vm1041, %v590, 0.0
      %v1074 = vsel %vm1042, %v589, 0.0
      %v1075 = vsel %vm1043, %v588, 0.0
      %v1076 = vsel %vm1044, %v587, 0.0
      %v1077 = vsel %vm1045, %v586, 0.0
      %v1078 = vsel %vm1046, %v585, 0.0
      %v1079 = vsel %vm1047, %v584, 0.0
      %v1080 = vsel %vm1048, %v583, 0.0
      %v1081 = vsel %vm1049, %v582, 0.0
      %v1082 = vsel %vm1050, %v581, 0.0
      %v1083 = vsel %vm1051, %v580, 0.0
      %v1084 = vsel %vm1052, %v579, 0.0
      %v1085 = vsel %vm1053, %v578, 0.0
      %v1086 = vsel %vm1054, %v577, 0.0
      %v1087 = vpack.c.bf16 %v1056, %v1055
      %v1088 = vpack.c.bf16 %v1058, %v1057
      %v1089 = vpack.c.bf16 %v1060, %v1059
      %v1090 = vpack.c.bf16 %v1062, %v1061
      %v1091 = vpack.c.bf16 %v1064, %v1063
      %v1092 = vpack.c.bf16 %v1066, %v1065
      %v1093 = vpack.c.bf16 %v1068, %v1067
      %v1094 = vpack.c.bf16 %v1070, %v1069
      %v1095 = vpack.c.bf16 %v1072, %v1071
      %v1096 = vpack.c.bf16 %v1074, %v1073
      %v1097 = vpack.c.bf16 %v1076, %v1075
      %v1098 = vpack.c.bf16 %v1078, %v1077
      %v1099 = vpack.c.bf16 %v1080, %v1079
      %v1100 = vpack.c.bf16 %v1082, %v1081
      %v1101 = vpack.c.bf16 %v1084, %v1083
      %v1102 = vpack.c.bf16 %v1086, %v1085
      %vm1103 = vcmp.ge.s32.totalorder %v398, 0
      %vm1104 = vcmp.ge.s32.totalorder %v399, 0
      %vm1105 = vcmp.ge.s32.totalorder %v400, 0
      %vm1106 = vcmp.ge.s32.totalorder %v401, 0
      %vm1107 = vcmp.ge.s32.totalorder %v402, 0
      %vm1108 = vcmp.ge.s32.totalorder %v403, 0
      %vm1109 = vcmp.ge.s32.totalorder %v404, 0
      %vm1110 = vcmp.ge.s32.totalorder %v405, 0
      %vm1111 = vcmp.ge.s32.totalorder %v406, 0
      %vm1112 = vcmp.ge.s32.totalorder %v407, 0
      %vm1113 = vcmp.ge.s32.totalorder %v408, 0
      %vm1114 = vcmp.ge.s32.totalorder %v409, 0
      %vm1115 = vcmp.ge.s32.totalorder %v410, 0
      %vm1116 = vcmp.ge.s32.totalorder %v411, 0
      %vm1117 = vcmp.ge.s32.totalorder %v412, 0
      %vm1118 = vcmp.ge.s32.totalorder %v413, 0
      %vm1119 = vcmp.ge.s32.totalorder %v414, 0
      %vm1120 = vcmp.ge.s32.totalorder %v415, 0
      %vm1121 = vcmp.ge.s32.totalorder %v416, 0
      %vm1122 = vcmp.ge.s32.totalorder %v417, 0
      %vm1123 = vcmp.ge.s32.totalorder %v418, 0
      %vm1124 = vcmp.ge.s32.totalorder %v419, 0
      %vm1125 = vcmp.ge.s32.totalorder %v420, 0
      %vm1126 = vcmp.ge.s32.totalorder %v421, 0
      %vm1127 = vcmp.ge.s32.totalorder %v422, 0
      %vm1128 = vcmp.ge.s32.totalorder %v423, 0
      %vm1129 = vcmp.ge.s32.totalorder %v424, 0
      %vm1130 = vcmp.ge.s32.totalorder %v425, 0
      %vm1131 = vcmp.ge.s32.totalorder %v426, 0
      %vm1132 = vcmp.ge.s32.totalorder %v427, 0
      %vm1133 = vcmp.ge.s32.totalorder %v428, 0
      %vm1134 = vcmp.ge.s32.totalorder %v429, 0
      %vm1135 = vmand %vm703, %vm1103
      %vm1136 = vmand %vm704, %vm1104
      %vm1137 = vmand %vm705, %vm1105
      %vm1138 = vmand %vm706, %vm1106
      %vm1139 = vmand %vm707, %vm1107
      %vm1140 = vmand %vm708, %vm1108
      %vm1141 = vmand %vm709, %vm1109
      %vm1142 = vmand %vm710, %vm1110
      %vm1143 = vmand %vm711, %vm1111
      %vm1144 = vmand %vm712, %vm1112
      %vm1145 = vmand %vm713, %vm1113
      %vm1146 = vmand %vm714, %vm1114
      %vm1147 = vmand %vm715, %vm1115
      %vm1148 = vmand %vm716, %vm1116
      %vm1149 = vmand %vm717, %vm1117
      %vm1150 = vmand %vm718, %vm1118
      %vm1151 = vmand %vm719, %vm1119
      %vm1152 = vmand %vm720, %vm1120
      %vm1153 = vmand %vm721, %vm1121
      %vm1154 = vmand %vm722, %vm1122
      %vm1155 = vmand %vm723, %vm1123
      %vm1156 = vmand %vm724, %vm1124
      %vm1157 = vmand %vm725, %vm1125
      %vm1158 = vmand %vm726, %vm1126
      %vm1159 = vmand %vm727, %vm1127
      %vm1160 = vmand %vm728, %vm1128
      %vm1161 = vmand %vm729, %vm1129
      %vm1162 = vmand %vm730, %vm1130
      %vm1163 = vmand %vm731, %vm1131
      %vm1164 = vmand %vm732, %vm1132
      %vm1165 = vmand %vm733, %vm1133
      %vm1166 = vmand %vm734, %vm1134
      %vm1167 = vcmp.lt.s32.totalorder %v398, 16
      %vm1168 = vcmp.lt.s32.totalorder %v399, 16
      %vm1169 = vcmp.lt.s32.totalorder %v400, 16
      %vm1170 = vcmp.lt.s32.totalorder %v401, 16
      %vm1171 = vcmp.lt.s32.totalorder %v402, 16
      %vm1172 = vcmp.lt.s32.totalorder %v403, 16
      %vm1173 = vcmp.lt.s32.totalorder %v404, 16
      %vm1174 = vcmp.lt.s32.totalorder %v405, 16
      %vm1175 = vcmp.lt.s32.totalorder %v406, 16
      %vm1176 = vcmp.lt.s32.totalorder %v407, 16
      %vm1177 = vcmp.lt.s32.totalorder %v408, 16
      %vm1178 = vcmp.lt.s32.totalorder %v409, 16
      %vm1179 = vcmp.lt.s32.totalorder %v410, 16
      %vm1180 = vcmp.lt.s32.totalorder %v411, 16
      %vm1181 = vcmp.lt.s32.totalorder %v412, 16
      %vm1182 = vcmp.lt.s32.totalorder %v413, 16
      %vm1183 = vcmp.lt.s32.totalorder %v414, 16
      %vm1184 = vcmp.lt.s32.totalorder %v415, 16
      %vm1185 = vcmp.lt.s32.totalorder %v416, 16
      %vm1186 = vcmp.lt.s32.totalorder %v417, 16
      %vm1187 = vcmp.lt.s32.totalorder %v418, 16
      %vm1188 = vcmp.lt.s32.totalorder %v419, 16
      %vm1189 = vcmp.lt.s32.totalorder %v420, 16
      %vm1190 = vcmp.lt.s32.totalorder %v421, 16
      %vm1191 = vcmp.lt.s32.totalorder %v422, 16
      %vm1192 = vcmp.lt.s32.totalorder %v423, 16
      %vm1193 = vcmp.lt.s32.totalorder %v424, 16
      %vm1194 = vcmp.lt.s32.totalorder %v425, 16
      %vm1195 = vcmp.lt.s32.totalorder %v426, 16
      %vm1196 = vcmp.lt.s32.totalorder %v427, 16
      %vm1197 = vcmp.lt.s32.totalorder %v428, 16
      %vm1198 = vcmp.lt.s32.totalorder %v429, 16
      %vm1199 = vmand %vm1135, %vm1167
      %vm1200 = vmand %vm1136, %vm1168
      %vm1201 = vmand %vm1137, %vm1169
      %vm1202 = vmand %vm1138, %vm1170
      %vm1203 = vmand %vm1139, %vm1171
      %vm1204 = vmand %vm1140, %vm1172
      %vm1205 = vmand %vm1141, %vm1173
      %vm1206 = vmand %vm1142, %vm1174
      %vm1207 = vmand %vm1143, %vm1175
      %vm1208 = vmand %vm1144, %vm1176
      %vm1209 = vmand %vm1145, %vm1177
      %vm1210 = vmand %vm1146, %vm1178
      %vm1211 = vmand %vm1147, %vm1179
      %vm1212 = vmand %vm1148, %vm1180
      %vm1213 = vmand %vm1149, %vm1181
      %vm1214 = vmand %vm1150, %vm1182
      %vm1215 = vmand %vm1151, %vm1183
      %vm1216 = vmand %vm1152, %vm1184
      %vm1217 = vmand %vm1153, %vm1185
      %vm1218 = vmand %vm1154, %vm1186
      %vm1219 = vmand %vm1155, %vm1187
      %vm1220 = vmand %vm1156, %vm1188
      %vm1221 = vmand %vm1157, %vm1189
      %vm1222 = vmand %vm1158, %vm1190
      %vm1223 = vmand %vm1159, %vm1191
      %vm1224 = vmand %vm1160, %vm1192
      %vm1225 = vmand %vm1161, %vm1193
      %vm1226 = vmand %vm1162, %vm1194
      %vm1227 = vmand %vm1163, %vm1195
      %vm1228 = vmand %vm1164, %vm1196
      %vm1229 = vmand %vm1165, %vm1197
      %vm1230 = vmand %vm1166, %vm1198
      %v1231 = vsel %vm1199, 1, 0
      %v1232 = vsel %vm1200, 1, 0
      %v1233 = vsel %vm1201, 1, 0
      %v1234 = vsel %vm1202, 1, 0
      %v1235 = vsel %vm1203, 1, 0
      %v1236 = vsel %vm1204, 1, 0
      %v1237 = vsel %vm1205, 1, 0
      %v1238 = vsel %vm1206, 1, 0
      %v1239 = vsel %vm1207, 1, 0
      %v1240 = vsel %vm1208, 1, 0
      %v1241 = vsel %vm1209, 1, 0
      %v1242 = vsel %vm1210, 1, 0
      %v1243 = vsel %vm1211, 1, 0
      %v1244 = vsel %vm1212, 1, 0
      %v1245 = vsel %vm1213, 1, 0
      %v1246 = vsel %vm1214, 1, 0
      %v1247 = vsel %vm1215, 1, 0
      %v1248 = vsel %vm1216, 1, 0
      %v1249 = vsel %vm1217, 1, 0
      %v1250 = vsel %vm1218, 1, 0
      %v1251 = vsel %vm1219, 1, 0
      %v1252 = vsel %vm1220, 1, 0
      %v1253 = vsel %vm1221, 1, 0
      %v1254 = vsel %vm1222, 1, 0
      %v1255 = vsel %vm1223, 1, 0
      %v1256 = vsel %vm1224, 1, 0
      %v1257 = vsel %vm1225, 1, 0
      %v1258 = vsel %vm1226, 1, 0
      %v1259 = vsel %vm1227, 1, 0
      %v1260 = vsel %vm1228, 1, 0
      %v1261 = vsel %vm1229, 1, 0
      %v1262 = vsel %vm1230, 1, 0
      %1263 = vset.pattern.permute.xlu0 0
      %1264 = vperm.xlu0 %1263, %v1231
      %v1265 = vpop.permute.xlu0 %1264
      %1266 = vset.pattern.permute.xlu0 0
      %1267 = vperm.xlu0 %1266, %v1232
      %v1268 = vpop.permute.xlu0 %1267
      %1269 = vset.pattern.permute.xlu0 0
      %1270 = vperm.xlu0 %1269, %v1233
      %v1271 = vpop.permute.xlu0 %1270
      %1272 = vset.pattern.permute.xlu0 0
      %1273 = vperm.xlu0 %1272, %v1234
      %v1274 = vpop.permute.xlu0 %1273
      %1275 = vset.pattern.permute.xlu0 0
      %1276 = vperm.xlu0 %1275, %v1235
      %v1277 = vpop.permute.xlu0 %1276
      %1278 = vset.pattern.permute.xlu0 0
      %1279 = vperm.xlu0 %1278, %v1236
      %v1280 = vpop.permute.xlu0 %1279
      %1281 = vset.pattern.permute.xlu0 0
      %1282 = vperm.xlu0 %1281, %v1237
      %v1283 = vpop.permute.xlu0 %1282
      %1284 = vset.pattern.permute.xlu0 0
      %1285 = vperm.xlu0 %1284, %v1238
      %v1286 = vpop.permute.xlu0 %1285
      %1287 = vset.pattern.permute.xlu0 0
      %1288 = vperm.xlu0 %1287, %v1239
      %v1289 = vpop.permute.xlu0 %1288
      %1290 = vset.pattern.permute.xlu0 0
      %1291 = vperm.xlu0 %1290, %v1240
      %v1292 = vpop.permute.xlu0 %1291
      %1293 = vset.pattern.permute.xlu0 0
      %1294 = vperm.xlu0 %1293, %v1241
      %v1295 = vpop.permute.xlu0 %1294
      %1296 = vset.pattern.permute.xlu0 0
      %1297 = vperm.xlu0 %1296, %v1242
      %v1298 = vpop.permute.xlu0 %1297
      %1299 = vset.pattern.permute.xlu0 0
      %1300 = vperm.xlu0 %1299, %v1243
      %v1301 = vpop.permute.xlu0 %1300
      %1302 = vset.pattern.permute.xlu0 0
      %1303 = vperm.xlu0 %1302, %v1244
      %v1304 = vpop.permute.xlu0 %1303
      %1305 = vset.pattern.permute.xlu0 0
      %1306 = vperm.xlu0 %1305, %v1245
      %v1307 = vpop.permute.xlu0 %1306
      %1308 = vset.pattern.permute.xlu0 0
      %1309 = vperm.xlu0 %1308, %v1246
      %v1310 = vpop.permute.xlu0 %1309
      %1311 = vset.pattern.permute.xlu0 0
      %1312 = vperm.xlu0 %1311, %v1247
      %v1313 = vpop.permute.xlu0 %1312
      %1314 = vset.pattern.permute.xlu0 0
      %1315 = vperm.xlu0 %1314, %v1248
      %v1316 = vpop.permute.xlu0 %1315
      %1317 = vset.pattern.permute.xlu0 0
      %1318 = vperm.xlu0 %1317, %v1249
      %v1319 = vpop.permute.xlu0 %1318
      %1320 = vset.pattern.permute.xlu0 0
      %1321 = vperm.xlu0 %1320, %v1250
      %v1322 = vpop.permute.xlu0 %1321
      %1323 = vset.pattern.permute.xlu0 0
      %1324 = vperm.xlu0 %1323, %v1251
      %v1325 = vpop.permute.xlu0 %1324
      %1326 = vset.pattern.permute.xlu0 0
      %1327 = vperm.xlu0 %1326, %v1252
      %v1328 = vpop.permute.xlu0 %1327
      %1329 = vset.pattern.permute.xlu0 0
      %1330 = vperm.xlu0 %1329, %v1253
      %v1331 = vpop.permute.xlu0 %1330
      %1332 = vset.pattern.permute.xlu0 0
      %1333 = vperm.xlu0 %1332, %v1254
      %v1334 = vpop.permute.xlu0 %1333
      %1335 = vset.pattern.permute.xlu0 0
      %1336 = vperm.xlu0 %1335, %v1255
      %v1337 = vpop.permute.xlu0 %1336
      %1338 = vset.pattern.permute.xlu0 0
      %1339 = vperm.xlu0 %1338, %v1256
      %v1340 = vpop.permute.xlu0 %1339
      %1341 = vset.pattern.permute.xlu0 0
      %1342 = vperm.xlu0 %1341, %v1257
      %v1343 = vpop.permute.xlu0 %1342
      %1344 = vset.pattern.permute.xlu0 0
      %1345 = vperm.xlu0 %1344, %v1258
      %v1346 = vpop.permute.xlu0 %1345
      %1347 = vset.pattern.permute.xlu0 0
      %1348 = vperm.xlu0 %1347, %v1259
      %v1349 = vpop.permute.xlu0 %1348
      %1350 = vset.pattern.permute.xlu0 0
      %1351 = vperm.xlu0 %1350, %v1260
      %v1352 = vpop.permute.xlu0 %1351
      %1353 = vset.pattern.permute.xlu0 0
      %1354 = vperm.xlu0 %1353, %v1261
      %v1355 = vpop.permute.xlu0 %1354
      %1356 = vset.pattern.permute.xlu0 0
      %1357 = vperm.xlu0 %1356, %v1262
      %v1358 = vpop.permute.xlu0 %1357
      %vm1359 = vcmp.eq.s32.totalorder %v1265, 1
      %vm1360 = vcmp.eq.s32.totalorder %v1268, 1
      %vm1361 = vcmp.eq.s32.totalorder %v1271, 1
      %vm1362 = vcmp.eq.s32.totalorder %v1274, 1
      %vm1363 = vcmp.eq.s32.totalorder %v1277, 1
      %vm1364 = vcmp.eq.s32.totalorder %v1280, 1
      %vm1365 = vcmp.eq.s32.totalorder %v1283, 1
      %vm1366 = vcmp.eq.s32.totalorder %v1286, 1
      %vm1367 = vcmp.eq.s32.totalorder %v1289, 1
      %vm1368 = vcmp.eq.s32.totalorder %v1292, 1
      %vm1369 = vcmp.eq.s32.totalorder %v1295, 1
      %vm1370 = vcmp.eq.s32.totalorder %v1298, 1
      %vm1371 = vcmp.eq.s32.totalorder %v1301, 1
      %vm1372 = vcmp.eq.s32.totalorder %v1304, 1
      %vm1373 = vcmp.eq.s32.totalorder %v1307, 1
      %vm1374 = vcmp.eq.s32.totalorder %v1310, 1
      %vm1375 = vcmp.eq.s32.totalorder %v1313, 1
      %vm1376 = vcmp.eq.s32.totalorder %v1316, 1
      %vm1377 = vcmp.eq.s32.totalorder %v1319, 1
      %vm1378 = vcmp.eq.s32.totalorder %v1322, 1
      %vm1379 = vcmp.eq.s32.totalorder %v1325, 1
      %vm1380 = vcmp.eq.s32.totalorder %v1328, 1
      %vm1381 = vcmp.eq.s32.totalorder %v1331, 1
      %vm1382 = vcmp.eq.s32.totalorder %v1334, 1
      %vm1383 = vcmp.eq.s32.totalorder %v1337, 1
      %vm1384 = vcmp.eq.s32.totalorder %v1340, 1
      %vm1385 = vcmp.eq.s32.totalorder %v1343, 1
      %vm1386 = vcmp.eq.s32.totalorder %v1346, 1
      %vm1387 = vcmp.eq.s32.totalorder %v1349, 1
      %vm1388 = vcmp.eq.s32.totalorder %v1352, 1
      %vm1389 = vcmp.eq.s32.totalorder %v1355, 1
      %vm1390 = vcmp.eq.s32.totalorder %v1358, 1
      %v1391 = vsel %vm1359, %v538, 0.0
      %v1392 = vsel %vm1360, %v539, 0.0
      %v1393 = vsel %vm1361, %v508, 0.0
      %v1394 = vsel %vm1362, %v509, 0.0
      %v1395 = vsel %vm1363, %v510, 0.0
      %v1396 = vsel %vm1364, %v511, 0.0
      %v1397 = vsel %vm1365, %v512, 0.0
      %v1398 = vsel %vm1366, %v513, 0.0
      %v1399 = vsel %vm1367, %v514, 0.0
      %v1400 = vsel %vm1368, %v515, 0.0
      %v1401 = vsel %vm1369, %v516, 0.0
      %v1402 = vsel %vm1370, %v517, 0.0
      %v1403 = vsel %vm1371, %v518, 0.0
      %v1404 = vsel %vm1372, %v519, 0.0
      %v1405 = vsel %vm1373, %v520, 0.0
      %v1406 = vsel %vm1374, %v521, 0.0
      %v1407 = vsel %vm1375, %v522, 0.0
      %v1408 = vsel %vm1376, %v523, 0.0
      %v1409 = vsel %vm1377, %v524, 0.0
      %v1410 = vsel %vm1378, %v525, 0.0
      %v1411 = vsel %vm1379, %v526, 0.0
      %v1412 = vsel %vm1380, %v527, 0.0
      %v1413 = vsel %vm1381, %v528, 0.0
      %v1414 = vsel %vm1382, %v529, 0.0
      %v1415 = vsel %vm1383, %v530, 0.0
      %v1416 = vsel %vm1384, %v531, 0.0
      %v1417 = vsel %vm1385, %v532, 0.0
      %v1418 = vsel %vm1386, %v533, 0.0
      %v1419 = vsel %vm1387, %v534, 0.0
      %v1420 = vsel %vm1388, %v535, 0.0
      %v1421 = vsel %vm1389, %v536, 0.0
      %v1422 = vsel %vm1390, %v537, 0.0
      %v1423 = vpack.c.bf16 %v1392, %v1391
      %v1424 = vpack.c.bf16 %v1394, %v1393
      %v1425 = vpack.c.bf16 %v1396, %v1395
      %v1426 = vpack.c.bf16 %v1398, %v1397
      %v1427 = vpack.c.bf16 %v1400, %v1399
      %v1428 = vpack.c.bf16 %v1402, %v1401
      %v1429 = vpack.c.bf16 %v1404, %v1403
      %v1430 = vpack.c.bf16 %v1406, %v1405
      %v1431 = vpack.c.bf16 %v1408, %v1407
      %v1432 = vpack.c.bf16 %v1410, %v1409
      %v1433 = vpack.c.bf16 %v1412, %v1411
      %v1434 = vpack.c.bf16 %v1414, %v1413
      %v1435 = vpack.c.bf16 %v1416, %v1415
      %v1436 = vpack.c.bf16 %v1418, %v1417
      %v1437 = vpack.c.bf16 %v1420, %v1419
      %v1438 = vpack.c.bf16 %v1422, %v1421
      %v1439 = vrot.slane %v508, 1
      %v1440 = vrot.slane %v509, 1
      %v1441 = vrot.slane %v510, 1
      %v1442 = vrot.slane %v511, 1
      %v1443 = vrot.slane %v512, 1
      %v1444 = vrot.slane %v513, 1
      %v1445 = vrot.slane %v514, 1
      %v1446 = vrot.slane %v515, 1
      %v1447 = vrot.slane %v516, 1
      %v1448 = vrot.slane %v517, 1
      %v1449 = vrot.slane %v518, 1
      %v1450 = vrot.slane %v519, 1
      %v1451 = vrot.slane %v520, 1
      %v1452 = vrot.slane %v521, 1
      %v1453 = vrot.slane %v522, 1
      %v1454 = vrot.slane %v523, 1
      %v1455 = vrot.slane %v524, 1
      %v1456 = vrot.slane %v525, 1
      %v1457 = vrot.slane %v526, 1
      %v1458 = vrot.slane %v527, 1
      %v1459 = vrot.slane %v528, 1
      %v1460 = vrot.slane %v529, 1
      %v1461 = vrot.slane %v530, 1
      %v1462 = vrot.slane %v531, 1
      %v1463 = vrot.slane %v532, 1
      %v1464 = vrot.slane %v533, 1
      %v1465 = vrot.slane %v534, 1
      %v1466 = vrot.slane %v535, 1
      %v1467 = vrot.slane %v536, 1
      %v1468 = vrot.slane %v537, 1
      %v1469 = vrot.slane %v538, 1
      %v1470 = vrot.slane %v539, 1
      %vm1471 = vcmp.lt.s32.totalorder %v573, 7
      %v1472 = vsel %vm1471, %v1469, %v1470
      %v1473 = vsel %vm1471, %v1468, %v1469
      %v1474 = vsel %vm1471, %v1467, %v1468
      %v1475 = vsel %vm1471, %v1466, %v1467
      %v1476 = vsel %vm1471, %v1465, %v1466
      %v1477 = vsel %vm1471, %v1464, %v1465
      %v1478 = vsel %vm1471, %v1463, %v1464
      %v1479 = vsel %vm1471, %v1462, %v1463
      %v1480 = vsel %vm1471, %v1461, %v1462
      %v1481 = vsel %vm1471, %v1460, %v1461
      %v1482 = vsel %vm1471, %v1459, %v1460
      %v1483 = vsel %vm1471, %v1458, %v1459
      %v1484 = vsel %vm1471, %v1457, %v1458
      %v1485 = vsel %vm1471, %v1456, %v1457
      %v1486 = vsel %vm1471, %v1455, %v1456
      %v1487 = vsel %vm1471, %v1454, %v1455
      %v1488 = vsel %vm1471, %v1453, %v1454
      %v1489 = vsel %vm1471, %v1452, %v1453
      %v1490 = vsel %vm1471, %v1451, %v1452
      %v1491 = vsel %vm1471, %v1450, %v1451
      %v1492 = vsel %vm1471, %v1449, %v1450
      %v1493 = vsel %vm1471, %v1448, %v1449
      %v1494 = vsel %vm1471, %v1447, %v1448
      %v1495 = vsel %vm1471, %v1446, %v1447
      %v1496 = vsel %vm1471, %v1445, %v1446
      %v1497 = vsel %vm1471, %v1444, %v1445
      %v1498 = vsel %vm1471, %v1443, %v1444
      %v1499 = vsel %vm1471, %v1442, %v1443
      %v1500 = vsel %vm1471, %v1441, %v1442
      %v1501 = vsel %vm1471, %v1440, %v1441
      %v1502 = vsel %vm1471, %v1439, %v1440
      %v1503 = vsel %vm1471, %v1470, %v1439
      %v1504 = vadd.s32 %v398, 1
      %v1505 = vadd.s32 %v399, 1
      %v1506 = vadd.s32 %v400, 1
      %v1507 = vadd.s32 %v401, 1
      %v1508 = vadd.s32 %v402, 1
      %v1509 = vadd.s32 %v403, 1
      %v1510 = vadd.s32 %v404, 1
      %v1511 = vadd.s32 %v405, 1
      %v1512 = vadd.s32 %v406, 1
      %v1513 = vadd.s32 %v407, 1
      %v1514 = vadd.s32 %v408, 1
      %v1515 = vadd.s32 %v409, 1
      %v1516 = vadd.s32 %v410, 1
      %v1517 = vadd.s32 %v411, 1
      %v1518 = vadd.s32 %v412, 1
      %v1519 = vadd.s32 %v413, 1
      %v1520 = vadd.s32 %v414, 1
      %v1521 = vadd.s32 %v415, 1
      %v1522 = vadd.s32 %v416, 1
      %v1523 = vadd.s32 %v417, 1
      %v1524 = vadd.s32 %v418, 1
      %v1525 = vadd.s32 %v419, 1
      %v1526 = vadd.s32 %v420, 1
      %v1527 = vadd.s32 %v421, 1
      %v1528 = vadd.s32 %v422, 1
      %v1529 = vadd.s32 %v423, 1
      %v1530 = vadd.s32 %v424, 1
      %v1531 = vadd.s32 %v425, 1
      %v1532 = vadd.s32 %v426, 1
      %v1533 = vadd.s32 %v427, 1
      %v1534 = vadd.s32 %v428, 1
      %v1535 = vadd.s32 %v429, 1
      %vm1536 = vcmp.ge.s32.totalorder %v1504, 0
      %vm1537 = vcmp.ge.s32.totalorder %v1505, 0
      %vm1538 = vcmp.ge.s32.totalorder %v1506, 0
      %vm1539 = vcmp.ge.s32.totalorder %v1507, 0
      %vm1540 = vcmp.ge.s32.totalorder %v1508, 0
      %vm1541 = vcmp.ge.s32.totalorder %v1509, 0
      %vm1542 = vcmp.ge.s32.totalorder %v1510, 0
      %vm1543 = vcmp.ge.s32.totalorder %v1511, 0
      %vm1544 = vcmp.ge.s32.totalorder %v1512, 0
      %vm1545 = vcmp.ge.s32.totalorder %v1513, 0
      %vm1546 = vcmp.ge.s32.totalorder %v1514, 0
      %vm1547 = vcmp.ge.s32.totalorder %v1515, 0
      %vm1548 = vcmp.ge.s32.totalorder %v1516, 0
      %vm1549 = vcmp.ge.s32.totalorder %v1517, 0
      %vm1550 = vcmp.ge.s32.totalorder %v1518, 0
      %vm1551 = vcmp.ge.s32.totalorder %v1519, 0
      %vm1552 = vcmp.ge.s32.totalorder %v1520, 0
      %vm1553 = vcmp.ge.s32.totalorder %v1521, 0
      %vm1554 = vcmp.ge.s32.totalorder %v1522, 0
      %vm1555 = vcmp.ge.s32.totalorder %v1523, 0
      %vm1556 = vcmp.ge.s32.totalorder %v1524, 0
      %vm1557 = vcmp.ge.s32.totalorder %v1525, 0
      %vm1558 = vcmp.ge.s32.totalorder %v1526, 0
      %vm1559 = vcmp.ge.s32.totalorder %v1527, 0
      %vm1560 = vcmp.ge.s32.totalorder %v1528, 0
      %vm1561 = vcmp.ge.s32.totalorder %v1529, 0
      %vm1562 = vcmp.ge.s32.totalorder %v1530, 0
      %vm1563 = vcmp.ge.s32.totalorder %v1531, 0
      %vm1564 = vcmp.ge.s32.totalorder %v1532, 0
      %vm1565 = vcmp.ge.s32.totalorder %v1533, 0
      %vm1566 = vcmp.ge.s32.totalorder %v1534, 0
      %vm1567 = vcmp.ge.s32.totalorder %v1535, 0
      %vm1568 = vmand %vm703, %vm1536
      %vm1569 = vmand %vm704, %vm1537
      %vm1570 = vmand %vm705, %vm1538
      %vm1571 = vmand %vm706, %vm1539
      %vm1572 = vmand %vm707, %vm1540
      %vm1573 = vmand %vm708, %vm1541
      %vm1574 = vmand %vm709, %vm1542
      %vm1575 = vmand %vm710, %vm1543
      %vm1576 = vmand %vm711, %vm1544
      %vm1577 = vmand %vm712, %vm1545
      %vm1578 = vmand %vm713, %vm1546
      %vm1579 = vmand %vm714, %vm1547
      %vm1580 = vmand %vm715, %vm1548
      %vm1581 = vmand %vm716, %vm1549
      %vm1582 = vmand %vm717, %vm1550
      %vm1583 = vmand %vm718, %vm1551
      %vm1584 = vmand %vm719, %vm1552
      %vm1585 = vmand %vm720, %vm1553
      %vm1586 = vmand %vm721, %vm1554
      %vm1587 = vmand %vm722, %vm1555
      %vm1588 = vmand %vm723, %vm1556
      %vm1589 = vmand %vm724, %vm1557
      %vm1590 = vmand %vm725, %vm1558
      %vm1591 = vmand %vm726, %vm1559
      %vm1592 = vmand %vm727, %vm1560
      %vm1593 = vmand %vm728, %vm1561
      %vm1594 = vmand %vm729, %vm1562
      %vm1595 = vmand %vm730, %vm1563
      %vm1596 = vmand %vm731, %vm1564
      %vm1597 = vmand %vm732, %vm1565
      %vm1598 = vmand %vm733, %vm1566
      %vm1599 = vmand %vm734, %vm1567
      %vm1600 = vcmp.lt.s32.totalorder %v1504, 16
      %vm1601 = vcmp.lt.s32.totalorder %v1505, 16
      %vm1602 = vcmp.lt.s32.totalorder %v1506, 16
      %vm1603 = vcmp.lt.s32.totalorder %v1507, 16
      %vm1604 = vcmp.lt.s32.totalorder %v1508, 16
      %vm1605 = vcmp.lt.s32.totalorder %v1509, 16
      %vm1606 = vcmp.lt.s32.totalorder %v1510, 16
      %vm1607 = vcmp.lt.s32.totalorder %v1511, 16
      %vm1608 = vcmp.lt.s32.totalorder %v1512, 16
      %vm1609 = vcmp.lt.s32.totalorder %v1513, 16
      %vm1610 = vcmp.lt.s32.totalorder %v1514, 16
      %vm1611 = vcmp.lt.s32.totalorder %v1515, 16
      %vm1612 = vcmp.lt.s32.totalorder %v1516, 16
      %vm1613 = vcmp.lt.s32.totalorder %v1517, 16
      %vm1614 = vcmp.lt.s32.totalorder %v1518, 16
      %vm1615 = vcmp.lt.s32.totalorder %v1519, 16
      %vm1616 = vcmp.lt.s32.totalorder %v1520, 16
      %vm1617 = vcmp.lt.s32.totalorder %v1521, 16
      %vm1618 = vcmp.lt.s32.totalorder %v1522, 16
      %vm1619 = vcmp.lt.s32.totalorder %v1523, 16
      %vm1620 = vcmp.lt.s32.totalorder %v1524, 16
      %vm1621 = vcmp.lt.s32.totalorder %v1525, 16
      %vm1622 = vcmp.lt.s32.totalorder %v1526, 16
      %vm1623 = vcmp.lt.s32.totalorder %v1527, 16
      %vm1624 = vcmp.lt.s32.totalorder %v1528, 16
      %vm1625 = vcmp.lt.s32.totalorder %v1529, 16
      %vm1626 = vcmp.lt.s32.totalorder %v1530, 16
      %vm1627 = vcmp.lt.s32.totalorder %v1531, 16
      %vm1628 = vcmp.lt.s32.totalorder %v1532, 16
      %vm1629 = vcmp.lt.s32.totalorder %v1533, 16
      %vm1630 = vcmp.lt.s32.totalorder %v1534, 16
      %vm1631 = vcmp.lt.s32.totalorder %v1535, 16
      %vm1632 = vmand %vm1568, %vm1600
      %vm1633 = vmand %vm1569, %vm1601
      %vm1634 = vmand %vm1570, %vm1602
      %vm1635 = vmand %vm1571, %vm1603
      %vm1636 = vmand %vm1572, %vm1604
      %vm1637 = vmand %vm1573, %vm1605
      %vm1638 = vmand %vm1574, %vm1606
      %vm1639 = vmand %vm1575, %vm1607
      %vm1640 = vmand %vm1576, %vm1608
      %vm1641 = vmand %vm1577, %vm1609
      %vm1642 = vmand %vm1578, %vm1610
      %vm1643 = vmand %vm1579, %vm1611
      %vm1644 = vmand %vm1580, %vm1612
      %vm1645 = vmand %vm1581, %vm1613
      %vm1646 = vmand %vm1582, %vm1614
      %vm1647 = vmand %vm1583, %vm1615
      %vm1648 = vmand %vm1584, %vm1616
      %vm1649 = vmand %vm1585, %vm1617
      %vm1650 = vmand %vm1586, %vm1618
      %vm1651 = vmand %vm1587, %vm1619
      %vm1652 = vmand %vm1588, %vm1620
      %vm1653 = vmand %vm1589, %vm1621
      %vm1654 = vmand %vm1590, %vm1622
      %vm1655 = vmand %vm1591, %vm1623
      %vm1656 = vmand %vm1592, %vm1624
      %vm1657 = vmand %vm1593, %vm1625
      %vm1658 = vmand %vm1594, %vm1626
      %vm1659 = vmand %vm1595, %vm1627
      %vm1660 = vmand %vm1596, %vm1628
      %vm1661 = vmand %vm1597, %vm1629
      %vm1662 = vmand %vm1598, %vm1630
      %vm1663 = vmand %vm1599, %vm1631
      %v1664 = vsel %vm1632, 1, 0
      %v1665 = vsel %vm1633, 1, 0
      %v1666 = vsel %vm1634, 1, 0
      %v1667 = vsel %vm1635, 1, 0
      %v1668 = vsel %vm1636, 1, 0
      %v1669 = vsel %vm1637, 1, 0
      %v1670 = vsel %vm1638, 1, 0
      %v1671 = vsel %vm1639, 1, 0
      %v1672 = vsel %vm1640, 1, 0
      %v1673 = vsel %vm1641, 1, 0
      %v1674 = vsel %vm1642, 1, 0
      %v1675 = vsel %vm1643, 1, 0
      %v1676 = vsel %vm1644, 1, 0
      %v1677 = vsel %vm1645, 1, 0
      %v1678 = vsel %vm1646, 1, 0
      %v1679 = vsel %vm1647, 1, 0
      %v1680 = vsel %vm1648, 1, 0
      %v1681 = vsel %vm1649, 1, 0
      %v1682 = vsel %vm1650, 1, 0
      %v1683 = vsel %vm1651, 1, 0
      %v1684 = vsel %vm1652, 1, 0
      %v1685 = vsel %vm1653, 1, 0
      %v1686 = vsel %vm1654, 1, 0
      %v1687 = vsel %vm1655, 1, 0
      %v1688 = vsel %vm1656, 1, 0
      %v1689 = vsel %vm1657, 1, 0
      %v1690 = vsel %vm1658, 1, 0
      %v1691 = vsel %vm1659, 1, 0
      %v1692 = vsel %vm1660, 1, 0
      %v1693 = vsel %vm1661, 1, 0
      %v1694 = vsel %vm1662, 1, 0
      %v1695 = vsel %vm1663, 1, 0
      %1696 = vset.pattern.permute.xlu0 0
      %1697 = vperm.xlu0 %1696, %v1664
      %v1698 = vpop.permute.xlu0 %1697
      %1699 = vset.pattern.permute.xlu0 0
      %1700 = vperm.xlu0 %1699, %v1665
      %v1701 = vpop.permute.xlu0 %1700
      %1702 = vset.pattern.permute.xlu0 0
      %1703 = vperm.xlu0 %1702, %v1666
      %v1704 = vpop.permute.xlu0 %1703
      %1705 = vset.pattern.permute.xlu0 0
      %1706 = vperm.xlu0 %1705, %v1667
      %v1707 = vpop.permute.xlu0 %1706
      %1708 = vset.pattern.permute.xlu0 0
      %1709 = vperm.xlu0 %1708, %v1668
      %v1710 = vpop.permute.xlu0 %1709
      %1711 = vset.pattern.permute.xlu0 0
      %1712 = vperm.xlu0 %1711, %v1669
      %v1713 = vpop.permute.xlu0 %1712
      %1714 = vset.pattern.permute.xlu0 0
      %1715 = vperm.xlu0 %1714, %v1670
      %v1716 = vpop.permute.xlu0 %1715
      %1717 = vset.pattern.permute.xlu0 0
      %1718 = vperm.xlu0 %1717, %v1671
      %v1719 = vpop.permute.xlu0 %1718
      %1720 = vset.pattern.permute.xlu0 0
      %1721 = vperm.xlu0 %1720, %v1672
      %v1722 = vpop.permute.xlu0 %1721
      %1723 = vset.pattern.permute.xlu0 0
      %1724 = vperm.xlu0 %1723, %v1673
      %v1725 = vpop.permute.xlu0 %1724
      %1726 = vset.pattern.permute.xlu0 0
      %1727 = vperm.xlu0 %1726, %v1674
      %v1728 = vpop.permute.xlu0 %1727
      %1729 = vset.pattern.permute.xlu0 0
      %1730 = vperm.xlu0 %1729, %v1675
      %v1731 = vpop.permute.xlu0 %1730
      %1732 = vset.pattern.permute.xlu0 0
      %1733 = vperm.xlu0 %1732, %v1676
      %v1734 = vpop.permute.xlu0 %1733
      %1735 = vset.pattern.permute.xlu0 0
      %1736 = vperm.xlu0 %1735, %v1677
      %v1737 = vpop.permute.xlu0 %1736
      %1738 = vset.pattern.permute.xlu0 0
      %1739 = vperm.xlu0 %1738, %v1678
      %v1740 = vpop.permute.xlu0 %1739
      %1741 = vset.pattern.permute.xlu0 0
      %1742 = vperm.xlu0 %1741, %v1679
      %v1743 = vpop.permute.xlu0 %1742
      %1744 = vset.pattern.permute.xlu0 0
      %1745 = vperm.xlu0 %1744, %v1680
      %v1746 = vpop.permute.xlu0 %1745
      %1747 = vset.pattern.permute.xlu0 0
      %1748 = vperm.xlu0 %1747, %v1681
      %v1749 = vpop.permute.xlu0 %1748
      %1750 = vset.pattern.permute.xlu0 0
      %1751 = vperm.xlu0 %1750, %v1682
      %v1752 = vpop.permute.xlu0 %1751
      %1753 = vset.pattern.permute.xlu0 0
      %1754 = vperm.xlu0 %1753, %v1683
      %v1755 = vpop.permute.xlu0 %1754
      %1756 = vset.pattern.permute.xlu0 0
      %1757 = vperm.xlu0 %1756, %v1684
      %v1758 = vpop.permute.xlu0 %1757
      %1759 = vset.pattern.permute.xlu0 0
      %1760 = vperm.xlu0 %1759, %v1685
      %v1761 = vpop.permute.xlu0 %1760
      %1762 = vset.pattern.permute.xlu0 0
      %1763 = vperm.xlu0 %1762, %v1686
      %v1764 = vpop.permute.xlu0 %1763
      %1765 = vset.pattern.permute.xlu0 0
      %1766 = vperm.xlu0 %1765, %v1687
      %v1767 = vpop.permute.xlu0 %1766
      %1768 = vset.pattern.permute.xlu0 0
      %1769 = vperm.xlu0 %1768, %v1688
      %v1770 = vpop.permute.xlu0 %1769
      %1771 = vset.pattern.permute.xlu0 0
      %1772 = vperm.xlu0 %1771, %v1689
      %v1773 = vpop.permute.xlu0 %1772
      %1774 = vset.pattern.permute.xlu0 0
      %1775 = vperm.xlu0 %1774, %v1690
      %v1776 = vpop.permute.xlu0 %1775
      %1777 = vset.pattern.permute.xlu0 0
      %1778 = vperm.xlu0 %1777, %v1691
      %v1779 = vpop.permute.xlu0 %1778
      %1780 = vset.pattern.permute.xlu0 0
      %1781 = vperm.xlu0 %1780, %v1692
      %v1782 = vpop.permute.xlu0 %1781
      %1783 = vset.pattern.permute.xlu0 0
      %1784 = vperm.xlu0 %1783, %v1693
      %v1785 = vpop.permute.xlu0 %1784
      %1786 = vset.pattern.permute.xlu0 0
      %1787 = vperm.xlu0 %1786, %v1694
      %v1788 = vpop.permute.xlu0 %1787
      %1789 = vset.pattern.permute.xlu0 0
      %1790 = vperm.xlu0 %1789, %v1695
      %v1791 = vpop.permute.xlu0 %1790
      %vm1792 = vcmp.eq.s32.totalorder %v1698, 1
      %vm1793 = vcmp.eq.s32.totalorder %v1701, 1
      %vm1794 = vcmp.eq.s32.totalorder %v1704, 1
      %vm1795 = vcmp.eq.s32.totalorder %v1707, 1
      %vm1796 = vcmp.eq.s32.totalorder %v1710, 1
      %vm1797 = vcmp.eq.s32.totalorder %v1713, 1
      %vm1798 = vcmp.eq.s32.totalorder %v1716, 1
      %vm1799 = vcmp.eq.s32.totalorder %v1719, 1
      %vm1800 = vcmp.eq.s32.totalorder %v1722, 1
      %vm1801 = vcmp.eq.s32.totalorder %v1725, 1
      %vm1802 = vcmp.eq.s32.totalorder %v1728, 1
      %vm1803 = vcmp.eq.s32.totalorder %v1731, 1
      %vm1804 = vcmp.eq.s32.totalorder %v1734, 1
      %vm1805 = vcmp.eq.s32.totalorder %v1737, 1
      %vm1806 = vcmp.eq.s32.totalorder %v1740, 1
      %vm1807 = vcmp.eq.s32.totalorder %v1743, 1
      %vm1808 = vcmp.eq.s32.totalorder %v1746, 1
      %vm1809 = vcmp.eq.s32.totalorder %v1749, 1
      %vm1810 = vcmp.eq.s32.totalorder %v1752, 1
      %vm1811 = vcmp.eq.s32.totalorder %v1755, 1
      %vm1812 = vcmp.eq.s32.totalorder %v1758, 1
      %vm1813 = vcmp.eq.s32.totalorder %v1761, 1
      %vm1814 = vcmp.eq.s32.totalorder %v1764, 1
      %vm1815 = vcmp.eq.s32.totalorder %v1767, 1
      %vm1816 = vcmp.eq.s32.totalorder %v1770, 1
      %vm1817 = vcmp.eq.s32.totalorder %v1773, 1
      %vm1818 = vcmp.eq.s32.totalorder %v1776, 1
      %vm1819 = vcmp.eq.s32.totalorder %v1779, 1
      %vm1820 = vcmp.eq.s32.totalorder %v1782, 1
      %vm1821 = vcmp.eq.s32.totalorder %v1785, 1
      %vm1822 = vcmp.eq.s32.totalorder %v1788, 1
      %vm1823 = vcmp.eq.s32.totalorder %v1791, 1
      %v1824 = vsel %vm1792, %v1472, 0.0
      %v1825 = vsel %vm1793, %v1503, 0.0
      %v1826 = vsel %vm1794, %v1502, 0.0
      %v1827 = vsel %vm1795, %v1501, 0.0
      %v1828 = vsel %vm1796, %v1500, 0.0
      %v1829 = vsel %vm1797, %v1499, 0.0
      %v1830 = vsel %vm1798, %v1498, 0.0
      %v1831 = vsel %vm1799, %v1497, 0.0
      %v1832 = vsel %vm1800, %v1496, 0.0
      %v1833 = vsel %vm1801, %v1495, 0.0
      %v1834 = vsel %vm1802, %v1494, 0.0
      %v1835 = vsel %vm1803, %v1493, 0.0
      %v1836 = vsel %vm1804, %v1492, 0.0
      %v1837 = vsel %vm1805, %v1491, 0.0
      %v1838 = vsel %vm1806, %v1490, 0.0
      %v1839 = vsel %vm1807, %v1489, 0.0
      %v1840 = vsel %vm1808, %v1488, 0.0
      %v1841 = vsel %vm1809, %v1487, 0.0
      %v1842 = vsel %vm1810, %v1486, 0.0
      %v1843 = vsel %vm1811, %v1485, 0.0
      %v1844 = vsel %vm1812, %v1484, 0.0
      %v1845 = vsel %vm1813, %v1483, 0.0
      %v1846 = vsel %vm1814, %v1482, 0.0
      %v1847 = vsel %vm1815, %v1481, 0.0
      %v1848 = vsel %vm1816, %v1480, 0.0
      %v1849 = vsel %vm1817, %v1479, 0.0
      %v1850 = vsel %vm1818, %v1478, 0.0
      %v1851 = vsel %vm1819, %v1477, 0.0
      %v1852 = vsel %vm1820, %v1476, 0.0
      %v1853 = vsel %vm1821, %v1475, 0.0
      %v1854 = vsel %vm1822, %v1474, 0.0
      %v1855 = vsel %vm1823, %v1473, 0.0
      %v1856 = vpack.c.bf16 %v1825, %v1824
      %v1857 = vpack.c.bf16 %v1827, %v1826
      %v1858 = vpack.c.bf16 %v1829, %v1828
      %v1859 = vpack.c.bf16 %v1831, %v1830
      %v1860 = vpack.c.bf16 %v1833, %v1832
      %v1861 = vpack.c.bf16 %v1835, %v1834
      %v1862 = vpack.c.bf16 %v1837, %v1836
      %v1863 = vpack.c.bf16 %v1839, %v1838
      %v1864 = vpack.c.bf16 %v1841, %v1840
      %v1865 = vpack.c.bf16 %v1843, %v1842
      %v1866 = vpack.c.bf16 %v1845, %v1844
      %v1867 = vpack.c.bf16 %v1847, %v1846
      %v1868 = vpack.c.bf16 %v1849, %v1848
      %v1869 = vpack.c.bf16 %v1851, %v1850
      %v1870 = vpack.c.bf16 %v1853, %v1852
      %v1871 = vpack.c.bf16 %v1855, %v1854
      %vm1872 = vcmp.ge.s32.totalorder %v366, 0
      %vm1873 = vcmp.ge.s32.totalorder %v367, 0
      %vm1874 = vcmp.ge.s32.totalorder %v368, 0
      %vm1875 = vcmp.ge.s32.totalorder %v369, 0
      %vm1876 = vcmp.ge.s32.totalorder %v370, 0
      %vm1877 = vcmp.ge.s32.totalorder %v371, 0
      %vm1878 = vcmp.ge.s32.totalorder %v372, 0
      %vm1879 = vcmp.ge.s32.totalorder %v373, 0
      %vm1880 = vcmp.ge.s32.totalorder %v374, 0
      %vm1881 = vcmp.ge.s32.totalorder %v375, 0
      %vm1882 = vcmp.ge.s32.totalorder %v376, 0
      %vm1883 = vcmp.ge.s32.totalorder %v377, 0
      %vm1884 = vcmp.ge.s32.totalorder %v378, 0
      %vm1885 = vcmp.ge.s32.totalorder %v379, 0
      %vm1886 = vcmp.ge.s32.totalorder %v380, 0
      %vm1887 = vcmp.ge.s32.totalorder %v381, 0
      %vm1888 = vcmp.ge.s32.totalorder %v382, 0
      %vm1889 = vcmp.ge.s32.totalorder %v383, 0
      %vm1890 = vcmp.ge.s32.totalorder %v384, 0
      %vm1891 = vcmp.ge.s32.totalorder %v385, 0
      %vm1892 = vcmp.ge.s32.totalorder %v386, 0
      %vm1893 = vcmp.ge.s32.totalorder %v387, 0
      %vm1894 = vcmp.ge.s32.totalorder %v388, 0
      %vm1895 = vcmp.ge.s32.totalorder %v389, 0
      %vm1896 = vcmp.ge.s32.totalorder %v390, 0
      %vm1897 = vcmp.ge.s32.totalorder %v391, 0
      %vm1898 = vcmp.ge.s32.totalorder %v392, 0
      %vm1899 = vcmp.ge.s32.totalorder %v393, 0
      %vm1900 = vcmp.ge.s32.totalorder %v394, 0
      %vm1901 = vcmp.ge.s32.totalorder %v395, 0
      %vm1902 = vcmp.ge.s32.totalorder %v396, 0
      %vm1903 = vcmp.ge.s32.totalorder %v397, 0
      %vm1904 = vcmp.lt.s32.totalorder %v366, 16
      %vm1905 = vcmp.lt.s32.totalorder %v367, 16
      %vm1906 = vcmp.lt.s32.totalorder %v368, 16
      %vm1907 = vcmp.lt.s32.totalorder %v369, 16
      %vm1908 = vcmp.lt.s32.totalorder %v370, 16
      %vm1909 = vcmp.lt.s32.totalorder %v371, 16
      %vm1910 = vcmp.lt.s32.totalorder %v372, 16
      %vm1911 = vcmp.lt.s32.totalorder %v373, 16
      %vm1912 = vcmp.lt.s32.totalorder %v374, 16
      %vm1913 = vcmp.lt.s32.totalorder %v375, 16
      %vm1914 = vcmp.lt.s32.totalorder %v376, 16
      %vm1915 = vcmp.lt.s32.totalorder %v377, 16
      %vm1916 = vcmp.lt.s32.totalorder %v378, 16
      %vm1917 = vcmp.lt.s32.totalorder %v379, 16
      %vm1918 = vcmp.lt.s32.totalorder %v380, 16
      %vm1919 = vcmp.lt.s32.totalorder %v381, 16
      %vm1920 = vcmp.lt.s32.totalorder %v382, 16
      %vm1921 = vcmp.lt.s32.totalorder %v383, 16
      %vm1922 = vcmp.lt.s32.totalorder %v384, 16
      %vm1923 = vcmp.lt.s32.totalorder %v385, 16
      %vm1924 = vcmp.lt.s32.totalorder %v386, 16
      %vm1925 = vcmp.lt.s32.totalorder %v387, 16
      %vm1926 = vcmp.lt.s32.totalorder %v388, 16
      %vm1927 = vcmp.lt.s32.totalorder %v389, 16
      %vm1928 = vcmp.lt.s32.totalorder %v390, 16
      %vm1929 = vcmp.lt.s32.totalorder %v391, 16
      %vm1930 = vcmp.lt.s32.totalorder %v392, 16
      %vm1931 = vcmp.lt.s32.totalorder %v393, 16
      %vm1932 = vcmp.lt.s32.totalorder %v394, 16
      %vm1933 = vcmp.lt.s32.totalorder %v395, 16
      %vm1934 = vcmp.lt.s32.totalorder %v396, 16
      %vm1935 = vcmp.lt.s32.totalorder %v397, 16
      %vm1936 = vmand %vm1872, %vm1904
      %vm1937 = vmand %vm1873, %vm1905
      %vm1938 = vmand %vm1874, %vm1906
      %vm1939 = vmand %vm1875, %vm1907
      %vm1940 = vmand %vm1876, %vm1908
      %vm1941 = vmand %vm1877, %vm1909
      %vm1942 = vmand %vm1878, %vm1910
      %vm1943 = vmand %vm1879, %vm1911
      %vm1944 = vmand %vm1880, %vm1912
      %vm1945 = vmand %vm1881, %vm1913
      %vm1946 = vmand %vm1882, %vm1914
      %vm1947 = vmand %vm1883, %vm1915
      %vm1948 = vmand %vm1884, %vm1916
      %vm1949 = vmand %vm1885, %vm1917
      %vm1950 = vmand %vm1886, %vm1918
      %vm1951 = vmand %vm1887, %vm1919
      %vm1952 = vmand %vm1888, %vm1920
      %vm1953 = vmand %vm1889, %vm1921
      %vm1954 = vmand %vm1890, %vm1922
      %vm1955 = vmand %vm1891, %vm1923
      %vm1956 = vmand %vm1892, %vm1924
      %vm1957 = vmand %vm1893, %vm1925
      %vm1958 = vmand %vm1894, %vm1926
      %vm1959 = vmand %vm1895, %vm1927
      %vm1960 = vmand %vm1896, %vm1928
      %vm1961 = vmand %vm1897, %vm1929
      %vm1962 = vmand %vm1898, %vm1930
      %vm1963 = vmand %vm1899, %vm1931
      %vm1964 = vmand %vm1900, %vm1932
      %vm1965 = vmand %vm1901, %vm1933
      %vm1966 = vmand %vm1902, %vm1934
      %vm1967 = vmand %vm1903, %vm1935
      %vm1968 = vmand %vm1936, %vm767
      %vm1969 = vmand %vm1937, %vm768
      %vm1970 = vmand %vm1938, %vm769
      %vm1971 = vmand %vm1939, %vm770
      %vm1972 = vmand %vm1940, %vm771
      %vm1973 = vmand %vm1941, %vm772
      %vm1974 = vmand %vm1942, %vm773
      %vm1975 = vmand %vm1943, %vm774
      %vm1976 = vmand %vm1944, %vm775
      %vm1977 = vmand %vm1945, %vm776
      %vm1978 = vmand %vm1946, %vm777
      %vm1979 = vmand %vm1947, %vm778
      %vm1980 = vmand %vm1948, %vm779
      %vm1981 = vmand %vm1949, %vm780
      %vm1982 = vmand %vm1950, %vm781
      %vm1983 = vmand %vm1951, %vm782
      %vm1984 = vmand %vm1952, %vm783
      %vm1985 = vmand %vm1953, %vm784
      %vm1986 = vmand %vm1954, %vm785
      %vm1987 = vmand %vm1955, %vm786
      %vm1988 = vmand %vm1956, %vm787
      %vm1989 = vmand %vm1957, %vm788
      %vm1990 = vmand %vm1958, %vm789
      %vm1991 = vmand %vm1959, %vm790
      %vm1992 = vmand %vm1960, %vm791
      %vm1993 = vmand %vm1961, %vm792
      %vm1994 = vmand %vm1962, %vm793
      %vm1995 = vmand %vm1963, %vm794
      %vm1996 = vmand %vm1964, %vm795
      %vm1997 = vmand %vm1965, %vm796
      %vm1998 = vmand %vm1966, %vm797
      %vm1999 = vmand %vm1967, %vm798
      %vm2000 = vmand %vm1968, %vm831
      %vm2001 = vmand %vm1969, %vm832
      %vm2002 = vmand %vm1970, %vm833
      %vm2003 = vmand %vm1971, %vm834
      %vm2004 = vmand %vm1972, %vm835
      %vm2005 = vmand %vm1973, %vm836
      %vm2006 = vmand %vm1974, %vm837
      %vm2007 = vmand %vm1975, %vm838
      %vm2008 = vmand %vm1976, %vm839
      %vm2009 = vmand %vm1977, %vm840
      %vm2010 = vmand %vm1978, %vm841
      %vm2011 = vmand %vm1979, %vm842
      %vm2012 = vmand %vm1980, %vm843
      %vm2013 = vmand %vm1981, %vm844
      %vm2014 = vmand %vm1982, %vm845
      %vm2015 = vmand %vm1983, %vm846
      %vm2016 = vmand %vm1984, %vm847
      %vm2017 = vmand %vm1985, %vm848
      %vm2018 = vmand %vm1986, %vm849
      %vm2019 = vmand %vm1987, %vm850
      %vm2020 = vmand %vm1988, %vm851
      %vm2021 = vmand %vm1989, %vm852
      %vm2022 = vmand %vm1990, %vm853
      %vm2023 = vmand %vm1991, %vm854
      %vm2024 = vmand %vm1992, %vm855
      %vm2025 = vmand %vm1993, %vm856
      %vm2026 = vmand %vm1994, %vm857
      %vm2027 = vmand %vm1995, %vm858
      %vm2028 = vmand %vm1996, %vm859
      %vm2029 = vmand %vm1997, %vm860
      %vm2030 = vmand %vm1998, %vm861
      %vm2031 = vmand %vm1999, %vm862
      %v2032 = vsel %vm2000, 1, 0
      %v2033 = vsel %vm2001, 1, 0
      %v2034 = vsel %vm2002, 1, 0
      %v2035 = vsel %vm2003, 1, 0
      %v2036 = vsel %vm2004, 1, 0
      %v2037 = vsel %vm2005, 1, 0
      %v2038 = vsel %vm2006, 1, 0
      %v2039 = vsel %vm2007, 1, 0
      %v2040 = vsel %vm2008, 1, 0
      %v2041 = vsel %vm2009, 1, 0
      %v2042 = vsel %vm2010, 1, 0
      %v2043 = vsel %vm2011, 1, 0
      %v2044 = vsel %vm2012, 1, 0
      %v2045 = vsel %vm2013, 1, 0
      %v2046 = vsel %vm2014, 1, 0
      %v2047 = vsel %vm2015, 1, 0
      %v2048 = vsel %vm2016, 1, 0
      %v2049 = vsel %vm2017, 1, 0
      %v2050 = vsel %vm2018, 1, 0
      %v2051 = vsel %vm2019, 1, 0
      %v2052 = vsel %vm2020, 1, 0
      %v2053 = vsel %vm2021, 1, 0
      %v2054 = vsel %vm2022, 1, 0
      %v2055 = vsel %vm2023, 1, 0
      %v2056 = vsel %vm2024, 1, 0
      %v2057 = vsel %vm2025, 1, 0
      %v2058 = vsel %vm2026, 1, 0
      %v2059 = vsel %vm2027, 1, 0
      %v2060 = vsel %vm2028, 1, 0
      %v2061 = vsel %vm2029, 1, 0
      %v2062 = vsel %vm2030, 1, 0
      %v2063 = vsel %vm2031, 1, 0
      %2064 = vset.pattern.permute.xlu0 0
      %2065 = vperm.xlu0 %2064, %v2032
      %v2066 = vpop.permute.xlu0 %2065
      %2067 = vset.pattern.permute.xlu0 0
      %2068 = vperm.xlu0 %2067, %v2033
      %v2069 = vpop.permute.xlu0 %2068
      %2070 = vset.pattern.permute.xlu0 0
      %2071 = vperm.xlu0 %2070, %v2034
      %v2072 = vpop.permute.xlu0 %2071
      %2073 = vset.pattern.permute.xlu0 0
      %2074 = vperm.xlu0 %2073, %v2035
      %v2075 = vpop.permute.xlu0 %2074
      %2076 = vset.pattern.permute.xlu0 0
      %2077 = vperm.xlu0 %2076, %v2036
      %v2078 = vpop.permute.xlu0 %2077
      %2079 = vset.pattern.permute.xlu0 0
      %2080 = vperm.xlu0 %2079, %v2037
      %v2081 = vpop.permute.xlu0 %2080
      %2082 = vset.pattern.permute.xlu0 0
      %2083 = vperm.xlu0 %2082, %v2038
      %v2084 = vpop.permute.xlu0 %2083
      %2085 = vset.pattern.permute.xlu0 0
      %2086 = vperm.xlu0 %2085, %v2039
      %v2087 = vpop.permute.xlu0 %2086
      %2088 = vset.pattern.permute.xlu0 0
      %2089 = vperm.xlu0 %2088, %v2040
      %v2090 = vpop.permute.xlu0 %2089
      %2091 = vset.pattern.permute.xlu0 0
      %2092 = vperm.xlu0 %2091, %v2041
      %v2093 = vpop.permute.xlu0 %2092
      %2094 = vset.pattern.permute.xlu0 0
      %2095 = vperm.xlu0 %2094, %v2042
      %v2096 = vpop.permute.xlu0 %2095
      %2097 = vset.pattern.permute.xlu0 0
      %2098 = vperm.xlu0 %2097, %v2043
      %v2099 = vpop.permute.xlu0 %2098
      %2100 = vset.pattern.permute.xlu0 0
      %2101 = vperm.xlu0 %2100, %v2044
      %v2102 = vpop.permute.xlu0 %2101
      %2103 = vset.pattern.permute.xlu0 0
      %2104 = vperm.xlu0 %2103, %v2045
      %v2105 = vpop.permute.xlu0 %2104
      %2106 = vset.pattern.permute.xlu0 0
      %2107 = vperm.xlu0 %2106, %v2046
      %v2108 = vpop.permute.xlu0 %2107
      %2109 = vset.pattern.permute.xlu0 0
      %2110 = vperm.xlu0 %2109, %v2047
      %v2111 = vpop.permute.xlu0 %2110
      %2112 = vset.pattern.permute.xlu0 0
      %2113 = vperm.xlu0 %2112, %v2048
      %v2114 = vpop.permute.xlu0 %2113
      %2115 = vset.pattern.permute.xlu0 0
      %2116 = vperm.xlu0 %2115, %v2049
      %v2117 = vpop.permute.xlu0 %2116
      %2118 = vset.pattern.permute.xlu0 0
      %2119 = vperm.xlu0 %2118, %v2050
      %v2120 = vpop.permute.xlu0 %2119
      %2121 = vset.pattern.permute.xlu0 0
      %2122 = vperm.xlu0 %2121, %v2051
      %v2123 = vpop.permute.xlu0 %2122
      %2124 = vset.pattern.permute.xlu0 0
      %2125 = vperm.xlu0 %2124, %v2052
      %v2126 = vpop.permute.xlu0 %2125
      %2127 = vset.pattern.permute.xlu0 0
      %2128 = vperm.xlu0 %2127, %v2053
      %v2129 = vpop.permute.xlu0 %2128
      %2130 = vset.pattern.permute.xlu0 0
      %2131 = vperm.xlu0 %2130, %v2054
      %v2132 = vpop.permute.xlu0 %2131
      %2133 = vset.pattern.permute.xlu0 0
      %2134 = vperm.xlu0 %2133, %v2055
      %v2135 = vpop.permute.xlu0 %2134
      %2136 = vset.pattern.permute.xlu0 0
      %2137 = vperm.xlu0 %2136, %v2056
      %v2138 = vpop.permute.xlu0 %2137
      %2139 = vset.pattern.permute.xlu0 0
      %2140 = vperm.xlu0 %2139, %v2057
      %v2141 = vpop.permute.xlu0 %2140
      %2142 = vset.pattern.permute.xlu0 0
      %2143 = vperm.xlu0 %2142, %v2058
      %v2144 = vpop.permute.xlu0 %2143
      %2145 = vset.pattern.permute.xlu0 0
      %2146 = vperm.xlu0 %2145, %v2059
      %v2147 = vpop.permute.xlu0 %2146
      %2148 = vset.pattern.permute.xlu0 0
      %2149 = vperm.xlu0 %2148, %v2060
      %v2150 = vpop.permute.xlu0 %2149
      %2151 = vset.pattern.permute.xlu0 0
      %2152 = vperm.xlu0 %2151, %v2061
      %v2153 = vpop.permute.xlu0 %2152
      %2154 = vset.pattern.permute.xlu0 0
      %2155 = vperm.xlu0 %2154, %v2062
      %v2156 = vpop.permute.xlu0 %2155
      %2157 = vset.pattern.permute.xlu0 0
      %2158 = vperm.xlu0 %2157, %v2063
      %v2159 = vpop.permute.xlu0 %2158
      %vm2160 = vcmp.eq.s32.totalorder %v2066, 1
      %vm2161 = vcmp.eq.s32.totalorder %v2069, 1
      %vm2162 = vcmp.eq.s32.totalorder %v2072, 1
      %vm2163 = vcmp.eq.s32.totalorder %v2075, 1
      %vm2164 = vcmp.eq.s32.totalorder %v2078, 1
      %vm2165 = vcmp.eq.s32.totalorder %v2081, 1
      %vm2166 = vcmp.eq.s32.totalorder %v2084, 1
      %vm2167 = vcmp.eq.s32.totalorder %v2087, 1
      %vm2168 = vcmp.eq.s32.totalorder %v2090, 1
      %vm2169 = vcmp.eq.s32.totalorder %v2093, 1
      %vm2170 = vcmp.eq.s32.totalorder %v2096, 1
      %vm2171 = vcmp.eq.s32.totalorder %v2099, 1
      %vm2172 = vcmp.eq.s32.totalorder %v2102, 1
      %vm2173 = vcmp.eq.s32.totalorder %v2105, 1
      %vm2174 = vcmp.eq.s32.totalorder %v2108, 1
      %vm2175 = vcmp.eq.s32.totalorder %v2111, 1
      %vm2176 = vcmp.eq.s32.totalorder %v2114, 1
      %vm2177 = vcmp.eq.s32.totalorder %v2117, 1
      %vm2178 = vcmp.eq.s32.totalorder %v2120, 1
      %vm2179 = vcmp.eq.s32.totalorder %v2123, 1
      %vm2180 = vcmp.eq.s32.totalorder %v2126, 1
      %vm2181 = vcmp.eq.s32.totalorder %v2129, 1
      %vm2182 = vcmp.eq.s32.totalorder %v2132, 1
      %vm2183 = vcmp.eq.s32.totalorder %v2135, 1
      %vm2184 = vcmp.eq.s32.totalorder %v2138, 1
      %vm2185 = vcmp.eq.s32.totalorder %v2141, 1
      %vm2186 = vcmp.eq.s32.totalorder %v2144, 1
      %vm2187 = vcmp.eq.s32.totalorder %v2147, 1
      %vm2188 = vcmp.eq.s32.totalorder %v2150, 1
      %vm2189 = vcmp.eq.s32.totalorder %v2153, 1
      %vm2190 = vcmp.eq.s32.totalorder %v2156, 1
      %vm2191 = vcmp.eq.s32.totalorder %v2159, 1
      %v2192 = vsel %vm2160, %v606, 0.0
      %v2193 = vsel %vm2161, %v605, 0.0
      %v2194 = vsel %vm2162, %v604, 0.0
      %v2195 = vsel %vm2163, %v603, 0.0
      %v2196 = vsel %vm2164, %v602, 0.0
      %v2197 = vsel %vm2165, %v601, 0.0
      %v2198 = vsel %vm2166, %v600, 0.0
      %v2199 = vsel %vm2167, %v599, 0.0
      %v2200 = vsel %vm2168, %v598, 0.0
      %v2201 = vsel %vm2169, %v597, 0.0
      %v2202 = vsel %vm2170, %v596, 0.0
      %v2203 = vsel %vm2171, %v595, 0.0
      %v2204 = vsel %vm2172, %v594, 0.0
      %v2205 = vsel %vm2173, %v593, 0.0
      %v2206 = vsel %vm2174, %v592, 0.0
      %v2207 = vsel %vm2175, %v591, 0.0
      %v2208 = vsel %vm2176, %v590, 0.0
      %v2209 = vsel %vm2177, %v589, 0.0
      %v2210 = vsel %vm2178, %v588, 0.0
      %v2211 = vsel %vm2179, %v587, 0.0
      %v2212 = vsel %vm2180, %v586, 0.0
      %v2213 = vsel %vm2181, %v585, 0.0
      %v2214 = vsel %vm2182, %v584, 0.0
      %v2215 = vsel %vm2183, %v583, 0.0
      %v2216 = vsel %vm2184, %v582, 0.0
      %v2217 = vsel %vm2185, %v581, 0.0
      %v2218 = vsel %vm2186, %v580, 0.0
      %v2219 = vsel %vm2187, %v579, 0.0
      %v2220 = vsel %vm2188, %v578, 0.0
      %v2221 = vsel %vm2189, %v577, 0.0
      %v2222 = vsel %vm2190, %v576, 0.0
      %v2223 = vsel %vm2191, %v575, 0.0
      %v2224 = vpack.c.bf16 %v2193, %v2192
      %v2225 = vpack.c.bf16 %v2195, %v2194
      %v2226 = vpack.c.bf16 %v2197, %v2196
      %v2227 = vpack.c.bf16 %v2199, %v2198
      %v2228 = vpack.c.bf16 %v2201, %v2200
      %v2229 = vpack.c.bf16 %v2203, %v2202
      %v2230 = vpack.c.bf16 %v2205, %v2204
      %v2231 = vpack.c.bf16 %v2207, %v2206
      %v2232 = vpack.c.bf16 %v2209, %v2208
      %v2233 = vpack.c.bf16 %v2211, %v2210
      %v2234 = vpack.c.bf16 %v2213, %v2212
      %v2235 = vpack.c.bf16 %v2215, %v2214
      %v2236 = vpack.c.bf16 %v2217, %v2216
      %v2237 = vpack.c.bf16 %v2219, %v2218
      %v2238 = vpack.c.bf16 %v2221, %v2220
      %v2239 = vpack.c.bf16 %v2223, %v2222
      %v2240 = vpack.c.bf16 %v509, %v508
      %v2241 = vpack.c.bf16 %v511, %v510
      %v2242 = vpack.c.bf16 %v513, %v512
      %v2243 = vpack.c.bf16 %v515, %v514
      %v2244 = vpack.c.bf16 %v517, %v516
      %v2245 = vpack.c.bf16 %v519, %v518
      %v2246 = vpack.c.bf16 %v521, %v520
      %v2247 = vpack.c.bf16 %v523, %v522
      %v2248 = vpack.c.bf16 %v525, %v524
      %v2249 = vpack.c.bf16 %v527, %v526
      %v2250 = vpack.c.bf16 %v529, %v528
      %v2251 = vpack.c.bf16 %v531, %v530
      %v2252 = vpack.c.bf16 %v533, %v532
      %v2253 = vpack.c.bf16 %v535, %v534
      %v2254 = vpack.c.bf16 %v537, %v536
      %v2255 = vpack.c.bf16 %v539, %v538
      %vm2256 = vmand %vm1936, %vm1536
      %vm2257 = vmand %vm1937, %vm1537
      %vm2258 = vmand %vm1938, %vm1538
      %vm2259 = vmand %vm1939, %vm1539
      %vm2260 = vmand %vm1940, %vm1540
      %vm2261 = vmand %vm1941, %vm1541
      %vm2262 = vmand %vm1942, %vm1542
      %vm2263 = vmand %vm1943, %vm1543
      %vm2264 = vmand %vm1944, %vm1544
      %vm2265 = vmand %vm1945, %vm1545
      %vm2266 = vmand %vm1946, %vm1546
      %vm2267 = vmand %vm1947, %vm1547
      %vm2268 = vmand %vm1948, %vm1548
      %vm2269 = vmand %vm1949, %vm1549
      %vm2270 = vmand %vm1950, %vm1550
      %vm2271 = vmand %vm1951, %vm1551
      %vm2272 = vmand %vm1952, %vm1552
      %vm2273 = vmand %vm1953, %vm1553
      %vm2274 = vmand %vm1954, %vm1554
      %vm2275 = vmand %vm1955, %vm1555
      %vm2276 = vmand %vm1956, %vm1556
      %vm2277 = vmand %vm1957, %vm1557
      %vm2278 = vmand %vm1958, %vm1558
      %vm2279 = vmand %vm1959, %vm1559
      %vm2280 = vmand %vm1960, %vm1560
      %vm2281 = vmand %vm1961, %vm1561
      %vm2282 = vmand %vm1962, %vm1562
      %vm2283 = vmand %vm1963, %vm1563
      %vm2284 = vmand %vm1964, %vm1564
      %vm2285 = vmand %vm1965, %vm1565
      %vm2286 = vmand %vm1966, %vm1566
      %vm2287 = vmand %vm1967, %vm1567
      %vm2288 = vmand %vm2256, %vm1600
      %vm2289 = vmand %vm2257, %vm1601
      %vm2290 = vmand %vm2258, %vm1602
      %vm2291 = vmand %vm2259, %vm1603
      %vm2292 = vmand %vm2260, %vm1604
      %vm2293 = vmand %vm2261, %vm1605
      %vm2294 = vmand %vm2262, %vm1606
      %vm2295 = vmand %vm2263, %vm1607
      %vm2296 = vmand %vm2264, %vm1608
      %vm2297 = vmand %vm2265, %vm1609
      %vm2298 = vmand %vm2266, %vm1610
      %vm2299 = vmand %vm2267, %vm1611
      %vm2300 = vmand %vm2268, %vm1612
      %vm2301 = vmand %vm2269, %vm1613
      %vm2302 = vmand %vm2270, %vm1614
      %vm2303 = vmand %vm2271, %vm1615
      %vm2304 = vmand %vm2272, %vm1616
      %vm2305 = vmand %vm2273, %vm1617
      %vm2306 = vmand %vm2274, %vm1618
      %vm2307 = vmand %vm2275, %vm1619
      %vm2308 = vmand %vm2276, %vm1620
      %vm2309 = vmand %vm2277, %vm1621
      %vm2310 = vmand %vm2278, %vm1622
      %vm2311 = vmand %vm2279, %vm1623
      %vm2312 = vmand %vm2280, %vm1624
      %vm2313 = vmand %vm2281, %vm1625
      %vm2314 = vmand %vm2282, %vm1626
      %vm2315 = vmand %vm2283, %vm1627
      %vm2316 = vmand %vm2284, %vm1628
      %vm2317 = vmand %vm2285, %vm1629
      %vm2318 = vmand %vm2286, %vm1630
      %vm2319 = vmand %vm2287, %vm1631
      %v2320 = vsel %vm2288, 1, 0
      %v2321 = vsel %vm2289, 1, 0
      %v2322 = vsel %vm2290, 1, 0
      %v2323 = vsel %vm2291, 1, 0
      %v2324 = vsel %vm2292, 1, 0
      %v2325 = vsel %vm2293, 1, 0
      %v2326 = vsel %vm2294, 1, 0
      %v2327 = vsel %vm2295, 1, 0
      %v2328 = vsel %vm2296, 1, 0
      %v2329 = vsel %vm2297, 1, 0
      %v2330 = vsel %vm2298, 1, 0
      %v2331 = vsel %vm2299, 1, 0
      %v2332 = vsel %vm2300, 1, 0
      %v2333 = vsel %vm2301, 1, 0
      %v2334 = vsel %vm2302, 1, 0
      %v2335 = vsel %vm2303, 1, 0
      %v2336 = vsel %vm2304, 1, 0
      %v2337 = vsel %vm2305, 1, 0
      %v2338 = vsel %vm2306, 1, 0
      %v2339 = vsel %vm2307, 1, 0
      %v2340 = vsel %vm2308, 1, 0
      %v2341 = vsel %vm2309, 1, 0
      %v2342 = vsel %vm2310, 1, 0
      %v2343 = vsel %vm2311, 1, 0
      %v2344 = vsel %vm2312, 1, 0
      %v2345 = vsel %vm2313, 1, 0
      %v2346 = vsel %vm2314, 1, 0
      %v2347 = vsel %vm2315, 1, 0
      %v2348 = vsel %vm2316, 1, 0
      %v2349 = vsel %vm2317, 1, 0
      %v2350 = vsel %vm2318, 1, 0
      %v2351 = vsel %vm2319, 1, 0
      %2352 = vset.pattern.permute.xlu0 0
      %2353 = vperm.xlu0 %2352, %v2320
      %v2354 = vpop.permute.xlu0 %2353
      %2355 = vset.pattern.permute.xlu0 0
      %2356 = vperm.xlu0 %2355, %v2321
      %v2357 = vpop.permute.xlu0 %2356
      %2358 = vset.pattern.permute.xlu0 0
      %2359 = vperm.xlu0 %2358, %v2322
      %v2360 = vpop.permute.xlu0 %2359
      %2361 = vset.pattern.permute.xlu0 0
      %2362 = vperm.xlu0 %2361, %v2323
      %v2363 = vpop.permute.xlu0 %2362
      %2364 = vset.pattern.permute.xlu0 0
      %2365 = vperm.xlu0 %2364, %v2324
      %v2366 = vpop.permute.xlu0 %2365
      %2367 = vset.pattern.permute.xlu0 0
      %2368 = vperm.xlu0 %2367, %v2325
      %v2369 = vpop.permute.xlu0 %2368
      %2370 = vset.pattern.permute.xlu0 0
      %2371 = vperm.xlu0 %2370, %v2326
      %v2372 = vpop.permute.xlu0 %2371
      %2373 = vset.pattern.permute.xlu0 0
      %2374 = vperm.xlu0 %2373, %v2327
      %v2375 = vpop.permute.xlu0 %2374
      %2376 = vset.pattern.permute.xlu0 0
      %2377 = vperm.xlu0 %2376, %v2328
      %v2378 = vpop.permute.xlu0 %2377
      %2379 = vset.pattern.permute.xlu0 0
      %2380 = vperm.xlu0 %2379, %v2329
      %v2381 = vpop.permute.xlu0 %2380
      %2382 = vset.pattern.permute.xlu0 0
      %2383 = vperm.xlu0 %2382, %v2330
      %v2384 = vpop.permute.xlu0 %2383
      %2385 = vset.pattern.permute.xlu0 0
      %2386 = vperm.xlu0 %2385, %v2331
      %v2387 = vpop.permute.xlu0 %2386
      %2388 = vset.pattern.permute.xlu0 0
      %2389 = vperm.xlu0 %2388, %v2332
      %v2390 = vpop.permute.xlu0 %2389
      %2391 = vset.pattern.permute.xlu0 0
      %2392 = vperm.xlu0 %2391, %v2333
      %v2393 = vpop.permute.xlu0 %2392
      %2394 = vset.pattern.permute.xlu0 0
      %2395 = vperm.xlu0 %2394, %v2334
      %v2396 = vpop.permute.xlu0 %2395
      %2397 = vset.pattern.permute.xlu0 0
      %2398 = vperm.xlu0 %2397, %v2335
      %v2399 = vpop.permute.xlu0 %2398
      %2400 = vset.pattern.permute.xlu0 0
      %2401 = vperm.xlu0 %2400, %v2336
      %v2402 = vpop.permute.xlu0 %2401
      %2403 = vset.pattern.permute.xlu0 0
      %2404 = vperm.xlu0 %2403, %v2337
      %v2405 = vpop.permute.xlu0 %2404
      %2406 = vset.pattern.permute.xlu0 0
      %2407 = vperm.xlu0 %2406, %v2338
      %v2408 = vpop.permute.xlu0 %2407
      %2409 = vset.pattern.permute.xlu0 0
      %2410 = vperm.xlu0 %2409, %v2339
      %v2411 = vpop.permute.xlu0 %2410
      %2412 = vset.pattern.permute.xlu0 0
      %2413 = vperm.xlu0 %2412, %v2340
      %v2414 = vpop.permute.xlu0 %2413
      %2415 = vset.pattern.permute.xlu0 0
      %2416 = vperm.xlu0 %2415, %v2341
      %v2417 = vpop.permute.xlu0 %2416
      %2418 = vset.pattern.permute.xlu0 0
      %2419 = vperm.xlu0 %2418, %v2342
      %v2420 = vpop.permute.xlu0 %2419
      %2421 = vset.pattern.permute.xlu0 0
      %2422 = vperm.xlu0 %2421, %v2343
      %v2423 = vpop.permute.xlu0 %2422
      %2424 = vset.pattern.permute.xlu0 0
      %2425 = vperm.xlu0 %2424, %v2344
      %v2426 = vpop.permute.xlu0 %2425
      %2427 = vset.pattern.permute.xlu0 0
      %2428 = vperm.xlu0 %2427, %v2345
      %v2429 = vpop.permute.xlu0 %2428
      %2430 = vset.pattern.permute.xlu0 0
      %2431 = vperm.xlu0 %2430, %v2346
      %v2432 = vpop.permute.xlu0 %2431
      %2433 = vset.pattern.permute.xlu0 0
      %2434 = vperm.xlu0 %2433, %v2347
      %v2435 = vpop.permute.xlu0 %2434
      %2436 = vset.pattern.permute.xlu0 0
      %2437 = vperm.xlu0 %2436, %v2348
      %v2438 = vpop.permute.xlu0 %2437
      %2439 = vset.pattern.permute.xlu0 0
      %2440 = vperm.xlu0 %2439, %v2349
      %v2441 = vpop.permute.xlu0 %2440
      %2442 = vset.pattern.permute.xlu0 0
      %2443 = vperm.xlu0 %2442, %v2350
      %v2444 = vpop.permute.xlu0 %2443
      %2445 = vset.pattern.permute.xlu0 0
      %2446 = vperm.xlu0 %2445, %v2351
      %v2447 = vpop.permute.xlu0 %2446
      %vm2448 = vcmp.eq.s32.totalorder %v2354, 1
      %vm2449 = vcmp.eq.s32.totalorder %v2357, 1
      %vm2450 = vcmp.eq.s32.totalorder %v2360, 1
      %vm2451 = vcmp.eq.s32.totalorder %v2363, 1
      %vm2452 = vcmp.eq.s32.totalorder %v2366, 1
      %vm2453 = vcmp.eq.s32.totalorder %v2369, 1
      %vm2454 = vcmp.eq.s32.totalorder %v2372, 1
      %vm2455 = vcmp.eq.s32.totalorder %v2375, 1
      %vm2456 = vcmp.eq.s32.totalorder %v2378, 1
      %vm2457 = vcmp.eq.s32.totalorder %v2381, 1
      %vm2458 = vcmp.eq.s32.totalorder %v2384, 1
      %vm2459 = vcmp.eq.s32.totalorder %v2387, 1
      %vm2460 = vcmp.eq.s32.totalorder %v2390, 1
      %vm2461 = vcmp.eq.s32.totalorder %v2393, 1
      %vm2462 = vcmp.eq.s32.totalorder %v2396, 1
      %vm2463 = vcmp.eq.s32.totalorder %v2399, 1
      %vm2464 = vcmp.eq.s32.totalorder %v2402, 1
      %vm2465 = vcmp.eq.s32.totalorder %v2405, 1
      %vm2466 = vcmp.eq.s32.totalorder %v2408, 1
      %vm2467 = vcmp.eq.s32.totalorder %v2411, 1
      %vm2468 = vcmp.eq.s32.totalorder %v2414, 1
      %vm2469 = vcmp.eq.s32.totalorder %v2417, 1
      %vm2470 = vcmp.eq.s32.totalorder %v2420, 1
      %vm2471 = vcmp.eq.s32.totalorder %v2423, 1
      %vm2472 = vcmp.eq.s32.totalorder %v2426, 1
      %vm2473 = vcmp.eq.s32.totalorder %v2429, 1
      %vm2474 = vcmp.eq.s32.totalorder %v2432, 1
      %vm2475 = vcmp.eq.s32.totalorder %v2435, 1
      %vm2476 = vcmp.eq.s32.totalorder %v2438, 1
      %vm2477 = vcmp.eq.s32.totalorder %v2441, 1
      %vm2478 = vcmp.eq.s32.totalorder %v2444, 1
      %vm2479 = vcmp.eq.s32.totalorder %v2447, 1
      %v2480 = vsel %vm2448, %v1502, 0.0
      %v2481 = vsel %vm2449, %v1501, 0.0
      %v2482 = vsel %vm2450, %v1500, 0.0
      %v2483 = vsel %vm2451, %v1499, 0.0
      %v2484 = vsel %vm2452, %v1498, 0.0
      %v2485 = vsel %vm2453, %v1497, 0.0
      %v2486 = vsel %vm2454, %v1496, 0.0
      %v2487 = vsel %vm2455, %v1495, 0.0
      %v2488 = vsel %vm2456, %v1494, 0.0
      %v2489 = vsel %vm2457, %v1493, 0.0
      %v2490 = vsel %vm2458, %v1492, 0.0
      %v2491 = vsel %vm2459, %v1491, 0.0
      %v2492 = vsel %vm2460, %v1490, 0.0
      %v2493 = vsel %vm2461, %v1489, 0.0
      %v2494 = vsel %vm2462, %v1488, 0.0
      %v2495 = vsel %vm2463, %v1487, 0.0
      %v2496 = vsel %vm2464, %v1486, 0.0
      %v2497 = vsel %vm2465, %v1485, 0.0
      %v2498 = vsel %vm2466, %v1484, 0.0
      %v2499 = vsel %vm2467, %v1483, 0.0
      %v2500 = vsel %vm2468, %v1482, 0.0
      %v2501 = vsel %vm2469, %v1481, 0.0
      %v2502 = vsel %vm2470, %v1480, 0.0
      %v2503 = vsel %vm2471, %v1479, 0.0
      %v2504 = vsel %vm2472, %v1478, 0.0
      %v2505 = vsel %vm2473, %v1477, 0.0
      %v2506 = vsel %vm2474, %v1476, 0.0
      %v2507 = vsel %vm2475, %v1475, 0.0
      %v2508 = vsel %vm2476, %v1474, 0.0
      %v2509 = vsel %vm2477, %v1473, 0.0
      %v2510 = vsel %vm2478, %v1472, 0.0
      %v2511 = vsel %vm2479, %v1503, 0.0
      %v2512 = vpack.c.bf16 %v2481, %v2480
      %v2513 = vpack.c.bf16 %v2483, %v2482
      %v2514 = vpack.c.bf16 %v2485, %v2484
      %v2515 = vpack.c.bf16 %v2487, %v2486
      %v2516 = vpack.c.bf16 %v2489, %v2488
      %v2517 = vpack.c.bf16 %v2491, %v2490
      %v2518 = vpack.c.bf16 %v2493, %v2492
      %v2519 = vpack.c.bf16 %v2495, %v2494
      %v2520 = vpack.c.bf16 %v2497, %v2496
      %v2521 = vpack.c.bf16 %v2499, %v2498
      %v2522 = vpack.c.bf16 %v2501, %v2500
      %v2523 = vpack.c.bf16 %v2503, %v2502
      %v2524 = vpack.c.bf16 %v2505, %v2504
      %v2525 = vpack.c.bf16 %v2507, %v2506
      %v2526 = vpack.c.bf16 %v2509, %v2508
      %v2527 = vpack.c.bf16 %v2511, %v2510
      %v2528 = vadd.s32 %v366, 1
      %v2529 = vadd.s32 %v367, 1
      %v2530 = vadd.s32 %v368, 1
      %v2531 = vadd.s32 %v369, 1
      %v2532 = vadd.s32 %v370, 1
      %v2533 = vadd.s32 %v371, 1
      %v2534 = vadd.s32 %v372, 1
      %v2535 = vadd.s32 %v373, 1
      %v2536 = vadd.s32 %v374, 1
      %v2537 = vadd.s32 %v375, 1
      %v2538 = vadd.s32 %v376, 1
      %v2539 = vadd.s32 %v377, 1
      %v2540 = vadd.s32 %v378, 1
      %v2541 = vadd.s32 %v379, 1
      %v2542 = vadd.s32 %v380, 1
      %v2543 = vadd.s32 %v381, 1
      %v2544 = vadd.s32 %v382, 1
      %v2545 = vadd.s32 %v383, 1
      %v2546 = vadd.s32 %v384, 1
      %v2547 = vadd.s32 %v385, 1
      %v2548 = vadd.s32 %v386, 1
      %v2549 = vadd.s32 %v387, 1
      %v2550 = vadd.s32 %v388, 1
      %v2551 = vadd.s32 %v389, 1
      %v2552 = vadd.s32 %v390, 1
      %v2553 = vadd.s32 %v391, 1
      %v2554 = vadd.s32 %v392, 1
      %v2555 = vadd.s32 %v393, 1
      %v2556 = vadd.s32 %v394, 1
      %v2557 = vadd.s32 %v395, 1
      %v2558 = vadd.s32 %v396, 1
      %v2559 = vadd.s32 %v397, 1
      %vm2560 = vcmp.ge.s32.totalorder %v2528, 0
      %vm2561 = vcmp.ge.s32.totalorder %v2529, 0
      %vm2562 = vcmp.ge.s32.totalorder %v2530, 0
      %vm2563 = vcmp.ge.s32.totalorder %v2531, 0
      %vm2564 = vcmp.ge.s32.totalorder %v2532, 0
      %vm2565 = vcmp.ge.s32.totalorder %v2533, 0
      %vm2566 = vcmp.ge.s32.totalorder %v2534, 0
      %vm2567 = vcmp.ge.s32.totalorder %v2535, 0
      %vm2568 = vcmp.ge.s32.totalorder %v2536, 0
      %vm2569 = vcmp.ge.s32.totalorder %v2537, 0
      %vm2570 = vcmp.ge.s32.totalorder %v2538, 0
      %vm2571 = vcmp.ge.s32.totalorder %v2539, 0
      %vm2572 = vcmp.ge.s32.totalorder %v2540, 0
      %vm2573 = vcmp.ge.s32.totalorder %v2541, 0
      %vm2574 = vcmp.ge.s32.totalorder %v2542, 0
      %vm2575 = vcmp.ge.s32.totalorder %v2543, 0
      %vm2576 = vcmp.ge.s32.totalorder %v2544, 0
      %vm2577 = vcmp.ge.s32.totalorder %v2545, 0
      %vm2578 = vcmp.ge.s32.totalorder %v2546, 0
      %vm2579 = vcmp.ge.s32.totalorder %v2547, 0
      %vm2580 = vcmp.ge.s32.totalorder %v2548, 0
      %vm2581 = vcmp.ge.s32.totalorder %v2549, 0
      %vm2582 = vcmp.ge.s32.totalorder %v2550, 0
      %vm2583 = vcmp.ge.s32.totalorder %v2551, 0
      %vm2584 = vcmp.ge.s32.totalorder %v2552, 0
      %vm2585 = vcmp.ge.s32.totalorder %v2553, 0
      %vm2586 = vcmp.ge.s32.totalorder %v2554, 0
      %vm2587 = vcmp.ge.s32.totalorder %v2555, 0
      %vm2588 = vcmp.ge.s32.totalorder %v2556, 0
      %vm2589 = vcmp.ge.s32.totalorder %v2557, 0
      %vm2590 = vcmp.ge.s32.totalorder %v2558, 0
      %vm2591 = vcmp.ge.s32.totalorder %v2559, 0
      %vm2592 = vcmp.lt.s32.totalorder %v2528, 16
      %vm2593 = vcmp.lt.s32.totalorder %v2529, 16
      %vm2594 = vcmp.lt.s32.totalorder %v2530, 16
      %vm2595 = vcmp.lt.s32.totalorder %v2531, 16
      %vm2596 = vcmp.lt.s32.totalorder %v2532, 16
      %vm2597 = vcmp.lt.s32.totalorder %v2533, 16
      %vm2598 = vcmp.lt.s32.totalorder %v2534, 16
      %vm2599 = vcmp.lt.s32.totalorder %v2535, 16
      %vm2600 = vcmp.lt.s32.totalorder %v2536, 16
      %vm2601 = vcmp.lt.s32.totalorder %v2537, 16
      %vm2602 = vcmp.lt.s32.totalorder %v2538, 16
      %vm2603 = vcmp.lt.s32.totalorder %v2539, 16
      %vm2604 = vcmp.lt.s32.totalorder %v2540, 16
      %vm2605 = vcmp.lt.s32.totalorder %v2541, 16
      %vm2606 = vcmp.lt.s32.totalorder %v2542, 16
      %vm2607 = vcmp.lt.s32.totalorder %v2543, 16
      %vm2608 = vcmp.lt.s32.totalorder %v2544, 16
      %vm2609 = vcmp.lt.s32.totalorder %v2545, 16
      %vm2610 = vcmp.lt.s32.totalorder %v2546, 16
      %vm2611 = vcmp.lt.s32.totalorder %v2547, 16
      %vm2612 = vcmp.lt.s32.totalorder %v2548, 16
      %vm2613 = vcmp.lt.s32.totalorder %v2549, 16
      %vm2614 = vcmp.lt.s32.totalorder %v2550, 16
      %vm2615 = vcmp.lt.s32.totalorder %v2551, 16
      %vm2616 = vcmp.lt.s32.totalorder %v2552, 16
      %vm2617 = vcmp.lt.s32.totalorder %v2553, 16
      %vm2618 = vcmp.lt.s32.totalorder %v2554, 16
      %vm2619 = vcmp.lt.s32.totalorder %v2555, 16
      %vm2620 = vcmp.lt.s32.totalorder %v2556, 16
      %vm2621 = vcmp.lt.s32.totalorder %v2557, 16
      %vm2622 = vcmp.lt.s32.totalorder %v2558, 16
      %vm2623 = vcmp.lt.s32.totalorder %v2559, 16
      %vm2624 = vmand %vm2560, %vm2592
      %vm2625 = vmand %vm2561, %vm2593
      %vm2626 = vmand %vm2562, %vm2594
      %vm2627 = vmand %vm2563, %vm2595
      %vm2628 = vmand %vm2564, %vm2596
      %vm2629 = vmand %vm2565, %vm2597
      %vm2630 = vmand %vm2566, %vm2598
      %vm2631 = vmand %vm2567, %vm2599
      %vm2632 = vmand %vm2568, %vm2600
      %vm2633 = vmand %vm2569, %vm2601
      %vm2634 = vmand %vm2570, %vm2602
      %vm2635 = vmand %vm2571, %vm2603
      %vm2636 = vmand %vm2572, %vm2604
      %vm2637 = vmand %vm2573, %vm2605
      %vm2638 = vmand %vm2574, %vm2606
      %vm2639 = vmand %vm2575, %vm2607
      %vm2640 = vmand %vm2576, %vm2608
      %vm2641 = vmand %vm2577, %vm2609
      %vm2642 = vmand %vm2578, %vm2610
      %vm2643 = vmand %vm2579, %vm2611
      %vm2644 = vmand %vm2580, %vm2612
      %vm2645 = vmand %vm2581, %vm2613
      %vm2646 = vmand %vm2582, %vm2614
      %vm2647 = vmand %vm2583, %vm2615
      %vm2648 = vmand %vm2584, %vm2616
      %vm2649 = vmand %vm2585, %vm2617
      %vm2650 = vmand %vm2586, %vm2618
      %vm2651 = vmand %vm2587, %vm2619
      %vm2652 = vmand %vm2588, %vm2620
      %vm2653 = vmand %vm2589, %vm2621
      %vm2654 = vmand %vm2590, %vm2622
      %vm2655 = vmand %vm2591, %vm2623
      %vm2656 = vmand %vm2624, %vm767
      %vm2657 = vmand %vm2625, %vm768
      %vm2658 = vmand %vm2626, %vm769
      %vm2659 = vmand %vm2627, %vm770
      %vm2660 = vmand %vm2628, %vm771
      %vm2661 = vmand %vm2629, %vm772
      %vm2662 = vmand %vm2630, %vm773
      %vm2663 = vmand %vm2631, %vm774
      %vm2664 = vmand %vm2632, %vm775
      %vm2665 = vmand %vm2633, %vm776
      %vm2666 = vmand %vm2634, %vm777
      %vm2667 = vmand %vm2635, %vm778
      %vm2668 = vmand %vm2636, %vm779
      %vm2669 = vmand %vm2637, %vm780
      %vm2670 = vmand %vm2638, %vm781
      %vm2671 = vmand %vm2639, %vm782
      %vm2672 = vmand %vm2640, %vm783
      %vm2673 = vmand %vm2641, %vm784
      %vm2674 = vmand %vm2642, %vm785
      %vm2675 = vmand %vm2643, %vm786
      %vm2676 = vmand %vm2644, %vm787
      %vm2677 = vmand %vm2645, %vm788
      %vm2678 = vmand %vm2646, %vm789
      %vm2679 = vmand %vm2647, %vm790
      %vm2680 = vmand %vm2648, %vm791
      %vm2681 = vmand %vm2649, %vm792
      %vm2682 = vmand %vm2650, %vm793
      %vm2683 = vmand %vm2651, %vm794
      %vm2684 = vmand %vm2652, %vm795
      %vm2685 = vmand %vm2653, %vm796
      %vm2686 = vmand %vm2654, %vm797
      %vm2687 = vmand %vm2655, %vm798
      %vm2688 = vmand %vm2656, %vm831
      %vm2689 = vmand %vm2657, %vm832
      %vm2690 = vmand %vm2658, %vm833
      %vm2691 = vmand %vm2659, %vm834
      %vm2692 = vmand %vm2660, %vm835
      %vm2693 = vmand %vm2661, %vm836
      %vm2694 = vmand %vm2662, %vm837
      %vm2695 = vmand %vm2663, %vm838
      %vm2696 = vmand %vm2664, %vm839
      %vm2697 = vmand %vm2665, %vm840
      %vm2698 = vmand %vm2666, %vm841
      %vm2699 = vmand %vm2667, %vm842
      %vm2700 = vmand %vm2668, %vm843
      %vm2701 = vmand %vm2669, %vm844
      %vm2702 = vmand %vm2670, %vm845
      %vm2703 = vmand %vm2671, %vm846
      %vm2704 = vmand %vm2672, %vm847
      %vm2705 = vmand %vm2673, %vm848
      %vm2706 = vmand %vm2674, %vm849
      %vm2707 = vmand %vm2675, %vm850
      %vm2708 = vmand %vm2676, %vm851
      %vm2709 = vmand %vm2677, %vm852
      %vm2710 = vmand %vm2678, %vm853
      %vm2711 = vmand %vm2679, %vm854
      %vm2712 = vmand %vm2680, %vm855
      %vm2713 = vmand %vm2681, %vm856
      %vm2714 = vmand %vm2682, %vm857
      %vm2715 = vmand %vm2683, %vm858
      %vm2716 = vmand %vm2684, %vm859
      %vm2717 = vmand %vm2685, %vm860
      %vm2718 = vmand %vm2686, %vm861
      %vm2719 = vmand %vm2687, %vm862
      %v2720 = vsel %vm2688, 1, 0
      %v2721 = vsel %vm2689, 1, 0
      %v2722 = vsel %vm2690, 1, 0
      %v2723 = vsel %vm2691, 1, 0
      %v2724 = vsel %vm2692, 1, 0
      %v2725 = vsel %vm2693, 1, 0
      %v2726 = vsel %vm2694, 1, 0
      %v2727 = vsel %vm2695, 1, 0
      %v2728 = vsel %vm2696, 1, 0
      %v2729 = vsel %vm2697, 1, 0
      %v2730 = vsel %vm2698, 1, 0
      %v2731 = vsel %vm2699, 1, 0
      %v2732 = vsel %vm2700, 1, 0
      %v2733 = vsel %vm2701, 1, 0
      %v2734 = vsel %vm2702, 1, 0
      %v2735 = vsel %vm2703, 1, 0
      %v2736 = vsel %vm2704, 1, 0
      %v2737 = vsel %vm2705, 1, 0
      %v2738 = vsel %vm2706, 1, 0
      %v2739 = vsel %vm2707, 1, 0
      %v2740 = vsel %vm2708, 1, 0
      %v2741 = vsel %vm2709, 1, 0
      %v2742 = vsel %vm2710, 1, 0
      %v2743 = vsel %vm2711, 1, 0
      %v2744 = vsel %vm2712, 1, 0
      %v2745 = vsel %vm2713, 1, 0
      %v2746 = vsel %vm2714, 1, 0
      %v2747 = vsel %vm2715, 1, 0
      %v2748 = vsel %vm2716, 1, 0
      %v2749 = vsel %vm2717, 1, 0
      %v2750 = vsel %vm2718, 1, 0
      %v2751 = vsel %vm2719, 1, 0
      %2752 = vset.pattern.permute.xlu0 0
      %2753 = vperm.xlu0 %2752, %v2720
      %v2754 = vpop.permute.xlu0 %2753
      %2755 = vset.pattern.permute.xlu0 0
      %2756 = vperm.xlu0 %2755, %v2721
      %v2757 = vpop.permute.xlu0 %2756
      %2758 = vset.pattern.permute.xlu0 0
      %2759 = vperm.xlu0 %2758, %v2722
      %v2760 = vpop.permute.xlu0 %2759
      %2761 = vset.pattern.permute.xlu0 0
      %2762 = vperm.xlu0 %2761, %v2723
      %v2763 = vpop.permute.xlu0 %2762
      %2764 = vset.pattern.permute.xlu0 0
      %2765 = vperm.xlu0 %2764, %v2724
      %v2766 = vpop.permute.xlu0 %2765
      %2767 = vset.pattern.permute.xlu0 0
      %2768 = vperm.xlu0 %2767, %v2725
      %v2769 = vpop.permute.xlu0 %2768
      %2770 = vset.pattern.permute.xlu0 0
      %2771 = vperm.xlu0 %2770, %v2726
      %v2772 = vpop.permute.xlu0 %2771
      %2773 = vset.pattern.permute.xlu0 0
      %2774 = vperm.xlu0 %2773, %v2727
      %v2775 = vpop.permute.xlu0 %2774
      %2776 = vset.pattern.permute.xlu0 0
      %2777 = vperm.xlu0 %2776, %v2728
      %v2778 = vpop.permute.xlu0 %2777
      %2779 = vset.pattern.permute.xlu0 0
      %2780 = vperm.xlu0 %2779, %v2729
      %v2781 = vpop.permute.xlu0 %2780
      %2782 = vset.pattern.permute.xlu0 0
      %2783 = vperm.xlu0 %2782, %v2730
      %v2784 = vpop.permute.xlu0 %2783
      %2785 = vset.pattern.permute.xlu0 0
      %2786 = vperm.xlu0 %2785, %v2731
      %v2787 = vpop.permute.xlu0 %2786
      %2788 = vset.pattern.permute.xlu0 0
      %2789 = vperm.xlu0 %2788, %v2732
      %v2790 = vpop.permute.xlu0 %2789
      %2791 = vset.pattern.permute.xlu0 0
      %2792 = vperm.xlu0 %2791, %v2733
      %v2793 = vpop.permute.xlu0 %2792
      %2794 = vset.pattern.permute.xlu0 0
      %2795 = vperm.xlu0 %2794, %v2734
      %v2796 = vpop.permute.xlu0 %2795
      %2797 = vset.pattern.permute.xlu0 0
      %2798 = vperm.xlu0 %2797, %v2735
      %v2799 = vpop.permute.xlu0 %2798
      %2800 = vset.pattern.permute.xlu0 0
      %2801 = vperm.xlu0 %2800, %v2736
      %v2802 = vpop.permute.xlu0 %2801
      %2803 = vset.pattern.permute.xlu0 0
      %2804 = vperm.xlu0 %2803, %v2737
      %v2805 = vpop.permute.xlu0 %2804
      %2806 = vset.pattern.permute.xlu0 0
      %2807 = vperm.xlu0 %2806, %v2738
      %v2808 = vpop.permute.xlu0 %2807
      %2809 = vset.pattern.permute.xlu0 0
      %2810 = vperm.xlu0 %2809, %v2739
      %v2811 = vpop.permute.xlu0 %2810
      %2812 = vset.pattern.permute.xlu0 0
      %2813 = vperm.xlu0 %2812, %v2740
      %v2814 = vpop.permute.xlu0 %2813
      %2815 = vset.pattern.permute.xlu0 0
      %2816 = vperm.xlu0 %2815, %v2741
      %v2817 = vpop.permute.xlu0 %2816
      %2818 = vset.pattern.permute.xlu0 0
      %2819 = vperm.xlu0 %2818, %v2742
      %v2820 = vpop.permute.xlu0 %2819
      %2821 = vset.pattern.permute.xlu0 0
      %2822 = vperm.xlu0 %2821, %v2743
      %v2823 = vpop.permute.xlu0 %2822
      %2824 = vset.pattern.permute.xlu0 0
      %2825 = vperm.xlu0 %2824, %v2744
      %v2826 = vpop.permute.xlu0 %2825
      %2827 = vset.pattern.permute.xlu0 0
      %2828 = vperm.xlu0 %2827, %v2745
      %v2829 = vpop.permute.xlu0 %2828
      %2830 = vset.pattern.permute.xlu0 0
      %2831 = vperm.xlu0 %2830, %v2746
      %v2832 = vpop.permute.xlu0 %2831
      %2833 = vset.pattern.permute.xlu0 0
      %2834 = vperm.xlu0 %2833, %v2747
      %v2835 = vpop.permute.xlu0 %2834
      %2836 = vset.pattern.permute.xlu0 0
      %2837 = vperm.xlu0 %2836, %v2748
      %v2838 = vpop.permute.xlu0 %2837
      %2839 = vset.pattern.permute.xlu0 0
      %2840 = vperm.xlu0 %2839, %v2749
      %v2841 = vpop.permute.xlu0 %2840
      %2842 = vset.pattern.permute.xlu0 0
      %2843 = vperm.xlu0 %2842, %v2750
      %v2844 = vpop.permute.xlu0 %2843
      %2845 = vset.pattern.permute.xlu0 0
      %2846 = vperm.xlu0 %2845, %v2751
      %v2847 = vpop.permute.xlu0 %2846
      %vm2848 = vcmp.eq.s32.totalorder %v2754, 1
      %vm2849 = vcmp.eq.s32.totalorder %v2757, 1
      %vm2850 = vcmp.eq.s32.totalorder %v2760, 1
      %vm2851 = vcmp.eq.s32.totalorder %v2763, 1
      %vm2852 = vcmp.eq.s32.totalorder %v2766, 1
      %vm2853 = vcmp.eq.s32.totalorder %v2769, 1
      %vm2854 = vcmp.eq.s32.totalorder %v2772, 1
      %vm2855 = vcmp.eq.s32.totalorder %v2775, 1
      %vm2856 = vcmp.eq.s32.totalorder %v2778, 1
      %vm2857 = vcmp.eq.s32.totalorder %v2781, 1
      %vm2858 = vcmp.eq.s32.totalorder %v2784, 1
      %vm2859 = vcmp.eq.s32.totalorder %v2787, 1
      %vm2860 = vcmp.eq.s32.totalorder %v2790, 1
      %vm2861 = vcmp.eq.s32.totalorder %v2793, 1
      %vm2862 = vcmp.eq.s32.totalorder %v2796, 1
      %vm2863 = vcmp.eq.s32.totalorder %v2799, 1
      %vm2864 = vcmp.eq.s32.totalorder %v2802, 1
      %vm2865 = vcmp.eq.s32.totalorder %v2805, 1
      %vm2866 = vcmp.eq.s32.totalorder %v2808, 1
      %vm2867 = vcmp.eq.s32.totalorder %v2811, 1
      %vm2868 = vcmp.eq.s32.totalorder %v2814, 1
      %vm2869 = vcmp.eq.s32.totalorder %v2817, 1
      %vm2870 = vcmp.eq.s32.totalorder %v2820, 1
      %vm2871 = vcmp.eq.s32.totalorder %v2823, 1
      %vm2872 = vcmp.eq.s32.totalorder %v2826, 1
      %vm2873 = vcmp.eq.s32.totalorder %v2829, 1
      %vm2874 = vcmp.eq.s32.totalorder %v2832, 1
      %vm2875 = vcmp.eq.s32.totalorder %v2835, 1
      %vm2876 = vcmp.eq.s32.totalorder %v2838, 1
      %vm2877 = vcmp.eq.s32.totalorder %v2841, 1
      %vm2878 = vcmp.eq.s32.totalorder %v2844, 1
      %vm2879 = vcmp.eq.s32.totalorder %v2847, 1
      %v2880 = vsel %vm2848, %v604, 0.0
      %v2881 = vsel %vm2849, %v603, 0.0
      %v2882 = vsel %vm2850, %v602, 0.0
      %v2883 = vsel %vm2851, %v601, 0.0
      %v2884 = vsel %vm2852, %v600, 0.0
      %v2885 = vsel %vm2853, %v599, 0.0
      %v2886 = vsel %vm2854, %v598, 0.0
      %v2887 = vsel %vm2855, %v597, 0.0
      %v2888 = vsel %vm2856, %v596, 0.0
      %v2889 = vsel %vm2857, %v595, 0.0
      %v2890 = vsel %vm2858, %v594, 0.0
      %v2891 = vsel %vm2859, %v593, 0.0
      %v2892 = vsel %vm2860, %v592, 0.0
      %v2893 = vsel %vm2861, %v591, 0.0
      %v2894 = vsel %vm2862, %v590, 0.0
      %v2895 = vsel %vm2863, %v589, 0.0
      %v2896 = vsel %vm2864, %v588, 0.0
      %v2897 = vsel %vm2865, %v587, 0.0
      %v2898 = vsel %vm2866, %v586, 0.0
      %v2899 = vsel %vm2867, %v585, 0.0
      %v2900 = vsel %vm2868, %v584, 0.0
      %v2901 = vsel %vm2869, %v583, 0.0
      %v2902 = vsel %vm2870, %v582, 0.0
      %v2903 = vsel %vm2871, %v581, 0.0
      %v2904 = vsel %vm2872, %v580, 0.0
      %v2905 = vsel %vm2873, %v579, 0.0
      %v2906 = vsel %vm2874, %v578, 0.0
      %v2907 = vsel %vm2875, %v577, 0.0
      %v2908 = vsel %vm2876, %v576, 0.0
      %v2909 = vsel %vm2877, %v575, 0.0
      %v2910 = vsel %vm2878, %v606, 0.0
      %v2911 = vsel %vm2879, %v605, 0.0
      %v2912 = vpack.c.bf16 %v2881, %v2880
      %v2913 = vpack.c.bf16 %v2883, %v2882
      %v2914 = vpack.c.bf16 %v2885, %v2884
      %v2915 = vpack.c.bf16 %v2887, %v2886
      %v2916 = vpack.c.bf16 %v2889, %v2888
      %v2917 = vpack.c.bf16 %v2891, %v2890
      %v2918 = vpack.c.bf16 %v2893, %v2892
      %v2919 = vpack.c.bf16 %v2895, %v2894
      %v2920 = vpack.c.bf16 %v2897, %v2896
      %v2921 = vpack.c.bf16 %v2899, %v2898
      %v2922 = vpack.c.bf16 %v2901, %v2900
      %v2923 = vpack.c.bf16 %v2903, %v2902
      %v2924 = vpack.c.bf16 %v2905, %v2904
      %v2925 = vpack.c.bf16 %v2907, %v2906
      %v2926 = vpack.c.bf16 %v2909, %v2908
      %v2927 = vpack.c.bf16 %v2911, %v2910
      %vm2928 = vmand %vm2624, %vm1103
      %vm2929 = vmand %vm2625, %vm1104
      %vm2930 = vmand %vm2626, %vm1105
      %vm2931 = vmand %vm2627, %vm1106
      %vm2932 = vmand %vm2628, %vm1107
      %vm2933 = vmand %vm2629, %vm1108
      %vm2934 = vmand %vm2630, %vm1109
      %vm2935 = vmand %vm2631, %vm1110
      %vm2936 = vmand %vm2632, %vm1111
      %vm2937 = vmand %vm2633, %vm1112
      %vm2938 = vmand %vm2634, %vm1113
      %vm2939 = vmand %vm2635, %vm1114
      %vm2940 = vmand %vm2636, %vm1115
      %vm2941 = vmand %vm2637, %vm1116
      %vm2942 = vmand %vm2638, %vm1117
      %vm2943 = vmand %vm2639, %vm1118
      %vm2944 = vmand %vm2640, %vm1119
      %vm2945 = vmand %vm2641, %vm1120
      %vm2946 = vmand %vm2642, %vm1121
      %vm2947 = vmand %vm2643, %vm1122
      %vm2948 = vmand %vm2644, %vm1123
      %vm2949 = vmand %vm2645, %vm1124
      %vm2950 = vmand %vm2646, %vm1125
      %vm2951 = vmand %vm2647, %vm1126
      %vm2952 = vmand %vm2648, %vm1127
      %vm2953 = vmand %vm2649, %vm1128
      %vm2954 = vmand %vm2650, %vm1129
      %vm2955 = vmand %vm2651, %vm1130
      %vm2956 = vmand %vm2652, %vm1131
      %vm2957 = vmand %vm2653, %vm1132
      %vm2958 = vmand %vm2654, %vm1133
      %vm2959 = vmand %vm2655, %vm1134
      %vm2960 = vmand %vm2928, %vm1167
      %vm2961 = vmand %vm2929, %vm1168
      %vm2962 = vmand %vm2930, %vm1169
      %vm2963 = vmand %vm2931, %vm1170
      %vm2964 = vmand %vm2932, %vm1171
      %vm2965 = vmand %vm2933, %vm1172
      %vm2966 = vmand %vm2934, %vm1173
      %vm2967 = vmand %vm2935, %vm1174
      %vm2968 = vmand %vm2936, %vm1175
      %vm2969 = vmand %vm2937, %vm1176
      %vm2970 = vmand %vm2938, %vm1177
      %vm2971 = vmand %vm2939, %vm1178
      %vm2972 = vmand %vm2940, %vm1179
      %vm2973 = vmand %vm2941, %vm1180
      %vm2974 = vmand %vm2942, %vm1181
      %vm2975 = vmand %vm2943, %vm1182
      %vm2976 = vmand %vm2944, %vm1183
      %vm2977 = vmand %vm2945, %vm1184
      %vm2978 = vmand %vm2946, %vm1185
      %vm2979 = vmand %vm2947, %vm1186
      %vm2980 = vmand %vm2948, %vm1187
      %vm2981 = vmand %vm2949, %vm1188
      %vm2982 = vmand %vm2950, %vm1189
      %vm2983 = vmand %vm2951, %vm1190
      %vm2984 = vmand %vm2952, %vm1191
      %vm2985 = vmand %vm2953, %vm1192
      %vm2986 = vmand %vm2954, %vm1193
      %vm2987 = vmand %vm2955, %vm1194
      %vm2988 = vmand %vm2956, %vm1195
      %vm2989 = vmand %vm2957, %vm1196
      %vm2990 = vmand %vm2958, %vm1197
      %vm2991 = vmand %vm2959, %vm1198
      %v2992 = vsel %vm2960, 1, 0
      %v2993 = vsel %vm2961, 1, 0
      %v2994 = vsel %vm2962, 1, 0
      %v2995 = vsel %vm2963, 1, 0
      %v2996 = vsel %vm2964, 1, 0
      %v2997 = vsel %vm2965, 1, 0
      %v2998 = vsel %vm2966, 1, 0
      %v2999 = vsel %vm2967, 1, 0
      %v3000 = vsel %vm2968, 1, 0
      %v3001 = vsel %vm2969, 1, 0
      %v3002 = vsel %vm2970, 1, 0
      %v3003 = vsel %vm2971, 1, 0
      %v3004 = vsel %vm2972, 1, 0
      %v3005 = vsel %vm2973, 1, 0
      %v3006 = vsel %vm2974, 1, 0
      %v3007 = vsel %vm2975, 1, 0
      %v3008 = vsel %vm2976, 1, 0
      %v3009 = vsel %vm2977, 1, 0
      %v3010 = vsel %vm2978, 1, 0
      %v3011 = vsel %vm2979, 1, 0
      %v3012 = vsel %vm2980, 1, 0
      %v3013 = vsel %vm2981, 1, 0
      %v3014 = vsel %vm2982, 1, 0
      %v3015 = vsel %vm2983, 1, 0
      %v3016 = vsel %vm2984, 1, 0
      %v3017 = vsel %vm2985, 1, 0
      %v3018 = vsel %vm2986, 1, 0
      %v3019 = vsel %vm2987, 1, 0
      %v3020 = vsel %vm2988, 1, 0
      %v3021 = vsel %vm2989, 1, 0
      %v3022 = vsel %vm2990, 1, 0
      %v3023 = vsel %vm2991, 1, 0
      %3024 = vset.pattern.permute.xlu0 0
      %3025 = vperm.xlu0 %3024, %v2992
      %v3026 = vpop.permute.xlu0 %3025
      %3027 = vset.pattern.permute.xlu0 0
      %3028 = vperm.xlu0 %3027, %v2993
      %v3029 = vpop.permute.xlu0 %3028
      %3030 = vset.pattern.permute.xlu0 0
      %3031 = vperm.xlu0 %3030, %v2994
      %v3032 = vpop.permute.xlu0 %3031
      %3033 = vset.pattern.permute.xlu0 0
      %3034 = vperm.xlu0 %3033, %v2995
      %v3035 = vpop.permute.xlu0 %3034
      %3036 = vset.pattern.permute.xlu0 0
      %3037 = vperm.xlu0 %3036, %v2996
      %v3038 = vpop.permute.xlu0 %3037
      %3039 = vset.pattern.permute.xlu0 0
      %3040 = vperm.xlu0 %3039, %v2997
      %v3041 = vpop.permute.xlu0 %3040
      %3042 = vset.pattern.permute.xlu0 0
      %3043 = vperm.xlu0 %3042, %v2998
      %v3044 = vpop.permute.xlu0 %3043
      %3045 = vset.pattern.permute.xlu0 0
      %3046 = vperm.xlu0 %3045, %v2999
      %v3047 = vpop.permute.xlu0 %3046
      %3048 = vset.pattern.permute.xlu0 0
      %3049 = vperm.xlu0 %3048, %v3000
      %v3050 = vpop.permute.xlu0 %3049
      %3051 = vset.pattern.permute.xlu0 0
      %3052 = vperm.xlu0 %3051, %v3001
      %v3053 = vpop.permute.xlu0 %3052
      %3054 = vset.pattern.permute.xlu0 0
      %3055 = vperm.xlu0 %3054, %v3002
      %v3056 = vpop.permute.xlu0 %3055
      %3057 = vset.pattern.permute.xlu0 0
      %3058 = vperm.xlu0 %3057, %v3003
      %v3059 = vpop.permute.xlu0 %3058
      %3060 = vset.pattern.permute.xlu0 0
      %3061 = vperm.xlu0 %3060, %v3004
      %v3062 = vpop.permute.xlu0 %3061
      %3063 = vset.pattern.permute.xlu0 0
      %3064 = vperm.xlu0 %3063, %v3005
      %v3065 = vpop.permute.xlu0 %3064
      %3066 = vset.pattern.permute.xlu0 0
      %3067 = vperm.xlu0 %3066, %v3006
      %v3068 = vpop.permute.xlu0 %3067
      %3069 = vset.pattern.permute.xlu0 0
      %3070 = vperm.xlu0 %3069, %v3007
      %v3071 = vpop.permute.xlu0 %3070
      %3072 = vset.pattern.permute.xlu0 0
      %3073 = vperm.xlu0 %3072, %v3008
      %v3074 = vpop.permute.xlu0 %3073
      %3075 = vset.pattern.permute.xlu0 0
      %3076 = vperm.xlu0 %3075, %v3009
      %v3077 = vpop.permute.xlu0 %3076
      %3078 = vset.pattern.permute.xlu0 0
      %3079 = vperm.xlu0 %3078, %v3010
      %v3080 = vpop.permute.xlu0 %3079
      %3081 = vset.pattern.permute.xlu0 0
      %3082 = vperm.xlu0 %3081, %v3011
      %v3083 = vpop.permute.xlu0 %3082
      %3084 = vset.pattern.permute.xlu0 0
      %3085 = vperm.xlu0 %3084, %v3012
      %v3086 = vpop.permute.xlu0 %3085
      %3087 = vset.pattern.permute.xlu0 0
      %3088 = vperm.xlu0 %3087, %v3013
      %v3089 = vpop.permute.xlu0 %3088
      %3090 = vset.pattern.permute.xlu0 0
      %3091 = vperm.xlu0 %3090, %v3014
      %v3092 = vpop.permute.xlu0 %3091
      %3093 = vset.pattern.permute.xlu0 0
      %3094 = vperm.xlu0 %3093, %v3015
      %v3095 = vpop.permute.xlu0 %3094
      %3096 = vset.pattern.permute.xlu0 0
      %3097 = vperm.xlu0 %3096, %v3016
      %v3098 = vpop.permute.xlu0 %3097
      %3099 = vset.pattern.permute.xlu0 0
      %3100 = vperm.xlu0 %3099, %v3017
      %v3101 = vpop.permute.xlu0 %3100
      %3102 = vset.pattern.permute.xlu0 0
      %3103 = vperm.xlu0 %3102, %v3018
      %v3104 = vpop.permute.xlu0 %3103
      %3105 = vset.pattern.permute.xlu0 0
      %3106 = vperm.xlu0 %3105, %v3019
      %v3107 = vpop.permute.xlu0 %3106
      %3108 = vset.pattern.permute.xlu0 0
      %3109 = vperm.xlu0 %3108, %v3020
      %v3110 = vpop.permute.xlu0 %3109
      %3111 = vset.pattern.permute.xlu0 0
      %3112 = vperm.xlu0 %3111, %v3021
      %v3113 = vpop.permute.xlu0 %3112
      %3114 = vset.pattern.permute.xlu0 0
      %3115 = vperm.xlu0 %3114, %v3022
      %v3116 = vpop.permute.xlu0 %3115
      %3117 = vset.pattern.permute.xlu0 0
      %3118 = vperm.xlu0 %3117, %v3023
      %v3119 = vpop.permute.xlu0 %3118
      %vm3120 = vcmp.eq.s32.totalorder %v3026, 1
      %vm3121 = vcmp.eq.s32.totalorder %v3029, 1
      %vm3122 = vcmp.eq.s32.totalorder %v3032, 1
      %vm3123 = vcmp.eq.s32.totalorder %v3035, 1
      %vm3124 = vcmp.eq.s32.totalorder %v3038, 1
      %vm3125 = vcmp.eq.s32.totalorder %v3041, 1
      %vm3126 = vcmp.eq.s32.totalorder %v3044, 1
      %vm3127 = vcmp.eq.s32.totalorder %v3047, 1
      %vm3128 = vcmp.eq.s32.totalorder %v3050, 1
      %vm3129 = vcmp.eq.s32.totalorder %v3053, 1
      %vm3130 = vcmp.eq.s32.totalorder %v3056, 1
      %vm3131 = vcmp.eq.s32.totalorder %v3059, 1
      %vm3132 = vcmp.eq.s32.totalorder %v3062, 1
      %vm3133 = vcmp.eq.s32.totalorder %v3065, 1
      %vm3134 = vcmp.eq.s32.totalorder %v3068, 1
      %vm3135 = vcmp.eq.s32.totalorder %v3071, 1
      %vm3136 = vcmp.eq.s32.totalorder %v3074, 1
      %vm3137 = vcmp.eq.s32.totalorder %v3077, 1
      %vm3138 = vcmp.eq.s32.totalorder %v3080, 1
      %vm3139 = vcmp.eq.s32.totalorder %v3083, 1
      %vm3140 = vcmp.eq.s32.totalorder %v3086, 1
      %vm3141 = vcmp.eq.s32.totalorder %v3089, 1
      %vm3142 = vcmp.eq.s32.totalorder %v3092, 1
      %vm3143 = vcmp.eq.s32.totalorder %v3095, 1
      %vm3144 = vcmp.eq.s32.totalorder %v3098, 1
      %vm3145 = vcmp.eq.s32.totalorder %v3101, 1
      %vm3146 = vcmp.eq.s32.totalorder %v3104, 1
      %vm3147 = vcmp.eq.s32.totalorder %v3107, 1
      %vm3148 = vcmp.eq.s32.totalorder %v3110, 1
      %vm3149 = vcmp.eq.s32.totalorder %v3113, 1
      %vm3150 = vcmp.eq.s32.totalorder %v3116, 1
      %vm3151 = vcmp.eq.s32.totalorder %v3119, 1
      %v3152 = vsel %vm3120, %v510, 0.0
      %v3153 = vsel %vm3121, %v511, 0.0
      %v3154 = vsel %vm3122, %v512, 0.0
      %v3155 = vsel %vm3123, %v513, 0.0
      %v3156 = vsel %vm3124, %v514, 0.0
      %v3157 = vsel %vm3125, %v515, 0.0
      %v3158 = vsel %vm3126, %v516, 0.0
      %v3159 = vsel %vm3127, %v517, 0.0
      %v3160 = vsel %vm3128, %v518, 0.0
      %v3161 = vsel %vm3129, %v519, 0.0
      %v3162 = vsel %vm3130, %v520, 0.0
      %v3163 = vsel %vm3131, %v521, 0.0
      %v3164 = vsel %vm3132, %v522, 0.0
      %v3165 = vsel %vm3133, %v523, 0.0
      %v3166 = vsel %vm3134, %v524, 0.0
      %v3167 = vsel %vm3135, %v525, 0.0
      %v3168 = vsel %vm3136, %v526, 0.0
      %v3169 = vsel %vm3137, %v527, 0.0
      %v3170 = vsel %vm3138, %v528, 0.0
      %v3171 = vsel %vm3139, %v529, 0.0
      %v3172 = vsel %vm3140, %v530, 0.0
      %v3173 = vsel %vm3141, %v531, 0.0
      %v3174 = vsel %vm3142, %v532, 0.0
      %v3175 = vsel %vm3143, %v533, 0.0
      %v3176 = vsel %vm3144, %v534, 0.0
      %v3177 = vsel %vm3145, %v535, 0.0
      %v3178 = vsel %vm3146, %v536, 0.0
      %v3179 = vsel %vm3147, %v537, 0.0
      %v3180 = vsel %vm3148, %v538, 0.0
      %v3181 = vsel %vm3149, %v539, 0.0
      %v3182 = vsel %vm3150, %v508, 0.0
      %v3183 = vsel %vm3151, %v509, 0.0
      %v3184 = vpack.c.bf16 %v3153, %v3152
      %v3185 = vpack.c.bf16 %v3155, %v3154
      %v3186 = vpack.c.bf16 %v3157, %v3156
      %v3187 = vpack.c.bf16 %v3159, %v3158
      %v3188 = vpack.c.bf16 %v3161, %v3160
      %v3189 = vpack.c.bf16 %v3163, %v3162
      %v3190 = vpack.c.bf16 %v3165, %v3164
      %v3191 = vpack.c.bf16 %v3167, %v3166
      %v3192 = vpack.c.bf16 %v3169, %v3168
      %v3193 = vpack.c.bf16 %v3171, %v3170
      %v3194 = vpack.c.bf16 %v3173, %v3172
      %v3195 = vpack.c.bf16 %v3175, %v3174
      %v3196 = vpack.c.bf16 %v3177, %v3176
      %v3197 = vpack.c.bf16 %v3179, %v3178
      %v3198 = vpack.c.bf16 %v3181, %v3180
      %v3199 = vpack.c.bf16 %v3183, %v3182
      %vm3200 = vmand %vm2624, %vm1536
      %vm3201 = vmand %vm2625, %vm1537
      %vm3202 = vmand %vm2626, %vm1538
      %vm3203 = vmand %vm2627, %vm1539
      %vm3204 = vmand %vm2628, %vm1540
      %vm3205 = vmand %vm2629, %vm1541
      %vm3206 = vmand %vm2630, %vm1542
      %vm3207 = vmand %vm2631, %vm1543
      %vm3208 = vmand %vm2632, %vm1544
      %vm3209 = vmand %vm2633, %vm1545
      %vm3210 = vmand %vm2634, %vm1546
      %vm3211 = vmand %vm2635, %vm1547
      %vm3212 = vmand %vm2636, %vm1548
      %vm3213 = vmand %vm2637, %vm1549
      %vm3214 = vmand %vm2638, %vm1550
      %vm3215 = vmand %vm2639, %vm1551
      %vm3216 = vmand %vm2640, %vm1552
      %vm3217 = vmand %vm2641, %vm1553
      %vm3218 = vmand %vm2642, %vm1554
      %vm3219 = vmand %vm2643, %vm1555
      %vm3220 = vmand %vm2644, %vm1556
      %vm3221 = vmand %vm2645, %vm1557
      %vm3222 = vmand %vm2646, %vm1558
      %vm3223 = vmand %vm2647, %vm1559
      %vm3224 = vmand %vm2648, %vm1560
      %vm3225 = vmand %vm2649, %vm1561
      %vm3226 = vmand %vm2650, %vm1562
      %vm3227 = vmand %vm2651, %vm1563
      %vm3228 = vmand %vm2652, %vm1564
      %vm3229 = vmand %vm2653, %vm1565
      %vm3230 = vmand %vm2654, %vm1566
      %vm3231 = vmand %vm2655, %vm1567
      %vm3232 = vmand %vm3200, %vm1600
      %vm3233 = vmand %vm3201, %vm1601
      %vm3234 = vmand %vm3202, %vm1602
      %vm3235 = vmand %vm3203, %vm1603
      %vm3236 = vmand %vm3204, %vm1604
      %vm3237 = vmand %vm3205, %vm1605
      %vm3238 = vmand %vm3206, %vm1606
      %vm3239 = vmand %vm3207, %vm1607
      %vm3240 = vmand %vm3208, %vm1608
      %vm3241 = vmand %vm3209, %vm1609
      %vm3242 = vmand %vm3210, %vm1610
      %vm3243 = vmand %vm3211, %vm1611
      %vm3244 = vmand %vm3212, %vm1612
      %vm3245 = vmand %vm3213, %vm1613
      %vm3246 = vmand %vm3214, %vm1614
      %vm3247 = vmand %vm3215, %vm1615
      %vm3248 = vmand %vm3216, %vm1616
      %vm3249 = vmand %vm3217, %vm1617
      %vm3250 = vmand %vm3218, %vm1618
      %vm3251 = vmand %vm3219, %vm1619
      %vm3252 = vmand %vm3220, %vm1620
      %vm3253 = vmand %vm3221, %vm1621
      %vm3254 = vmand %vm3222, %vm1622
      %vm3255 = vmand %vm3223, %vm1623
      %vm3256 = vmand %vm3224, %vm1624
      %vm3257 = vmand %vm3225, %vm1625
      %vm3258 = vmand %vm3226, %vm1626
      %vm3259 = vmand %vm3227, %vm1627
      %vm3260 = vmand %vm3228, %vm1628
      %vm3261 = vmand %vm3229, %vm1629
      %vm3262 = vmand %vm3230, %vm1630
      %vm3263 = vmand %vm3231, %vm1631
      %v3264 = vsel %vm3232, 1, 0
      %v3265 = vsel %vm3233, 1, 0
      %v3266 = vsel %vm3234, 1, 0
      %v3267 = vsel %vm3235, 1, 0
      %v3268 = vsel %vm3236, 1, 0
      %v3269 = vsel %vm3237, 1, 0
      %v3270 = vsel %vm3238, 1, 0
      %v3271 = vsel %vm3239, 1, 0
      %v3272 = vsel %vm3240, 1, 0
      %v3273 = vsel %vm3241, 1, 0
      %v3274 = vsel %vm3242, 1, 0
      %v3275 = vsel %vm3243, 1, 0
      %v3276 = vsel %vm3244, 1, 0
      %v3277 = vsel %vm3245, 1, 0
      %v3278 = vsel %vm3246, 1, 0
      %v3279 = vsel %vm3247, 1, 0
      %v3280 = vsel %vm3248, 1, 0
      %v3281 = vsel %vm3249, 1, 0
      %v3282 = vsel %vm3250, 1, 0
      %v3283 = vsel %vm3251, 1, 0
      %v3284 = vsel %vm3252, 1, 0
      %v3285 = vsel %vm3253, 1, 0
      %v3286 = vsel %vm3254, 1, 0
      %v3287 = vsel %vm3255, 1, 0
      %v3288 = vsel %vm3256, 1, 0
      %v3289 = vsel %vm3257, 1, 0
      %v3290 = vsel %vm3258, 1, 0
      %v3291 = vsel %vm3259, 1, 0
      %v3292 = vsel %vm3260, 1, 0
      %v3293 = vsel %vm3261, 1, 0
      %v3294 = vsel %vm3262, 1, 0
      %v3295 = vsel %vm3263, 1, 0
      %3296 = vset.pattern.permute.xlu0 0
      %3297 = vperm.xlu0 %3296, %v3264
      %v3298 = vpop.permute.xlu0 %3297
      %3299 = vset.pattern.permute.xlu0 0
      %3300 = vperm.xlu0 %3299, %v3265
      %v3301 = vpop.permute.xlu0 %3300
      %3302 = vset.pattern.permute.xlu0 0
      %3303 = vperm.xlu0 %3302, %v3266
      %v3304 = vpop.permute.xlu0 %3303
      %3305 = vset.pattern.permute.xlu0 0
      %3306 = vperm.xlu0 %3305, %v3267
      %v3307 = vpop.permute.xlu0 %3306
      %3308 = vset.pattern.permute.xlu0 0
      %3309 = vperm.xlu0 %3308, %v3268
      %v3310 = vpop.permute.xlu0 %3309
      %3311 = vset.pattern.permute.xlu0 0
      %3312 = vperm.xlu0 %3311, %v3269
      %v3313 = vpop.permute.xlu0 %3312
      %3314 = vset.pattern.permute.xlu0 0
      %3315 = vperm.xlu0 %3314, %v3270
      %v3316 = vpop.permute.xlu0 %3315
      %3317 = vset.pattern.permute.xlu0 0
      %3318 = vperm.xlu0 %3317, %v3271
      %v3319 = vpop.permute.xlu0 %3318
      %3320 = vset.pattern.permute.xlu0 0
      %3321 = vperm.xlu0 %3320, %v3272
      %v3322 = vpop.permute.xlu0 %3321
      %3323 = vset.pattern.permute.xlu0 0
      %3324 = vperm.xlu0 %3323, %v3273
      %v3325 = vpop.permute.xlu0 %3324
      %3326 = vset.pattern.permute.xlu0 0
      %3327 = vperm.xlu0 %3326, %v3274
      %v3328 = vpop.permute.xlu0 %3327
      %3329 = vset.pattern.permute.xlu0 0
      %3330 = vperm.xlu0 %3329, %v3275
      %v3331 = vpop.permute.xlu0 %3330
      %3332 = vset.pattern.permute.xlu0 0
      %3333 = vperm.xlu0 %3332, %v3276
      %v3334 = vpop.permute.xlu0 %3333
      %3335 = vset.pattern.permute.xlu0 0
      %3336 = vperm.xlu0 %3335, %v3277
      %v3337 = vpop.permute.xlu0 %3336
      %3338 = vset.pattern.permute.xlu0 0
      %3339 = vperm.xlu0 %3338, %v3278
      %v3340 = vpop.permute.xlu0 %3339
      %3341 = vset.pattern.permute.xlu0 0
      %3342 = vperm.xlu0 %3341, %v3279
      %v3343 = vpop.permute.xlu0 %3342
      %3344 = vset.pattern.permute.xlu0 0
      %3345 = vperm.xlu0 %3344, %v3280
      %v3346 = vpop.permute.xlu0 %3345
      %3347 = vset.pattern.permute.xlu0 0
      %3348 = vperm.xlu0 %3347, %v3281
      %v3349 = vpop.permute.xlu0 %3348
      %3350 = vset.pattern.permute.xlu0 0
      %3351 = vperm.xlu0 %3350, %v3282
      %v3352 = vpop.permute.xlu0 %3351
      %3353 = vset.pattern.permute.xlu0 0
      %3354 = vperm.xlu0 %3353, %v3283
      %v3355 = vpop.permute.xlu0 %3354
      %3356 = vset.pattern.permute.xlu0 0
      %3357 = vperm.xlu0 %3356, %v3284
      %v3358 = vpop.permute.xlu0 %3357
      %3359 = vset.pattern.permute.xlu0 0
      %3360 = vperm.xlu0 %3359, %v3285
      %v3361 = vpop.permute.xlu0 %3360
      %3362 = vset.pattern.permute.xlu0 0
      %3363 = vperm.xlu0 %3362, %v3286
      %v3364 = vpop.permute.xlu0 %3363
      %3365 = vset.pattern.permute.xlu0 0
      %3366 = vperm.xlu0 %3365, %v3287
      %v3367 = vpop.permute.xlu0 %3366
      %3368 = vset.pattern.permute.xlu0 0
      %3369 = vperm.xlu0 %3368, %v3288
      %v3370 = vpop.permute.xlu0 %3369
      %3371 = vset.pattern.permute.xlu0 0
      %3372 = vperm.xlu0 %3371, %v3289
      %v3373 = vpop.permute.xlu0 %3372
      %3374 = vset.pattern.permute.xlu0 0
      %3375 = vperm.xlu0 %3374, %v3290
      %v3376 = vpop.permute.xlu0 %3375
      %3377 = vset.pattern.permute.xlu0 0
      %3378 = vperm.xlu0 %3377, %v3291
      %v3379 = vpop.permute.xlu0 %3378
      %3380 = vset.pattern.permute.xlu0 0
      %3381 = vperm.xlu0 %3380, %v3292
      %v3382 = vpop.permute.xlu0 %3381
      %3383 = vset.pattern.permute.xlu0 0
      %3384 = vperm.xlu0 %3383, %v3293
      %v3385 = vpop.permute.xlu0 %3384
      %3386 = vset.pattern.permute.xlu0 0
      %3387 = vperm.xlu0 %3386, %v3294
      %v3388 = vpop.permute.xlu0 %3387
      %3389 = vset.pattern.permute.xlu0 0
      %3390 = vperm.xlu0 %3389, %v3295
      %v3391 = vpop.permute.xlu0 %3390
      %vm3392 = vcmp.eq.s32.totalorder %v3298, 1
      %vm3393 = vcmp.eq.s32.totalorder %v3301, 1
      %vm3394 = vcmp.eq.s32.totalorder %v3304, 1
      %vm3395 = vcmp.eq.s32.totalorder %v3307, 1
      %vm3396 = vcmp.eq.s32.totalorder %v3310, 1
      %vm3397 = vcmp.eq.s32.totalorder %v3313, 1
      %vm3398 = vcmp.eq.s32.totalorder %v3316, 1
      %vm3399 = vcmp.eq.s32.totalorder %v3319, 1
      %vm3400 = vcmp.eq.s32.totalorder %v3322, 1
      %vm3401 = vcmp.eq.s32.totalorder %v3325, 1
      %vm3402 = vcmp.eq.s32.totalorder %v3328, 1
      %vm3403 = vcmp.eq.s32.totalorder %v3331, 1
      %vm3404 = vcmp.eq.s32.totalorder %v3334, 1
      %vm3405 = vcmp.eq.s32.totalorder %v3337, 1
      %vm3406 = vcmp.eq.s32.totalorder %v3340, 1
      %vm3407 = vcmp.eq.s32.totalorder %v3343, 1
      %vm3408 = vcmp.eq.s32.totalorder %v3346, 1
      %vm3409 = vcmp.eq.s32.totalorder %v3349, 1
      %vm3410 = vcmp.eq.s32.totalorder %v3352, 1
      %vm3411 = vcmp.eq.s32.totalorder %v3355, 1
      %vm3412 = vcmp.eq.s32.totalorder %v3358, 1
      %vm3413 = vcmp.eq.s32.totalorder %v3361, 1
      %vm3414 = vcmp.eq.s32.totalorder %v3364, 1
      %vm3415 = vcmp.eq.s32.totalorder %v3367, 1
      %vm3416 = vcmp.eq.s32.totalorder %v3370, 1
      %vm3417 = vcmp.eq.s32.totalorder %v3373, 1
      %vm3418 = vcmp.eq.s32.totalorder %v3376, 1
      %vm3419 = vcmp.eq.s32.totalorder %v3379, 1
      %vm3420 = vcmp.eq.s32.totalorder %v3382, 1
      %vm3421 = vcmp.eq.s32.totalorder %v3385, 1
      %vm3422 = vcmp.eq.s32.totalorder %v3388, 1
      %vm3423 = vcmp.eq.s32.totalorder %v3391, 1
      %v3424 = vsel %vm3392, %v1500, 0.0
      %v3425 = vsel %vm3393, %v1499, 0.0
      %v3426 = vsel %vm3394, %v1498, 0.0
      %v3427 = vsel %vm3395, %v1497, 0.0
      %v3428 = vsel %vm3396, %v1496, 0.0
      %v3429 = vsel %vm3397, %v1495, 0.0
      %v3430 = vsel %vm3398, %v1494, 0.0
      %v3431 = vsel %vm3399, %v1493, 0.0
      %v3432 = vsel %vm3400, %v1492, 0.0
      %v3433 = vsel %vm3401, %v1491, 0.0
      %v3434 = vsel %vm3402, %v1490, 0.0
      %v3435 = vsel %vm3403, %v1489, 0.0
      %v3436 = vsel %vm3404, %v1488, 0.0
      %v3437 = vsel %vm3405, %v1487, 0.0
      %v3438 = vsel %vm3406, %v1486, 0.0
      %v3439 = vsel %vm3407, %v1485, 0.0
      %v3440 = vsel %vm3408, %v1484, 0.0
      %v3441 = vsel %vm3409, %v1483, 0.0
      %v3442 = vsel %vm3410, %v1482, 0.0
      %v3443 = vsel %vm3411, %v1481, 0.0
      %v3444 = vsel %vm3412, %v1480, 0.0
      %v3445 = vsel %vm3413, %v1479, 0.0
      %v3446 = vsel %vm3414, %v1478, 0.0
      %v3447 = vsel %vm3415, %v1477, 0.0
      %v3448 = vsel %vm3416, %v1476, 0.0
      %v3449 = vsel %vm3417, %v1475, 0.0
      %v3450 = vsel %vm3418, %v1474, 0.0
      %v3451 = vsel %vm3419, %v1473, 0.0
      %v3452 = vsel %vm3420, %v1472, 0.0
      %v3453 = vsel %vm3421, %v1503, 0.0
      %v3454 = vsel %vm3422, %v1502, 0.0
      %v3455 = vsel %vm3423, %v1501, 0.0
      %v3456 = vpack.c.bf16 %v3425, %v3424
      %v3457 = vpack.c.bf16 %v3427, %v3426
      %v3458 = vpack.c.bf16 %v3429, %v3428
      %v3459 = vpack.c.bf16 %v3431, %v3430
      %v3460 = vpack.c.bf16 %v3433, %v3432
      %v3461 = vpack.c.bf16 %v3435, %v3434
      %v3462 = vpack.c.bf16 %v3437, %v3436
      %v3463 = vpack.c.bf16 %v3439, %v3438
      %v3464 = vpack.c.bf16 %v3441, %v3440
      %v3465 = vpack.c.bf16 %v3443, %v3442
      %v3466 = vpack.c.bf16 %v3445, %v3444
      %v3467 = vpack.c.bf16 %v3447, %v3446
      %v3468 = vpack.c.bf16 %v3449, %v3448
      %v3469 = vpack.c.bf16 %v3451, %v3450
      %v3470 = vpack.c.bf16 %v3453, %v3452
      %v3471 = vpack.c.bf16 %v3455, %v3454
      %v3472 = vld [vmem:[%s3] sm:$0xf]
      %v3473 = vld [vmem:[%s3 + $0x4] sm:$0xf]
      %v3474 = vld [vmem:[%s3 + $0x8] sm:$0xf]
      %v3475 = vld [vmem:[%s3 + $0xc] sm:$0xf]
      %v3476 = vld [vmem:[%s3 + $0x10] sm:$0xf]
      %v3477 = vld [vmem:[%s3 + $0x14] sm:$0xf]
      %v3478 = vld [vmem:[%s3 + $0x18] sm:$0xf]
      %v3479 = vld [vmem:[%s3 + $0x1c] sm:$0xf]
      %v3480 = vld [vmem:[%s3 + $0x20] sm:$0xf]
      %v3481 = vld [vmem:[%s3 + $0x24] sm:$0xf]
      %v3482 = vld [vmem:[%s3 + $0x28] sm:$0xf]
      %v3483 = vld [vmem:[%s3 + $0x2c] sm:$0xf]
      %v3484 = vld [vmem:[%s3 + $0x30] sm:$0xf]
      %v3485 = vld [vmem:[%s3 + $0x34] sm:$0xf]
      %v3486 = vld [vmem:[%s3 + $0x38] sm:$0xf]
      %v3487 = vld [vmem:[%s3 + $0x3c] sm:$0xf]
      %v3488 = vld [vmem:[%s3 + $0x40] sm:$0xf]
      %v3489 = vld [vmem:[%s3 + $0x44] sm:$0xf]
      %v3490 = vld [vmem:[%s3 + $0x48] sm:$0xf]
      %v3491 = vld [vmem:[%s3 + $0x4c] sm:$0xf]
      %v3492 = vld [vmem:[%s3 + $0x50] sm:$0xf]
      %v3493 = vld [vmem:[%s3 + $0x54] sm:$0xf]
      %v3494 = vld [vmem:[%s3 + $0x58] sm:$0xf]
      %v3495 = vld [vmem:[%s3 + $0x5c] sm:$0xf]
      %v3496 = vld [vmem:[%s3 + $0x60] sm:$0xf]
      %v3497 = vld [vmem:[%s3 + $0x64] sm:$0xf]
      %v3498 = vld [vmem:[%s3 + $0x68] sm:$0xf]
      %v3499 = vld [vmem:[%s3 + $0x6c] sm:$0xf]
      %v3500 = vld [vmem:[%s3 + $0x70] sm:$0xf]
      %v3501 = vld [vmem:[%s3 + $0x74] sm:$0xf]
      %v3502 = vld [vmem:[%s3 + $0x78] sm:$0xf]
      %v3503 = vld [vmem:[%s3 + $0x7c] sm:$0xf]
      %v3504 = vld [vmem:[%s3 + $0x80] sm:$0xf]
      %v3505 = vld [vmem:[%s3 + $0x84] sm:$0xf]
      %v3506 = vld [vmem:[%s3 + $0x88] sm:$0xf]
      %v3507 = vld [vmem:[%s3 + $0x8c] sm:$0xf]
      %v3508 = vld [vmem:[%s3 + $0x90] sm:$0xf]
      %v3509 = vld [vmem:[%s3 + $0x94] sm:$0xf]
      %v3510 = vld [vmem:[%s3 + $0x98] sm:$0xf]
      %v3511 = vld [vmem:[%s3 + $0x9c] sm:$0xf]
      %v3512 = vld [vmem:[%s3 + $0xa0] sm:$0xf]
      %v3513 = vld [vmem:[%s3 + $0xa4] sm:$0xf]
      %v3514 = vld [vmem:[%s3 + $0xa8] sm:$0xf]
      %v3515 = vld [vmem:[%s3 + $0xac] sm:$0xf]
      %v3516 = vld [vmem:[%s3 + $0xb0] sm:$0xf]
      %v3517 = vld [vmem:[%s3 + $0xb4] sm:$0xf]
      %v3518 = vld [vmem:[%s3 + $0xb8] sm:$0xf]
      %v3519 = vld [vmem:[%s3 + $0xbc] sm:$0xf]
      %v3520 = vld [vmem:[%s3 + $0xc0] sm:$0xf]
      %v3521 = vld [vmem:[%s3 + $0xc4] sm:$0xf]
      %v3522 = vld [vmem:[%s3 + $0xc8] sm:$0xf]
      %v3523 = vld [vmem:[%s3 + $0xcc] sm:$0xf]
      %v3524 = vld [vmem:[%s3 + $0xd0] sm:$0xf]
      %v3525 = vld [vmem:[%s3 + $0xd4] sm:$0xf]
      %v3526 = vld [vmem:[%s3 + $0xd8] sm:$0xf]
      %v3527 = vld [vmem:[%s3 + $0xdc] sm:$0xf]
      %v3528 = vld [vmem:[%s3 + $0xe0] sm:$0xf]
      %v3529 = vld [vmem:[%s3 + $0xe4] sm:$0xf]
      %v3530 = vld [vmem:[%s3 + $0xe8] sm:$0xf]
      %v3531 = vld [vmem:[%s3 + $0xec] sm:$0xf]
      %v3532 = vld [vmem:[%s3 + $0xf0] sm:$0xf]
      %v3533 = vld [vmem:[%s3 + $0xf4] sm:$0xf]
      %v3534 = vld [vmem:[%s3 + $0xf8] sm:$0xf]
      %v3535 = vld [vmem:[%s3 + $0xfc] sm:$0xf]
      %v3536 = vld [vmem:[%s3 + $0x100] sm:$0xf]
      %v3537 = vld [vmem:[%s3 + $0x104] sm:$0xf]
      %v3538 = vld [vmem:[%s3 + $0x108] sm:$0xf]
      %v3539 = vld [vmem:[%s3 + $0x10c] sm:$0xf]
      %v3540 = vld [vmem:[%s3 + $0x110] sm:$0xf]
      %v3541 = vld [vmem:[%s3 + $0x114] sm:$0xf]
      %v3542 = vld [vmem:[%s3 + $0x118] sm:$0xf]
      %v3543 = vld [vmem:[%s3 + $0x11c] sm:$0xf]
      %v3544 = vld [vmem:[%s3 + $0x120] sm:$0xf]
      %v3545 = vld [vmem:[%s3 + $0x124] sm:$0xf]
      %v3546 = vld [vmem:[%s3 + $0x128] sm:$0xf]
      %v3547 = vld [vmem:[%s3 + $0x12c] sm:$0xf]
      %v3548 = vld [vmem:[%s3 + $0x130] sm:$0xf]
      %v3549 = vld [vmem:[%s3 + $0x134] sm:$0xf]
      %v3550 = vld [vmem:[%s3 + $0x138] sm:$0xf]
      %v3551 = vld [vmem:[%s3 + $0x13c] sm:$0xf]
      %v3552 = vld [vmem:[%s3 + $0x140] sm:$0xf]
      %v3553 = vld [vmem:[%s3 + $0x144] sm:$0xf]
      %v3554 = vld [vmem:[%s3 + $0x148] sm:$0xf]
      %v3555 = vld [vmem:[%s3 + $0x14c] sm:$0xf]
      %v3556 = vld [vmem:[%s3 + $0x150] sm:$0xf]
      %v3557 = vld [vmem:[%s3 + $0x154] sm:$0xf]
      %v3558 = vld [vmem:[%s3 + $0x158] sm:$0xf]
      %v3559 = vld [vmem:[%s3 + $0x15c] sm:$0xf]
      %v3560 = vld [vmem:[%s3 + $0x160] sm:$0xf]
      %v3561 = vld [vmem:[%s3 + $0x164] sm:$0xf]
      %v3562 = vld [vmem:[%s3 + $0x168] sm:$0xf]
      %v3563 = vld [vmem:[%s3 + $0x16c] sm:$0xf]
      %v3564 = vld [vmem:[%s3 + $0x170] sm:$0xf]
      %v3565 = vld [vmem:[%s3 + $0x174] sm:$0xf]
      %v3566 = vld [vmem:[%s3 + $0x178] sm:$0xf]
      %v3567 = vld [vmem:[%s3 + $0x17c] sm:$0xf]
      %v3568 = vld [vmem:[%s3 + $0x180] sm:$0xf]
      %v3569 = vld [vmem:[%s3 + $0x184] sm:$0xf]
      %v3570 = vld [vmem:[%s3 + $0x188] sm:$0xf]
      %v3571 = vld [vmem:[%s3 + $0x18c] sm:$0xf]
      %v3572 = vld [vmem:[%s3 + $0x190] sm:$0xf]
      %v3573 = vld [vmem:[%s3 + $0x194] sm:$0xf]
      %v3574 = vld [vmem:[%s3 + $0x198] sm:$0xf]
      %v3575 = vld [vmem:[%s3 + $0x19c] sm:$0xf]
      %v3576 = vld [vmem:[%s3 + $0x1a0] sm:$0xf]
      %v3577 = vld [vmem:[%s3 + $0x1a4] sm:$0xf]
      %v3578 = vld [vmem:[%s3 + $0x1a8] sm:$0xf]
      %v3579 = vld [vmem:[%s3 + $0x1ac] sm:$0xf]
      %v3580 = vld [vmem:[%s3 + $0x1b0] sm:$0xf]
      %v3581 = vld [vmem:[%s3 + $0x1b4] sm:$0xf]
      %v3582 = vld [vmem:[%s3 + $0x1b8] sm:$0xf]
      %v3583 = vld [vmem:[%s3 + $0x1bc] sm:$0xf]
      %v3584 = vld [vmem:[%s3 + $0x1c0] sm:$0xf]
      %v3585 = vld [vmem:[%s3 + $0x1c4] sm:$0xf]
      %v3586 = vld [vmem:[%s3 + $0x1c8] sm:$0xf]
      %v3587 = vld [vmem:[%s3 + $0x1cc] sm:$0xf]
      %v3588 = vld [vmem:[%s3 + $0x1d0] sm:$0xf]
      %v3589 = vld [vmem:[%s3 + $0x1d4] sm:$0xf]
      %v3590 = vld [vmem:[%s3 + $0x1d8] sm:$0xf]
      %v3591 = vld [vmem:[%s3 + $0x1dc] sm:$0xf]
      %v3592 = vld [vmem:[%s3 + $0x1e0] sm:$0xf]
      %v3593 = vld [vmem:[%s3 + $0x1e4] sm:$0xf]
      %v3594 = vld [vmem:[%s3 + $0x1e8] sm:$0xf]
      %v3595 = vld [vmem:[%s3 + $0x1ec] sm:$0xf]
      %v3596 = vld [vmem:[%s3 + $0x1f0] sm:$0xf]
      %v3597 = vld [vmem:[%s3 + $0x1f4] sm:$0xf]
      %v3598 = vld [vmem:[%s3 + $0x1f8] sm:$0xf]
      %v3599 = vld [vmem:[%s3 + $0x1fc] sm:$0xf]
      %v3600 = vld [vmem:[%s3 + $0x200] sm:$0xf]
      %v3601 = vld [vmem:[%s3 + $0x204] sm:$0xf]
      %v3602 = vld [vmem:[%s3 + $0x208] sm:$0xf]
      %v3603 = vld [vmem:[%s3 + $0x20c] sm:$0xf]
      %v3604 = vld [vmem:[%s3 + $0x210] sm:$0xf]
      %v3605 = vld [vmem:[%s3 + $0x214] sm:$0xf]
      %v3606 = vld [vmem:[%s3 + $0x218] sm:$0xf]
      %v3607 = vld [vmem:[%s3 + $0x21c] sm:$0xf]
      %v3608 = vld [vmem:[%s3 + $0x220] sm:$0xf]
      %v3609 = vld [vmem:[%s3 + $0x224] sm:$0xf]
      %v3610 = vld [vmem:[%s3 + $0x228] sm:$0xf]
      %v3611 = vld [vmem:[%s3 + $0x22c] sm:$0xf]
      %v3612 = vld [vmem:[%s3 + $0x230] sm:$0xf]
      %v3613 = vld [vmem:[%s3 + $0x234] sm:$0xf]
      %v3614 = vld [vmem:[%s3 + $0x238] sm:$0xf]
      %v3615 = vld [vmem:[%s3 + $0x23c] sm:$0xf]
      %v3760 = vunpack.c.l.b16 %v3472
      %v3761 = vunpack.c.l.b16 %v3473
      %v3762 = vunpack.c.l.b16 %v3474
      %v3763 = vunpack.c.l.b16 %v3475
      %v3764 = vunpack.c.l.b16 %v3476
      %v3765 = vunpack.c.l.b16 %v3477
      %v3766 = vunpack.c.l.b16 %v3478
      %v3767 = vunpack.c.l.b16 %v3479
      %v3768 = vunpack.c.l.b16 %v3480
      %v3769 = vunpack.c.l.b16 %v3481
      %v3770 = vunpack.c.l.b16 %v3482
      %v3771 = vunpack.c.l.b16 %v3483
      %v3772 = vunpack.c.l.b16 %v3484
      %v3773 = vunpack.c.l.b16 %v3485
      %v3774 = vunpack.c.l.b16 %v3486
      %v3775 = vunpack.c.l.b16 %v3487
      %v3776 = vunpack.c.l.b16 %v3488
      %v3777 = vunpack.c.l.b16 %v3489
      %v3778 = vunpack.c.l.b16 %v3490
      %v3779 = vunpack.c.l.b16 %v3491
      %v3780 = vunpack.c.l.b16 %v3492
      %v3781 = vunpack.c.l.b16 %v3493
      %v3782 = vunpack.c.l.b16 %v3494
      %v3783 = vunpack.c.l.b16 %v3495
      %v3784 = vunpack.c.l.b16 %v3496
      %v3785 = vunpack.c.l.b16 %v3497
      %v3786 = vunpack.c.l.b16 %v3498
      %v3787 = vunpack.c.l.b16 %v3499
      %v3788 = vunpack.c.l.b16 %v3500
      %v3789 = vunpack.c.l.b16 %v3501
      %v3790 = vunpack.c.l.b16 %v3502
      %v3791 = vunpack.c.l.b16 %v3503
      %v3792 = vunpack.c.l.b16 %v3504
      %v3793 = vunpack.c.l.b16 %v3505
      %v3794 = vunpack.c.l.b16 %v3506
      %v3795 = vunpack.c.l.b16 %v3507
      %v3796 = vunpack.c.l.b16 %v3508
      %v3797 = vunpack.c.l.b16 %v3509
      %v3798 = vunpack.c.l.b16 %v3510
      %v3799 = vunpack.c.l.b16 %v3511
      %v3800 = vunpack.c.l.b16 %v3512
      %v3801 = vunpack.c.l.b16 %v3513
      %v3802 = vunpack.c.l.b16 %v3514
      %v3803 = vunpack.c.l.b16 %v3515
      %v3804 = vunpack.c.l.b16 %v3516
      %v3805 = vunpack.c.l.b16 %v3517
      %v3806 = vunpack.c.l.b16 %v3518
      %v3807 = vunpack.c.l.b16 %v3519
      %v3808 = vunpack.c.l.b16 %v3520
      %v3809 = vunpack.c.l.b16 %v3521
      %v3810 = vunpack.c.l.b16 %v3522
      %v3811 = vunpack.c.l.b16 %v3523
      %v3812 = vunpack.c.l.b16 %v3524
      %v3813 = vunpack.c.l.b16 %v3525
      %v3814 = vunpack.c.l.b16 %v3526
      %v3815 = vunpack.c.l.b16 %v3527
      %v3816 = vunpack.c.l.b16 %v3528
      %v3817 = vunpack.c.l.b16 %v3529
      %v3818 = vunpack.c.l.b16 %v3530
      %v3819 = vunpack.c.l.b16 %v3531
      %v3820 = vunpack.c.l.b16 %v3532
      %v3821 = vunpack.c.l.b16 %v3533
      %v3822 = vunpack.c.l.b16 %v3534
      %v3823 = vunpack.c.l.b16 %v3535
      %v3824 = vunpack.c.l.b16 %v3536
      %v3825 = vunpack.c.l.b16 %v3537
      %v3826 = vunpack.c.l.b16 %v3538
      %v3827 = vunpack.c.l.b16 %v3539
      %v3828 = vunpack.c.l.b16 %v3540
      %v3829 = vunpack.c.l.b16 %v3541
      %v3830 = vunpack.c.l.b16 %v3542
      %v3831 = vunpack.c.l.b16 %v3543
      %v3832 = vunpack.c.l.b16 %v3544
      %v3833 = vunpack.c.l.b16 %v3545
      %v3834 = vunpack.c.l.b16 %v3546
      %v3835 = vunpack.c.l.b16 %v3547
      %v3836 = vunpack.c.l.b16 %v3548
      %v3837 = vunpack.c.l.b16 %v3549
      %v3838 = vunpack.c.l.b16 %v3550
      %v3839 = vunpack.c.l.b16 %v3551
      %v3840 = vunpack.c.l.b16 %v3552
      %v3841 = vunpack.c.l.b16 %v3553
      %v3842 = vunpack.c.l.b16 %v3554
      %v3843 = vunpack.c.l.b16 %v3555
      %v3844 = vunpack.c.l.b16 %v3556
      %v3845 = vunpack.c.l.b16 %v3557
      %v3846 = vunpack.c.l.b16 %v3558
      %v3847 = vunpack.c.l.b16 %v3559
      %v3848 = vunpack.c.l.b16 %v3560
      %v3849 = vunpack.c.l.b16 %v3561
      %v3850 = vunpack.c.l.b16 %v3562
      %v3851 = vunpack.c.l.b16 %v3563
      %v3852 = vunpack.c.l.b16 %v3564
      %v3853 = vunpack.c.l.b16 %v3565
      %v3854 = vunpack.c.l.b16 %v3566
      %v3855 = vunpack.c.l.b16 %v3567
      %v3856 = vunpack.c.l.b16 %v3568
      %v3857 = vunpack.c.l.b16 %v3569
      %v3858 = vunpack.c.l.b16 %v3570
      %v3859 = vunpack.c.l.b16 %v3571
      %v3860 = vunpack.c.l.b16 %v3572
      %v3861 = vunpack.c.l.b16 %v3573
      %v3862 = vunpack.c.l.b16 %v3574
      %v3863 = vunpack.c.l.b16 %v3575
      %v3864 = vunpack.c.l.b16 %v3576
      %v3865 = vunpack.c.l.b16 %v3577
      %v3866 = vunpack.c.l.b16 %v3578
      %v3867 = vunpack.c.l.b16 %v3579
      %v3868 = vunpack.c.l.b16 %v3580
      %v3869 = vunpack.c.l.b16 %v3581
      %v3870 = vunpack.c.l.b16 %v3582
      %v3871 = vunpack.c.l.b16 %v3583
      %v3872 = vunpack.c.l.b16 %v3584
      %v3873 = vunpack.c.l.b16 %v3585
      %v3874 = vunpack.c.l.b16 %v3586
      %v3875 = vunpack.c.l.b16 %v3587
      %v3876 = vunpack.c.l.b16 %v3588
      %v3877 = vunpack.c.l.b16 %v3589
      %v3878 = vunpack.c.l.b16 %v3590
      %v3879 = vunpack.c.l.b16 %v3591
      %v3880 = vunpack.c.l.b16 %v3592
      %v3881 = vunpack.c.l.b16 %v3593
      %v3882 = vunpack.c.l.b16 %v3594
      %v3883 = vunpack.c.l.b16 %v3595
      %v3884 = vunpack.c.l.b16 %v3596
      %v3885 = vunpack.c.l.b16 %v3597
      %v3886 = vunpack.c.l.b16 %v3598
      %v3887 = vunpack.c.l.b16 %v3599
      %v3888 = vunpack.c.l.b16 %v3600
      %v3889 = vunpack.c.l.b16 %v3601
      %v3890 = vunpack.c.l.b16 %v3602
      %v3891 = vunpack.c.l.b16 %v3603
      %v3892 = vunpack.c.l.b16 %v3604
      %v3893 = vunpack.c.l.b16 %v3605
      %v3894 = vunpack.c.l.b16 %v3606
      %v3895 = vunpack.c.l.b16 %v3607
      %v3896 = vunpack.c.l.b16 %v3608
      %v3897 = vunpack.c.l.b16 %v3609
      %v3898 = vunpack.c.l.b16 %v3610
      %v3899 = vunpack.c.l.b16 %v3611
      %v3900 = vunpack.c.l.b16 %v3612
      %v3901 = vunpack.c.l.b16 %v3613
      %v3902 = vunpack.c.l.b16 %v3614
      %v3903 = vunpack.c.l.b16 %v3615
      %v3904 = vpack.c.b16 %v3761, %v3760
      %v3905 = vpack.c.b16 %v3763, %v3762
      %v3906 = vpack.c.b16 %v3765, %v3764
      %v3907 = vpack.c.b16 %v3767, %v3766
      %v3908 = vpack.c.b16 %v3769, %v3768
      %v3909 = vpack.c.b16 %v3771, %v3770
      %v3910 = vpack.c.b16 %v3773, %v3772
      %v3911 = vpack.c.b16 %v3775, %v3774
      %v3912 = vpack.c.b16 %v3777, %v3776
      %v3913 = vpack.c.b16 %v3779, %v3778
      %v3914 = vpack.c.b16 %v3781, %v3780
      %v3915 = vpack.c.b16 %v3783, %v3782
      %v3916 = vpack.c.b16 %v3785, %v3784
      %v3917 = vpack.c.b16 %v3787, %v3786
      %v3918 = vpack.c.b16 %v3789, %v3788
      %v3919 = vpack.c.b16 %v3791, %v3790
      %v3920 = vpack.c.b16 %v3793, %v3792
      %v3921 = vpack.c.b16 %v3795, %v3794
      %v3922 = vpack.c.b16 %v3797, %v3796
      %v3923 = vpack.c.b16 %v3799, %v3798
      %v3924 = vpack.c.b16 %v3801, %v3800
      %v3925 = vpack.c.b16 %v3803, %v3802
      %v3926 = vpack.c.b16 %v3805, %v3804
      %v3927 = vpack.c.b16 %v3807, %v3806
      %v3928 = vpack.c.b16 %v3809, %v3808
      %v3929 = vpack.c.b16 %v3811, %v3810
      %v3930 = vpack.c.b16 %v3813, %v3812
      %v3931 = vpack.c.b16 %v3815, %v3814
      %v3932 = vpack.c.b16 %v3817, %v3816
      %v3933 = vpack.c.b16 %v3819, %v3818
      %v3934 = vpack.c.b16 %v3821, %v3820
      %v3935 = vpack.c.b16 %v3823, %v3822
      %v3936 = vpack.c.b16 %v3825, %v3824
      %v3937 = vpack.c.b16 %v3827, %v3826
      %v3938 = vpack.c.b16 %v3829, %v3828
      %v3939 = vpack.c.b16 %v3831, %v3830
      %v3940 = vpack.c.b16 %v3833, %v3832
      %v3941 = vpack.c.b16 %v3835, %v3834
      %v3942 = vpack.c.b16 %v3837, %v3836
      %v3943 = vpack.c.b16 %v3839, %v3838
      %v3944 = vpack.c.b16 %v3841, %v3840
      %v3945 = vpack.c.b16 %v3843, %v3842
      %v3946 = vpack.c.b16 %v3845, %v3844
      %v3947 = vpack.c.b16 %v3847, %v3846
      %v3948 = vpack.c.b16 %v3849, %v3848
      %v3949 = vpack.c.b16 %v3851, %v3850
      %v3950 = vpack.c.b16 %v3853, %v3852
      %v3951 = vpack.c.b16 %v3855, %v3854
      %v3952 = vpack.c.b16 %v3857, %v3856
      %v3953 = vpack.c.b16 %v3859, %v3858
      %v3954 = vpack.c.b16 %v3861, %v3860
      %v3955 = vpack.c.b16 %v3863, %v3862
      %v3956 = vpack.c.b16 %v3865, %v3864
      %v3957 = vpack.c.b16 %v3867, %v3866
      %v3958 = vpack.c.b16 %v3869, %v3868
      %v3959 = vpack.c.b16 %v3871, %v3870
      %v3960 = vpack.c.b16 %v3873, %v3872
      %v3961 = vpack.c.b16 %v3875, %v3874
      %v3962 = vpack.c.b16 %v3877, %v3876
      %v3963 = vpack.c.b16 %v3879, %v3878
      %v3964 = vpack.c.b16 %v3881, %v3880
      %v3965 = vpack.c.b16 %v3883, %v3882
      %v3966 = vpack.c.b16 %v3885, %v3884
      %v3967 = vpack.c.b16 %v3887, %v3886
      %v3968 = vpack.c.b16 %v3889, %v3888
      %v3969 = vpack.c.b16 %v3891, %v3890
      %v3970 = vpack.c.b16 %v3893, %v3892
      %v3971 = vpack.c.b16 %v3895, %v3894
      %v3972 = vpack.c.b16 %v3897, %v3896
      %v3973 = vpack.c.b16 %v3899, %v3898
      %v3974 = vpack.c.b16 %v3901, %v3900
      %v3975 = vpack.c.b16 %v3903, %v3902
      %4048 = vmatprep.subr.bf16.mxu0 0
      %4049 = vmatpush1.bf16.msra.mxu0 %v3904
      %4050 = vmatprep.subr.bf16.mxu0 0
      %4051 = vmatpush1.bf16.msra.mxu0 %v3905
      %4052 = vmatprep.subr.bf16.mxu0 0
      %4053 = vmatpush1.bf16.msra.mxu0 %v3906
      %4054 = vmatprep.subr.bf16.mxu0 0
      %4055 = vmatpush1.bf16.msra.mxu0 %v3907
      %4056 = vmatprep.subr.bf16.mxu0 0
      %4057 = vmatpush1.bf16.msra.mxu0 %v3908
      %4058 = vmatprep.subr.bf16.mxu0 0
      %4059 = vmatpush1.bf16.msra.mxu0 %v3909
      %4060 = vmatprep.subr.bf16.mxu0 0
      %4061 = vmatpush1.bf16.msra.mxu0 %v3910
      %4062 = vmatprep.subr.bf16.mxu0 0
      %4063 = vmatpush1.bf16.msra.mxu0 %v3911
      %4064 = vmatprep.subr.bf16.mxu0 0
      %4065 = vmatpush1.bf16.msra.mxu0 %v3912
      %4066 = vmatprep.subr.bf16.mxu0 0
      %4067 = vmatpush1.bf16.msra.mxu0 %v3913
      %4068 = vmatprep.subr.bf16.mxu0 0
      %4069 = vmatpush1.bf16.msra.mxu0 %v3914
      %4070 = vmatprep.subr.bf16.mxu0 0
      %4071 = vmatpush1.bf16.msra.mxu0 %v3915
      %4072 = vmatprep.subr.bf16.mxu0 0
      %4073 = vmatpush1.bf16.msra.mxu0 %v3916
      %4074 = vmatprep.subr.bf16.mxu0 0
      %4075 = vmatpush1.bf16.msra.mxu0 %v3917
      %4076 = vmatprep.subr.bf16.mxu0 0
      %4077 = vmatpush1.bf16.msra.mxu0 %v3918
      %4078 = vmatprep.subr.bf16.mxu0 0
      %4079 = vmatpush1.bf16.msra.mxu0 %v3919
      %4080 = vmatprep.mubr.bf16.mxu0 %v1423
      %4081 = vmatmul.mubr.bf16.gmra.mrb[0].mxu0 %v1087
      %v4082 = vpop.f32.mrb[0].mxu0
      %v4083 = vadd.f32 0.0, %v4082
      %v4084 = vpop.f32.mrb[0].mxu0
      %v4085 = vpop.f32.mrb[0].mxu0
      %v4086 = vadd.f32 0.0, %v4085
      %v4087 = vpop.f32.mrb[0].mxu0
      %4088 = vmatprep.mubr.bf16.mxu0 %v1424
      %4089 = vmatmul.mubr.bf16.gmra.mrb[0].mxu0 %v1088
      %v4090 = vpop.f32.mrb[0].mxu0
      %v4091 = vadd.f32 0.0, %v4090
      %v4092 = vpop.f32.mrb[0].mxu0
      %v4093 = vpop.f32.mrb[0].mxu0
      %v4094 = vadd.f32 0.0, %v4093
      %v4095 = vpop.f32.mrb[0].mxu0
      %4096 = vmatprep.mubr.bf16.mxu0 %v1425
      %4097 = vmatmul.mubr.bf16.gmra.mrb[0].mxu0 %v1089
      %v4098 = vpop.f32.mrb[0].mxu0
      %v4099 = vadd.f32 0.0, %v4098
      %v4100 = vpop.f32.mrb[0].mxu0
      %v4101 = vpop.f32.mrb[0].mxu0
      %v4102 = vadd.f32 0.0, %v4101
      %v4103 = vpop.f32.mrb[0].mxu0
      %4104 = vmatprep.mubr.bf16.mxu0 %v1426
      %4105 = vmatmul.mubr.bf16.gmra.mrb[0].mxu0 %v1090
      %v4106 = vpop.f32.mrb[0].mxu0
      %v4107 = vadd.f32 0.0, %v4106
      %v4108 = vpop.f32.mrb[0].mxu0
      %v4109 = vpop.f32.mrb[0].mxu0
      %v4110 = vadd.f32 0.0, %v4109
      %v4111 = vpop.f32.mrb[0].mxu0
      %4112 = vmatprep.mubr.bf16.mxu0 %v1427
      %4113 = vmatmul.mubr.bf16.gmra.mrb[0].mxu0 %v1091
      %v4114 = vpop.f32.mrb[0].mxu0
      %v4115 = vadd.f32 0.0, %v4114
      %v4116 = vpop.f32.mrb[0].mxu0
      %v4117 = vpop.f32.mrb[0].mxu0
      %v4118 = vadd.f32 0.0, %v4117
      %v4119 = vpop.f32.mrb[0].mxu0
      %4120 = vmatprep.mubr.bf16.mxu0 %v1428
      %4121 = vmatmul.mubr.bf16.gmra.mrb[0].mxu0 %v1092
      %v4122 = vpop.f32.mrb[0].mxu0
      %v4123 = vadd.f32 0.0, %v4122
      %v4124 = vpop.f32.mrb[0].mxu0
      %v4125 = vpop.f32.mrb[0].mxu0
      %v4126 = vadd.f32 0.0, %v4125
      %v4127 = vpop.f32.mrb[0].mxu0
      %4128 = vmatprep.mubr.bf16.mxu0 %v1429
      %4129 = vmatmul.mubr.bf16.gmra.mrb[0].mxu0 %v1093
      %v4130 = vpop.f32.mrb[0].mxu0
      %v4131 = vadd.f32 0.0, %v4130
      %v4132 = vpop.f32.mrb[0].mxu0
      %v4133 = vpop.f32.mrb[0].mxu0
      %v4134 = vadd.f32 0.0, %v4133
      %v4135 = vpop.f32.mrb[0].mxu0
      %4136 = vmatprep.mubr.bf16.mxu0 %v1430
      %4137 = vmatmul.mubr.bf16.gmra.mrb[0].mxu0 %v1094
      %v4138 = vpop.f32.mrb[0].mxu0
      %v4139 = vadd.f32 0.0, %v4138
      %v4140 = vpop.f32.mrb[0].mxu0
      %v4141 = vpop.f32.mrb[0].mxu0
      %v4142 = vadd.f32 0.0, %v4141
      %v4143 = vpop.f32.mrb[0].mxu0
      %4144 = vmatprep.mubr.bf16.mxu0 %v1431
      %4145 = vmatmul.mubr.bf16.gmra.mrb[0].mxu0 %v1095
      %v4146 = vpop.f32.mrb[0].mxu0
      %v4147 = vadd.f32 0.0, %v4146
      %v4148 = vpop.f32.mrb[0].mxu0
      %v4149 = vpop.f32.mrb[0].mxu0
      %v4150 = vadd.f32 0.0, %v4149
      %v4151 = vpop.f32.mrb[0].mxu0
      %4152 = vmatprep.mubr.bf16.mxu0 %v1432
      %4153 = vmatmul.mubr.bf16.gmra.mrb[0].mxu0 %v1096
      %v4154 = vpop.f32.mrb[0].mxu0
      %v4155 = vadd.f32 0.0, %v4154
      %v4156 = vpop.f32.mrb[0].mxu0
      %v4157 = vpop.f32.mrb[0].mxu0
      %v4158 = vadd.f32 0.0, %v4157
      %v4159 = vpop.f32.mrb[0].mxu0
      %4160 = vmatprep.mubr.bf16.mxu0 %v1433
      %4161 = vmatmul.mubr.bf16.gmra.mrb[0].mxu0 %v1097
      %v4162 = vpop.f32.mrb[0].mxu0
      %v4163 = vadd.f32 0.0, %v4162
      %v4164 = vpop.f32.mrb[0].mxu0
      %v4165 = vpop.f32.mrb[0].mxu0
      %v4166 = vadd.f32 0.0, %v4165
      %v4167 = vpop.f32.mrb[0].mxu0
      %4168 = vmatprep.mubr.bf16.mxu0 %v1434
      %4169 = vmatmul.mubr.bf16.gmra.mrb[0].mxu0 %v1098
      %v4170 = vpop.f32.mrb[0].mxu0
      %v4171 = vadd.f32 0.0, %v4170
      %v4172 = vpop.f32.mrb[0].mxu0
      %v4173 = vpop.f32.mrb[0].mxu0
      %v4174 = vadd.f32 0.0, %v4173
      %v4175 = vpop.f32.mrb[0].mxu0
      %4176 = vmatprep.mubr.bf16.mxu0 %v1435
      %4177 = vmatmul.mubr.bf16.gmra.mrb[0].mxu0 %v1099
      %v4178 = vpop.f32.mrb[0].mxu0
      %v4179 = vadd.f32 0.0, %v4178
      %v4180 = vpop.f32.mrb[0].mxu0
      %v4181 = vpop.f32.mrb[0].mxu0
      %v4182 = vadd.f32 0.0, %v4181
      %v4183 = vpop.f32.mrb[0].mxu0
      %4184 = vmatprep.mubr.bf16.mxu0 %v1436
      %4185 = vmatmul.mubr.bf16.gmra.mrb[0].mxu0 %v1100
      %v4186 = vpop.f32.mrb[0].mxu0
      %v4187 = vadd.f32 0.0, %v4186
      %v4188 = vpop.f32.mrb[0].mxu0
      %v4189 = vpop.f32.mrb[0].mxu0
      %v4190 = vadd.f32 0.0, %v4189
      %v4191 = vpop.f32.mrb[0].mxu0
      %4192 = vmatprep.mubr.bf16.mxu0 %v1437
      %4193 = vmatmul.mubr.bf16.gmra.mrb[0].mxu0 %v1101
      %v4194 = vpop.f32.mrb[0].mxu0
      %v4195 = vadd.f32 0.0, %v4194
      %v4196 = vpop.f32.mrb[0].mxu0
      %v4197 = vpop.f32.mrb[0].mxu0
      %v4198 = vadd.f32 0.0, %v4197
      %v4199 = vpop.f32.mrb[0].mxu0
      %4200 = vmatprep.mubr.bf16.mxu0 %v1438
      %4201 = vmatmul.mubr.bf16.gmra.mrb[0].mxu0 %v1102
      %v4202 = vpop.f32.mrb[0].mxu0
      %v4203 = vadd.f32 0.0, %v4202
      %v4204 = vpop.f32.mrb[0].mxu0
      %v4205 = vpop.f32.mrb[0].mxu0
      %v4206 = vadd.f32 0.0, %v4205
      %v4207 = vpop.f32.mrb[0].mxu0
      %4208 = vdwg.mxu0
      %4209 = vmatprep.subr.bf16.mxu0 0
      %4210 = vmatpush1.bf16.msra.mxu0 %v3920
      %4211 = vmatprep.subr.bf16.mxu0 0
      %4212 = vmatpush1.bf16.msra.mxu0 %v3921
      %4213 = vmatprep.subr.bf16.mxu0 0
      %4214 = vmatpush1.bf16.msra.mxu0 %v3922
      %4215 = vmatprep.subr.bf16.mxu0 0
      %4216 = vmatpush1.bf16.msra.mxu0 %v3923
      %4217 = vmatprep.subr.bf16.mxu0 0
      %4218 = vmatpush1.bf16.msra.mxu0 %v3924
      %4219 = vmatprep.subr.bf16.mxu0 0
      %4220 = vmatpush1.bf16.msra.mxu0 %v3925
      %4221 = vmatprep.subr.bf16.mxu0 0
      %4222 = vmatpush1.bf16.msra.mxu0 %v3926
      %4223 = vmatprep.subr.bf16.mxu0 0
      %4224 = vmatpush1.bf16.msra.mxu0 %v3927
      %4225 = vmatprep.subr.bf16.mxu0 0
      %4226 = vmatpush1.bf16.msra.mxu0 %v3928
      %4227 = vmatprep.subr.bf16.mxu0 0
      %4228 = vmatpush1.bf16.msra.mxu0 %v3929
      %4229 = vmatprep.subr.bf16.mxu0 0
      %4230 = vmatpush1.bf16.msra.mxu0 %v3930
      %4231 = vmatprep.subr.bf16.mxu0 0
      %4232 = vmatpush1.bf16.msra.mxu0 %v3931
      %4233 = vmatprep.subr.bf16.mxu0 0
      %4234 = vmatpush1.bf16.msra.mxu0 %v3932
      %4235 = vmatprep.subr.bf16.mxu0 0
      %4236 = vmatpush1.bf16.msra.mxu0 %v3933
      %4237 = vmatprep.subr.bf16.mxu0 0
      %4238 = vmatpush1.bf16.msra.mxu0 %v3934
      %4239 = vmatprep.subr.bf16.mxu0 0
      %4240 = vmatpush1.bf16.msra.mxu0 %v3935
      %4241 = vmatprep.mubr.bf16.mxu0 %v2224
      %4242 = vmatmul.mubr.bf16.gmra.mrb[0].mxu0 %v1856
      %v4243 = vpop.f32.mrb[0].mxu0
      %v4244 = vadd.f32 %v4083, %v4243
      %v4245 = vpop.f32.mrb[0].mxu0
      %v4246 = vpop.f32.mrb[0].mxu0
      %v4247 = vadd.f32 %v4086, %v4246
      %v4248 = vpop.f32.mrb[0].mxu0
      %4249 = vmatprep.mubr.bf16.mxu0 %v2225
      %4250 = vmatmul.mubr.bf16.gmra.mrb[0].mxu0 %v1857
      %v4251 = vpop.f32.mrb[0].mxu0
      %v4252 = vadd.f32 %v4091, %v4251
      %v4253 = vpop.f32.mrb[0].mxu0
      %v4254 = vpop.f32.mrb[0].mxu0
      %v4255 = vadd.f32 %v4094, %v4254
      %v4256 = vpop.f32.mrb[0].mxu0
      %4257 = vmatprep.mubr.bf16.mxu0 %v2226
      %4258 = vmatmul.mubr.bf16.gmra.mrb[0].mxu0 %v1858
      %v4259 = vpop.f32.mrb[0].mxu0
      %v4260 = vadd.f32 %v4099, %v4259
      %v4261 = vpop.f32.mrb[0].mxu0
      %v4262 = vpop.f32.mrb[0].mxu0
      %v4263 = vadd.f32 %v4102, %v4262
      %v4264 = vpop.f32.mrb[0].mxu0
      %4265 = vmatprep.mubr.bf16.mxu0 %v2227
      %4266 = vmatmul.mubr.bf16.gmra.mrb[0].mxu0 %v1859
      %v4267 = vpop.f32.mrb[0].mxu0
      %v4268 = vadd.f32 %v4107, %v4267
      %v4269 = vpop.f32.mrb[0].mxu0
      %v4270 = vpop.f32.mrb[0].mxu0
      %v4271 = vadd.f32 %v4110, %v4270
      %v4272 = vpop.f32.mrb[0].mxu0
      %4273 = vmatprep.mubr.bf16.mxu0 %v2228
      %4274 = vmatmul.mubr.bf16.gmra.mrb[0].mxu0 %v1860
      %v4275 = vpop.f32.mrb[0].mxu0
      %v4276 = vadd.f32 %v4115, %v4275
      %v4277 = vpop.f32.mrb[0].mxu0
      %v4278 = vpop.f32.mrb[0].mxu0
      %v4279 = vadd.f32 %v4118, %v4278
      %v4280 = vpop.f32.mrb[0].mxu0
      %4281 = vmatprep.mubr.bf16.mxu0 %v2229
      %4282 = vmatmul.mubr.bf16.gmra.mrb[0].mxu0 %v1861
      %v4283 = vpop.f32.mrb[0].mxu0
      %v4284 = vadd.f32 %v4123, %v4283
      %v4285 = vpop.f32.mrb[0].mxu0
      %v4286 = vpop.f32.mrb[0].mxu0
      %v4287 = vadd.f32 %v4126, %v4286
      %v4288 = vpop.f32.mrb[0].mxu0
      %4289 = vmatprep.mubr.bf16.mxu0 %v2230
      %4290 = vmatmul.mubr.bf16.gmra.mrb[0].mxu0 %v1862
      %v4291 = vpop.f32.mrb[0].mxu0
      %v4292 = vadd.f32 %v4131, %v4291
      %v4293 = vpop.f32.mrb[0].mxu0
      %v4294 = vpop.f32.mrb[0].mxu0
      %v4295 = vadd.f32 %v4134, %v4294
      %v4296 = vpop.f32.mrb[0].mxu0
      %4297 = vmatprep.mubr.bf16.mxu0 %v2231
      %4298 = vmatmul.mubr.bf16.gmra.mrb[0].mxu0 %v1863
      %v4299 = vpop.f32.mrb[0].mxu0
      %v4300 = vadd.f32 %v4139, %v4299
      %v4301 = vpop.f32.mrb[0].mxu0
      %v4302 = vpop.f32.mrb[0].mxu0
      %v4303 = vadd.f32 %v4142, %v4302
      %v4304 = vpop.f32.mrb[0].mxu0
      %4305 = vmatprep.mubr.bf16.mxu0 %v2232
      %4306 = vmatmul.mubr.bf16.gmra.mrb[0].mxu0 %v1864
      %v4307 = vpop.f32.mrb[0].mxu0
      %v4308 = vadd.f32 %v4147, %v4307
      %v4309 = vpop.f32.mrb[0].mxu0
      %v4310 = vpop.f32.mrb[0].mxu0
      %v4311 = vadd.f32 %v4150, %v4310
      %v4312 = vpop.f32.mrb[0].mxu0
      %4313 = vmatprep.mubr.bf16.mxu0 %v2233
      %4314 = vmatmul.mubr.bf16.gmra.mrb[0].mxu0 %v1865
      %v4315 = vpop.f32.mrb[0].mxu0
      %v4316 = vadd.f32 %v4155, %v4315
      %v4317 = vpop.f32.mrb[0].mxu0
      %v4318 = vpop.f32.mrb[0].mxu0
      %v4319 = vadd.f32 %v4158, %v4318
      %v4320 = vpop.f32.mrb[0].mxu0
      %4321 = vmatprep.mubr.bf16.mxu0 %v2234
      %4322 = vmatmul.mubr.bf16.gmra.mrb[0].mxu0 %v1866
      %v4323 = vpop.f32.mrb[0].mxu0
      %v4324 = vadd.f32 %v4163, %v4323
      %v4325 = vpop.f32.mrb[0].mxu0
      %v4326 = vpop.f32.mrb[0].mxu0
      %v4327 = vadd.f32 %v4166, %v4326
      %v4328 = vpop.f32.mrb[0].mxu0
      %4329 = vmatprep.mubr.bf16.mxu0 %v2235
      %4330 = vmatmul.mubr.bf16.gmra.mrb[0].mxu0 %v1867
      %v4331 = vpop.f32.mrb[0].mxu0
      %v4332 = vadd.f32 %v4171, %v4331
      %v4333 = vpop.f32.mrb[0].mxu0
      %v4334 = vpop.f32.mrb[0].mxu0
      %v4335 = vadd.f32 %v4174, %v4334
      %v4336 = vpop.f32.mrb[0].mxu0
      %4337 = vmatprep.mubr.bf16.mxu0 %v2236
      %4338 = vmatmul.mubr.bf16.gmra.mrb[0].mxu0 %v1868
      %v4339 = vpop.f32.mrb[0].mxu0
      %v4340 = vadd.f32 %v4179, %v4339
      %v4341 = vpop.f32.mrb[0].mxu0
      %v4342 = vpop.f32.mrb[0].mxu0
      %v4343 = vadd.f32 %v4182, %v4342
      %v4344 = vpop.f32.mrb[0].mxu0
      %4345 = vmatprep.mubr.bf16.mxu0 %v2237
      %4346 = vmatmul.mubr.bf16.gmra.mrb[0].mxu0 %v1869
      %v4347 = vpop.f32.mrb[0].mxu0
      %v4348 = vadd.f32 %v4187, %v4347
      %v4349 = vpop.f32.mrb[0].mxu0
      %v4350 = vpop.f32.mrb[0].mxu0
      %v4351 = vadd.f32 %v4190, %v4350
      %v4352 = vpop.f32.mrb[0].mxu0
      %4353 = vmatprep.mubr.bf16.mxu0 %v2238
      %4354 = vmatmul.mubr.bf16.gmra.mrb[0].mxu0 %v1870
      %v4355 = vpop.f32.mrb[0].mxu0
      %v4356 = vadd.f32 %v4195, %v4355
      %v4357 = vpop.f32.mrb[0].mxu0
      %v4358 = vpop.f32.mrb[0].mxu0
      %v4359 = vadd.f32 %v4198, %v4358
      %v4360 = vpop.f32.mrb[0].mxu0
      %4361 = vmatprep.mubr.bf16.mxu0 %v2239
      %4362 = vmatmul.mubr.bf16.gmra.mrb[0].mxu0 %v1871
      %v4363 = vpop.f32.mrb[0].mxu0
      %v4364 = vadd.f32 %v4203, %v4363
      %v4365 = vpop.f32.mrb[0].mxu0
      %v4366 = vpop.f32.mrb[0].mxu0
      %v4367 = vadd.f32 %v4206, %v4366
      %v4368 = vpop.f32.mrb[0].mxu0
      %4369 = vdwg.mxu0
      %4370 = vmatprep.subr.bf16.mxu0 0
      %4371 = vmatpush1.bf16.msra.mxu0 %v3936
      %4372 = vmatprep.subr.bf16.mxu0 0
      %4373 = vmatpush1.bf16.msra.mxu0 %v3937
      %4374 = vmatprep.subr.bf16.mxu0 0
      %4375 = vmatpush1.bf16.msra.mxu0 %v3938
      %4376 = vmatprep.subr.bf16.mxu0 0
      %4377 = vmatpush1.bf16.msra.mxu0 %v3939
      %4378 = vmatprep.subr.bf16.mxu0 0
      %4379 = vmatpush1.bf16.msra.mxu0 %v3940
      %4380 = vmatprep.subr.bf16.mxu0 0
      %4381 = vmatpush1.bf16.msra.mxu0 %v3941
      %4382 = vmatprep.subr.bf16.mxu0 0
      %4383 = vmatpush1.bf16.msra.mxu0 %v3942
      %4384 = vmatprep.subr.bf16.mxu0 0
      %4385 = vmatpush1.bf16.msra.mxu0 %v3943
      %4386 = vmatprep.subr.bf16.mxu0 0
      %4387 = vmatpush1.bf16.msra.mxu0 %v3944
      %4388 = vmatprep.subr.bf16.mxu0 0
      %4389 = vmatpush1.bf16.msra.mxu0 %v3945
      %4390 = vmatprep.subr.bf16.mxu0 0
      %4391 = vmatpush1.bf16.msra.mxu0 %v3946
      %4392 = vmatprep.subr.bf16.mxu0 0
      %4393 = vmatpush1.bf16.msra.mxu0 %v3947
      %4394 = vmatprep.subr.bf16.mxu0 0
      %4395 = vmatpush1.bf16.msra.mxu0 %v3948
      %4396 = vmatprep.subr.bf16.mxu0 0
      %4397 = vmatpush1.bf16.msra.mxu0 %v3949
      %4398 = vmatprep.subr.bf16.mxu0 0
      %4399 = vmatpush1.bf16.msra.mxu0 %v3950
      %4400 = vmatprep.subr.bf16.mxu0 0
      %4401 = vmatpush1.bf16.msra.mxu0 %v3951
      %4402 = vmatprep.mubr.bf16.mxu0 %v2512
      %4403 = vmatmul.mubr.bf16.gmra.mrb[0].mxu0 %v2240
      %v4404 = vpop.f32.mrb[0].mxu0
      %v4405 = vadd.f32 %v4244, %v4404
      %v4406 = vpop.f32.mrb[0].mxu0
      %v4407 = vpop.f32.mrb[0].mxu0
      %v4408 = vadd.f32 %v4247, %v4407
      %v4409 = vpop.f32.mrb[0].mxu0
      %4410 = vmatprep.mubr.bf16.mxu0 %v2513
      %4411 = vmatmul.mubr.bf16.gmra.mrb[0].mxu0 %v2241
      %v4412 = vpop.f32.mrb[0].mxu0
      %v4413 = vadd.f32 %v4252, %v4412
      %v4414 = vpop.f32.mrb[0].mxu0
      %v4415 = vpop.f32.mrb[0].mxu0
      %v4416 = vadd.f32 %v4255, %v4415
      %v4417 = vpop.f32.mrb[0].mxu0
      %4418 = vmatprep.mubr.bf16.mxu0 %v2514
      %4419 = vmatmul.mubr.bf16.gmra.mrb[0].mxu0 %v2242
      %v4420 = vpop.f32.mrb[0].mxu0
      %v4421 = vadd.f32 %v4260, %v4420
      %v4422 = vpop.f32.mrb[0].mxu0
      %v4423 = vpop.f32.mrb[0].mxu0
      %v4424 = vadd.f32 %v4263, %v4423
      %v4425 = vpop.f32.mrb[0].mxu0
      %4426 = vmatprep.mubr.bf16.mxu0 %v2515
      %4427 = vmatmul.mubr.bf16.gmra.mrb[0].mxu0 %v2243
      %v4428 = vpop.f32.mrb[0].mxu0
      %v4429 = vadd.f32 %v4268, %v4428
      %v4430 = vpop.f32.mrb[0].mxu0
      %v4431 = vpop.f32.mrb[0].mxu0
      %v4432 = vadd.f32 %v4271, %v4431
      %v4433 = vpop.f32.mrb[0].mxu0
      %4434 = vmatprep.mubr.bf16.mxu0 %v2516
      %4435 = vmatmul.mubr.bf16.gmra.mrb[0].mxu0 %v2244
      %v4436 = vpop.f32.mrb[0].mxu0
      %v4437 = vadd.f32 %v4276, %v4436
      %v4438 = vpop.f32.mrb[0].mxu0
      %v4439 = vpop.f32.mrb[0].mxu0
      %v4440 = vadd.f32 %v4279, %v4439
      %v4441 = vpop.f32.mrb[0].mxu0
      %4442 = vmatprep.mubr.bf16.mxu0 %v2517
      %4443 = vmatmul.mubr.bf16.gmra.mrb[0].mxu0 %v2245
      %v4444 = vpop.f32.mrb[0].mxu0
      %v4445 = vadd.f32 %v4284, %v4444
      %v4446 = vpop.f32.mrb[0].mxu0
      %v4447 = vpop.f32.mrb[0].mxu0
      %v4448 = vadd.f32 %v4287, %v4447
      %v4449 = vpop.f32.mrb[0].mxu0
      %4450 = vmatprep.mubr.bf16.mxu0 %v2518
      %4451 = vmatmul.mubr.bf16.gmra.mrb[0].mxu0 %v2246
      %v4452 = vpop.f32.mrb[0].mxu0
      %v4453 = vadd.f32 %v4292, %v4452
      %v4454 = vpop.f32.mrb[0].mxu0
      %v4455 = vpop.f32.mrb[0].mxu0
      %v4456 = vadd.f32 %v4295, %v4455
      %v4457 = vpop.f32.mrb[0].mxu0
      %4458 = vmatprep.mubr.bf16.mxu0 %v2519
      %4459 = vmatmul.mubr.bf16.gmra.mrb[0].mxu0 %v2247
      %v4460 = vpop.f32.mrb[0].mxu0
      %v4461 = vadd.f32 %v4300, %v4460
      %v4462 = vpop.f32.mrb[0].mxu0
      %v4463 = vpop.f32.mrb[0].mxu0
      %v4464 = vadd.f32 %v4303, %v4463
      %v4465 = vpop.f32.mrb[0].mxu0
      %4466 = vmatprep.mubr.bf16.mxu0 %v2520
      %4467 = vmatmul.mubr.bf16.gmra.mrb[0].mxu0 %v2248
      %v4468 = vpop.f32.mrb[0].mxu0
      %v4469 = vadd.f32 %v4308, %v4468
      %v4470 = vpop.f32.mrb[0].mxu0
      %v4471 = vpop.f32.mrb[0].mxu0
      %v4472 = vadd.f32 %v4311, %v4471
      %v4473 = vpop.f32.mrb[0].mxu0
      %4474 = vmatprep.mubr.bf16.mxu0 %v2521
      %4475 = vmatmul.mubr.bf16.gmra.mrb[0].mxu0 %v2249
      %v4476 = vpop.f32.mrb[0].mxu0
      %v4477 = vadd.f32 %v4316, %v4476
      %v4478 = vpop.f32.mrb[0].mxu0
      %v4479 = vpop.f32.mrb[0].mxu0
      %v4480 = vadd.f32 %v4319, %v4479
      %v4481 = vpop.f32.mrb[0].mxu0
      %4482 = vmatprep.mubr.bf16.mxu0 %v2522
      %4483 = vmatmul.mubr.bf16.gmra.mrb[0].mxu0 %v2250
      %v4484 = vpop.f32.mrb[0].mxu0
      %v4485 = vadd.f32 %v4324, %v4484
      %v4486 = vpop.f32.mrb[0].mxu0
      %v4487 = vpop.f32.mrb[0].mxu0
      %v4488 = vadd.f32 %v4327, %v4487
      %v4489 = vpop.f32.mrb[0].mxu0
      %4490 = vmatprep.mubr.bf16.mxu0 %v2523
      %4491 = vmatmul.mubr.bf16.gmra.mrb[0].mxu0 %v2251
      %v4492 = vpop.f32.mrb[0].mxu0
      %v4493 = vadd.f32 %v4332, %v4492
      %v4494 = vpop.f32.mrb[0].mxu0
      %v4495 = vpop.f32.mrb[0].mxu0
      %v4496 = vadd.f32 %v4335, %v4495
      %v4497 = vpop.f32.mrb[0].mxu0
      %4498 = vmatprep.mubr.bf16.mxu0 %v2524
      %4499 = vmatmul.mubr.bf16.gmra.mrb[0].mxu0 %v2252
      %v4500 = vpop.f32.mrb[0].mxu0
      %v4501 = vadd.f32 %v4340, %v4500
      %v4502 = vpop.f32.mrb[0].mxu0
      %v4503 = vpop.f32.mrb[0].mxu0
      %v4504 = vadd.f32 %v4343, %v4503
      %v4505 = vpop.f32.mrb[0].mxu0
      %4506 = vmatprep.mubr.bf16.mxu0 %v2525
      %4507 = vmatmul.mubr.bf16.gmra.mrb[0].mxu0 %v2253
      %v4508 = vpop.f32.mrb[0].mxu0
      %v4509 = vadd.f32 %v4348, %v4508
      %v4510 = vpop.f32.mrb[0].mxu0
      %v4511 = vpop.f32.mrb[0].mxu0
      %v4512 = vadd.f32 %v4351, %v4511
      %v4513 = vpop.f32.mrb[0].mxu0
      %4514 = vmatprep.mubr.bf16.mxu0 %v2526
      %4515 = vmatmul.mubr.bf16.gmra.mrb[0].mxu0 %v2254
      %v4516 = vpop.f32.mrb[0].mxu0
      %v4517 = vadd.f32 %v4356, %v4516
      %v4518 = vpop.f32.mrb[0].mxu0
      %v4519 = vpop.f32.mrb[0].mxu0
      %v4520 = vadd.f32 %v4359, %v4519
      %v4521 = vpop.f32.mrb[0].mxu0
      %4522 = vmatprep.mubr.bf16.mxu0 %v2527
      %4523 = vmatmul.mubr.bf16.gmra.mrb[0].mxu0 %v2255
      %v4524 = vpop.f32.mrb[0].mxu0
      %v4525 = vadd.f32 %v4364, %v4524
      %v4526 = vpop.f32.mrb[0].mxu0
      %v4527 = vpop.f32.mrb[0].mxu0
      %v4528 = vadd.f32 %v4367, %v4527
      %v4529 = vpop.f32.mrb[0].mxu0
      %4530 = vdwg.mxu0
      %4531 = vmatprep.subr.bf16.mxu0 0
      %4532 = vmatpush1.bf16.msra.mxu0 %v3952
      %4533 = vmatprep.subr.bf16.mxu0 0
      %4534 = vmatpush1.bf16.msra.mxu0 %v3953
      %4535 = vmatprep.subr.bf16.mxu0 0
      %4536 = vmatpush1.bf16.msra.mxu0 %v3954
      %4537 = vmatprep.subr.bf16.mxu0 0
      %4538 = vmatpush1.bf16.msra.mxu0 %v3955
      %4539 = vmatprep.subr.bf16.mxu0 0
      %4540 = vmatpush1.bf16.msra.mxu0 %v3956
      %4541 = vmatprep.subr.bf16.mxu0 0
      %4542 = vmatpush1.bf16.msra.mxu0 %v3957
      %4543 = vmatprep.subr.bf16.mxu0 0
      %4544 = vmatpush1.bf16.msra.mxu0 %v3958
      %4545 = vmatprep.subr.bf16.mxu0 0
      %4546 = vmatpush1.bf16.msra.mxu0 %v3959
      %4547 = vmatprep.subr.bf16.mxu0 0
      %4548 = vmatpush1.bf16.msra.mxu0 %v3960
      %4549 = vmatprep.subr.bf16.mxu0 0
      %4550 = vmatpush1.bf16.msra.mxu0 %v3961
      %4551 = vmatprep.subr.bf16.mxu0 0
      %4552 = vmatpush1.bf16.msra.mxu0 %v3962
      %4553 = vmatprep.subr.bf16.mxu0 0
      %4554 = vmatpush1.bf16.msra.mxu0 %v3963
      %4555 = vmatprep.subr.bf16.mxu0 0
      %4556 = vmatpush1.bf16.msra.mxu0 %v3964
      %4557 = vmatprep.subr.bf16.mxu0 0
      %4558 = vmatpush1.bf16.msra.mxu0 %v3965
      %4559 = vmatprep.subr.bf16.mxu0 0
      %4560 = vmatpush1.bf16.msra.mxu0 %v3966
      %4561 = vmatprep.subr.bf16.mxu0 0
      %4562 = vmatpush1.bf16.msra.mxu0 %v3967
      %4563 = vmatprep.mubr.bf16.mxu0 %v3184
      %4564 = vmatmul.mubr.bf16.gmra.mrb[0].mxu0 %v2912
      %v4565 = vpop.f32.mrb[0].mxu0
      %v4566 = vadd.f32 %v4405, %v4565
      %v4567 = vpop.f32.mrb[0].mxu0
      %v4568 = vpop.f32.mrb[0].mxu0
      %v4569 = vadd.f32 %v4408, %v4568
      %v4570 = vpop.f32.mrb[0].mxu0
      %4571 = vmatprep.mubr.bf16.mxu0 %v3185
      %4572 = vmatmul.mubr.bf16.gmra.mrb[0].mxu0 %v2913
      %v4573 = vpop.f32.mrb[0].mxu0
      %v4574 = vadd.f32 %v4413, %v4573
      %v4575 = vpop.f32.mrb[0].mxu0
      %v4576 = vpop.f32.mrb[0].mxu0
      %v4577 = vadd.f32 %v4416, %v4576
      %v4578 = vpop.f32.mrb[0].mxu0
      %4579 = vmatprep.mubr.bf16.mxu0 %v3186
      %4580 = vmatmul.mubr.bf16.gmra.mrb[0].mxu0 %v2914
      %v4581 = vpop.f32.mrb[0].mxu0
      %v4582 = vadd.f32 %v4421, %v4581
      %v4583 = vpop.f32.mrb[0].mxu0
      %v4584 = vpop.f32.mrb[0].mxu0
      %v4585 = vadd.f32 %v4424, %v4584
      %v4586 = vpop.f32.mrb[0].mxu0
      %4587 = vmatprep.mubr.bf16.mxu0 %v3187
      %4588 = vmatmul.mubr.bf16.gmra.mrb[0].mxu0 %v2915
      %v4589 = vpop.f32.mrb[0].mxu0
      %v4590 = vadd.f32 %v4429, %v4589
      %v4591 = vpop.f32.mrb[0].mxu0
      %v4592 = vpop.f32.mrb[0].mxu0
      %v4593 = vadd.f32 %v4432, %v4592
      %v4594 = vpop.f32.mrb[0].mxu0
      %4595 = vmatprep.mubr.bf16.mxu0 %v3188
      %4596 = vmatmul.mubr.bf16.gmra.mrb[0].mxu0 %v2916
      %v4597 = vpop.f32.mrb[0].mxu0
      %v4598 = vadd.f32 %v4437, %v4597
      %v4599 = vpop.f32.mrb[0].mxu0
      %v4600 = vpop.f32.mrb[0].mxu0
      %v4601 = vadd.f32 %v4440, %v4600
      %v4602 = vpop.f32.mrb[0].mxu0
      %4603 = vmatprep.mubr.bf16.mxu0 %v3189
      %4604 = vmatmul.mubr.bf16.gmra.mrb[0].mxu0 %v2917
      %v4605 = vpop.f32.mrb[0].mxu0
      %v4606 = vadd.f32 %v4445, %v4605
      %v4607 = vpop.f32.mrb[0].mxu0
      %v4608 = vpop.f32.mrb[0].mxu0
      %v4609 = vadd.f32 %v4448, %v4608
      %v4610 = vpop.f32.mrb[0].mxu0
      %4611 = vmatprep.mubr.bf16.mxu0 %v3190
      %4612 = vmatmul.mubr.bf16.gmra.mrb[0].mxu0 %v2918
      %v4613 = vpop.f32.mrb[0].mxu0
      %v4614 = vadd.f32 %v4453, %v4613
      %v4615 = vpop.f32.mrb[0].mxu0
      %v4616 = vpop.f32.mrb[0].mxu0
      %v4617 = vadd.f32 %v4456, %v4616
      %v4618 = vpop.f32.mrb[0].mxu0
      %4619 = vmatprep.mubr.bf16.mxu0 %v3191
      %4620 = vmatmul.mubr.bf16.gmra.mrb[0].mxu0 %v2919
      %v4621 = vpop.f32.mrb[0].mxu0
      %v4622 = vadd.f32 %v4461, %v4621
      %v4623 = vpop.f32.mrb[0].mxu0
      %v4624 = vpop.f32.mrb[0].mxu0
      %v4625 = vadd.f32 %v4464, %v4624
      %v4626 = vpop.f32.mrb[0].mxu0
      %4627 = vmatprep.mubr.bf16.mxu0 %v3192
      %4628 = vmatmul.mubr.bf16.gmra.mrb[0].mxu0 %v2920
      %v4629 = vpop.f32.mrb[0].mxu0
      %v4630 = vadd.f32 %v4469, %v4629
      %v4631 = vpop.f32.mrb[0].mxu0
      %v4632 = vpop.f32.mrb[0].mxu0
      %v4633 = vadd.f32 %v4472, %v4632
      %v4634 = vpop.f32.mrb[0].mxu0
      %4635 = vmatprep.mubr.bf16.mxu0 %v3193
      %4636 = vmatmul.mubr.bf16.gmra.mrb[0].mxu0 %v2921
      %v4637 = vpop.f32.mrb[0].mxu0
      %v4638 = vadd.f32 %v4477, %v4637
      %v4639 = vpop.f32.mrb[0].mxu0
      %v4640 = vpop.f32.mrb[0].mxu0
      %v4641 = vadd.f32 %v4480, %v4640
      %v4642 = vpop.f32.mrb[0].mxu0
      %4643 = vmatprep.mubr.bf16.mxu0 %v3194
      %4644 = vmatmul.mubr.bf16.gmra.mrb[0].mxu0 %v2922
      %v4645 = vpop.f32.mrb[0].mxu0
      %v4646 = vadd.f32 %v4485, %v4645
      %v4647 = vpop.f32.mrb[0].mxu0
      %v4648 = vpop.f32.mrb[0].mxu0
      %v4649 = vadd.f32 %v4488, %v4648
      %v4650 = vpop.f32.mrb[0].mxu0
      %4651 = vmatprep.mubr.bf16.mxu0 %v3195
      %4652 = vmatmul.mubr.bf16.gmra.mrb[0].mxu0 %v2923
      %v4653 = vpop.f32.mrb[0].mxu0
      %v4654 = vadd.f32 %v4493, %v4653
      %v4655 = vpop.f32.mrb[0].mxu0
      %v4656 = vpop.f32.mrb[0].mxu0
      %v4657 = vadd.f32 %v4496, %v4656
      %v4658 = vpop.f32.mrb[0].mxu0
      %4659 = vmatprep.mubr.bf16.mxu0 %v3196
      %4660 = vmatmul.mubr.bf16.gmra.mrb[0].mxu0 %v2924
      %v4661 = vpop.f32.mrb[0].mxu0
      %v4662 = vadd.f32 %v4501, %v4661
      %v4663 = vpop.f32.mrb[0].mxu0
      %v4664 = vpop.f32.mrb[0].mxu0
      %v4665 = vadd.f32 %v4504, %v4664
      %v4666 = vpop.f32.mrb[0].mxu0
      %4667 = vmatprep.mubr.bf16.mxu0 %v3197
      %4668 = vmatmul.mubr.bf16.gmra.mrb[0].mxu0 %v2925
      %v4669 = vpop.f32.mrb[0].mxu0
      %v4670 = vadd.f32 %v4509, %v4669
      %v4671 = vpop.f32.mrb[0].mxu0
      %v4672 = vpop.f32.mrb[0].mxu0
      %v4673 = vadd.f32 %v4512, %v4672
      %v4674 = vpop.f32.mrb[0].mxu0
      %4675 = vmatprep.mubr.bf16.mxu0 %v3198
      %4676 = vmatmul.mubr.bf16.gmra.mrb[0].mxu0 %v2926
      %v4677 = vpop.f32.mrb[0].mxu0
      %v4678 = vadd.f32 %v4517, %v4677
      %v4679 = vpop.f32.mrb[0].mxu0
      %v4680 = vpop.f32.mrb[0].mxu0
      %v4681 = vadd.f32 %v4520, %v4680
      %v4682 = vpop.f32.mrb[0].mxu0
      %4683 = vmatprep.mubr.bf16.mxu0 %v3199
      %4684 = vmatmul.mubr.bf16.gmra.mrb[0].mxu0 %v2927
      %v4685 = vpop.f32.mrb[0].mxu0
      %v4686 = vadd.f32 %v4525, %v4685
      %v4687 = vpop.f32.mrb[0].mxu0
      %v4688 = vpop.f32.mrb[0].mxu0
      %v4689 = vadd.f32 %v4528, %v4688
      %v4690 = vpop.f32.mrb[0].mxu0
      %4691 = vdwg.mxu0
      %4692 = vmatprep.subr.bf16.mxu0 0
      %4693 = vmatpush1.bf16.msra.mxu0 %v3968
      %4694 = vmatprep.subr.bf16.mxu0 0
      %4695 = vmatpush1.bf16.msra.mxu0 %v3969
      %4696 = vmatprep.subr.bf16.mxu0 0
      %4697 = vmatpush1.bf16.msra.mxu0 %v3970
      %4698 = vmatprep.subr.bf16.mxu0 0
      %4699 = vmatpush1.bf16.msra.mxu0 %v3971
      %4700 = vmatprep.subr.bf16.mxu0 0
      %4701 = vmatpush1.bf16.msra.mxu0 %v3972
      %4702 = vmatprep.subr.bf16.mxu0 0
      %4703 = vmatpush1.bf16.msra.mxu0 %v3973
      %4704 = vmatprep.subr.bf16.mxu0 0
      %4705 = vmatpush1.bf16.msra.mxu0 %v3974
      %4706 = vmatprep.subr.bf16.mxu0 0
      %4707 = vmatpush1.bf16.msra.mxu0 %v3975
      %4708 = vmatprep.subr.bf16.mxu0 0
      %4709 = vmatpush1.bf16.msra.mxu0 0
      %4710 = vmatprep.subr.bf16.mxu0 0
      %4711 = vmatpush1.bf16.msra.mxu0 0
      %4712 = vmatprep.subr.bf16.mxu0 0
      %4713 = vmatpush1.bf16.msra.mxu0 0
      %4714 = vmatprep.subr.bf16.mxu0 0
      %4715 = vmatpush1.bf16.msra.mxu0 0
      %4716 = vmatprep.subr.bf16.mxu0 0
      %4717 = vmatpush1.bf16.msra.mxu0 0
      %4718 = vmatprep.subr.bf16.mxu0 0
      %4719 = vmatpush1.bf16.msra.mxu0 0
      %4720 = vmatprep.subr.bf16.mxu0 0
      %4721 = vmatpush1.bf16.msra.mxu0 0
      %4722 = vmatprep.subr.bf16.mxu0 0
      %4723 = vmatpush1.bf16.msra.mxu0 0
      %4724 = vmatprep.mubr.bf16.mxu0 0
      %4725 = vmatmul.mubr.bf16.gmra.mrb[0].mxu0 %v3456
      %v4726 = vpop.f32.mrb[0].mxu0
      %v4727 = vadd.f32 %v4566, %v4726
      %v4728 = vpop.f32.mrb[0].mxu0
      %v4729 = vpop.f32.mrb[0].mxu0
      %v4730 = vadd.f32 %v4569, %v4729
      %v4731 = vpop.f32.mrb[0].mxu0
      %4732 = vmatprep.mubr.bf16.mxu0 0
      %4733 = vmatmul.mubr.bf16.gmra.mrb[0].mxu0 %v3457
      %v4734 = vpop.f32.mrb[0].mxu0
      %v4735 = vadd.f32 %v4574, %v4734
      %v4736 = vpop.f32.mrb[0].mxu0
      %v4737 = vpop.f32.mrb[0].mxu0
      %v4738 = vadd.f32 %v4577, %v4737
      %v4739 = vpop.f32.mrb[0].mxu0
      %4740 = vmatprep.mubr.bf16.mxu0 0
      %4741 = vmatmul.mubr.bf16.gmra.mrb[0].mxu0 %v3458
      %v4742 = vpop.f32.mrb[0].mxu0
      %v4743 = vadd.f32 %v4582, %v4742
      %v4744 = vpop.f32.mrb[0].mxu0
      %v4745 = vpop.f32.mrb[0].mxu0
      %v4746 = vadd.f32 %v4585, %v4745
      %v4747 = vpop.f32.mrb[0].mxu0
      %4748 = vmatprep.mubr.bf16.mxu0 0
      %4749 = vmatmul.mubr.bf16.gmra.mrb[0].mxu0 %v3459
      %v4750 = vpop.f32.mrb[0].mxu0
      %v4751 = vadd.f32 %v4590, %v4750
      %v4752 = vpop.f32.mrb[0].mxu0
      %v4753 = vpop.f32.mrb[0].mxu0
      %v4754 = vadd.f32 %v4593, %v4753
      %v4755 = vpop.f32.mrb[0].mxu0
      %4756 = vmatprep.mubr.bf16.mxu0 0
      %4757 = vmatmul.mubr.bf16.gmra.mrb[0].mxu0 %v3460
      %v4758 = vpop.f32.mrb[0].mxu0
      %v4759 = vadd.f32 %v4598, %v4758
      %v4760 = vpop.f32.mrb[0].mxu0
      %v4761 = vpop.f32.mrb[0].mxu0
      %v4762 = vadd.f32 %v4601, %v4761
      %v4763 = vpop.f32.mrb[0].mxu0
      %4764 = vmatprep.mubr.bf16.mxu0 0
      %4765 = vmatmul.mubr.bf16.gmra.mrb[0].mxu0 %v3461
      %v4766 = vpop.f32.mrb[0].mxu0
      %v4767 = vadd.f32 %v4606, %v4766
      %v4768 = vpop.f32.mrb[0].mxu0
      %v4769 = vpop.f32.mrb[0].mxu0
      %v4770 = vadd.f32 %v4609, %v4769
      %v4771 = vpop.f32.mrb[0].mxu0
      %4772 = vmatprep.mubr.bf16.mxu0 0
      %4773 = vmatmul.mubr.bf16.gmra.mrb[0].mxu0 %v3462
      %v4774 = vpop.f32.mrb[0].mxu0
      %v4775 = vadd.f32 %v4614, %v4774
      %v4776 = vpop.f32.mrb[0].mxu0
      %v4777 = vpop.f32.mrb[0].mxu0
      %v4778 = vadd.f32 %v4617, %v4777
      %v4779 = vpop.f32.mrb[0].mxu0
      %4780 = vmatprep.mubr.bf16.mxu0 0
      %4781 = vmatmul.mubr.bf16.gmra.mrb[0].mxu0 %v3463
      %v4782 = vpop.f32.mrb[0].mxu0
      %v4783 = vadd.f32 %v4622, %v4782
      %v4784 = vpop.f32.mrb[0].mxu0
      %v4785 = vpop.f32.mrb[0].mxu0
      %v4786 = vadd.f32 %v4625, %v4785
      %v4787 = vpop.f32.mrb[0].mxu0
      %4788 = vmatprep.mubr.bf16.mxu0 0
      %4789 = vmatmul.mubr.bf16.gmra.mrb[0].mxu0 %v3464
      %v4790 = vpop.f32.mrb[0].mxu0
      %v4791 = vadd.f32 %v4630, %v4790
      %v4792 = vpop.f32.mrb[0].mxu0
      %v4793 = vpop.f32.mrb[0].mxu0
      %v4794 = vadd.f32 %v4633, %v4793
      %v4795 = vpop.f32.mrb[0].mxu0
      %4796 = vmatprep.mubr.bf16.mxu0 0
      %4797 = vmatmul.mubr.bf16.gmra.mrb[0].mxu0 %v3465
      %v4798 = vpop.f32.mrb[0].mxu0
      %v4799 = vadd.f32 %v4638, %v4798
      %v4800 = vpop.f32.mrb[0].mxu0
      %v4801 = vpop.f32.mrb[0].mxu0
      %v4802 = vadd.f32 %v4641, %v4801
      %v4803 = vpop.f32.mrb[0].mxu0
      %4804 = vmatprep.mubr.bf16.mxu0 0
      %4805 = vmatmul.mubr.bf16.gmra.mrb[0].mxu0 %v3466
      %v4806 = vpop.f32.mrb[0].mxu0
      %v4807 = vadd.f32 %v4646, %v4806
      %v4808 = vpop.f32.mrb[0].mxu0
      %v4809 = vpop.f32.mrb[0].mxu0
      %v4810 = vadd.f32 %v4649, %v4809
      %v4811 = vpop.f32.mrb[0].mxu0
      %4812 = vmatprep.mubr.bf16.mxu0 0
      %4813 = vmatmul.mubr.bf16.gmra.mrb[0].mxu0 %v3467
      %v4814 = vpop.f32.mrb[0].mxu0
      %v4815 = vadd.f32 %v4654, %v4814
      %v4816 = vpop.f32.mrb[0].mxu0
      %v4817 = vpop.f32.mrb[0].mxu0
      %v4818 = vadd.f32 %v4657, %v4817
      %v4819 = vpop.f32.mrb[0].mxu0
      %4820 = vmatprep.mubr.bf16.mxu0 0
      %4821 = vmatmul.mubr.bf16.gmra.mrb[0].mxu0 %v3468
      %v4822 = vpop.f32.mrb[0].mxu0
      %v4823 = vadd.f32 %v4662, %v4822
      %v4824 = vpop.f32.mrb[0].mxu0
      %v4825 = vpop.f32.mrb[0].mxu0
      %v4826 = vadd.f32 %v4665, %v4825
      %v4827 = vpop.f32.mrb[0].mxu0
      %4828 = vmatprep.mubr.bf16.mxu0 0
      %4829 = vmatmul.mubr.bf16.gmra.mrb[0].mxu0 %v3469
      %v4830 = vpop.f32.mrb[0].mxu0
      %v4831 = vadd.f32 %v4670, %v4830
      %v4832 = vpop.f32.mrb[0].mxu0
      %v4833 = vpop.f32.mrb[0].mxu0
      %v4834 = vadd.f32 %v4673, %v4833
      %v4835 = vpop.f32.mrb[0].mxu0
      %4836 = vmatprep.mubr.bf16.mxu0 0
      %4837 = vmatmul.mubr.bf16.gmra.mrb[0].mxu0 %v3470
      %v4838 = vpop.f32.mrb[0].mxu0
      %v4839 = vadd.f32 %v4678, %v4838
      %v4840 = vpop.f32.mrb[0].mxu0
      %v4841 = vpop.f32.mrb[0].mxu0
      %v4842 = vadd.f32 %v4681, %v4841
      %v4843 = vpop.f32.mrb[0].mxu0
      %4844 = vmatprep.mubr.bf16.mxu0 0
      %4845 = vmatmul.mubr.bf16.gmra.mrb[0].mxu0 %v3471
      %v4846 = vpop.f32.mrb[0].mxu0
      %v4847 = vadd.f32 %v4686, %v4846
      %v4848 = vpop.f32.mrb[0].mxu0
      %v4849 = vpop.f32.mrb[0].mxu0
      %v4850 = vadd.f32 %v4689, %v4849
      %v4851 = vpop.f32.mrb[0].mxu0
      %4852 = vdwg.mxu0
      %v4853 = vld [vmem:[%s7] sm:$0x1]
      %v4855 = vlaneseq
      %v4856 = vshrl.u32 %v4855, 7
      %v4857 = vsub.s32 0, %v4856
      %v4858 = vrot.slane %v4853, %v4857
      %v4860 = vmul.f32 %v4727, %v4858
      %v4861 = vmul.f32 %v4730, %v4858
      %v4862 = vmul.f32 %v4735, %v4858
      %v4863 = vmul.f32 %v4738, %v4858
      %v4864 = vmul.f32 %v4743, %v4858
      %v4865 = vmul.f32 %v4746, %v4858
      %v4866 = vmul.f32 %v4751, %v4858
      %v4867 = vmul.f32 %v4754, %v4858
      %v4868 = vmul.f32 %v4759, %v4858
      %v4869 = vmul.f32 %v4762, %v4858
      %v4870 = vmul.f32 %v4767, %v4858
      %v4871 = vmul.f32 %v4770, %v4858
      %v4872 = vmul.f32 %v4775, %v4858
      %v4873 = vmul.f32 %v4778, %v4858
      %v4874 = vmul.f32 %v4783, %v4858
      %v4875 = vmul.f32 %v4786, %v4858
      %v4876 = vmul.f32 %v4791, %v4858
      %v4877 = vmul.f32 %v4794, %v4858
      %v4878 = vmul.f32 %v4799, %v4858
      %v4879 = vmul.f32 %v4802, %v4858
      %v4880 = vmul.f32 %v4807, %v4858
      %v4881 = vmul.f32 %v4810, %v4858
      %v4882 = vmul.f32 %v4815, %v4858
      %v4883 = vmul.f32 %v4818, %v4858
      %v4884 = vmul.f32 %v4823, %v4858
      %v4885 = vmul.f32 %v4826, %v4858
      %v4886 = vmul.f32 %v4831, %v4858
      %v4887 = vmul.f32 %v4834, %v4858
      %v4888 = vmul.f32 %v4839, %v4858
      %v4889 = vmul.f32 %v4842, %v4858
      %v4890 = vmul.f32 %v4847, %v4858
      %v4891 = vmul.f32 %v4850, %v4858
      %v4892 = vld [vmem:[%s8] sm:$0x1]
      %v4894 = vlaneseq
      %v4895 = vshrl.u32 %v4894, 7
      %v4896 = vsub.s32 0, %v4895
      %v4897 = vrot.slane %v4892, %v4896
      %v4899 = vadd.f32 %v4860, %v4897
      %v4900 = vadd.f32 %v4861, %v4897
      %v4901 = vadd.f32 %v4862, %v4897
      %v4902 = vadd.f32 %v4863, %v4897
      %v4903 = vadd.f32 %v4864, %v4897
      %v4904 = vadd.f32 %v4865, %v4897
      %v4905 = vadd.f32 %v4866, %v4897
      %v4906 = vadd.f32 %v4867, %v4897
      %v4907 = vadd.f32 %v4868, %v4897
      %v4908 = vadd.f32 %v4869, %v4897
      %v4909 = vadd.f32 %v4870, %v4897
      %v4910 = vadd.f32 %v4871, %v4897
      %v4911 = vadd.f32 %v4872, %v4897
      %v4912 = vadd.f32 %v4873, %v4897
      %v4913 = vadd.f32 %v4874, %v4897
      %v4914 = vadd.f32 %v4875, %v4897
      %v4915 = vadd.f32 %v4876, %v4897
      %v4916 = vadd.f32 %v4877, %v4897
      %v4917 = vadd.f32 %v4878, %v4897
      %v4918 = vadd.f32 %v4879, %v4897
      %v4919 = vadd.f32 %v4880, %v4897
      %v4920 = vadd.f32 %v4881, %v4897
      %v4921 = vadd.f32 %v4882, %v4897
      %v4922 = vadd.f32 %v4883, %v4897
      %v4923 = vadd.f32 %v4884, %v4897
      %v4924 = vadd.f32 %v4885, %v4897
      %v4925 = vadd.f32 %v4886, %v4897
      %v4926 = vadd.f32 %v4887, %v4897
      %v4927 = vadd.f32 %v4888, %v4897
      %v4928 = vadd.f32 %v4889, %v4897
      %v4929 = vadd.f32 %v4890, %v4897
      %v4930 = vadd.f32 %v4891, %v4897
      %v4931 = vmax.f32 %v4899, 0.0
      %v4932 = vmax.f32 %v4900, 0.0
      %v4933 = vmax.f32 %v4901, 0.0
      %v4934 = vmax.f32 %v4902, 0.0
      %v4935 = vmax.f32 %v4903, 0.0
      %v4936 = vmax.f32 %v4904, 0.0
      %v4937 = vmax.f32 %v4905, 0.0
      %v4938 = vmax.f32 %v4906, 0.0
      %v4939 = vmax.f32 %v4907, 0.0
      %v4940 = vmax.f32 %v4908, 0.0
      %v4941 = vmax.f32 %v4909, 0.0
      %v4942 = vmax.f32 %v4910, 0.0
      %v4943 = vmax.f32 %v4911, 0.0
      %v4944 = vmax.f32 %v4912, 0.0
      %v4945 = vmax.f32 %v4913, 0.0
      %v4946 = vmax.f32 %v4914, 0.0
      %v4947 = vmax.f32 %v4915, 0.0
      %v4948 = vmax.f32 %v4916, 0.0
      %v4949 = vmax.f32 %v4917, 0.0
      %v4950 = vmax.f32 %v4918, 0.0
      %v4951 = vmax.f32 %v4919, 0.0
      %v4952 = vmax.f32 %v4920, 0.0
      %v4953 = vmax.f32 %v4921, 0.0
      %v4954 = vmax.f32 %v4922, 0.0
      %v4955 = vmax.f32 %v4923, 0.0
      %v4956 = vmax.f32 %v4924, 0.0
      %v4957 = vmax.f32 %v4925, 0.0
      %v4958 = vmax.f32 %v4926, 0.0
      %v4959 = vmax.f32 %v4927, 0.0
      %v4960 = vmax.f32 %v4928, 0.0
      %v4961 = vmax.f32 %v4929, 0.0
      %v4962 = vmax.f32 %v4930, 0.0
      %v4963 = vrot.slane %v4931, 7
      %v4964 = vrot.slane %v4932, 7
      %v4965 = vrot.slane %v4933, 7
      %v4966 = vrot.slane %v4934, 7
      %v4967 = vrot.slane %v4935, 7
      %v4968 = vrot.slane %v4936, 7
      %v4969 = vrot.slane %v4937, 7
      %v4970 = vrot.slane %v4938, 7
      %v4971 = vrot.slane %v4939, 7
      %v4972 = vrot.slane %v4940, 7
      %v4973 = vrot.slane %v4941, 7
      %v4974 = vrot.slane %v4942, 7
      %v4975 = vrot.slane %v4943, 7
      %v4976 = vrot.slane %v4944, 7
      %v4977 = vrot.slane %v4945, 7
      %v4978 = vrot.slane %v4946, 7
      %v4979 = vrot.slane %v4947, 7
      %v4980 = vrot.slane %v4948, 7
      %v4981 = vrot.slane %v4949, 7
      %v4982 = vrot.slane %v4950, 7
      %v4983 = vrot.slane %v4951, 7
      %v4984 = vrot.slane %v4952, 7
      %v4985 = vrot.slane %v4953, 7
      %v4986 = vrot.slane %v4954, 7
      %v4987 = vrot.slane %v4955, 7
      %v4988 = vrot.slane %v4956, 7
      %v4989 = vrot.slane %v4957, 7
      %v4990 = vrot.slane %v4958, 7
      %v4991 = vrot.slane %v4959, 7
      %v4992 = vrot.slane %v4960, 7
      %v4993 = vrot.slane %v4961, 7
      %v4994 = vrot.slane %v4962, 7
      %v4995 = vsel %vm574, %v4993, %v4994
      %v4996 = vsel %vm574, %v4992, %v4993
      %v4997 = vsel %vm574, %v4991, %v4992
      %v4998 = vsel %vm574, %v4990, %v4991
      %v4999 = vsel %vm574, %v4989, %v4990
      %v5000 = vsel %vm574, %v4988, %v4989
      %v5001 = vsel %vm574, %v4987, %v4988
      %v5002 = vsel %vm574, %v4986, %v4987
      %v5003 = vsel %vm574, %v4985, %v4986
      %v5004 = vsel %vm574, %v4984, %v4985
      %v5005 = vsel %vm574, %v4983, %v4984
      %v5006 = vsel %vm574, %v4982, %v4983
      %v5007 = vsel %vm574, %v4981, %v4982
      %v5008 = vsel %vm574, %v4980, %v4981
      %v5009 = vsel %vm574, %v4979, %v4980
      %v5010 = vsel %vm574, %v4978, %v4979
      %v5011 = vsel %vm574, %v4977, %v4978
      %v5012 = vsel %vm574, %v4976, %v4977
      %v5013 = vsel %vm574, %v4975, %v4976
      %v5014 = vsel %vm574, %v4974, %v4975
      %v5015 = vsel %vm574, %v4973, %v4974
      %v5016 = vsel %vm574, %v4972, %v4973
      %v5017 = vsel %vm574, %v4971, %v4972
      %v5018 = vsel %vm574, %v4970, %v4971
      %v5019 = vsel %vm574, %v4969, %v4970
      %v5020 = vsel %vm574, %v4968, %v4969
      %v5021 = vsel %vm574, %v4967, %v4968
      %v5022 = vsel %vm574, %v4966, %v4967
      %v5023 = vsel %vm574, %v4965, %v4966
      %v5024 = vsel %vm574, %v4964, %v4965
      %v5025 = vsel %vm574, %v4963, %v4964
      %v5026 = vsel %vm574, %v4994, %v4963
      %v5027 = vsel %vm1023, %v4996, 0.0
      %v5028 = vsel %vm1024, %v4995, 0.0
      %v5029 = vsel %vm1025, %v5026, 0.0
      %v5030 = vsel %vm1026, %v5025, 0.0
      %v5031 = vsel %vm1027, %v5024, 0.0
      %v5032 = vsel %vm1028, %v5023, 0.0
      %v5033 = vsel %vm1029, %v5022, 0.0
      %v5034 = vsel %vm1030, %v5021, 0.0
      %v5035 = vsel %vm1031, %v5020, 0.0
      %v5036 = vsel %vm1032, %v5019, 0.0
      %v5037 = vsel %vm1033, %v5018, 0.0
      %v5038 = vsel %vm1034, %v5017, 0.0
      %v5039 = vsel %vm1035, %v5016, 0.0
      %v5040 = vsel %vm1036, %v5015, 0.0
      %v5041 = vsel %vm1037, %v5014, 0.0
      %v5042 = vsel %vm1038, %v5013, 0.0
      %v5043 = vsel %vm1039, %v5012, 0.0
      %v5044 = vsel %vm1040, %v5011, 0.0
      %v5045 = vsel %vm1041, %v5010, 0.0
      %v5046 = vsel %vm1042, %v5009, 0.0
      %v5047 = vsel %vm1043, %v5008, 0.0
      %v5048 = vsel %vm1044, %v5007, 0.0
      %v5049 = vsel %vm1045, %v5006, 0.0
      %v5050 = vsel %vm1046, %v5005, 0.0
      %v5051 = vsel %vm1047, %v5004, 0.0
      %v5052 = vsel %vm1048, %v5003, 0.0
      %v5053 = vsel %vm1049, %v5002, 0.0
      %v5054 = vsel %vm1050, %v5001, 0.0
      %v5055 = vsel %vm1051, %v5000, 0.0
      %v5056 = vsel %vm1052, %v4999, 0.0
      %v5057 = vsel %vm1053, %v4998, 0.0
      %v5058 = vsel %vm1054, %v4997, 0.0
      %v5059 = vpack.c.bf16 %v5028, %v5027
      %v5060 = vpack.c.bf16 %v5030, %v5029
      %v5061 = vpack.c.bf16 %v5032, %v5031
      %v5062 = vpack.c.bf16 %v5034, %v5033
      %v5063 = vpack.c.bf16 %v5036, %v5035
      %v5064 = vpack.c.bf16 %v5038, %v5037
      %v5065 = vpack.c.bf16 %v5040, %v5039
      %v5066 = vpack.c.bf16 %v5042, %v5041
      %v5067 = vpack.c.bf16 %v5044, %v5043
      %v5068 = vpack.c.bf16 %v5046, %v5045
      %v5069 = vpack.c.bf16 %v5048, %v5047
      %v5070 = vpack.c.bf16 %v5050, %v5049
      %v5071 = vpack.c.bf16 %v5052, %v5051
      %v5072 = vpack.c.bf16 %v5054, %v5053
      %v5073 = vpack.c.bf16 %v5056, %v5055
      %v5074 = vpack.c.bf16 %v5058, %v5057
      %v5075 = vsel %vm1359, %v4961, 0.0
      %v5076 = vsel %vm1360, %v4962, 0.0
      %v5077 = vsel %vm1361, %v4931, 0.0
      %v5078 = vsel %vm1362, %v4932, 0.0
      %v5079 = vsel %vm1363, %v4933, 0.0
      %v5080 = vsel %vm1364, %v4934, 0.0
      %v5081 = vsel %vm1365, %v4935, 0.0
      %v5082 = vsel %vm1366, %v4936, 0.0
      %v5083 = vsel %vm1367, %v4937, 0.0
      %v5084 = vsel %vm1368, %v4938, 0.0
      %v5085 = vsel %vm1369, %v4939, 0.0
      %v5086 = vsel %vm1370, %v4940, 0.0
      %v5087 = vsel %vm1371, %v4941, 0.0
      %v5088 = vsel %vm1372, %v4942, 0.0
      %v5089 = vsel %vm1373, %v4943, 0.0
      %v5090 = vsel %vm1374, %v4944, 0.0
      %v5091 = vsel %vm1375, %v4945, 0.0
      %v5092 = vsel %vm1376, %v4946, 0.0
      %v5093 = vsel %vm1377, %v4947, 0.0
      %v5094 = vsel %vm1378, %v4948, 0.0
      %v5095 = vsel %vm1379, %v4949, 0.0
      %v5096 = vsel %vm1380, %v4950, 0.0
      %v5097 = vsel %vm1381, %v4951, 0.0
      %v5098 = vsel %vm1382, %v4952, 0.0
      %v5099 = vsel %vm1383, %v4953, 0.0
      %v5100 = vsel %vm1384, %v4954, 0.0
      %v5101 = vsel %vm1385, %v4955, 0.0
      %v5102 = vsel %vm1386, %v4956, 0.0
      %v5103 = vsel %vm1387, %v4957, 0.0
      %v5104 = vsel %vm1388, %v4958, 0.0
      %v5105 = vsel %vm1389, %v4959, 0.0
      %v5106 = vsel %vm1390, %v4960, 0.0
      %v5107 = vpack.c.bf16 %v5076, %v5075
      %v5108 = vpack.c.bf16 %v5078, %v5077
      %v5109 = vpack.c.bf16 %v5080, %v5079
      %v5110 = vpack.c.bf16 %v5082, %v5081
      %v5111 = vpack.c.bf16 %v5084, %v5083
      %v5112 = vpack.c.bf16 %v5086, %v5085
      %v5113 = vpack.c.bf16 %v5088, %v5087
      %v5114 = vpack.c.bf16 %v5090, %v5089
      %v5115 = vpack.c.bf16 %v5092, %v5091
      %v5116 = vpack.c.bf16 %v5094, %v5093
      %v5117 = vpack.c.bf16 %v5096, %v5095
      %v5118 = vpack.c.bf16 %v5098, %v5097
      %v5119 = vpack.c.bf16 %v5100, %v5099
      %v5120 = vpack.c.bf16 %v5102, %v5101
      %v5121 = vpack.c.bf16 %v5104, %v5103
      %v5122 = vpack.c.bf16 %v5106, %v5105
      %v5123 = vrot.slane %v4931, 1
      %v5124 = vrot.slane %v4932, 1
      %v5125 = vrot.slane %v4933, 1
      %v5126 = vrot.slane %v4934, 1
      %v5127 = vrot.slane %v4935, 1
      %v5128 = vrot.slane %v4936, 1
      %v5129 = vrot.slane %v4937, 1
      %v5130 = vrot.slane %v4938, 1
      %v5131 = vrot.slane %v4939, 1
      %v5132 = vrot.slane %v4940, 1
      %v5133 = vrot.slane %v4941, 1
      %v5134 = vrot.slane %v4942, 1
      %v5135 = vrot.slane %v4943, 1
      %v5136 = vrot.slane %v4944, 1
      %v5137 = vrot.slane %v4945, 1
      %v5138 = vrot.slane %v4946, 1
      %v5139 = vrot.slane %v4947, 1
      %v5140 = vrot.slane %v4948, 1
      %v5141 = vrot.slane %v4949, 1
      %v5142 = vrot.slane %v4950, 1
      %v5143 = vrot.slane %v4951, 1
      %v5144 = vrot.slane %v4952, 1
      %v5145 = vrot.slane %v4953, 1
      %v5146 = vrot.slane %v4954, 1
      %v5147 = vrot.slane %v4955, 1
      %v5148 = vrot.slane %v4956, 1
      %v5149 = vrot.slane %v4957, 1
      %v5150 = vrot.slane %v4958, 1
      %v5151 = vrot.slane %v4959, 1
      %v5152 = vrot.slane %v4960, 1
      %v5153 = vrot.slane %v4961, 1
      %v5154 = vrot.slane %v4962, 1
      %v5155 = vsel %vm1471, %v5153, %v5154
      %v5156 = vsel %vm1471, %v5152, %v5153
      %v5157 = vsel %vm1471, %v5151, %v5152
      %v5158 = vsel %vm1471, %v5150, %v5151
      %v5159 = vsel %vm1471, %v5149, %v5150
      %v5160 = vsel %vm1471, %v5148, %v5149
      %v5161 = vsel %vm1471, %v5147, %v5148
      %v5162 = vsel %vm1471, %v5146, %v5147
      %v5163 = vsel %vm1471, %v5145, %v5146
      %v5164 = vsel %vm1471, %v5144, %v5145
      %v5165 = vsel %vm1471, %v5143, %v5144
      %v5166 = vsel %vm1471, %v5142, %v5143
      %v5167 = vsel %vm1471, %v5141, %v5142
      %v5168 = vsel %vm1471, %v5140, %v5141
      %v5169 = vsel %vm1471, %v5139, %v5140
      %v5170 = vsel %vm1471, %v5138, %v5139
      %v5171 = vsel %vm1471, %v5137, %v5138
      %v5172 = vsel %vm1471, %v5136, %v5137
      %v5173 = vsel %vm1471, %v5135, %v5136
      %v5174 = vsel %vm1471, %v5134, %v5135
      %v5175 = vsel %vm1471, %v5133, %v5134
      %v5176 = vsel %vm1471, %v5132, %v5133
      %v5177 = vsel %vm1471, %v5131, %v5132
      %v5178 = vsel %vm1471, %v5130, %v5131
      %v5179 = vsel %vm1471, %v5129, %v5130
      %v5180 = vsel %vm1471, %v5128, %v5129
      %v5181 = vsel %vm1471, %v5127, %v5128
      %v5182 = vsel %vm1471, %v5126, %v5127
      %v5183 = vsel %vm1471, %v5125, %v5126
      %v5184 = vsel %vm1471, %v5124, %v5125
      %v5185 = vsel %vm1471, %v5123, %v5124
      %v5186 = vsel %vm1471, %v5154, %v5123
      %v5187 = vsel %vm1792, %v5155, 0.0
      %v5188 = vsel %vm1793, %v5186, 0.0
      %v5189 = vsel %vm1794, %v5185, 0.0
      %v5190 = vsel %vm1795, %v5184, 0.0
      %v5191 = vsel %vm1796, %v5183, 0.0
      %v5192 = vsel %vm1797, %v5182, 0.0
      %v5193 = vsel %vm1798, %v5181, 0.0
      %v5194 = vsel %vm1799, %v5180, 0.0
      %v5195 = vsel %vm1800, %v5179, 0.0
      %v5196 = vsel %vm1801, %v5178, 0.0
      %v5197 = vsel %vm1802, %v5177, 0.0
      %v5198 = vsel %vm1803, %v5176, 0.0
      %v5199 = vsel %vm1804, %v5175, 0.0
      %v5200 = vsel %vm1805, %v5174, 0.0
      %v5201 = vsel %vm1806, %v5173, 0.0
      %v5202 = vsel %vm1807, %v5172, 0.0
      %v5203 = vsel %vm1808, %v5171, 0.0
      %v5204 = vsel %vm1809, %v5170, 0.0
      %v5205 = vsel %vm1810, %v5169, 0.0
      %v5206 = vsel %vm1811, %v5168, 0.0
      %v5207 = vsel %vm1812, %v5167, 0.0
      %v5208 = vsel %vm1813, %v5166, 0.0
      %v5209 = vsel %vm1814, %v5165, 0.0
      %v5210 = vsel %vm1815, %v5164, 0.0
      %v5211 = vsel %vm1816, %v5163, 0.0
      %v5212 = vsel %vm1817, %v5162, 0.0
      %v5213 = vsel %vm1818, %v5161, 0.0
      %v5214 = vsel %vm1819, %v5160, 0.0
      %v5215 = vsel %vm1820, %v5159, 0.0
      %v5216 = vsel %vm1821, %v5158, 0.0
      %v5217 = vsel %vm1822, %v5157, 0.0
      %v5218 = vsel %vm1823, %v5156, 0.0
      %v5219 = vpack.c.bf16 %v5188, %v5187
      %v5220 = vpack.c.bf16 %v5190, %v5189
      %v5221 = vpack.c.bf16 %v5192, %v5191
      %v5222 = vpack.c.bf16 %v5194, %v5193
      %v5223 = vpack.c.bf16 %v5196, %v5195
      %v5224 = vpack.c.bf16 %v5198, %v5197
      %v5225 = vpack.c.bf16 %v5200, %v5199
      %v5226 = vpack.c.bf16 %v5202, %v5201
      %v5227 = vpack.c.bf16 %v5204, %v5203
      %v5228 = vpack.c.bf16 %v5206, %v5205
      %v5229 = vpack.c.bf16 %v5208, %v5207
      %v5230 = vpack.c.bf16 %v5210, %v5209
      %v5231 = vpack.c.bf16 %v5212, %v5211
      %v5232 = vpack.c.bf16 %v5214, %v5213
      %v5233 = vpack.c.bf16 %v5216, %v5215
      %v5234 = vpack.c.bf16 %v5218, %v5217
      %v5235 = vsel %vm2160, %v5026, 0.0
      %v5236 = vsel %vm2161, %v5025, 0.0
      %v5237 = vsel %vm2162, %v5024, 0.0
      %v5238 = vsel %vm2163, %v5023, 0.0
      %v5239 = vsel %vm2164, %v5022, 0.0
      %v5240 = vsel %vm2165, %v5021, 0.0
      %v5241 = vsel %vm2166, %v5020, 0.0
      %v5242 = vsel %vm2167, %v5019, 0.0
      %v5243 = vsel %vm2168, %v5018, 0.0
      %v5244 = vsel %vm2169, %v5017, 0.0
      %v5245 = vsel %vm2170, %v5016, 0.0
      %v5246 = vsel %vm2171, %v5015, 0.0
      %v5247 = vsel %vm2172, %v5014, 0.0
      %v5248 = vsel %vm2173, %v5013, 0.0
      %v5249 = vsel %vm2174, %v5012, 0.0
      %v5250 = vsel %vm2175, %v5011, 0.0
      %v5251 = vsel %vm2176, %v5010, 0.0
      %v5252 = vsel %vm2177, %v5009, 0.0
      %v5253 = vsel %vm2178, %v5008, 0.0
      %v5254 = vsel %vm2179, %v5007, 0.0
      %v5255 = vsel %vm2180, %v5006, 0.0
      %v5256 = vsel %vm2181, %v5005, 0.0
      %v5257 = vsel %vm2182, %v5004, 0.0
      %v5258 = vsel %vm2183, %v5003, 0.0
      %v5259 = vsel %vm2184, %v5002, 0.0
      %v5260 = vsel %vm2185, %v5001, 0.0
      %v5261 = vsel %vm2186, %v5000, 0.0
      %v5262 = vsel %vm2187, %v4999, 0.0
      %v5263 = vsel %vm2188, %v4998, 0.0
      %v5264 = vsel %vm2189, %v4997, 0.0
      %v5265 = vsel %vm2190, %v4996, 0.0
      %v5266 = vsel %vm2191, %v4995, 0.0
      %v5267 = vpack.c.bf16 %v5236, %v5235
      %v5268 = vpack.c.bf16 %v5238, %v5237
      %v5269 = vpack.c.bf16 %v5240, %v5239
      %v5270 = vpack.c.bf16 %v5242, %v5241
      %v5271 = vpack.c.bf16 %v5244, %v5243
      %v5272 = vpack.c.bf16 %v5246, %v5245
      %v5273 = vpack.c.bf16 %v5248, %v5247
      %v5274 = vpack.c.bf16 %v5250, %v5249
      %v5275 = vpack.c.bf16 %v5252, %v5251
      %v5276 = vpack.c.bf16 %v5254, %v5253
      %v5277 = vpack.c.bf16 %v5256, %v5255
      %v5278 = vpack.c.bf16 %v5258, %v5257
      %v5279 = vpack.c.bf16 %v5260, %v5259
      %v5280 = vpack.c.bf16 %v5262, %v5261
      %v5281 = vpack.c.bf16 %v5264, %v5263
      %v5282 = vpack.c.bf16 %v5266, %v5265
      %v5283 = vpack.c.bf16 %v4932, %v4931
      %v5284 = vpack.c.bf16 %v4934, %v4933
      %v5285 = vpack.c.bf16 %v4936, %v4935
      %v5286 = vpack.c.bf16 %v4938, %v4937
      %v5287 = vpack.c.bf16 %v4940, %v4939
      %v5288 = vpack.c.bf16 %v4942, %v4941
      %v5289 = vpack.c.bf16 %v4944, %v4943
      %v5290 = vpack.c.bf16 %v4946, %v4945
      %v5291 = vpack.c.bf16 %v4948, %v4947
      %v5292 = vpack.c.bf16 %v4950, %v4949
      %v5293 = vpack.c.bf16 %v4952, %v4951
      %v5294 = vpack.c.bf16 %v4954, %v4953
      %v5295 = vpack.c.bf16 %v4956, %v4955
      %v5296 = vpack.c.bf16 %v4958, %v4957
      %v5297 = vpack.c.bf16 %v4960, %v4959
      %v5298 = vpack.c.bf16 %v4962, %v4961
      %v5299 = vsel %vm2448, %v5185, 0.0
      %v5300 = vsel %vm2449, %v5184, 0.0
      %v5301 = vsel %vm2450, %v5183, 0.0
      %v5302 = vsel %vm2451, %v5182, 0.0
      %v5303 = vsel %vm2452, %v5181, 0.0
      %v5304 = vsel %vm2453, %v5180, 0.0
      %v5305 = vsel %vm2454, %v5179, 0.0
      %v5306 = vsel %vm2455, %v5178, 0.0
      %v5307 = vsel %vm2456, %v5177, 0.0
      %v5308 = vsel %vm2457, %v5176, 0.0
      %v5309 = vsel %vm2458, %v5175, 0.0
      %v5310 = vsel %vm2459, %v5174, 0.0
      %v5311 = vsel %vm2460, %v5173, 0.0
      %v5312 = vsel %vm2461, %v5172, 0.0
      %v5313 = vsel %vm2462, %v5171, 0.0
      %v5314 = vsel %vm2463, %v5170, 0.0
      %v5315 = vsel %vm2464, %v5169, 0.0
      %v5316 = vsel %vm2465, %v5168, 0.0
      %v5317 = vsel %vm2466, %v5167, 0.0
      %v5318 = vsel %vm2467, %v5166, 0.0
      %v5319 = vsel %vm2468, %v5165, 0.0
      %v5320 = vsel %vm2469, %v5164, 0.0
      %v5321 = vsel %vm2470, %v5163, 0.0
      %v5322 = vsel %vm2471, %v5162, 0.0
      %v5323 = vsel %vm2472, %v5161, 0.0
      %v5324 = vsel %vm2473, %v5160, 0.0
      %v5325 = vsel %vm2474, %v5159, 0.0
      %v5326 = vsel %vm2475, %v5158, 0.0
      %v5327 = vsel %vm2476, %v5157, 0.0
      %v5328 = vsel %vm2477, %v5156, 0.0
      %v5329 = vsel %vm2478, %v5155, 0.0
      %v5330 = vsel %vm2479, %v5186, 0.0
      %v5331 = vpack.c.bf16 %v5300, %v5299
      %v5332 = vpack.c.bf16 %v5302, %v5301
      %v5333 = vpack.c.bf16 %v5304, %v5303
      %v5334 = vpack.c.bf16 %v5306, %v5305
      %v5335 = vpack.c.bf16 %v5308, %v5307
      %v5336 = vpack.c.bf16 %v5310, %v5309
      %v5337 = vpack.c.bf16 %v5312, %v5311
      %v5338 = vpack.c.bf16 %v5314, %v5313
      %v5339 = vpack.c.bf16 %v5316, %v5315
      %v5340 = vpack.c.bf16 %v5318, %v5317
      %v5341 = vpack.c.bf16 %v5320, %v5319
      %v5342 = vpack.c.bf16 %v5322, %v5321
      %v5343 = vpack.c.bf16 %v5324, %v5323
      %v5344 = vpack.c.bf16 %v5326, %v5325
      %v5345 = vpack.c.bf16 %v5328, %v5327
      %v5346 = vpack.c.bf16 %v5330, %v5329
      %v5347 = vsel %vm2848, %v5024, 0.0
      %v5348 = vsel %vm2849, %v5023, 0.0
      %v5349 = vsel %vm2850, %v5022, 0.0
      %v5350 = vsel %vm2851, %v5021, 0.0
      %v5351 = vsel %vm2852, %v5020, 0.0
      %v5352 = vsel %vm2853, %v5019, 0.0
      %v5353 = vsel %vm2854, %v5018, 0.0
      %v5354 = vsel %vm2855, %v5017, 0.0
      %v5355 = vsel %vm2856, %v5016, 0.0
      %v5356 = vsel %vm2857, %v5015, 0.0
      %v5357 = vsel %vm2858, %v5014, 0.0
      %v5358 = vsel %vm2859, %v5013, 0.0
      %v5359 = vsel %vm2860, %v5012, 0.0
      %v5360 = vsel %vm2861, %v5011, 0.0
      %v5361 = vsel %vm2862, %v5010, 0.0
      %v5362 = vsel %vm2863, %v5009, 0.0
      %v5363 = vsel %vm2864, %v5008, 0.0
      %v5364 = vsel %vm2865, %v5007, 0.0
      %v5365 = vsel %vm2866, %v5006, 0.0
      %v5366 = vsel %vm2867, %v5005, 0.0
      %v5367 = vsel %vm2868, %v5004, 0.0
      %v5368 = vsel %vm2869, %v5003, 0.0
      %v5369 = vsel %vm2870, %v5002, 0.0
      %v5370 = vsel %vm2871, %v5001, 0.0
      %v5371 = vsel %vm2872, %v5000, 0.0
      %v5372 = vsel %vm2873, %v4999, 0.0
      %v5373 = vsel %vm2874, %v4998, 0.0
      %v5374 = vsel %vm2875, %v4997, 0.0
      %v5375 = vsel %vm2876, %v4996, 0.0
      %v5376 = vsel %vm2877, %v4995, 0.0
      %v5377 = vsel %vm2878, %v5026, 0.0
      %v5378 = vsel %vm2879, %v5025, 0.0
      %v5379 = vpack.c.bf16 %v5348, %v5347
      %v5380 = vpack.c.bf16 %v5350, %v5349
      %v5381 = vpack.c.bf16 %v5352, %v5351
      %v5382 = vpack.c.bf16 %v5354, %v5353
      %v5383 = vpack.c.bf16 %v5356, %v5355
      %v5384 = vpack.c.bf16 %v5358, %v5357
      %v5385 = vpack.c.bf16 %v5360, %v5359
      %v5386 = vpack.c.bf16 %v5362, %v5361
      %v5387 = vpack.c.bf16 %v5364, %v5363
      %v5388 = vpack.c.bf16 %v5366, %v5365
      %v5389 = vpack.c.bf16 %v5368, %v5367
      %v5390 = vpack.c.bf16 %v5370, %v5369
      %v5391 = vpack.c.bf16 %v5372, %v5371
      %v5392 = vpack.c.bf16 %v5374, %v5373
      %v5393 = vpack.c.bf16 %v5376, %v5375
      %v5394 = vpack.c.bf16 %v5378, %v5377
      %v5395 = vsel %vm3120, %v4933, 0.0
      %v5396 = vsel %vm3121, %v4934, 0.0
      %v5397 = vsel %vm3122, %v4935, 0.0
      %v5398 = vsel %vm3123, %v4936, 0.0
      %v5399 = vsel %vm3124, %v4937, 0.0
      %v5400 = vsel %vm3125, %v4938, 0.0
      %v5401 = vsel %vm3126, %v4939, 0.0
      %v5402 = vsel %vm3127, %v4940, 0.0
      %v5403 = vsel %vm3128, %v4941, 0.0
      %v5404 = vsel %vm3129, %v4942, 0.0
      %v5405 = vsel %vm3130, %v4943, 0.0
      %v5406 = vsel %vm3131, %v4944, 0.0
      %v5407 = vsel %vm3132, %v4945, 0.0
      %v5408 = vsel %vm3133, %v4946, 0.0
      %v5409 = vsel %vm3134, %v4947, 0.0
      %v5410 = vsel %vm3135, %v4948, 0.0
      %v5411 = vsel %vm3136, %v4949, 0.0
      %v5412 = vsel %vm3137, %v4950, 0.0
      %v5413 = vsel %vm3138, %v4951, 0.0
      %v5414 = vsel %vm3139, %v4952, 0.0
      %v5415 = vsel %vm3140, %v4953, 0.0
      %v5416 = vsel %vm3141, %v4954, 0.0
      %v5417 = vsel %vm3142, %v4955, 0.0
      %v5418 = vsel %vm3143, %v4956, 0.0
      %v5419 = vsel %vm3144, %v4957, 0.0
      %v5420 = vsel %vm3145, %v4958, 0.0
      %v5421 = vsel %vm3146, %v4959, 0.0
      %v5422 = vsel %vm3147, %v4960, 0.0
      %v5423 = vsel %vm3148, %v4961, 0.0
      %v5424 = vsel %vm3149, %v4962, 0.0
      %v5425 = vsel %vm3150, %v4931, 0.0
      %v5426 = vsel %vm3151, %v4932, 0.0
      %v5427 = vpack.c.bf16 %v5396, %v5395
      %v5428 = vpack.c.bf16 %v5398, %v5397
      %v5429 = vpack.c.bf16 %v5400, %v5399
      %v5430 = vpack.c.bf16 %v5402, %v5401
      %v5431 = vpack.c.bf16 %v5404, %v5403
      %v5432 = vpack.c.bf16 %v5406, %v5405
      %v5433 = vpack.c.bf16 %v5408, %v5407
      %v5434 = vpack.c.bf16 %v5410, %v5409
      %v5435 = vpack.c.bf16 %v5412, %v5411
      %v5436 = vpack.c.bf16 %v5414, %v5413
      %v5437 = vpack.c.bf16 %v5416, %v5415
      %v5438 = vpack.c.bf16 %v5418, %v5417
      %v5439 = vpack.c.bf16 %v5420, %v5419
      %v5440 = vpack.c.bf16 %v5422, %v5421
      %v5441 = vpack.c.bf16 %v5424, %v5423
      %v5442 = vpack.c.bf16 %v5426, %v5425
      %v5443 = vsel %vm3392, %v5183, 0.0
      %v5444 = vsel %vm3393, %v5182, 0.0
      %v5445 = vsel %vm3394, %v5181, 0.0
      %v5446 = vsel %vm3395, %v5180, 0.0
      %v5447 = vsel %vm3396, %v5179, 0.0
      %v5448 = vsel %vm3397, %v5178, 0.0
      %v5449 = vsel %vm3398, %v5177, 0.0
      %v5450 = vsel %vm3399, %v5176, 0.0
      %v5451 = vsel %vm3400, %v5175, 0.0
      %v5452 = vsel %vm3401, %v5174, 0.0
      %v5453 = vsel %vm3402, %v5173, 0.0
      %v5454 = vsel %vm3403, %v5172, 0.0
      %v5455 = vsel %vm3404, %v5171, 0.0
      %v5456 = vsel %vm3405, %v5170, 0.0
      %v5457 = vsel %vm3406, %v5169, 0.0
      %v5458 = vsel %vm3407, %v5168, 0.0
      %v5459 = vsel %vm3408, %v5167, 0.0
      %v5460 = vsel %vm3409, %v5166, 0.0
      %v5461 = vsel %vm3410, %v5165, 0.0
      %v5462 = vsel %vm3411, %v5164, 0.0
      %v5463 = vsel %vm3412, %v5163, 0.0
      %v5464 = vsel %vm3413, %v5162, 0.0
      %v5465 = vsel %vm3414, %v5161, 0.0
      %v5466 = vsel %vm3415, %v5160, 0.0
      %v5467 = vsel %vm3416, %v5159, 0.0
      %v5468 = vsel %vm3417, %v5158, 0.0
      %v5469 = vsel %vm3418, %v5157, 0.0
      %v5470 = vsel %vm3419, %v5156, 0.0
      %v5471 = vsel %vm3420, %v5155, 0.0
      %v5472 = vsel %vm3421, %v5186, 0.0
      %v5473 = vsel %vm3422, %v5185, 0.0
      %v5474 = vsel %vm3423, %v5184, 0.0
      %v5475 = vpack.c.bf16 %v5444, %v5443
      %v5476 = vpack.c.bf16 %v5446, %v5445
      %v5477 = vpack.c.bf16 %v5448, %v5447
      %v5478 = vpack.c.bf16 %v5450, %v5449
      %v5479 = vpack.c.bf16 %v5452, %v5451
      %v5480 = vpack.c.bf16 %v5454, %v5453
      %v5481 = vpack.c.bf16 %v5456, %v5455
      %v5482 = vpack.c.bf16 %v5458, %v5457
      %v5483 = vpack.c.bf16 %v5460, %v5459
      %v5484 = vpack.c.bf16 %v5462, %v5461
      %v5485 = vpack.c.bf16 %v5464, %v5463
      %v5486 = vpack.c.bf16 %v5466, %v5465
      %v5487 = vpack.c.bf16 %v5468, %v5467
      %v5488 = vpack.c.bf16 %v5470, %v5469
      %v5489 = vpack.c.bf16 %v5472, %v5471
      %v5490 = vpack.c.bf16 %v5474, %v5473
      %v5491 = vld [vmem:[%s4] sm:$0xf]
      %v5492 = vld [vmem:[%s4 + $0x4] sm:$0xf]
      %v5493 = vld [vmem:[%s4 + $0x8] sm:$0xf]
      %v5494 = vld [vmem:[%s4 + $0xc] sm:$0xf]
      %v5495 = vld [vmem:[%s4 + $0x10] sm:$0xf]
      %v5496 = vld [vmem:[%s4 + $0x14] sm:$0xf]
      %v5497 = vld [vmem:[%s4 + $0x18] sm:$0xf]
      %v5498 = vld [vmem:[%s4 + $0x1c] sm:$0xf]
      %v5499 = vld [vmem:[%s4 + $0x20] sm:$0xf]
      %v5500 = vld [vmem:[%s4 + $0x24] sm:$0xf]
      %v5501 = vld [vmem:[%s4 + $0x28] sm:$0xf]
      %v5502 = vld [vmem:[%s4 + $0x2c] sm:$0xf]
      %v5503 = vld [vmem:[%s4 + $0x30] sm:$0xf]
      %v5504 = vld [vmem:[%s4 + $0x34] sm:$0xf]
      %v5505 = vld [vmem:[%s4 + $0x38] sm:$0xf]
      %v5506 = vld [vmem:[%s4 + $0x3c] sm:$0xf]
      %v5507 = vld [vmem:[%s4 + $0x40] sm:$0xf]
      %v5508 = vld [vmem:[%s4 + $0x44] sm:$0xf]
      %v5509 = vld [vmem:[%s4 + $0x48] sm:$0xf]
      %v5510 = vld [vmem:[%s4 + $0x4c] sm:$0xf]
      %v5511 = vld [vmem:[%s4 + $0x50] sm:$0xf]
      %v5512 = vld [vmem:[%s4 + $0x54] sm:$0xf]
      %v5513 = vld [vmem:[%s4 + $0x58] sm:$0xf]
      %v5514 = vld [vmem:[%s4 + $0x5c] sm:$0xf]
      %v5515 = vld [vmem:[%s4 + $0x60] sm:$0xf]
      %v5516 = vld [vmem:[%s4 + $0x64] sm:$0xf]
      %v5517 = vld [vmem:[%s4 + $0x68] sm:$0xf]
      %v5518 = vld [vmem:[%s4 + $0x6c] sm:$0xf]
      %v5519 = vld [vmem:[%s4 + $0x70] sm:$0xf]
      %v5520 = vld [vmem:[%s4 + $0x74] sm:$0xf]
      %v5521 = vld [vmem:[%s4 + $0x78] sm:$0xf]
      %v5522 = vld [vmem:[%s4 + $0x7c] sm:$0xf]
      %v5523 = vld [vmem:[%s4 + $0x80] sm:$0xf]
      %v5524 = vld [vmem:[%s4 + $0x84] sm:$0xf]
      %v5525 = vld [vmem:[%s4 + $0x88] sm:$0xf]
      %v5526 = vld [vmem:[%s4 + $0x8c] sm:$0xf]
      %v5527 = vld [vmem:[%s4 + $0x90] sm:$0xf]
      %v5528 = vld [vmem:[%s4 + $0x94] sm:$0xf]
      %v5529 = vld [vmem:[%s4 + $0x98] sm:$0xf]
      %v5530 = vld [vmem:[%s4 + $0x9c] sm:$0xf]
      %v5531 = vld [vmem:[%s4 + $0xa0] sm:$0xf]
      %v5532 = vld [vmem:[%s4 + $0xa4] sm:$0xf]
      %v5533 = vld [vmem:[%s4 + $0xa8] sm:$0xf]
      %v5534 = vld [vmem:[%s4 + $0xac] sm:$0xf]
      %v5535 = vld [vmem:[%s4 + $0xb0] sm:$0xf]
      %v5536 = vld [vmem:[%s4 + $0xb4] sm:$0xf]
      %v5537 = vld [vmem:[%s4 + $0xb8] sm:$0xf]
      %v5538 = vld [vmem:[%s4 + $0xbc] sm:$0xf]
      %v5539 = vld [vmem:[%s4 + $0xc0] sm:$0xf]
      %v5540 = vld [vmem:[%s4 + $0xc4] sm:$0xf]
      %v5541 = vld [vmem:[%s4 + $0xc8] sm:$0xf]
      %v5542 = vld [vmem:[%s4 + $0xcc] sm:$0xf]
      %v5543 = vld [vmem:[%s4 + $0xd0] sm:$0xf]
      %v5544 = vld [vmem:[%s4 + $0xd4] sm:$0xf]
      %v5545 = vld [vmem:[%s4 + $0xd8] sm:$0xf]
      %v5546 = vld [vmem:[%s4 + $0xdc] sm:$0xf]
      %v5547 = vld [vmem:[%s4 + $0xe0] sm:$0xf]
      %v5548 = vld [vmem:[%s4 + $0xe4] sm:$0xf]
      %v5549 = vld [vmem:[%s4 + $0xe8] sm:$0xf]
      %v5550 = vld [vmem:[%s4 + $0xec] sm:$0xf]
      %v5551 = vld [vmem:[%s4 + $0xf0] sm:$0xf]
      %v5552 = vld [vmem:[%s4 + $0xf4] sm:$0xf]
      %v5553 = vld [vmem:[%s4 + $0xf8] sm:$0xf]
      %v5554 = vld [vmem:[%s4 + $0xfc] sm:$0xf]
      %v5555 = vld [vmem:[%s4 + $0x100] sm:$0xf]
      %v5556 = vld [vmem:[%s4 + $0x104] sm:$0xf]
      %v5557 = vld [vmem:[%s4 + $0x108] sm:$0xf]
      %v5558 = vld [vmem:[%s4 + $0x10c] sm:$0xf]
      %v5559 = vld [vmem:[%s4 + $0x110] sm:$0xf]
      %v5560 = vld [vmem:[%s4 + $0x114] sm:$0xf]
      %v5561 = vld [vmem:[%s4 + $0x118] sm:$0xf]
      %v5562 = vld [vmem:[%s4 + $0x11c] sm:$0xf]
      %v5563 = vld [vmem:[%s4 + $0x120] sm:$0xf]
      %v5564 = vld [vmem:[%s4 + $0x124] sm:$0xf]
      %v5565 = vld [vmem:[%s4 + $0x128] sm:$0xf]
      %v5566 = vld [vmem:[%s4 + $0x12c] sm:$0xf]
      %v5567 = vld [vmem:[%s4 + $0x130] sm:$0xf]
      %v5568 = vld [vmem:[%s4 + $0x134] sm:$0xf]
      %v5569 = vld [vmem:[%s4 + $0x138] sm:$0xf]
      %v5570 = vld [vmem:[%s4 + $0x13c] sm:$0xf]
      %v5571 = vld [vmem:[%s4 + $0x140] sm:$0xf]
      %v5572 = vld [vmem:[%s4 + $0x144] sm:$0xf]
      %v5573 = vld [vmem:[%s4 + $0x148] sm:$0xf]
      %v5574 = vld [vmem:[%s4 + $0x14c] sm:$0xf]
      %v5575 = vld [vmem:[%s4 + $0x150] sm:$0xf]
      %v5576 = vld [vmem:[%s4 + $0x154] sm:$0xf]
      %v5577 = vld [vmem:[%s4 + $0x158] sm:$0xf]
      %v5578 = vld [vmem:[%s4 + $0x15c] sm:$0xf]
      %v5579 = vld [vmem:[%s4 + $0x160] sm:$0xf]
      %v5580 = vld [vmem:[%s4 + $0x164] sm:$0xf]
      %v5581 = vld [vmem:[%s4 + $0x168] sm:$0xf]
      %v5582 = vld [vmem:[%s4 + $0x16c] sm:$0xf]
      %v5583 = vld [vmem:[%s4 + $0x170] sm:$0xf]
      %v5584 = vld [vmem:[%s4 + $0x174] sm:$0xf]
      %v5585 = vld [vmem:[%s4 + $0x178] sm:$0xf]
      %v5586 = vld [vmem:[%s4 + $0x17c] sm:$0xf]
      %v5587 = vld [vmem:[%s4 + $0x180] sm:$0xf]
      %v5588 = vld [vmem:[%s4 + $0x184] sm:$0xf]
      %v5589 = vld [vmem:[%s4 + $0x188] sm:$0xf]
      %v5590 = vld [vmem:[%s4 + $0x18c] sm:$0xf]
      %v5591 = vld [vmem:[%s4 + $0x190] sm:$0xf]
      %v5592 = vld [vmem:[%s4 + $0x194] sm:$0xf]
      %v5593 = vld [vmem:[%s4 + $0x198] sm:$0xf]
      %v5594 = vld [vmem:[%s4 + $0x19c] sm:$0xf]
      %v5595 = vld [vmem:[%s4 + $0x1a0] sm:$0xf]
      %v5596 = vld [vmem:[%s4 + $0x1a4] sm:$0xf]
      %v5597 = vld [vmem:[%s4 + $0x1a8] sm:$0xf]
      %v5598 = vld [vmem:[%s4 + $0x1ac] sm:$0xf]
      %v5599 = vld [vmem:[%s4 + $0x1b0] sm:$0xf]
      %v5600 = vld [vmem:[%s4 + $0x1b4] sm:$0xf]
      %v5601 = vld [vmem:[%s4 + $0x1b8] sm:$0xf]
      %v5602 = vld [vmem:[%s4 + $0x1bc] sm:$0xf]
      %v5603 = vld [vmem:[%s4 + $0x1c0] sm:$0xf]
      %v5604 = vld [vmem:[%s4 + $0x1c4] sm:$0xf]
      %v5605 = vld [vmem:[%s4 + $0x1c8] sm:$0xf]
      %v5606 = vld [vmem:[%s4 + $0x1cc] sm:$0xf]
      %v5607 = vld [vmem:[%s4 + $0x1d0] sm:$0xf]
      %v5608 = vld [vmem:[%s4 + $0x1d4] sm:$0xf]
      %v5609 = vld [vmem:[%s4 + $0x1d8] sm:$0xf]
      %v5610 = vld [vmem:[%s4 + $0x1dc] sm:$0xf]
      %v5611 = vld [vmem:[%s4 + $0x1e0] sm:$0xf]
      %v5612 = vld [vmem:[%s4 + $0x1e4] sm:$0xf]
      %v5613 = vld [vmem:[%s4 + $0x1e8] sm:$0xf]
      %v5614 = vld [vmem:[%s4 + $0x1ec] sm:$0xf]
      %v5615 = vld [vmem:[%s4 + $0x1f0] sm:$0xf]
      %v5616 = vld [vmem:[%s4 + $0x1f4] sm:$0xf]
      %v5617 = vld [vmem:[%s4 + $0x1f8] sm:$0xf]
      %v5618 = vld [vmem:[%s4 + $0x1fc] sm:$0xf]
      %v5619 = vld [vmem:[%s4 + $0x200] sm:$0xf]
      %v5620 = vld [vmem:[%s4 + $0x204] sm:$0xf]
      %v5621 = vld [vmem:[%s4 + $0x208] sm:$0xf]
      %v5622 = vld [vmem:[%s4 + $0x20c] sm:$0xf]
      %v5623 = vld [vmem:[%s4 + $0x210] sm:$0xf]
      %v5624 = vld [vmem:[%s4 + $0x214] sm:$0xf]
      %v5625 = vld [vmem:[%s4 + $0x218] sm:$0xf]
      %v5626 = vld [vmem:[%s4 + $0x21c] sm:$0xf]
      %v5627 = vld [vmem:[%s4 + $0x220] sm:$0xf]
      %v5628 = vld [vmem:[%s4 + $0x224] sm:$0xf]
      %v5629 = vld [vmem:[%s4 + $0x228] sm:$0xf]
      %v5630 = vld [vmem:[%s4 + $0x22c] sm:$0xf]
      %v5631 = vld [vmem:[%s4 + $0x230] sm:$0xf]
      %v5632 = vld [vmem:[%s4 + $0x234] sm:$0xf]
      %v5633 = vld [vmem:[%s4 + $0x238] sm:$0xf]
      %v5634 = vld [vmem:[%s4 + $0x23c] sm:$0xf]
      %v5779 = vunpack.c.l.b16 %v5491
      %v5780 = vunpack.c.l.b16 %v5492
      %v5781 = vunpack.c.l.b16 %v5493
      %v5782 = vunpack.c.l.b16 %v5494
      %v5783 = vunpack.c.l.b16 %v5495
      %v5784 = vunpack.c.l.b16 %v5496
      %v5785 = vunpack.c.l.b16 %v5497
      %v5786 = vunpack.c.l.b16 %v5498
      %v5787 = vunpack.c.l.b16 %v5499
      %v5788 = vunpack.c.l.b16 %v5500
      %v5789 = vunpack.c.l.b16 %v5501
      %v5790 = vunpack.c.l.b16 %v5502
      %v5791 = vunpack.c.l.b16 %v5503
      %v5792 = vunpack.c.l.b16 %v5504
      %v5793 = vunpack.c.l.b16 %v5505
      %v5794 = vunpack.c.l.b16 %v5506
      %v5795 = vunpack.c.l.b16 %v5507
      %v5796 = vunpack.c.l.b16 %v5508
      %v5797 = vunpack.c.l.b16 %v5509
      %v5798 = vunpack.c.l.b16 %v5510
      %v5799 = vunpack.c.l.b16 %v5511
      %v5800 = vunpack.c.l.b16 %v5512
      %v5801 = vunpack.c.l.b16 %v5513
      %v5802 = vunpack.c.l.b16 %v5514
      %v5803 = vunpack.c.l.b16 %v5515
      %v5804 = vunpack.c.l.b16 %v5516
      %v5805 = vunpack.c.l.b16 %v5517
      %v5806 = vunpack.c.l.b16 %v5518
      %v5807 = vunpack.c.l.b16 %v5519
      %v5808 = vunpack.c.l.b16 %v5520
      %v5809 = vunpack.c.l.b16 %v5521
      %v5810 = vunpack.c.l.b16 %v5522
      %v5811 = vunpack.c.l.b16 %v5523
      %v5812 = vunpack.c.l.b16 %v5524
      %v5813 = vunpack.c.l.b16 %v5525
      %v5814 = vunpack.c.l.b16 %v5526
      %v5815 = vunpack.c.l.b16 %v5527
      %v5816 = vunpack.c.l.b16 %v5528
      %v5817 = vunpack.c.l.b16 %v5529
      %v5818 = vunpack.c.l.b16 %v5530
      %v5819 = vunpack.c.l.b16 %v5531
      %v5820 = vunpack.c.l.b16 %v5532
      %v5821 = vunpack.c.l.b16 %v5533
      %v5822 = vunpack.c.l.b16 %v5534
      %v5823 = vunpack.c.l.b16 %v5535
      %v5824 = vunpack.c.l.b16 %v5536
      %v5825 = vunpack.c.l.b16 %v5537
      %v5826 = vunpack.c.l.b16 %v5538
      %v5827 = vunpack.c.l.b16 %v5539
      %v5828 = vunpack.c.l.b16 %v5540
      %v5829 = vunpack.c.l.b16 %v5541
      %v5830 = vunpack.c.l.b16 %v5542
      %v5831 = vunpack.c.l.b16 %v5543
      %v5832 = vunpack.c.l.b16 %v5544
      %v5833 = vunpack.c.l.b16 %v5545
      %v5834 = vunpack.c.l.b16 %v5546
      %v5835 = vunpack.c.l.b16 %v5547
      %v5836 = vunpack.c.l.b16 %v5548
      %v5837 = vunpack.c.l.b16 %v5549
      %v5838 = vunpack.c.l.b16 %v5550
      %v5839 = vunpack.c.l.b16 %v5551
      %v5840 = vunpack.c.l.b16 %v5552
      %v5841 = vunpack.c.l.b16 %v5553
      %v5842 = vunpack.c.l.b16 %v5554
      %v5843 = vunpack.c.l.b16 %v5555
      %v5844 = vunpack.c.l.b16 %v5556
      %v5845 = vunpack.c.l.b16 %v5557
      %v5846 = vunpack.c.l.b16 %v5558
      %v5847 = vunpack.c.l.b16 %v5559
      %v5848 = vunpack.c.l.b16 %v5560
      %v5849 = vunpack.c.l.b16 %v5561
      %v5850 = vunpack.c.l.b16 %v5562
      %v5851 = vunpack.c.l.b16 %v5563
      %v5852 = vunpack.c.l.b16 %v5564
      %v5853 = vunpack.c.l.b16 %v5565
      %v5854 = vunpack.c.l.b16 %v5566
      %v5855 = vunpack.c.l.b16 %v5567
      %v5856 = vunpack.c.l.b16 %v5568
      %v5857 = vunpack.c.l.b16 %v5569
      %v5858 = vunpack.c.l.b16 %v5570
      %v5859 = vunpack.c.l.b16 %v5571
      %v5860 = vunpack.c.l.b16 %v5572
      %v5861 = vunpack.c.l.b16 %v5573
      %v5862 = vunpack.c.l.b16 %v5574
      %v5863 = vunpack.c.l.b16 %v5575
      %v5864 = vunpack.c.l.b16 %v5576
      %v5865 = vunpack.c.l.b16 %v5577
      %v5866 = vunpack.c.l.b16 %v5578
      %v5867 = vunpack.c.l.b16 %v5579
      %v5868 = vunpack.c.l.b16 %v5580
      %v5869 = vunpack.c.l.b16 %v5581
      %v5870 = vunpack.c.l.b16 %v5582
      %v5871 = vunpack.c.l.b16 %v5583
      %v5872 = vunpack.c.l.b16 %v5584
      %v5873 = vunpack.c.l.b16 %v5585
      %v5874 = vunpack.c.l.b16 %v5586
      %v5875 = vunpack.c.l.b16 %v5587
      %v5876 = vunpack.c.l.b16 %v5588
      %v5877 = vunpack.c.l.b16 %v5589
      %v5878 = vunpack.c.l.b16 %v5590
      %v5879 = vunpack.c.l.b16 %v5591
      %v5880 = vunpack.c.l.b16 %v5592
      %v5881 = vunpack.c.l.b16 %v5593
      %v5882 = vunpack.c.l.b16 %v5594
      %v5883 = vunpack.c.l.b16 %v5595
      %v5884 = vunpack.c.l.b16 %v5596
      %v5885 = vunpack.c.l.b16 %v5597
      %v5886 = vunpack.c.l.b16 %v5598
      %v5887 = vunpack.c.l.b16 %v5599
      %v5888 = vunpack.c.l.b16 %v5600
      %v5889 = vunpack.c.l.b16 %v5601
      %v5890 = vunpack.c.l.b16 %v5602
      %v5891 = vunpack.c.l.b16 %v5603
      %v5892 = vunpack.c.l.b16 %v5604
      %v5893 = vunpack.c.l.b16 %v5605
      %v5894 = vunpack.c.l.b16 %v5606
      %v5895 = vunpack.c.l.b16 %v5607
      %v5896 = vunpack.c.l.b16 %v5608
      %v5897 = vunpack.c.l.b16 %v5609
      %v5898 = vunpack.c.l.b16 %v5610
      %v5899 = vunpack.c.l.b16 %v5611
      %v5900 = vunpack.c.l.b16 %v5612
      %v5901 = vunpack.c.l.b16 %v5613
      %v5902 = vunpack.c.l.b16 %v5614
      %v5903 = vunpack.c.l.b16 %v5615
      %v5904 = vunpack.c.l.b16 %v5616
      %v5905 = vunpack.c.l.b16 %v5617
      %v5906 = vunpack.c.l.b16 %v5618
      %v5907 = vunpack.c.l.b16 %v5619
      %v5908 = vunpack.c.l.b16 %v5620
      %v5909 = vunpack.c.l.b16 %v5621
      %v5910 = vunpack.c.l.b16 %v5622
      %v5911 = vunpack.c.l.b16 %v5623
      %v5912 = vunpack.c.l.b16 %v5624
      %v5913 = vunpack.c.l.b16 %v5625
      %v5914 = vunpack.c.l.b16 %v5626
      %v5915 = vunpack.c.l.b16 %v5627
      %v5916 = vunpack.c.l.b16 %v5628
      %v5917 = vunpack.c.l.b16 %v5629
      %v5918 = vunpack.c.l.b16 %v5630
      %v5919 = vunpack.c.l.b16 %v5631
      %v5920 = vunpack.c.l.b16 %v5632
      %v5921 = vunpack.c.l.b16 %v5633
      %v5922 = vunpack.c.l.b16 %v5634
      %v5923 = vpack.c.b16 %v5780, %v5779
      %v5924 = vpack.c.b16 %v5782, %v5781
      %v5925 = vpack.c.b16 %v5784, %v5783
      %v5926 = vpack.c.b16 %v5786, %v5785
      %v5927 = vpack.c.b16 %v5788, %v5787
      %v5928 = vpack.c.b16 %v5790, %v5789
      %v5929 = vpack.c.b16 %v5792, %v5791
      %v5930 = vpack.c.b16 %v5794, %v5793
      %v5931 = vpack.c.b16 %v5796, %v5795
      %v5932 = vpack.c.b16 %v5798, %v5797
      %v5933 = vpack.c.b16 %v5800, %v5799
      %v5934 = vpack.c.b16 %v5802, %v5801
      %v5935 = vpack.c.b16 %v5804, %v5803
      %v5936 = vpack.c.b16 %v5806, %v5805
      %v5937 = vpack.c.b16 %v5808, %v5807
      %v5938 = vpack.c.b16 %v5810, %v5809
      %v5939 = vpack.c.b16 %v5812, %v5811
      %v5940 = vpack.c.b16 %v5814, %v5813
      %v5941 = vpack.c.b16 %v5816, %v5815
      %v5942 = vpack.c.b16 %v5818, %v5817
      %v5943 = vpack.c.b16 %v5820, %v5819
      %v5944 = vpack.c.b16 %v5822, %v5821
      %v5945 = vpack.c.b16 %v5824, %v5823
      %v5946 = vpack.c.b16 %v5826, %v5825
      %v5947 = vpack.c.b16 %v5828, %v5827
      %v5948 = vpack.c.b16 %v5830, %v5829
      %v5949 = vpack.c.b16 %v5832, %v5831
      %v5950 = vpack.c.b16 %v5834, %v5833
      %v5951 = vpack.c.b16 %v5836, %v5835
      %v5952 = vpack.c.b16 %v5838, %v5837
      %v5953 = vpack.c.b16 %v5840, %v5839
      %v5954 = vpack.c.b16 %v5842, %v5841
      %v5955 = vpack.c.b16 %v5844, %v5843
      %v5956 = vpack.c.b16 %v5846, %v5845
      %v5957 = vpack.c.b16 %v5848, %v5847
      %v5958 = vpack.c.b16 %v5850, %v5849
      %v5959 = vpack.c.b16 %v5852, %v5851
      %v5960 = vpack.c.b16 %v5854, %v5853
      %v5961 = vpack.c.b16 %v5856, %v5855
      %v5962 = vpack.c.b16 %v5858, %v5857
      %v5963 = vpack.c.b16 %v5860, %v5859
      %v5964 = vpack.c.b16 %v5862, %v5861
      %v5965 = vpack.c.b16 %v5864, %v5863
      %v5966 = vpack.c.b16 %v5866, %v5865
      %v5967 = vpack.c.b16 %v5868, %v5867
      %v5968 = vpack.c.b16 %v5870, %v5869
      %v5969 = vpack.c.b16 %v5872, %v5871
      %v5970 = vpack.c.b16 %v5874, %v5873
      %v5971 = vpack.c.b16 %v5876, %v5875
      %v5972 = vpack.c.b16 %v5878, %v5877
      %v5973 = vpack.c.b16 %v5880, %v5879
      %v5974 = vpack.c.b16 %v5882, %v5881
      %v5975 = vpack.c.b16 %v5884, %v5883
      %v5976 = vpack.c.b16 %v5886, %v5885
      %v5977 = vpack.c.b16 %v5888, %v5887
      %v5978 = vpack.c.b16 %v5890, %v5889
      %v5979 = vpack.c.b16 %v5892, %v5891
      %v5980 = vpack.c.b16 %v5894, %v5893
      %v5981 = vpack.c.b16 %v5896, %v5895
      %v5982 = vpack.c.b16 %v5898, %v5897
      %v5983 = vpack.c.b16 %v5900, %v5899
      %v5984 = vpack.c.b16 %v5902, %v5901
      %v5985 = vpack.c.b16 %v5904, %v5903
      %v5986 = vpack.c.b16 %v5906, %v5905
      %v5987 = vpack.c.b16 %v5908, %v5907
      %v5988 = vpack.c.b16 %v5910, %v5909
      %v5989 = vpack.c.b16 %v5912, %v5911
      %v5990 = vpack.c.b16 %v5914, %v5913
      %v5991 = vpack.c.b16 %v5916, %v5915
      %v5992 = vpack.c.b16 %v5918, %v5917
      %v5993 = vpack.c.b16 %v5920, %v5919
      %v5994 = vpack.c.b16 %v5922, %v5921
      %6067 = vmatprep.subr.bf16.mxu0 0
      %6068 = vmatpush1.bf16.msra.mxu0 %v5923
      %6069 = vmatprep.subr.bf16.mxu0 0
      %6070 = vmatpush1.bf16.msra.mxu0 %v5924
      %6071 = vmatprep.subr.bf16.mxu0 0
      %6072 = vmatpush1.bf16.msra.mxu0 %v5925
      %6073 = vmatprep.subr.bf16.mxu0 0
      %6074 = vmatpush1.bf16.msra.mxu0 %v5926
      %6075 = vmatprep.subr.bf16.mxu0 0
      %6076 = vmatpush1.bf16.msra.mxu0 %v5927
      %6077 = vmatprep.subr.bf16.mxu0 0
      %6078 = vmatpush1.bf16.msra.mxu0 %v5928
      %6079 = vmatprep.subr.bf16.mxu0 0
      %6080 = vmatpush1.bf16.msra.mxu0 %v5929
      %6081 = vmatprep.subr.bf16.mxu0 0
      %6082 = vmatpush1.bf16.msra.mxu0 %v5930
      %6083 = vmatprep.subr.bf16.mxu0 0
      %6084 = vmatpush1.bf16.msra.mxu0 %v5931
      %6085 = vmatprep.subr.bf16.mxu0 0
      %6086 = vmatpush1.bf16.msra.mxu0 %v5932
      %6087 = vmatprep.subr.bf16.mxu0 0
      %6088 = vmatpush1.bf16.msra.mxu0 %v5933
      %6089 = vmatprep.subr.bf16.mxu0 0
      %6090 = vmatpush1.bf16.msra.mxu0 %v5934
      %6091 = vmatprep.subr.bf16.mxu0 0
      %6092 = vmatpush1.bf16.msra.mxu0 %v5935
      %6093 = vmatprep.subr.bf16.mxu0 0
      %6094 = vmatpush1.bf16.msra.mxu0 %v5936
      %6095 = vmatprep.subr.bf16.mxu0 0
      %6096 = vmatpush1.bf16.msra.mxu0 %v5937
      %6097 = vmatprep.subr.bf16.mxu0 0
      %6098 = vmatpush1.bf16.msra.mxu0 %v5938
      %6099 = vmatprep.mubr.bf16.mxu0 %v5107
      %6100 = vmatmul.mubr.bf16.gmra.mrb[0].mxu0 %v5059
      %v6101 = vpop.f32.mrb[0].mxu0
      %v6102 = vadd.f32 %v334, %v6101
      %v6103 = vpop.f32.mrb[0].mxu0
      %v6104 = vpop.f32.mrb[0].mxu0
      %v6105 = vadd.f32 %v335, %v6104
      %v6106 = vpop.f32.mrb[0].mxu0
      %6107 = vmatprep.mubr.bf16.mxu0 %v5108
      %6108 = vmatmul.mubr.bf16.gmra.mrb[0].mxu0 %v5060
      %v6109 = vpop.f32.mrb[0].mxu0
      %v6110 = vadd.f32 %v336, %v6109
      %v6111 = vpop.f32.mrb[0].mxu0
      %v6112 = vpop.f32.mrb[0].mxu0
      %v6113 = vadd.f32 %v337, %v6112
      %v6114 = vpop.f32.mrb[0].mxu0
      %6115 = vmatprep.mubr.bf16.mxu0 %v5109
      %6116 = vmatmul.mubr.bf16.gmra.mrb[0].mxu0 %v5061
      %v6117 = vpop.f32.mrb[0].mxu0
      %v6118 = vadd.f32 %v338, %v6117
      %v6119 = vpop.f32.mrb[0].mxu0
      %v6120 = vpop.f32.mrb[0].mxu0
      %v6121 = vadd.f32 %v339, %v6120
      %v6122 = vpop.f32.mrb[0].mxu0
      %6123 = vmatprep.mubr.bf16.mxu0 %v5110
      %6124 = vmatmul.mubr.bf16.gmra.mrb[0].mxu0 %v5062
      %v6125 = vpop.f32.mrb[0].mxu0
      %v6126 = vadd.f32 %v340, %v6125
      %v6127 = vpop.f32.mrb[0].mxu0
      %v6128 = vpop.f32.mrb[0].mxu0
      %v6129 = vadd.f32 %v341, %v6128
      %v6130 = vpop.f32.mrb[0].mxu0
      %6131 = vmatprep.mubr.bf16.mxu0 %v5111
      %6132 = vmatmul.mubr.bf16.gmra.mrb[0].mxu0 %v5063
      %v6133 = vpop.f32.mrb[0].mxu0
      %v6134 = vadd.f32 %v342, %v6133
      %v6135 = vpop.f32.mrb[0].mxu0
      %v6136 = vpop.f32.mrb[0].mxu0
      %v6137 = vadd.f32 %v343, %v6136
      %v6138 = vpop.f32.mrb[0].mxu0
      %6139 = vmatprep.mubr.bf16.mxu0 %v5112
      %6140 = vmatmul.mubr.bf16.gmra.mrb[0].mxu0 %v5064
      %v6141 = vpop.f32.mrb[0].mxu0
      %v6142 = vadd.f32 %v344, %v6141
      %v6143 = vpop.f32.mrb[0].mxu0
      %v6144 = vpop.f32.mrb[0].mxu0
      %v6145 = vadd.f32 %v345, %v6144
      %v6146 = vpop.f32.mrb[0].mxu0
      %6147 = vmatprep.mubr.bf16.mxu0 %v5113
      %6148 = vmatmul.mubr.bf16.gmra.mrb[0].mxu0 %v5065
      %v6149 = vpop.f32.mrb[0].mxu0
      %v6150 = vadd.f32 %v346, %v6149
      %v6151 = vpop.f32.mrb[0].mxu0
      %v6152 = vpop.f32.mrb[0].mxu0
      %v6153 = vadd.f32 %v347, %v6152
      %v6154 = vpop.f32.mrb[0].mxu0
      %6155 = vmatprep.mubr.bf16.mxu0 %v5114
      %6156 = vmatmul.mubr.bf16.gmra.mrb[0].mxu0 %v5066
      %v6157 = vpop.f32.mrb[0].mxu0
      %v6158 = vadd.f32 %v348, %v6157
      %v6159 = vpop.f32.mrb[0].mxu0
      %v6160 = vpop.f32.mrb[0].mxu0
      %v6161 = vadd.f32 %v349, %v6160
      %v6162 = vpop.f32.mrb[0].mxu0
      %6163 = vmatprep.mubr.bf16.mxu0 %v5115
      %6164 = vmatmul.mubr.bf16.gmra.mrb[0].mxu0 %v5067
      %v6165 = vpop.f32.mrb[0].mxu0
      %v6166 = vadd.f32 %v350, %v6165
      %v6167 = vpop.f32.mrb[0].mxu0
      %v6168 = vpop.f32.mrb[0].mxu0
      %v6169 = vadd.f32 %v351, %v6168
      %v6170 = vpop.f32.mrb[0].mxu0
      %6171 = vmatprep.mubr.bf16.mxu0 %v5116
      %6172 = vmatmul.mubr.bf16.gmra.mrb[0].mxu0 %v5068
      %v6173 = vpop.f32.mrb[0].mxu0
      %v6174 = vadd.f32 %v352, %v6173
      %v6175 = vpop.f32.mrb[0].mxu0
      %v6176 = vpop.f32.mrb[0].mxu0
      %v6177 = vadd.f32 %v353, %v6176
      %v6178 = vpop.f32.mrb[0].mxu0
      %6179 = vmatprep.mubr.bf16.mxu0 %v5117
      %6180 = vmatmul.mubr.bf16.gmra.mrb[0].mxu0 %v5069
      %v6181 = vpop.f32.mrb[0].mxu0
      %v6182 = vadd.f32 %v354, %v6181
      %v6183 = vpop.f32.mrb[0].mxu0
      %v6184 = vpop.f32.mrb[0].mxu0
      %v6185 = vadd.f32 %v355, %v6184
      %v6186 = vpop.f32.mrb[0].mxu0
      %6187 = vmatprep.mubr.bf16.mxu0 %v5118
      %6188 = vmatmul.mubr.bf16.gmra.mrb[0].mxu0 %v5070
      %v6189 = vpop.f32.mrb[0].mxu0
      %v6190 = vadd.f32 %v356, %v6189
      %v6191 = vpop.f32.mrb[0].mxu0
      %v6192 = vpop.f32.mrb[0].mxu0
      %v6193 = vadd.f32 %v357, %v6192
      %v6194 = vpop.f32.mrb[0].mxu0
      %6195 = vmatprep.mubr.bf16.mxu0 %v5119
      %6196 = vmatmul.mubr.bf16.gmra.mrb[0].mxu0 %v5071
      %v6197 = vpop.f32.mrb[0].mxu0
      %v6198 = vadd.f32 %v358, %v6197
      %v6199 = vpop.f32.mrb[0].mxu0
      %v6200 = vpop.f32.mrb[0].mxu0
      %v6201 = vadd.f32 %v359, %v6200
      %v6202 = vpop.f32.mrb[0].mxu0
      %6203 = vmatprep.mubr.bf16.mxu0 %v5120
      %6204 = vmatmul.mubr.bf16.gmra.mrb[0].mxu0 %v5072
      %v6205 = vpop.f32.mrb[0].mxu0
      %v6206 = vadd.f32 %v360, %v6205
      %v6207 = vpop.f32.mrb[0].mxu0
      %v6208 = vpop.f32.mrb[0].mxu0
      %v6209 = vadd.f32 %v361, %v6208
      %v6210 = vpop.f32.mrb[0].mxu0
      %6211 = vmatprep.mubr.bf16.mxu0 %v5121
      %6212 = vmatmul.mubr.bf16.gmra.mrb[0].mxu0 %v5073
      %v6213 = vpop.f32.mrb[0].mxu0
      %v6214 = vadd.f32 %v362, %v6213
      %v6215 = vpop.f32.mrb[0].mxu0
      %v6216 = vpop.f32.mrb[0].mxu0
      %v6217 = vadd.f32 %v363, %v6216
      %v6218 = vpop.f32.mrb[0].mxu0
      %6219 = vmatprep.mubr.bf16.mxu0 %v5122
      %6220 = vmatmul.mubr.bf16.gmra.mrb[0].mxu0 %v5074
      %v6221 = vpop.f32.mrb[0].mxu0
      %v6222 = vadd.f32 %v364, %v6221
      %v6223 = vpop.f32.mrb[0].mxu0
      %v6224 = vpop.f32.mrb[0].mxu0
      %v6225 = vadd.f32 %v365, %v6224
      %v6226 = vpop.f32.mrb[0].mxu0
      %6227 = vdwg.mxu0
      %6228 = vmatprep.subr.bf16.mxu0 0
      %6229 = vmatpush1.bf16.msra.mxu0 %v5939
      %6230 = vmatprep.subr.bf16.mxu0 0
      %6231 = vmatpush1.bf16.msra.mxu0 %v5940
      %6232 = vmatprep.subr.bf16.mxu0 0
      %6233 = vmatpush1.bf16.msra.mxu0 %v5941
      %6234 = vmatprep.subr.bf16.mxu0 0
      %6235 = vmatpush1.bf16.msra.mxu0 %v5942
      %6236 = vmatprep.subr.bf16.mxu0 0
      %6237 = vmatpush1.bf16.msra.mxu0 %v5943
      %6238 = vmatprep.subr.bf16.mxu0 0
      %6239 = vmatpush1.bf16.msra.mxu0 %v5944
      %6240 = vmatprep.subr.bf16.mxu0 0
      %6241 = vmatpush1.bf16.msra.mxu0 %v5945
      %6242 = vmatprep.subr.bf16.mxu0 0
      %6243 = vmatpush1.bf16.msra.mxu0 %v5946
      %6244 = vmatprep.subr.bf16.mxu0 0
      %6245 = vmatpush1.bf16.msra.mxu0 %v5947
      %6246 = vmatprep.subr.bf16.mxu0 0
      %6247 = vmatpush1.bf16.msra.mxu0 %v5948
      %6248 = vmatprep.subr.bf16.mxu0 0
      %6249 = vmatpush1.bf16.msra.mxu0 %v5949
      %6250 = vmatprep.subr.bf16.mxu0 0
      %6251 = vmatpush1.bf16.msra.mxu0 %v5950
      %6252 = vmatprep.subr.bf16.mxu0 0
      %6253 = vmatpush1.bf16.msra.mxu0 %v5951
      %6254 = vmatprep.subr.bf16.mxu0 0
      %6255 = vmatpush1.bf16.msra.mxu0 %v5952
      %6256 = vmatprep.subr.bf16.mxu0 0
      %6257 = vmatpush1.bf16.msra.mxu0 %v5953
      %6258 = vmatprep.subr.bf16.mxu0 0
      %6259 = vmatpush1.bf16.msra.mxu0 %v5954
      %6260 = vmatprep.mubr.bf16.mxu0 %v5267
      %6261 = vmatmul.mubr.bf16.gmra.mrb[0].mxu0 %v5219
      %v6262 = vpop.f32.mrb[0].mxu0
      %v6263 = vadd.f32 %v6102, %v6262
      %v6264 = vpop.f32.mrb[0].mxu0
      %v6265 = vpop.f32.mrb[0].mxu0
      %v6266 = vadd.f32 %v6105, %v6265
      %v6267 = vpop.f32.mrb[0].mxu0
      %6268 = vmatprep.mubr.bf16.mxu0 %v5268
      %6269 = vmatmul.mubr.bf16.gmra.mrb[0].mxu0 %v5220
      %v6270 = vpop.f32.mrb[0].mxu0
      %v6271 = vadd.f32 %v6110, %v6270
      %v6272 = vpop.f32.mrb[0].mxu0
      %v6273 = vpop.f32.mrb[0].mxu0
      %v6274 = vadd.f32 %v6113, %v6273
      %v6275 = vpop.f32.mrb[0].mxu0
      %6276 = vmatprep.mubr.bf16.mxu0 %v5269
      %6277 = vmatmul.mubr.bf16.gmra.mrb[0].mxu0 %v5221
      %v6278 = vpop.f32.mrb[0].mxu0
      %v6279 = vadd.f32 %v6118, %v6278
      %v6280 = vpop.f32.mrb[0].mxu0
      %v6281 = vpop.f32.mrb[0].mxu0
      %v6282 = vadd.f32 %v6121, %v6281
      %v6283 = vpop.f32.mrb[0].mxu0
      %6284 = vmatprep.mubr.bf16.mxu0 %v5270
      %6285 = vmatmul.mubr.bf16.gmra.mrb[0].mxu0 %v5222
      %v6286 = vpop.f32.mrb[0].mxu0
      %v6287 = vadd.f32 %v6126, %v6286
      %v6288 = vpop.f32.mrb[0].mxu0
      %v6289 = vpop.f32.mrb[0].mxu0
      %v6290 = vadd.f32 %v6129, %v6289
      %v6291 = vpop.f32.mrb[0].mxu0
      %6292 = vmatprep.mubr.bf16.mxu0 %v5271
      %6293 = vmatmul.mubr.bf16.gmra.mrb[0].mxu0 %v5223
      %v6294 = vpop.f32.mrb[0].mxu0
      %v6295 = vadd.f32 %v6134, %v6294
      %v6296 = vpop.f32.mrb[0].mxu0
      %v6297 = vpop.f32.mrb[0].mxu0
      %v6298 = vadd.f32 %v6137, %v6297
      %v6299 = vpop.f32.mrb[0].mxu0
      %6300 = vmatprep.mubr.bf16.mxu0 %v5272
      %6301 = vmatmul.mubr.bf16.gmra.mrb[0].mxu0 %v5224
      %v6302 = vpop.f32.mrb[0].mxu0
      %v6303 = vadd.f32 %v6142, %v6302
      %v6304 = vpop.f32.mrb[0].mxu0
      %v6305 = vpop.f32.mrb[0].mxu0
      %v6306 = vadd.f32 %v6145, %v6305
      %v6307 = vpop.f32.mrb[0].mxu0
      %6308 = vmatprep.mubr.bf16.mxu0 %v5273
      %6309 = vmatmul.mubr.bf16.gmra.mrb[0].mxu0 %v5225
      %v6310 = vpop.f32.mrb[0].mxu0
      %v6311 = vadd.f32 %v6150, %v6310
      %v6312 = vpop.f32.mrb[0].mxu0
      %v6313 = vpop.f32.mrb[0].mxu0
      %v6314 = vadd.f32 %v6153, %v6313
      %v6315 = vpop.f32.mrb[0].mxu0
      %6316 = vmatprep.mubr.bf16.mxu0 %v5274
      %6317 = vmatmul.mubr.bf16.gmra.mrb[0].mxu0 %v5226
      %v6318 = vpop.f32.mrb[0].mxu0
      %v6319 = vadd.f32 %v6158, %v6318
      %v6320 = vpop.f32.mrb[0].mxu0
      %v6321 = vpop.f32.mrb[0].mxu0
      %v6322 = vadd.f32 %v6161, %v6321
      %v6323 = vpop.f32.mrb[0].mxu0
      %6324 = vmatprep.mubr.bf16.mxu0 %v5275
      %6325 = vmatmul.mubr.bf16.gmra.mrb[0].mxu0 %v5227
      %v6326 = vpop.f32.mrb[0].mxu0
      %v6327 = vadd.f32 %v6166, %v6326
      %v6328 = vpop.f32.mrb[0].mxu0
      %v6329 = vpop.f32.mrb[0].mxu0
      %v6330 = vadd.f32 %v6169, %v6329
      %v6331 = vpop.f32.mrb[0].mxu0
      %6332 = vmatprep.mubr.bf16.mxu0 %v5276
      %6333 = vmatmul.mubr.bf16.gmra.mrb[0].mxu0 %v5228
      %v6334 = vpop.f32.mrb[0].mxu0
      %v6335 = vadd.f32 %v6174, %v6334
      %v6336 = vpop.f32.mrb[0].mxu0
      %v6337 = vpop.f32.mrb[0].mxu0
      %v6338 = vadd.f32 %v6177, %v6337
      %v6339 = vpop.f32.mrb[0].mxu0
      %6340 = vmatprep.mubr.bf16.mxu0 %v5277
      %6341 = vmatmul.mubr.bf16.gmra.mrb[0].mxu0 %v5229
      %v6342 = vpop.f32.mrb[0].mxu0
      %v6343 = vadd.f32 %v6182, %v6342
      %v6344 = vpop.f32.mrb[0].mxu0
      %v6345 = vpop.f32.mrb[0].mxu0
      %v6346 = vadd.f32 %v6185, %v6345
      %v6347 = vpop.f32.mrb[0].mxu0
      %6348 = vmatprep.mubr.bf16.mxu0 %v5278
      %6349 = vmatmul.mubr.bf16.gmra.mrb[0].mxu0 %v5230
      %v6350 = vpop.f32.mrb[0].mxu0
      %v6351 = vadd.f32 %v6190, %v6350
      %v6352 = vpop.f32.mrb[0].mxu0
      %v6353 = vpop.f32.mrb[0].mxu0
      %v6354 = vadd.f32 %v6193, %v6353
      %v6355 = vpop.f32.mrb[0].mxu0
      %6356 = vmatprep.mubr.bf16.mxu0 %v5279
      %6357 = vmatmul.mubr.bf16.gmra.mrb[0].mxu0 %v5231
      %v6358 = vpop.f32.mrb[0].mxu0
      %v6359 = vadd.f32 %v6198, %v6358
      %v6360 = vpop.f32.mrb[0].mxu0
      %v6361 = vpop.f32.mrb[0].mxu0
      %v6362 = vadd.f32 %v6201, %v6361
      %v6363 = vpop.f32.mrb[0].mxu0
      %6364 = vmatprep.mubr.bf16.mxu0 %v5280
      %6365 = vmatmul.mubr.bf16.gmra.mrb[0].mxu0 %v5232
      %v6366 = vpop.f32.mrb[0].mxu0
      %v6367 = vadd.f32 %v6206, %v6366
      %v6368 = vpop.f32.mrb[0].mxu0
      %v6369 = vpop.f32.mrb[0].mxu0
      %v6370 = vadd.f32 %v6209, %v6369
      %v6371 = vpop.f32.mrb[0].mxu0
      %6372 = vmatprep.mubr.bf16.mxu0 %v5281
      %6373 = vmatmul.mubr.bf16.gmra.mrb[0].mxu0 %v5233
      %v6374 = vpop.f32.mrb[0].mxu0
      %v6375 = vadd.f32 %v6214, %v6374
      %v6376 = vpop.f32.mrb[0].mxu0
      %v6377 = vpop.f32.mrb[0].mxu0
      %v6378 = vadd.f32 %v6217, %v6377
      %v6379 = vpop.f32.mrb[0].mxu0
      %6380 = vmatprep.mubr.bf16.mxu0 %v5282
      %6381 = vmatmul.mubr.bf16.gmra.mrb[0].mxu0 %v5234
      %v6382 = vpop.f32.mrb[0].mxu0
      %v6383 = vadd.f32 %v6222, %v6382
      %v6384 = vpop.f32.mrb[0].mxu0
      %v6385 = vpop.f32.mrb[0].mxu0
      %v6386 = vadd.f32 %v6225, %v6385
      %v6387 = vpop.f32.mrb[0].mxu0
      %6388 = vdwg.mxu0
      %6389 = vmatprep.subr.bf16.mxu0 0
      %6390 = vmatpush1.bf16.msra.mxu0 %v5955
      %6391 = vmatprep.subr.bf16.mxu0 0
      %6392 = vmatpush1.bf16.msra.mxu0 %v5956
      %6393 = vmatprep.subr.bf16.mxu0 0
      %6394 = vmatpush1.bf16.msra.mxu0 %v5957
      %6395 = vmatprep.subr.bf16.mxu0 0
      %6396 = vmatpush1.bf16.msra.mxu0 %v5958
      %6397 = vmatprep.subr.bf16.mxu0 0
      %6398 = vmatpush1.bf16.msra.mxu0 %v5959
      %6399 = vmatprep.subr.bf16.mxu0 0
      %6400 = vmatpush1.bf16.msra.mxu0 %v5960
      %6401 = vmatprep.subr.bf16.mxu0 0
      %6402 = vmatpush1.bf16.msra.mxu0 %v5961
      %6403 = vmatprep.subr.bf16.mxu0 0
      %6404 = vmatpush1.bf16.msra.mxu0 %v5962
      %6405 = vmatprep.subr.bf16.mxu0 0
      %6406 = vmatpush1.bf16.msra.mxu0 %v5963
      %6407 = vmatprep.subr.bf16.mxu0 0
      %6408 = vmatpush1.bf16.msra.mxu0 %v5964
      %6409 = vmatprep.subr.bf16.mxu0 0
      %6410 = vmatpush1.bf16.msra.mxu0 %v5965
      %6411 = vmatprep.subr.bf16.mxu0 0
      %6412 = vmatpush1.bf16.msra.mxu0 %v5966
      %6413 = vmatprep.subr.bf16.mxu0 0
      %6414 = vmatpush1.bf16.msra.mxu0 %v5967
      %6415 = vmatprep.subr.bf16.mxu0 0
      %6416 = vmatpush1.bf16.msra.mxu0 %v5968
      %6417 = vmatprep.subr.bf16.mxu0 0
      %6418 = vmatpush1.bf16.msra.mxu0 %v5969
      %6419 = vmatprep.subr.bf16.mxu0 0
      %6420 = vmatpush1.bf16.msra.mxu0 %v5970
      %6421 = vmatprep.mubr.bf16.mxu0 %v5331
      %6422 = vmatmul.mubr.bf16.gmra.mrb[0].mxu0 %v5283
      %v6423 = vpop.f32.mrb[0].mxu0
      %v6424 = vadd.f32 %v6263, %v6423
      %v6425 = vpop.f32.mrb[0].mxu0
      %v6426 = vpop.f32.mrb[0].mxu0
      %v6427 = vadd.f32 %v6266, %v6426
      %v6428 = vpop.f32.mrb[0].mxu0
      %6429 = vmatprep.mubr.bf16.mxu0 %v5332
      %6430 = vmatmul.mubr.bf16.gmra.mrb[0].mxu0 %v5284
      %v6431 = vpop.f32.mrb[0].mxu0
      %v6432 = vadd.f32 %v6271, %v6431
      %v6433 = vpop.f32.mrb[0].mxu0
      %v6434 = vpop.f32.mrb[0].mxu0
      %v6435 = vadd.f32 %v6274, %v6434
      %v6436 = vpop.f32.mrb[0].mxu0
      %6437 = vmatprep.mubr.bf16.mxu0 %v5333
      %6438 = vmatmul.mubr.bf16.gmra.mrb[0].mxu0 %v5285
      %v6439 = vpop.f32.mrb[0].mxu0
      %v6440 = vadd.f32 %v6279, %v6439
      %v6441 = vpop.f32.mrb[0].mxu0
      %v6442 = vpop.f32.mrb[0].mxu0
      %v6443 = vadd.f32 %v6282, %v6442
      %v6444 = vpop.f32.mrb[0].mxu0
      %6445 = vmatprep.mubr.bf16.mxu0 %v5334
      %6446 = vmatmul.mubr.bf16.gmra.mrb[0].mxu0 %v5286
      %v6447 = vpop.f32.mrb[0].mxu0
      %v6448 = vadd.f32 %v6287, %v6447
      %v6449 = vpop.f32.mrb[0].mxu0
      %v6450 = vpop.f32.mrb[0].mxu0
      %v6451 = vadd.f32 %v6290, %v6450
      %v6452 = vpop.f32.mrb[0].mxu0
      %6453 = vmatprep.mubr.bf16.mxu0 %v5335
      %6454 = vmatmul.mubr.bf16.gmra.mrb[0].mxu0 %v5287
      %v6455 = vpop.f32.mrb[0].mxu0
      %v6456 = vadd.f32 %v6295, %v6455
      %v6457 = vpop.f32.mrb[0].mxu0
      %v6458 = vpop.f32.mrb[0].mxu0
      %v6459 = vadd.f32 %v6298, %v6458
      %v6460 = vpop.f32.mrb[0].mxu0
      %6461 = vmatprep.mubr.bf16.mxu0 %v5336
      %6462 = vmatmul.mubr.bf16.gmra.mrb[0].mxu0 %v5288
      %v6463 = vpop.f32.mrb[0].mxu0
      %v6464 = vadd.f32 %v6303, %v6463
      %v6465 = vpop.f32.mrb[0].mxu0
      %v6466 = vpop.f32.mrb[0].mxu0
      %v6467 = vadd.f32 %v6306, %v6466
      %v6468 = vpop.f32.mrb[0].mxu0
      %6469 = vmatprep.mubr.bf16.mxu0 %v5337
      %6470 = vmatmul.mubr.bf16.gmra.mrb[0].mxu0 %v5289
      %v6471 = vpop.f32.mrb[0].mxu0
      %v6472 = vadd.f32 %v6311, %v6471
      %v6473 = vpop.f32.mrb[0].mxu0
      %v6474 = vpop.f32.mrb[0].mxu0
      %v6475 = vadd.f32 %v6314, %v6474
      %v6476 = vpop.f32.mrb[0].mxu0
      %6477 = vmatprep.mubr.bf16.mxu0 %v5338
      %6478 = vmatmul.mubr.bf16.gmra.mrb[0].mxu0 %v5290
      %v6479 = vpop.f32.mrb[0].mxu0
      %v6480 = vadd.f32 %v6319, %v6479
      %v6481 = vpop.f32.mrb[0].mxu0
      %v6482 = vpop.f32.mrb[0].mxu0
      %v6483 = vadd.f32 %v6322, %v6482
      %v6484 = vpop.f32.mrb[0].mxu0
      %6485 = vmatprep.mubr.bf16.mxu0 %v5339
      %6486 = vmatmul.mubr.bf16.gmra.mrb[0].mxu0 %v5291
      %v6487 = vpop.f32.mrb[0].mxu0
      %v6488 = vadd.f32 %v6327, %v6487
      %v6489 = vpop.f32.mrb[0].mxu0
      %v6490 = vpop.f32.mrb[0].mxu0
      %v6491 = vadd.f32 %v6330, %v6490
      %v6492 = vpop.f32.mrb[0].mxu0
      %6493 = vmatprep.mubr.bf16.mxu0 %v5340
      %6494 = vmatmul.mubr.bf16.gmra.mrb[0].mxu0 %v5292
      %v6495 = vpop.f32.mrb[0].mxu0
      %v6496 = vadd.f32 %v6335, %v6495
      %v6497 = vpop.f32.mrb[0].mxu0
      %v6498 = vpop.f32.mrb[0].mxu0
      %v6499 = vadd.f32 %v6338, %v6498
      %v6500 = vpop.f32.mrb[0].mxu0
      %6501 = vmatprep.mubr.bf16.mxu0 %v5341
      %6502 = vmatmul.mubr.bf16.gmra.mrb[0].mxu0 %v5293
      %v6503 = vpop.f32.mrb[0].mxu0
      %v6504 = vadd.f32 %v6343, %v6503
      %v6505 = vpop.f32.mrb[0].mxu0
      %v6506 = vpop.f32.mrb[0].mxu0
      %v6507 = vadd.f32 %v6346, %v6506
      %v6508 = vpop.f32.mrb[0].mxu0
      %6509 = vmatprep.mubr.bf16.mxu0 %v5342
      %6510 = vmatmul.mubr.bf16.gmra.mrb[0].mxu0 %v5294
      %v6511 = vpop.f32.mrb[0].mxu0
      %v6512 = vadd.f32 %v6351, %v6511
      %v6513 = vpop.f32.mrb[0].mxu0
      %v6514 = vpop.f32.mrb[0].mxu0
      %v6515 = vadd.f32 %v6354, %v6514
      %v6516 = vpop.f32.mrb[0].mxu0
      %6517 = vmatprep.mubr.bf16.mxu0 %v5343
      %6518 = vmatmul.mubr.bf16.gmra.mrb[0].mxu0 %v5295
      %v6519 = vpop.f32.mrb[0].mxu0
      %v6520 = vadd.f32 %v6359, %v6519
      %v6521 = vpop.f32.mrb[0].mxu0
      %v6522 = vpop.f32.mrb[0].mxu0
      %v6523 = vadd.f32 %v6362, %v6522
      %v6524 = vpop.f32.mrb[0].mxu0
      %6525 = vmatprep.mubr.bf16.mxu0 %v5344
      %6526 = vmatmul.mubr.bf16.gmra.mrb[0].mxu0 %v5296
      %v6527 = vpop.f32.mrb[0].mxu0
      %v6528 = vadd.f32 %v6367, %v6527
      %v6529 = vpop.f32.mrb[0].mxu0
      %v6530 = vpop.f32.mrb[0].mxu0
      %v6531 = vadd.f32 %v6370, %v6530
      %v6532 = vpop.f32.mrb[0].mxu0
      %6533 = vmatprep.mubr.bf16.mxu0 %v5345
      %6534 = vmatmul.mubr.bf16.gmra.mrb[0].mxu0 %v5297
      %v6535 = vpop.f32.mrb[0].mxu0
      %v6536 = vadd.f32 %v6375, %v6535
      %v6537 = vpop.f32.mrb[0].mxu0
      %v6538 = vpop.f32.mrb[0].mxu0
      %v6539 = vadd.f32 %v6378, %v6538
      %v6540 = vpop.f32.mrb[0].mxu0
      %6541 = vmatprep.mubr.bf16.mxu0 %v5346
      %6542 = vmatmul.mubr.bf16.gmra.mrb[0].mxu0 %v5298
      %v6543 = vpop.f32.mrb[0].mxu0
      %v6544 = vadd.f32 %v6383, %v6543
      %v6545 = vpop.f32.mrb[0].mxu0
      %v6546 = vpop.f32.mrb[0].mxu0
      %v6547 = vadd.f32 %v6386, %v6546
      %v6548 = vpop.f32.mrb[0].mxu0
      %6549 = vdwg.mxu0
      %6550 = vmatprep.subr.bf16.mxu0 0
      %6551 = vmatpush1.bf16.msra.mxu0 %v5971
      %6552 = vmatprep.subr.bf16.mxu0 0
      %6553 = vmatpush1.bf16.msra.mxu0 %v5972
      %6554 = vmatprep.subr.bf16.mxu0 0
      %6555 = vmatpush1.bf16.msra.mxu0 %v5973
      %6556 = vmatprep.subr.bf16.mxu0 0
      %6557 = vmatpush1.bf16.msra.mxu0 %v5974
      %6558 = vmatprep.subr.bf16.mxu0 0
      %6559 = vmatpush1.bf16.msra.mxu0 %v5975
      %6560 = vmatprep.subr.bf16.mxu0 0
      %6561 = vmatpush1.bf16.msra.mxu0 %v5976
      %6562 = vmatprep.subr.bf16.mxu0 0
      %6563 = vmatpush1.bf16.msra.mxu0 %v5977
      %6564 = vmatprep.subr.bf16.mxu0 0
      %6565 = vmatpush1.bf16.msra.mxu0 %v5978
      %6566 = vmatprep.subr.bf16.mxu0 0
      %6567 = vmatpush1.bf16.msra.mxu0 %v5979
      %6568 = vmatprep.subr.bf16.mxu0 0
      %6569 = vmatpush1.bf16.msra.mxu0 %v5980
      %6570 = vmatprep.subr.bf16.mxu0 0
      %6571 = vmatpush1.bf16.msra.mxu0 %v5981
      %6572 = vmatprep.subr.bf16.mxu0 0
      %6573 = vmatpush1.bf16.msra.mxu0 %v5982
      %6574 = vmatprep.subr.bf16.mxu0 0
      %6575 = vmatpush1.bf16.msra.mxu0 %v5983
      %6576 = vmatprep.subr.bf16.mxu0 0
      %6577 = vmatpush1.bf16.msra.mxu0 %v5984
      %6578 = vmatprep.subr.bf16.mxu0 0
      %6579 = vmatpush1.bf16.msra.mxu0 %v5985
      %6580 = vmatprep.subr.bf16.mxu0 0
      %6581 = vmatpush1.bf16.msra.mxu0 %v5986
      %6582 = vmatprep.mubr.bf16.mxu0 %v5427
      %6583 = vmatmul.mubr.bf16.gmra.mrb[0].mxu0 %v5379
      %v6584 = vpop.f32.mrb[0].mxu0
      %v6585 = vadd.f32 %v6424, %v6584
      %v6586 = vpop.f32.mrb[0].mxu0
      %v6587 = vpop.f32.mrb[0].mxu0
      %v6588 = vadd.f32 %v6427, %v6587
      %v6589 = vpop.f32.mrb[0].mxu0
      %6590 = vmatprep.mubr.bf16.mxu0 %v5428
      %6591 = vmatmul.mubr.bf16.gmra.mrb[0].mxu0 %v5380
      %v6592 = vpop.f32.mrb[0].mxu0
      %v6593 = vadd.f32 %v6432, %v6592
      %v6594 = vpop.f32.mrb[0].mxu0
      %v6595 = vpop.f32.mrb[0].mxu0
      %v6596 = vadd.f32 %v6435, %v6595
      %v6597 = vpop.f32.mrb[0].mxu0
      %6598 = vmatprep.mubr.bf16.mxu0 %v5429
      %6599 = vmatmul.mubr.bf16.gmra.mrb[0].mxu0 %v5381
      %v6600 = vpop.f32.mrb[0].mxu0
      %v6601 = vadd.f32 %v6440, %v6600
      %v6602 = vpop.f32.mrb[0].mxu0
      %v6603 = vpop.f32.mrb[0].mxu0
      %v6604 = vadd.f32 %v6443, %v6603
      %v6605 = vpop.f32.mrb[0].mxu0
      %6606 = vmatprep.mubr.bf16.mxu0 %v5430
      %6607 = vmatmul.mubr.bf16.gmra.mrb[0].mxu0 %v5382
      %v6608 = vpop.f32.mrb[0].mxu0
      %v6609 = vadd.f32 %v6448, %v6608
      %v6610 = vpop.f32.mrb[0].mxu0
      %v6611 = vpop.f32.mrb[0].mxu0
      %v6612 = vadd.f32 %v6451, %v6611
      %v6613 = vpop.f32.mrb[0].mxu0
      %6614 = vmatprep.mubr.bf16.mxu0 %v5431
      %6615 = vmatmul.mubr.bf16.gmra.mrb[0].mxu0 %v5383
      %v6616 = vpop.f32.mrb[0].mxu0
      %v6617 = vadd.f32 %v6456, %v6616
      %v6618 = vpop.f32.mrb[0].mxu0
      %v6619 = vpop.f32.mrb[0].mxu0
      %v6620 = vadd.f32 %v6459, %v6619
      %v6621 = vpop.f32.mrb[0].mxu0
      %6622 = vmatprep.mubr.bf16.mxu0 %v5432
      %6623 = vmatmul.mubr.bf16.gmra.mrb[0].mxu0 %v5384
      %v6624 = vpop.f32.mrb[0].mxu0
      %v6625 = vadd.f32 %v6464, %v6624
      %v6626 = vpop.f32.mrb[0].mxu0
      %v6627 = vpop.f32.mrb[0].mxu0
      %v6628 = vadd.f32 %v6467, %v6627
      %v6629 = vpop.f32.mrb[0].mxu0
      %6630 = vmatprep.mubr.bf16.mxu0 %v5433
      %6631 = vmatmul.mubr.bf16.gmra.mrb[0].mxu0 %v5385
      %v6632 = vpop.f32.mrb[0].mxu0
      %v6633 = vadd.f32 %v6472, %v6632
      %v6634 = vpop.f32.mrb[0].mxu0
      %v6635 = vpop.f32.mrb[0].mxu0
      %v6636 = vadd.f32 %v6475, %v6635
      %v6637 = vpop.f32.mrb[0].mxu0
      %6638 = vmatprep.mubr.bf16.mxu0 %v5434
      %6639 = vmatmul.mubr.bf16.gmra.mrb[0].mxu0 %v5386
      %v6640 = vpop.f32.mrb[0].mxu0
      %v6641 = vadd.f32 %v6480, %v6640
      %v6642 = vpop.f32.mrb[0].mxu0
      %v6643 = vpop.f32.mrb[0].mxu0
      %v6644 = vadd.f32 %v6483, %v6643
      %v6645 = vpop.f32.mrb[0].mxu0
      %6646 = vmatprep.mubr.bf16.mxu0 %v5435
      %6647 = vmatmul.mubr.bf16.gmra.mrb[0].mxu0 %v5387
      %v6648 = vpop.f32.mrb[0].mxu0
      %v6649 = vadd.f32 %v6488, %v6648
      %v6650 = vpop.f32.mrb[0].mxu0
      %v6651 = vpop.f32.mrb[0].mxu0
      %v6652 = vadd.f32 %v6491, %v6651
      %v6653 = vpop.f32.mrb[0].mxu0
      %6654 = vmatprep.mubr.bf16.mxu0 %v5436
      %6655 = vmatmul.mubr.bf16.gmra.mrb[0].mxu0 %v5388
      %v6656 = vpop.f32.mrb[0].mxu0
      %v6657 = vadd.f32 %v6496, %v6656
      %v6658 = vpop.f32.mrb[0].mxu0
      %v6659 = vpop.f32.mrb[0].mxu0
      %v6660 = vadd.f32 %v6499, %v6659
      %v6661 = vpop.f32.mrb[0].mxu0
      %6662 = vmatprep.mubr.bf16.mxu0 %v5437
      %6663 = vmatmul.mubr.bf16.gmra.mrb[0].mxu0 %v5389
      %v6664 = vpop.f32.mrb[0].mxu0
      %v6665 = vadd.f32 %v6504, %v6664
      %v6666 = vpop.f32.mrb[0].mxu0
      %v6667 = vpop.f32.mrb[0].mxu0
      %v6668 = vadd.f32 %v6507, %v6667
      %v6669 = vpop.f32.mrb[0].mxu0
      %6670 = vmatprep.mubr.bf16.mxu0 %v5438
      %6671 = vmatmul.mubr.bf16.gmra.mrb[0].mxu0 %v5390
      %v6672 = vpop.f32.mrb[0].mxu0
      %v6673 = vadd.f32 %v6512, %v6672
      %v6674 = vpop.f32.mrb[0].mxu0
      %v6675 = vpop.f32.mrb[0].mxu0
      %v6676 = vadd.f32 %v6515, %v6675
      %v6677 = vpop.f32.mrb[0].mxu0
      %6678 = vmatprep.mubr.bf16.mxu0 %v5439
      %6679 = vmatmul.mubr.bf16.gmra.mrb[0].mxu0 %v5391
      %v6680 = vpop.f32.mrb[0].mxu0
      %v6681 = vadd.f32 %v6520, %v6680
      %v6682 = vpop.f32.mrb[0].mxu0
      %v6683 = vpop.f32.mrb[0].mxu0
      %v6684 = vadd.f32 %v6523, %v6683
      %v6685 = vpop.f32.mrb[0].mxu0
      %6686 = vmatprep.mubr.bf16.mxu0 %v5440
      %6687 = vmatmul.mubr.bf16.gmra.mrb[0].mxu0 %v5392
      %v6688 = vpop.f32.mrb[0].mxu0
      %v6689 = vadd.f32 %v6528, %v6688
      %v6690 = vpop.f32.mrb[0].mxu0
      %v6691 = vpop.f32.mrb[0].mxu0
      %v6692 = vadd.f32 %v6531, %v6691
      %v6693 = vpop.f32.mrb[0].mxu0
      %6694 = vmatprep.mubr.bf16.mxu0 %v5441
      %6695 = vmatmul.mubr.bf16.gmra.mrb[0].mxu0 %v5393
      %v6696 = vpop.f32.mrb[0].mxu0
      %v6697 = vadd.f32 %v6536, %v6696
      %v6698 = vpop.f32.mrb[0].mxu0
      %v6699 = vpop.f32.mrb[0].mxu0
      %v6700 = vadd.f32 %v6539, %v6699
      %v6701 = vpop.f32.mrb[0].mxu0
      %6702 = vmatprep.mubr.bf16.mxu0 %v5442
      %6703 = vmatmul.mubr.bf16.gmra.mrb[0].mxu0 %v5394
      %v6704 = vpop.f32.mrb[0].mxu0
      %v6705 = vadd.f32 %v6544, %v6704
      %v6706 = vpop.f32.mrb[0].mxu0
      %v6707 = vpop.f32.mrb[0].mxu0
      %v6708 = vadd.f32 %v6547, %v6707
      %v6709 = vpop.f32.mrb[0].mxu0
      %6710 = vdwg.mxu0
      %6711 = vmatprep.subr.bf16.mxu0 0
      %6712 = vmatpush1.bf16.msra.mxu0 %v5987
      %6713 = vmatprep.subr.bf16.mxu0 0
      %6714 = vmatpush1.bf16.msra.mxu0 %v5988
      %6715 = vmatprep.subr.bf16.mxu0 0
      %6716 = vmatpush1.bf16.msra.mxu0 %v5989
      %6717 = vmatprep.subr.bf16.mxu0 0
      %6718 = vmatpush1.bf16.msra.mxu0 %v5990
      %6719 = vmatprep.subr.bf16.mxu0 0
      %6720 = vmatpush1.bf16.msra.mxu0 %v5991
      %6721 = vmatprep.subr.bf16.mxu0 0
      %6722 = vmatpush1.bf16.msra.mxu0 %v5992
      %6723 = vmatprep.subr.bf16.mxu0 0
      %6724 = vmatpush1.bf16.msra.mxu0 %v5993
      %6725 = vmatprep.subr.bf16.mxu0 0
      %6726 = vmatpush1.bf16.msra.mxu0 %v5994
      %6727 = vmatprep.subr.bf16.mxu0 0
      %6728 = vmatpush1.bf16.msra.mxu0 0
      %6729 = vmatprep.subr.bf16.mxu0 0
      %6730 = vmatpush1.bf16.msra.mxu0 0
      %6731 = vmatprep.subr.bf16.mxu0 0
      %6732 = vmatpush1.bf16.msra.mxu0 0
      %6733 = vmatprep.subr.bf16.mxu0 0
      %6734 = vmatpush1.bf16.msra.mxu0 0
      %6735 = vmatprep.subr.bf16.mxu0 0
      %6736 = vmatpush1.bf16.msra.mxu0 0
      %6737 = vmatprep.subr.bf16.mxu0 0
      %6738 = vmatpush1.bf16.msra.mxu0 0
      %6739 = vmatprep.subr.bf16.mxu0 0
      %6740 = vmatpush1.bf16.msra.mxu0 0
      %6741 = vmatprep.subr.bf16.mxu0 0
      %6742 = vmatpush1.bf16.msra.mxu0 0
      %6743 = vmatprep.mubr.bf16.mxu0 0
      %6744 = vmatmul.mubr.bf16.gmra.mrb[0].mxu0 %v5475
      %v6745 = vpop.f32.mrb[0].mxu0
      %v6746 = vadd.f32 %v6585, %v6745
      %v6747 = vpop.f32.mrb[0].mxu0
      %v6748 = vpop.f32.mrb[0].mxu0
      %v6749 = vadd.f32 %v6588, %v6748
      %v6750 = vpop.f32.mrb[0].mxu0
      %6751 = vmatprep.mubr.bf16.mxu0 0
      %6752 = vmatmul.mubr.bf16.gmra.mrb[0].mxu0 %v5476
      %v6753 = vpop.f32.mrb[0].mxu0
      %v6754 = vadd.f32 %v6593, %v6753
      %v6755 = vpop.f32.mrb[0].mxu0
      %v6756 = vpop.f32.mrb[0].mxu0
      %v6757 = vadd.f32 %v6596, %v6756
      %v6758 = vpop.f32.mrb[0].mxu0
      %6759 = vmatprep.mubr.bf16.mxu0 0
      %6760 = vmatmul.mubr.bf16.gmra.mrb[0].mxu0 %v5477
      %v6761 = vpop.f32.mrb[0].mxu0
      %v6762 = vadd.f32 %v6601, %v6761
      %v6763 = vpop.f32.mrb[0].mxu0
      %v6764 = vpop.f32.mrb[0].mxu0
      %v6765 = vadd.f32 %v6604, %v6764
      %v6766 = vpop.f32.mrb[0].mxu0
      %6767 = vmatprep.mubr.bf16.mxu0 0
      %6768 = vmatmul.mubr.bf16.gmra.mrb[0].mxu0 %v5478
      %v6769 = vpop.f32.mrb[0].mxu0
      %v6770 = vadd.f32 %v6609, %v6769
      %v6771 = vpop.f32.mrb[0].mxu0
      %v6772 = vpop.f32.mrb[0].mxu0
      %v6773 = vadd.f32 %v6612, %v6772
      %v6774 = vpop.f32.mrb[0].mxu0
      %6775 = vmatprep.mubr.bf16.mxu0 0
      %6776 = vmatmul.mubr.bf16.gmra.mrb[0].mxu0 %v5479
      %v6777 = vpop.f32.mrb[0].mxu0
      %v6778 = vadd.f32 %v6617, %v6777
      %v6779 = vpop.f32.mrb[0].mxu0
      %v6780 = vpop.f32.mrb[0].mxu0
      %v6781 = vadd.f32 %v6620, %v6780
      %v6782 = vpop.f32.mrb[0].mxu0
      %6783 = vmatprep.mubr.bf16.mxu0 0
      %6784 = vmatmul.mubr.bf16.gmra.mrb[0].mxu0 %v5480
      %v6785 = vpop.f32.mrb[0].mxu0
      %v6786 = vadd.f32 %v6625, %v6785
      %v6787 = vpop.f32.mrb[0].mxu0
      %v6788 = vpop.f32.mrb[0].mxu0
      %v6789 = vadd.f32 %v6628, %v6788
      %v6790 = vpop.f32.mrb[0].mxu0
      %6791 = vmatprep.mubr.bf16.mxu0 0
      %6792 = vmatmul.mubr.bf16.gmra.mrb[0].mxu0 %v5481
      %v6793 = vpop.f32.mrb[0].mxu0
      %v6794 = vadd.f32 %v6633, %v6793
      %v6795 = vpop.f32.mrb[0].mxu0
      %v6796 = vpop.f32.mrb[0].mxu0
      %v6797 = vadd.f32 %v6636, %v6796
      %v6798 = vpop.f32.mrb[0].mxu0
      %6799 = vmatprep.mubr.bf16.mxu0 0
      %6800 = vmatmul.mubr.bf16.gmra.mrb[0].mxu0 %v5482
      %v6801 = vpop.f32.mrb[0].mxu0
      %v6802 = vadd.f32 %v6641, %v6801
      %v6803 = vpop.f32.mrb[0].mxu0
      %v6804 = vpop.f32.mrb[0].mxu0
      %v6805 = vadd.f32 %v6644, %v6804
      %v6806 = vpop.f32.mrb[0].mxu0
      %6807 = vmatprep.mubr.bf16.mxu0 0
      %6808 = vmatmul.mubr.bf16.gmra.mrb[0].mxu0 %v5483
      %v6809 = vpop.f32.mrb[0].mxu0
      %v6810 = vadd.f32 %v6649, %v6809
      %v6811 = vpop.f32.mrb[0].mxu0
      %v6812 = vpop.f32.mrb[0].mxu0
      %v6813 = vadd.f32 %v6652, %v6812
      %v6814 = vpop.f32.mrb[0].mxu0
      %6815 = vmatprep.mubr.bf16.mxu0 0
      %6816 = vmatmul.mubr.bf16.gmra.mrb[0].mxu0 %v5484
      %v6817 = vpop.f32.mrb[0].mxu0
      %v6818 = vadd.f32 %v6657, %v6817
      %v6819 = vpop.f32.mrb[0].mxu0
      %v6820 = vpop.f32.mrb[0].mxu0
      %v6821 = vadd.f32 %v6660, %v6820
      %v6822 = vpop.f32.mrb[0].mxu0
      %6823 = vmatprep.mubr.bf16.mxu0 0
      %6824 = vmatmul.mubr.bf16.gmra.mrb[0].mxu0 %v5485
      %v6825 = vpop.f32.mrb[0].mxu0
      %v6826 = vadd.f32 %v6665, %v6825
      %v6827 = vpop.f32.mrb[0].mxu0
      %v6828 = vpop.f32.mrb[0].mxu0
      %v6829 = vadd.f32 %v6668, %v6828
      %v6830 = vpop.f32.mrb[0].mxu0
      %6831 = vmatprep.mubr.bf16.mxu0 0
      %6832 = vmatmul.mubr.bf16.gmra.mrb[0].mxu0 %v5486
      %v6833 = vpop.f32.mrb[0].mxu0
      %v6834 = vadd.f32 %v6673, %v6833
      %v6835 = vpop.f32.mrb[0].mxu0
      %v6836 = vpop.f32.mrb[0].mxu0
      %v6837 = vadd.f32 %v6676, %v6836
      %v6838 = vpop.f32.mrb[0].mxu0
      %6839 = vmatprep.mubr.bf16.mxu0 0
      %6840 = vmatmul.mubr.bf16.gmra.mrb[0].mxu0 %v5487
      %v6841 = vpop.f32.mrb[0].mxu0
      %v6842 = vadd.f32 %v6681, %v6841
      %v6843 = vpop.f32.mrb[0].mxu0
      %v6844 = vpop.f32.mrb[0].mxu0
      %v6845 = vadd.f32 %v6684, %v6844
      %v6846 = vpop.f32.mrb[0].mxu0
      %6847 = vmatprep.mubr.bf16.mxu0 0
      %6848 = vmatmul.mubr.bf16.gmra.mrb[0].mxu0 %v5488
      %v6849 = vpop.f32.mrb[0].mxu0
      %v6850 = vadd.f32 %v6689, %v6849
      %v6851 = vpop.f32.mrb[0].mxu0
      %v6852 = vpop.f32.mrb[0].mxu0
      %v6853 = vadd.f32 %v6692, %v6852
      %v6854 = vpop.f32.mrb[0].mxu0
      %6855 = vmatprep.mubr.bf16.mxu0 0
      %6856 = vmatmul.mubr.bf16.gmra.mrb[0].mxu0 %v5489
      %v6857 = vpop.f32.mrb[0].mxu0
      %v6858 = vadd.f32 %v6697, %v6857
      %v6859 = vpop.f32.mrb[0].mxu0
      %v6860 = vpop.f32.mrb[0].mxu0
      %v6861 = vadd.f32 %v6700, %v6860
      %v6862 = vpop.f32.mrb[0].mxu0
      %6863 = vmatprep.mubr.bf16.mxu0 0
      %6864 = vmatmul.mubr.bf16.gmra.mrb[0].mxu0 %v5490
      %v6865 = vpop.f32.mrb[0].mxu0
      %v6866 = vadd.f32 %v6705, %v6865
      %v6867 = vpop.f32.mrb[0].mxu0
      %v6868 = vpop.f32.mrb[0].mxu0
      %v6869 = vadd.f32 %v6708, %v6868
      %v6870 = vpop.f32.mrb[0].mxu0
      %6871 = vdwg.mxu0
      %6872 = vst [vmem:[%s332] sm:$0xff] %v6746
      %6873 = vst [vmem:[%s332 + $0x8] sm:$0xff] %v6749
      %6874 = vst [vmem:[%s332 + $0x10] sm:$0xff] %v6754
      %6875 = vst [vmem:[%s332 + $0x18] sm:$0xff] %v6757
      %6876 = vst [vmem:[%s332 + $0x20] sm:$0xff] %v6762
      %6877 = vst [vmem:[%s332 + $0x28] sm:$0xff] %v6765
      %6878 = vst [vmem:[%s332 + $0x30] sm:$0xff] %v6770
      %6879 = vst [vmem:[%s332 + $0x38] sm:$0xff] %v6773
      %6880 = vst [vmem:[%s332 + $0x40] sm:$0xff] %v6778
      %6881 = vst [vmem:[%s332 + $0x48] sm:$0xff] %v6781
      %6882 = vst [vmem:[%s332 + $0x50] sm:$0xff] %v6786
      %6883 = vst [vmem:[%s332 + $0x58] sm:$0xff] %v6789
      %6884 = vst [vmem:[%s332 + $0x60] sm:$0xff] %v6794
      %6885 = vst [vmem:[%s332 + $0x68] sm:$0xff] %v6797
      %6886 = vst [vmem:[%s332 + $0x70] sm:$0xff] %v6802
      %6887 = vst [vmem:[%s332 + $0x78] sm:$0xff] %v6805
      %6888 = vst [vmem:[%s332 + $0x80] sm:$0xff] %v6810
      %6889 = vst [vmem:[%s332 + $0x88] sm:$0xff] %v6813
      %6890 = vst [vmem:[%s332 + $0x90] sm:$0xff] %v6818
      %6891 = vst [vmem:[%s332 + $0x98] sm:$0xff] %v6821
      %6892 = vst [vmem:[%s332 + $0xa0] sm:$0xff] %v6826
      %6893 = vst [vmem:[%s332 + $0xa8] sm:$0xff] %v6829
      %6894 = vst [vmem:[%s332 + $0xb0] sm:$0xff] %v6834
      %6895 = vst [vmem:[%s332 + $0xb8] sm:$0xff] %v6837
      %6896 = vst [vmem:[%s332 + $0xc0] sm:$0xff] %v6842
      %6897 = vst [vmem:[%s332 + $0xc8] sm:$0xff] %v6845
      %6898 = vst [vmem:[%s332 + $0xd0] sm:$0xff] %v6850
      %6899 = vst [vmem:[%s332 + $0xd8] sm:$0xff] %v6853
      %6900 = vst [vmem:[%s332 + $0xe0] sm:$0xff] %v6858
      %6901 = vst [vmem:[%s332 + $0xe8] sm:$0xff] %v6861
      %6902 = vst [vmem:[%s332 + $0xf0] sm:$0xff] %v6866
      %6903 = vst [vmem:[%s332 + $0xf8] sm:$0xff] %v6869
      %p6904 = scmp.lt.s32.totalorder %s20, 1
      %s6905 = scalar_select %p6904, %s20, 1
      %s6906 = smul.addr %s6905, 32
      %s6907 = smul.addr %s6906, 8
      %s6908 = scalar_lea.vmem %s9, %s6907
      // Predicated region
      $region57: #{preact_block_nchw.1} parent=55 // pred_check
        %p6909 = pneg %p232
      $region58: #{preact_block_nchw.1} parent=55 // pred_check_branch
        %6911 = sbr.rel (%p6909) target = $region60
      $region59: #{preact_block_nchw.1} parent=55 // pred_region
        _
      $region60: #{preact_block_nchw.1} parent=55 // pred_fallthru
        _
    $region56: #{preact_block_nchw.1} parent=5 // pred_fallthru
      _
    %p6912 = scmp.le.s32.totalorder 2, %s15
    // Predicated region
    $region61: #{preact_block_nchw.1} parent=5 // pred_check
      %p6913 = pneg %p6912
    $region62: #{preact_block_nchw.1} parent=5 // pred_check_branch
      %6915 = sbr.rel (%p6913) target = $region64
    $region63: #{preact_block_nchw.1} parent=5 // pred_region
      %s6916 = ssub.s32 %s15, 2
      // Predicated region
      $region65: #{preact_block_nchw.1} parent=63 // pred_check
        %p6917 = pneg %p238
      $region66: #{preact_block_nchw.1} parent=63 // pred_check_branch
        %6919 = sbr.rel (%p6917) target = $region68
      $region67: #{preact_block_nchw.1} parent=63 // pred_region
        %p6920 = scmp.lt.s32.totalorder %s21, 1
        %s6921 = scalar_select %p6920, %s21, 1
        %s6922 = smul.addr %s6921, 32
        %s6923 = smul.addr %s6922, 8
        %s6924 = scalar_lea.vmem %s9, %s6923
      $region68: #{preact_block_nchw.1} parent=63 // pred_fallthru
        _
    $region64: #{preact_block_nchw.1} parent=5 // pred_fallthru
      _
  $region6: #{preact_block_nchw.1} parent=0 // loop_footer
    %s19 = sadd.s32 1, %s15
  $region7: #{preact_block_nchw.1} parent=0 // loop_footer_branch
    %14 = sbr.rel target = $region3
  $region8: #{preact_block_nchw.1} parent=0 // loop_exit
    _

</llo_original>
